<compile_context>
chip_gen: v5e
topology: v5e:2x2
jax: 0.10.0
libtpu: 0.0.40
codegen_flags: <defaults>
</compile_context>

<pallas_src>
import functools

import numpy as np
import jax
import jax.numpy as jnp
from jax import lax
from jax.experimental import pallas as pl
from jax.experimental.pallas import tpu as pltpu


def fused_dip_kernel(x_ref, w_ref, b_ref, o_ref, col_ref, *, H, W, n_layers, margin):
    """All conv3x3(+ReLU) layers for one batch element, activations resident in VMEM.

    x_ref:   (1, C, S)                    input image (channels zero-padded to C)
    w_ref:   (L, 3, C, 3C)                per-layer, per-row (Cout, 3*Cin) matrices
                                          (column blocks = taps dx = -1, 0, +1)
    b_ref:   (L, C, 1)                    per-layer bias
    o_ref:   (1, C, S)                    last conv output (no ReLU)
    col_ref: (3C, margin + S + margin)    scratch holding three column-shifted
                                          copies of the current activations;
                                          zero lane-margins implement the
                                          vertical zero-padding of the conv.
    """
    C = x_ref.shape[1]
    S = H * W
    M = margin
    f32 = jnp.float32

    # Zero scratch once per image: the lane margins (never written afterwards)
    # are the conv's vertical zero padding; row-shifted reads land in them.
    col_ref[...] = jnp.zeros_like(col_ref)
    # dx == 0 block carries the current layer's input (interior lanes only).
    col_ref[C:2 * C, M:M + S] = x_ref[0]

    # Column index of every flattened spatial position; dx = +/-1 taps must be
    # zeroed where a flat shift would wrap across a row boundary.
    pos = lax.broadcasted_iota(jnp.int32, (1, S), 1)
    xx = (pos & (W - 1)) if (W & (W - 1)) == 0 else (pos % W)
    mask_left = (xx >= 1).astype(f32)       # valid output columns for dx == -1
    mask_right = (xx <= W - 2).astype(f32)  # valid output columns for dx == +1

    for l in range(n_layers):
        # Rebuild the column-shifted (dx = -1 / +1) copies of the activations.
        # Reads at M-1 / M+1 that touch a margin are zero (also masked anyway).
        col_ref[0:C, M:M + S] = col_ref[C:2 * C, M - 1:M - 1 + S] * mask_left
        col_ref[2 * C:3 * C, M:M + S] = col_ref[C:2 * C, M + 1:M + 1 + S] * mask_right

        # One (C, 3C) x (3C, S) MXU matmul per kernel row dy in {-1, 0, +1}:
        # shifting the whole 3C-row stack by dy*W lanes picks the right rows,
        # and out-of-image rows read the zero margins.
        acc = jnp.dot(w_ref[l, 0], col_ref[:, M - W:M - W + S],
                      preferred_element_type=f32)
        acc = acc + jnp.dot(w_ref[l, 1], col_ref[:, M:M + S],
                            preferred_element_type=f32)
        acc = acc + jnp.dot(w_ref[l, 2], col_ref[:, M + W:M + W + S],
                            preferred_element_type=f32)
        acc = acc + b_ref[l]

        if l < n_layers - 1:
            acc = jnp.maximum(acc, 0.0)              # ReLU between layers
            col_ref[C:2 * C, M:M + S] = acc          # feed next layer (interior only)
        else:
            o_ref[0] = acc.astype(o_ref.dtype)       # no ReLU after the last conv


@jax.jit
def forward(x_nchw, w_all, b_all):
    """Reproduces the PyTorch forward: conv1..conv8, ReLU between, none after conv8."""
    N, Cin, H, W = x_nchw.shape
    L, _, C, _ = w_all.shape
    S = H * W
    margin = -(-max(W, 1) // 128) * 128  # >= W (max |row shift|), 128-lane aligned

    x = x_nchw.astype(jnp.float32).reshape(N, Cin, S)
    if Cin < C:
        x = jnp.pad(x, ((0, 0), (0, C - Cin), (0, 0)))  # pad channels once (layer 1)

    kern = functools.partial(fused_dip_kernel, H=H, W=W, n_layers=L, margin=margin)
    out = pl.pallas_call(
        kern,
        out_shape=jax.ShapeDtypeStruct((N, C, S), jnp.float32),
        grid=(N,),
        in_specs=[
            pl.BlockSpec((1, C, S), lambda n: (n, 0, 0)),
            pl.BlockSpec((L, 3, C, 3 * C), lambda n: (0, 0, 0, 0)),  # resident once
            pl.BlockSpec((L, C, 1), lambda n: (0, 0, 0)),
        ],
        out_specs=pl.BlockSpec((1, C, S), lambda n: (n, 0, 0)),
        scratch_shapes=[pltpu.VMEM((3 * C, margin + S + margin), jnp.float32)],
        compiler_params=pltpu.CompilerParams(dimension_semantics=("parallel",)),
    )(x, w_all, b_all)
    return out.reshape(N, C, H, W)


def init_params(key, number_of_image_channels, n_features, n_layers=8):
    """Matches the module: weights via kaiming_uniform_ (a=0 -> bound sqrt(6/fan_in)),
    biases keep PyTorch Conv2d's default U(-1/sqrt(fan_in), 1/sqrt(fan_in))."""
    params = []
    cin = number_of_image_channels
    for _ in range(n_layers):
        cout = n_features
        key, wk, bk = jax.random.split(key, 3)
        fan_in = cin * 9
        w_bound = (6.0 / fan_in) ** 0.5
        b_bound = 1.0 / fan_in ** 0.5
        w = jax.random.uniform(wk, (cout, cin, 3, 3), jnp.float32, -w_bound, w_bound)  # OIHW
        b = jax.random.uniform(bk, (cout,), jnp.float32, -b_bound, b_bound)
        params.append((w, b))
        cin = cout
    return params


def pack_params(params, n_features):
    """Per-layer weights as (L, 3, C, 3C): row r = dy+1, column block dxi = dx+1
    holds the (Cout, Cin) tap matrix (layer-1 input channels zero-padded to C).
    Biases as (L, C, 1)."""
    L = len(params)
    C = n_features
    w_all = np.zeros((L, 3, C, 3 * C), np.float32)
    b_all = np.zeros((L, C, 1), np.float32)
    for l, (w, b) in enumerate(params):
        w = np.asarray(w)
        b = np.asarray(b)
        cout, cin = w.shape[0], w.shape[1]
        for r in range(3):          # dy + 1
            for dxi in range(3):    # dx + 1
                w_all[l, r, :cout, dxi * C:dxi * C + cin] = w[:, :, r, dxi]
        b_all[l, :cout, 0] = b
    return jnp.asarray(w_all), jnp.asarray(b_all)


def reference_forward(x_nchw, params):
    out = x_nchw
    L = len(params)
    for i, (w, b) in enumerate(params):
        out = lax.conv_general_dilated(
            out, w, window_strides=(1, 1), padding="SAME",
            dimension_numbers=("NCHW", "OIHW", "NCHW"),
            precision=lax.Precision.HIGHEST)
        out = out + b.reshape(1, -1, 1, 1)
        if i < L - 1:
            out = jnp.maximum(out, 0.0)
    return out


if __name__ == "__main__":
    numberOfImageChannels = 4
    nFeaturesIntermediateLayers = 32
    N, H, W = 2, 16, 16

    key = jax.random.PRNGKey(0)
    key, xk = jax.random.split(key)
    x = jax.random.normal(xk, (N, numberOfImageChannels, H, W), jnp.float32)  # NCHW
    params = init_params(key, numberOfImageChannels, nFeaturesIntermediateLayers)
    w_all, b_all = pack_params(params, nFeaturesIntermediateLayers)

    out = forward(x, w_all, b_all)
    out = jax.block_until_ready(out)

    ref = reference_forward(x, params)
    assert out.shape == (N, nFeaturesIntermediateLayers, H, W)
    assert jnp.allclose(out, ref, atol=5e-4, rtol=5e-4), "mismatch vs lax.conv reference"

    print("KERNEL_OK")
</pallas_src>

<mosaic_0001>
module attributes {stable_mosaic.version = 11 : i64} {
  func.func @fused_dip_kernel(%arg0: i32, %arg1: memref<1x32x256xf32, #tpu.memory_space<vmem>>, %arg2: memref<8x3x32x96xf32, #tpu.memory_space<vmem>>, %arg3: memref<8x32x1xf32, #tpu.memory_space<vmem>>, %arg4: memref<1x32x256xf32, #tpu.memory_space<vmem>>, %arg5: memref<96x512xf32, #tpu.memory_space<vmem>>) attributes {dimension_semantics = [#tpu.dimension_semantics<parallel>], iteration_bounds = array<i64: 2>, scalar_prefetch = 0 : i64, scratch_operands = 1 : i64, tpu.core_type = #tpu.core_type<tc>, window_params = [{transform_indices = @transform_0, window_bounds = array<i64: 1, 32, 256>}, {pipeline_mode = #tpu.pipeline_mode<synchronous>, transform_indices = @transform_1, window_bounds = array<i64: 8, 3, 32, 96>}, {pipeline_mode = #tpu.pipeline_mode<synchronous>, transform_indices = @transform_2, window_bounds = array<i64: 8, 32, 1>}, {transform_indices = @transform_3, window_bounds = array<i64: 1, 32, 256>}]} {
    %cst = arith.constant 0.000000e+00 : f32
    %0 = vector.broadcast %cst : f32 to vector<96x512xf32>
    %c0 = arith.constant 0 : index
    %c0_0 = arith.constant 0 : index
    %1 = vector.load %arg5[%c0, %c0_0] : memref<96x512xf32, #tpu.memory_space<vmem>>, vector<96x512xf32>
    tpu.vector_store %arg5[%c0, %c0_0], %0 {strides = array<i32>} : memref<96x512xf32, #tpu.memory_space<vmem>>, vector<96x512xf32>,
    %c0_1 = arith.constant 0 : index
    %c0_2 = arith.constant 0 : index
    %c0_3 = arith.constant 0 : index
    %2 = vector.load %arg1[%c0_1, %c0_2, %c0_3] : memref<1x32x256xf32, #tpu.memory_space<vmem>>, vector<1x32x256xf32>
    %3 = vector.shape_cast %2 : vector<1x32x256xf32> to vector<32x256xf32>
    %c32 = arith.constant 32 : index
    %c128 = arith.constant 128 : index
    %4 = vector.load %arg5[%c32, %c128] : memref<96x512xf32, #tpu.memory_space<vmem>>, vector<32x256xf32>
    tpu.vector_store %arg5[%c32, %c128], %3 {strides = array<i32>} : memref<96x512xf32, #tpu.memory_space<vmem>>, vector<32x256xf32>,
    %5 = tpu.iota {dimensions = array<i32: 1>} : vector<1x256xi32>
    %c15_i32 = arith.constant 15 : i32
    %6 = vector.broadcast %c15_i32 : i32 to vector<1x256xi32>
    %7 = arith.andi %5, %6 : vector<1x256xi32>
    %c1_i32 = arith.constant 1 : i32
    %8 = vector.broadcast %c1_i32 : i32 to vector<1x256xi32>
    %9 = arith.cmpi sge, %7, %8 : vector<1x256xi32>
    %10 = arith.extui %9 : vector<1x256xi1> to vector<1x256xi32>
    %11 = arith.sitofp %10 : vector<1x256xi32> to vector<1x256xf32>
    %c14_i32 = arith.constant 14 : i32
    %12 = vector.broadcast %c14_i32 : i32 to vector<1x256xi32>
    %13 = arith.cmpi sle, %7, %12 : vector<1x256xi32>
    %14 = arith.extui %13 : vector<1x256xi1> to vector<1x256xi32>
    %15 = arith.sitofp %14 : vector<1x256xi32> to vector<1x256xf32>
    %c32_4 = arith.constant 32 : index
    %c127 = arith.constant 127 : index
    %16 = vector.load %arg5[%c32_4, %c127] : memref<96x512xf32, #tpu.memory_space<vmem>>, vector<32x256xf32>
    %17 = vector.broadcast %11 : vector<1x256xf32> to vector<32x256xf32>
    %18 = arith.mulf %16, %17 : vector<32x256xf32>
    %c0_5 = arith.constant 0 : index
    %c128_6 = arith.constant 128 : index
    %19 = vector.load %arg5[%c0_5, %c128_6] : memref<96x512xf32, #tpu.memory_space<vmem>>, vector<32x256xf32>
    tpu.vector_store %arg5[%c0_5, %c128_6], %18 {strides = array<i32>} : memref<96x512xf32, #tpu.memory_space<vmem>>, vector<32x256xf32>,
    %c32_7 = arith.constant 32 : index
    %c129 = arith.constant 129 : index
    %20 = vector.load %arg5[%c32_7, %c129] : memref<96x512xf32, #tpu.memory_space<vmem>>, vector<32x256xf32>
    %21 = vector.broadcast %15 : vector<1x256xf32> to vector<32x256xf32>
    %22 = arith.mulf %20, %21 : vector<32x256xf32>
    %c64 = arith.constant 64 : index
    %c128_8 = arith.constant 128 : index
    %23 = vector.load %arg5[%c64, %c128_8] : memref<96x512xf32, #tpu.memory_space<vmem>>, vector<32x256xf32>
    tpu.vector_store %arg5[%c64, %c128_8], %22 {strides = array<i32>} : memref<96x512xf32, #tpu.memory_space<vmem>>, vector<32x256xf32>,
    %c0_9 = arith.constant 0 : index
    %c0_10 = arith.constant 0 : index
    %c0_11 = arith.constant 0 : index
    %c0_12 = arith.constant 0 : index
    %24 = vector.load %arg2[%c0_9, %c0_10, %c0_11, %c0_12] : memref<8x3x32x96xf32, #tpu.memory_space<vmem>>, vector<1x1x32x96xf32>
    %25 = vector.shape_cast %24 : vector<1x1x32x96xf32> to vector<32x96xf32>
    %c0_13 = arith.constant 0 : index
    %c112 = arith.constant 112 : index
    %26 = vector.load %arg5[%c0_13, %c112] : memref<96x512xf32, #tpu.memory_space<vmem>>, vector<96x256xf32>
    %cst_14 = arith.constant dense<0.000000e+00> : vector<32x256xf32>
    %27 = tpu.matmul %25, %26, %cst_14 {dimension_numbers = #tpu.dot_dimension_numbers<[1], [0], [0], [1], [0, 0, 1, 1], [], []>} : vector<32x96xf32>, vector<96x256xf32>, vector<32x256xf32> -> vector<32x256xf32>
    %c0_15 = arith.constant 0 : index
    %c1 = arith.constant 1 : index
    %c0_16 = arith.constant 0 : index
    %c0_17 = arith.constant 0 : index
    %28 = vector.load %arg2[%c0_15, %c1, %c0_16, %c0_17] : memref<8x3x32x96xf32, #tpu.memory_space<vmem>>, vector<1x1x32x96xf32>
    %29 = vector.shape_cast %28 : vector<1x1x32x96xf32> to vector<32x96xf32>
    %c0_18 = arith.constant 0 : index
    %c128_19 = arith.constant 128 : index
    %30 = vector.load %arg5[%c0_18, %c128_19] : memref<96x512xf32, #tpu.memory_space<vmem>>, vector<96x256xf32>
    %cst_20 = arith.constant dense<0.000000e+00> : vector<32x256xf32>
    %31 = tpu.matmul %29, %30, %cst_20 {dimension_numbers = #tpu.dot_dimension_numbers<[1], [0], [0], [1], [0, 0, 1, 1], [], []>} : vector<32x96xf32>, vector<96x256xf32>, vector<32x256xf32> -> vector<32x256xf32>
    %32 = arith.addf %27, %31 : vector<32x256xf32>
    %c0_21 = arith.constant 0 : index
    %c2 = arith.constant 2 : index
    %c0_22 = arith.constant 0 : index
    %c0_23 = arith.constant 0 : index
    %33 = vector.load %arg2[%c0_21, %c2, %c0_22, %c0_23] : memref<8x3x32x96xf32, #tpu.memory_space<vmem>>, vector<1x1x32x96xf32>
    %34 = vector.shape_cast %33 : vector<1x1x32x96xf32> to vector<32x96xf32>
    %c0_24 = arith.constant 0 : index
    %c144 = arith.constant 144 : index
    %35 = vector.load %arg5[%c0_24, %c144] : memref<96x512xf32, #tpu.memory_space<vmem>>, vector<96x256xf32>
    %cst_25 = arith.constant dense<0.000000e+00> : vector<32x256xf32>
    %36 = tpu.matmul %34, %35, %cst_25 {dimension_numbers = #tpu.dot_dimension_numbers<[1], [0], [0], [1], [0, 0, 1, 1], [], []>} : vector<32x96xf32>, vector<96x256xf32>, vector<32x256xf32> -> vector<32x256xf32>
    %37 = arith.addf %32, %36 : vector<32x256xf32>
    %c0_26 = arith.constant 0 : index
    %c0_27 = arith.constant 0 : index
    %c0_28 = arith.constant 0 : index
    %38 = vector.load %arg3[%c0_26, %c0_27, %c0_28] : memref<8x32x1xf32, #tpu.memory_space<vmem>>, vector<1x32x1xf32>
    %39 = vector.shape_cast %38 : vector<1x32x1xf32> to vector<32x1xf32>
    %40 = vector.broadcast %39 : vector<32x1xf32> to vector<32x256xf32>
    %41 = arith.addf %37, %40 : vector<32x256xf32>
    %cst_29 = arith.constant 0.000000e+00 : f32
    %42 = vector.broadcast %cst_29 : f32 to vector<32x256xf32>
    %43 = arith.maximumf %41, %42 : vector<32x256xf32>
    %c32_30 = arith.constant 32 : index
    %c128_31 = arith.constant 128 : index
    %44 = vector.load %arg5[%c32_30, %c128_31] : memref<96x512xf32, #tpu.memory_space<vmem>>, vector<32x256xf32>
    tpu.vector_store %arg5[%c32_30, %c128_31], %43 {strides = array<i32>} : memref<96x512xf32, #tpu.memory_space<vmem>>, vector<32x256xf32>,
    %c32_32 = arith.constant 32 : index
    %c127_33 = arith.constant 127 : index
    %45 = vector.load %arg5[%c32_32, %c127_33] : memref<96x512xf32, #tpu.memory_space<vmem>>, vector<32x256xf32>
    %46 = vector.broadcast %11 : vector<1x256xf32> to vector<32x256xf32>
    %47 = arith.mulf %45, %46 : vector<32x256xf32>
    %c0_34 = arith.constant 0 : index
    %c128_35 = arith.constant 128 : index
    %48 = vector.load %arg5[%c0_34, %c128_35] : memref<96x512xf32, #tpu.memory_space<vmem>>, vector<32x256xf32>
    tpu.vector_store %arg5[%c0_34, %c128_35], %47 {strides = array<i32>} : memref<96x512xf32, #tpu.memory_space<vmem>>, vector<32x256xf32>,
    %c32_36 = arith.constant 32 : index
    %c129_37 = arith.constant 129 : index
    %49 = vector.load %arg5[%c32_36, %c129_37] : memref<96x512xf32, #tpu.memory_space<vmem>>, vector<32x256xf32>
    %50 = vector.broadcast %15 : vector<1x256xf32> to vector<32x256xf32>
    %51 = arith.mulf %49, %50 : vector<32x256xf32>
    %c64_38 = arith.constant 64 : index
    %c128_39 = arith.constant 128 : index
    %52 = vector.load %arg5[%c64_38, %c128_39] : memref<96x512xf32, #tpu.memory_space<vmem>>, vector<32x256xf32>
    tpu.vector_store %arg5[%c64_38, %c128_39], %51 {strides = array<i32>} : memref<96x512xf32, #tpu.memory_space<vmem>>, vector<32x256xf32>,
    %c1_40 = arith.constant 1 : index
    %c0_41 = arith.constant 0 : index
    %c0_42 = arith.constant 0 : index
    %c0_43 = arith.constant 0 : index
    %53 = vector.load %arg2[%c1_40, %c0_41, %c0_42, %c0_43] : memref<8x3x32x96xf32, #tpu.memory_space<vmem>>, vector<1x1x32x96xf32>
    %54 = vector.shape_cast %53 : vector<1x1x32x96xf32> to vector<32x96xf32>
    %c0_44 = arith.constant 0 : index
    %c112_45 = arith.constant 112 : index
    %55 = vector.load %arg5[%c0_44, %c112_45] : memref<96x512xf32, #tpu.memory_space<vmem>>, vector<96x256xf32>
    %cst_46 = arith.constant dense<0.000000e+00> : vector<32x256xf32>
    %56 = tpu.matmul %54, %55, %cst_46 {dimension_numbers = #tpu.dot_dimension_numbers<[1], [0], [0], [1], [0, 0, 1, 1], [], []>} : vector<32x96xf32>, vector<96x256xf32>, vector<32x256xf32> -> vector<32x256xf32>
    %c1_47 = arith.constant 1 : index
    %c1_48 = arith.constant 1 : index
    %c0_49 = arith.constant 0 : index
    %c0_50 = arith.constant 0 : index
    %57 = vector.load %arg2[%c1_47, %c1_48, %c0_49, %c0_50] : memref<8x3x32x96xf32, #tpu.memory_space<vmem>>, vector<1x1x32x96xf32>
    %58 = vector.shape_cast %57 : vector<1x1x32x96xf32> to vector<32x96xf32>
    %c0_51 = arith.constant 0 : index
    %c128_52 = arith.constant 128 : index
    %59 = vector.load %arg5[%c0_51, %c128_52] : memref<96x512xf32, #tpu.memory_space<vmem>>, vector<96x256xf32>
    %cst_53 = arith.constant dense<0.000000e+00> : vector<32x256xf32>
    %60 = tpu.matmul %58, %59, %cst_53 {dimension_numbers = #tpu.dot_dimension_numbers<[1], [0], [0], [1], [0, 0, 1, 1], [], []>} : vector<32x96xf32>, vector<96x256xf32>, vector<32x256xf32> -> vector<32x256xf32>
    %61 = arith.addf %56, %60 : vector<32x256xf32>
    %c1_54 = arith.constant 1 : index
    %c2_55 = arith.constant 2 : index
    %c0_56 = arith.constant 0 : index
    %c0_57 = arith.constant 0 : index
    %62 = vector.load %arg2[%c1_54, %c2_55, %c0_56, %c0_57] : memref<8x3x32x96xf32, #tpu.memory_space<vmem>>, vector<1x1x32x96xf32>
    %63 = vector.shape_cast %62 : vector<1x1x32x96xf32> to vector<32x96xf32>
    %c0_58 = arith.constant 0 : index
    %c144_59 = arith.constant 144 : index
    %64 = vector.load %arg5[%c0_58, %c144_59] : memref<96x512xf32, #tpu.memory_space<vmem>>, vector<96x256xf32>
    %cst_60 = arith.constant dense<0.000000e+00> : vector<32x256xf32>
    %65 = tpu.matmul %63, %64, %cst_60 {dimension_numbers = #tpu.dot_dimension_numbers<[1], [0], [0], [1], [0, 0, 1, 1], [], []>} : vector<32x96xf32>, vector<96x256xf32>, vector<32x256xf32> -> vector<32x256xf32>
    %66 = arith.addf %61, %65 : vector<32x256xf32>
    %c1_61 = arith.constant 1 : index
    %c0_62 = arith.constant 0 : index
    %c0_63 = arith.constant 0 : index
    %67 = vector.load %arg3[%c1_61, %c0_62, %c0_63] : memref<8x32x1xf32, #tpu.memory_space<vmem>>, vector<1x32x1xf32>
    %68 = vector.shape_cast %67 : vector<1x32x1xf32> to vector<32x1xf32>
    %69 = vector.broadcast %68 : vector<32x1xf32> to vector<32x256xf32>
    %70 = arith.addf %66, %69 : vector<32x256xf32>
    %cst_64 = arith.constant 0.000000e+00 : f32
    %71 = vector.broadcast %cst_64 : f32 to vector<32x256xf32>
    %72 = arith.maximumf %70, %71 : vector<32x256xf32>
    %c32_65 = arith.constant 32 : index
    %c128_66 = arith.constant 128 : index
    %73 = vector.load %arg5[%c32_65, %c128_66] : memref<96x512xf32, #tpu.memory_space<vmem>>, vector<32x256xf32>
    tpu.vector_store %arg5[%c32_65, %c128_66], %72 {strides = array<i32>} : memref<96x512xf32, #tpu.memory_space<vmem>>, vector<32x256xf32>,
    %c32_67 = arith.constant 32 : index
    %c127_68 = arith.constant 127 : index
    %74 = vector.load %arg5[%c32_67, %c127_68] : memref<96x512xf32, #tpu.memory_space<vmem>>, vector<32x256xf32>
    %75 = vector.broadcast %11 : vector<1x256xf32> to vector<32x256xf32>
    %76 = arith.mulf %74, %75 : vector<32x256xf32>
    %c0_69 = arith.constant 0 : index
    %c128_70 = arith.constant 128 : index
    %77 = vector.load %arg5[%c0_69, %c128_70] : memref<96x512xf32, #tpu.memory_space<vmem>>, vector<32x256xf32>
    tpu.vector_store %arg5[%c0_69, %c128_70], %76 {strides = array<i32>} : memref<96x512xf32, #tpu.memory_space<vmem>>, vector<32x256xf32>,
    %c32_71 = arith.constant 32 : index
    %c129_72 = arith.constant 129 : index
    %78 = vector.load %arg5[%c32_71, %c129_72] : memref<96x512xf32, #tpu.memory_space<vmem>>, vector<32x256xf32>
    %79 = vector.broadcast %15 : vector<1x256xf32> to vector<32x256xf32>
    %80 = arith.mulf %78, %79 : vector<32x256xf32>
    %c64_73 = arith.constant 64 : index
    %c128_74 = arith.constant 128 : index
    %81 = vector.load %arg5[%c64_73, %c128_74] : memref<96x512xf32, #tpu.memory_space<vmem>>, vector<32x256xf32>
    tpu.vector_store %arg5[%c64_73, %c128_74], %80 {strides = array<i32>} : memref<96x512xf32, #tpu.memory_space<vmem>>, vector<32x256xf32>,
    %c2_75 = arith.constant 2 : index
    %c0_76 = arith.constant 0 : index
    %c0_77 = arith.constant 0 : index
    %c0_78 = arith.constant 0 : index
    %82 = vector.load %arg2[%c2_75, %c0_76, %c0_77, %c0_78] : memref<8x3x32x96xf32, #tpu.memory_space<vmem>>, vector<1x1x32x96xf32>
    %83 = vector.shape_cast %82 : vector<1x1x32x96xf32> to vector<32x96xf32>
    %c0_79 = arith.constant 0 : index
    %c112_80 = arith.constant 112 : index
    %84 = vector.load %arg5[%c0_79, %c112_80] : memref<96x512xf32, #tpu.memory_space<vmem>>, vector<96x256xf32>
    %cst_81 = arith.constant dense<0.000000e+00> : vector<32x256xf32>
    %85 = tpu.matmul %83, %84, %cst_81 {dimension_numbers = #tpu.dot_dimension_numbers<[1], [0], [0], [1], [0, 0, 1, 1], [], []>} : vector<32x96xf32>, vector<96x256xf32>, vector<32x256xf32> -> vector<32x256xf32>
    %c2_82 = arith.constant 2 : index
    %c1_83 = arith.constant 1 : index
    %c0_84 = arith.constant 0 : index
    %c0_85 = arith.constant 0 : index
    %86 = vector.load %arg2[%c2_82, %c1_83, %c0_84, %c0_85] : memref<8x3x32x96xf32, #tpu.memory_space<vmem>>, vector<1x1x32x96xf32>
    %87 = vector.shape_cast %86 : vector<1x1x32x96xf32> to vector<32x96xf32>
    %c0_86 = arith.constant 0 : index
    %c128_87 = arith.constant 128 : index
    %88 = vector.load %arg5[%c0_86, %c128_87] : memref<96x512xf32, #tpu.memory_space<vmem>>, vector<96x256xf32>
    %cst_88 = arith.constant dense<0.000000e+00> : vector<32x256xf32>
    %89 = tpu.matmul %87, %88, %cst_88 {dimension_numbers = #tpu.dot_dimension_numbers<[1], [0], [0], [1], [0, 0, 1, 1], [], []>} : vector<32x96xf32>, vector<96x256xf32>, vector<32x256xf32> -> vector<32x256xf32>
    %90 = arith.addf %85, %89 : vector<32x256xf32>
    %c2_89 = arith.constant 2 : index
    %c2_90 = arith.constant 2 : index
    %c0_91 = arith.constant 0 : index
    %c0_92 = arith.constant 0 : index
    %91 = vector.load %arg2[%c2_89, %c2_90, %c0_91, %c0_92] : memref<8x3x32x96xf32, #tpu.memory_space<vmem>>, vector<1x1x32x96xf32>
    %92 = vector.shape_cast %91 : vector<1x1x32x96xf32> to vector<32x96xf32>
    %c0_93 = arith.constant 0 : index
    %c144_94 = arith.constant 144 : index
    %93 = vector.load %arg5[%c0_93, %c144_94] : memref<96x512xf32, #tpu.memory_space<vmem>>, vector<96x256xf32>
    %cst_95 = arith.constant dense<0.000000e+00> : vector<32x256xf32>
    %94 = tpu.matmul %92, %93, %cst_95 {dimension_numbers = #tpu.dot_dimension_numbers<[1], [0], [0], [1], [0, 0, 1, 1], [], []>} : vector<32x96xf32>, vector<96x256xf32>, vector<32x256xf32> -> vector<32x256xf32>
    %95 = arith.addf %90, %94 : vector<32x256xf32>
    %c2_96 = arith.constant 2 : index
    %c0_97 = arith.constant 0 : index
    %c0_98 = arith.constant 0 : index
    %96 = vector.load %arg3[%c2_96, %c0_97, %c0_98] : memref<8x32x1xf32, #tpu.memory_space<vmem>>, vector<1x32x1xf32>
    %97 = vector.shape_cast %96 : vector<1x32x1xf32> to vector<32x1xf32>
    %98 = vector.broadcast %97 : vector<32x1xf32> to vector<32x256xf32>
    %99 = arith.addf %95, %98 : vector<32x256xf32>
    %cst_99 = arith.constant 0.000000e+00 : f32
    %100 = vector.broadcast %cst_99 : f32 to vector<32x256xf32>
    %101 = arith.maximumf %99, %100 : vector<32x256xf32>
    %c32_100 = arith.constant 32 : index
    %c128_101 = arith.constant 128 : index
    %102 = vector.load %arg5[%c32_100, %c128_101] : memref<96x512xf32, #tpu.memory_space<vmem>>, vector<32x256xf32>
    tpu.vector_store %arg5[%c32_100, %c128_101], %101 {strides = array<i32>} : memref<96x512xf32, #tpu.memory_space<vmem>>, vector<32x256xf32>,
    %c32_102 = arith.constant 32 : index
    %c127_103 = arith.constant 127 : index
    %103 = vector.load %arg5[%c32_102, %c127_103] : memref<96x512xf32, #tpu.memory_space<vmem>>, vector<32x256xf32>
    %104 = vector.broadcast %11 : vector<1x256xf32> to vector<32x256xf32>
    %105 = arith.mulf %103, %104 : vector<32x256xf32>
    %c0_104 = arith.constant 0 : index
    %c128_105 = arith.constant 128 : index
    %106 = vector.load %arg5[%c0_104, %c128_105] : memref<96x512xf32, #tpu.memory_space<vmem>>, vector<32x256xf32>
    tpu.vector_store %arg5[%c0_104, %c128_105], %105 {strides = array<i32>} : memref<96x512xf32, #tpu.memory_space<vmem>>, vector<32x256xf32>,
    %c32_106 = arith.constant 32 : index
    %c129_107 = arith.constant 129 : index
    %107 = vector.load %arg5[%c32_106, %c129_107] : memref<96x512xf32, #tpu.memory_space<vmem>>, vector<32x256xf32>
    %108 = vector.broadcast %15 : vector<1x256xf32> to vector<32x256xf32>
    %109 = arith.mulf %107, %108 : vector<32x256xf32>
    %c64_108 = arith.constant 64 : index
    %c128_109 = arith.constant 128 : index
    %110 = vector.load %arg5[%c64_108, %c128_109] : memref<96x512xf32, #tpu.memory_space<vmem>>, vector<32x256xf32>
    tpu.vector_store %arg5[%c64_108, %c128_109], %109 {strides = array<i32>} : memref<96x512xf32, #tpu.memory_space<vmem>>, vector<32x256xf32>,
    %c3 = arith.constant 3 : index
    %c0_110 = arith.constant 0 : index
    %c0_111 = arith.constant 0 : index
    %c0_112 = arith.constant 0 : index
    %111 = vector.load %arg2[%c3, %c0_110, %c0_111, %c0_112] : memref<8x3x32x96xf32, #tpu.memory_space<vmem>>, vector<1x1x32x96xf32>
    %112 = vector.shape_cast %111 : vector<1x1x32x96xf32> to vector<32x96xf32>
    %c0_113 = arith.constant 0 : index
    %c112_114 = arith.constant 112 : index
    %113 = vector.load %arg5[%c0_113, %c112_114] : memref<96x512xf32, #tpu.memory_space<vmem>>, vector<96x256xf32>
    %cst_115 = arith.constant dense<0.000000e+00> : vector<32x256xf32>
    %114 = tpu.matmul %112, %113, %cst_115 {dimension_numbers = #tpu.dot_dimension_numbers<[1], [0], [0], [1], [0, 0, 1, 1], [], []>} : vector<32x96xf32>, vector<96x256xf32>, vector<32x256xf32> -> vector<32x256xf32>
    %c3_116 = arith.constant 3 : index
    %c1_117 = arith.constant 1 : index
    %c0_118 = arith.constant 0 : index
    %c0_119 = arith.constant 0 : index
    %115 = vector.load %arg2[%c3_116, %c1_117, %c0_118, %c0_119] : memref<8x3x32x96xf32, #tpu.memory_space<vmem>>, vector<1x1x32x96xf32>
    %116 = vector.shape_cast %115 : vector<1x1x32x96xf32> to vector<32x96xf32>
    %c0_120 = arith.constant 0 : index
    %c128_121 = arith.constant 128 : index
    %117 = vector.load %arg5[%c0_120, %c128_121] : memref<96x512xf32, #tpu.memory_space<vmem>>, vector<96x256xf32>
    %cst_122 = arith.constant dense<0.000000e+00> : vector<32x256xf32>
    %118 = tpu.matmul %116, %117, %cst_122 {dimension_numbers = #tpu.dot_dimension_numbers<[1], [0], [0], [1], [0, 0, 1, 1], [], []>} : vector<32x96xf32>, vector<96x256xf32>, vector<32x256xf32> -> vector<32x256xf32>
    %119 = arith.addf %114, %118 : vector<32x256xf32>
    %c3_123 = arith.constant 3 : index
    %c2_124 = arith.constant 2 : index
    %c0_125 = arith.constant 0 : index
    %c0_126 = arith.constant 0 : index
    %120 = vector.load %arg2[%c3_123, %c2_124, %c0_125, %c0_126] : memref<8x3x32x96xf32, #tpu.memory_space<vmem>>, vector<1x1x32x96xf32>
    %121 = vector.shape_cast %120 : vector<1x1x32x96xf32> to vector<32x96xf32>
    %c0_127 = arith.constant 0 : index
    %c144_128 = arith.constant 144 : index
    %122 = vector.load %arg5[%c0_127, %c144_128] : memref<96x512xf32, #tpu.memory_space<vmem>>, vector<96x256xf32>
    %cst_129 = arith.constant dense<0.000000e+00> : vector<32x256xf32>
    %123 = tpu.matmul %121, %122, %cst_129 {dimension_numbers = #tpu.dot_dimension_numbers<[1], [0], [0], [1], [0, 0, 1, 1], [], []>} : vector<32x96xf32>, vector<96x256xf32>, vector<32x256xf32> -> vector<32x256xf32>
    %124 = arith.addf %119, %123 : vector<32x256xf32>
    %c3_130 = arith.constant 3 : index
    %c0_131 = arith.constant 0 : index
    %c0_132 = arith.constant 0 : index
    %125 = vector.load %arg3[%c3_130, %c0_131, %c0_132] : memref<8x32x1xf32, #tpu.memory_space<vmem>>, vector<1x32x1xf32>
    %126 = vector.shape_cast %125 : vector<1x32x1xf32> to vector<32x1xf32>
    %127 = vector.broadcast %126 : vector<32x1xf32> to vector<32x256xf32>
    %128 = arith.addf %124, %127 : vector<32x256xf32>
    %cst_133 = arith.constant 0.000000e+00 : f32
    %129 = vector.broadcast %cst_133 : f32 to vector<32x256xf32>
    %130 = arith.maximumf %128, %129 : vector<32x256xf32>
    %c32_134 = arith.constant 32 : index
    %c128_135 = arith.constant 128 : index
    %131 = vector.load %arg5[%c32_134, %c128_135] : memref<96x512xf32, #tpu.memory_space<vmem>>, vector<32x256xf32>
    tpu.vector_store %arg5[%c32_134, %c128_135], %130 {strides = array<i32>} : memref<96x512xf32, #tpu.memory_space<vmem>>, vector<32x256xf32>,
    %c32_136 = arith.constant 32 : index
    %c127_137 = arith.constant 127 : index
    %132 = vector.load %arg5[%c32_136, %c127_137] : memref<96x512xf32, #tpu.memory_space<vmem>>, vector<32x256xf32>
    %133 = vector.broadcast %11 : vector<1x256xf32> to vector<32x256xf32>
    %134 = arith.mulf %132, %133 : vector<32x256xf32>
    %c0_138 = arith.constant 0 : index
    %c128_139 = arith.constant 128 : index
    %135 = vector.load %arg5[%c0_138, %c128_139] : memref<96x512xf32, #tpu.memory_space<vmem>>, vector<32x256xf32>
    tpu.vector_store %arg5[%c0_138, %c128_139], %134 {strides = array<i32>} : memref<96x512xf32, #tpu.memory_space<vmem>>, vector<32x256xf32>,
    %c32_140 = arith.constant 32 : index
    %c129_141 = arith.constant 129 : index
    %136 = vector.load %arg5[%c32_140, %c129_141] : memref<96x512xf32, #tpu.memory_space<vmem>>, vector<32x256xf32>
    %137 = vector.broadcast %15 : vector<1x256xf32> to vector<32x256xf32>
    %138 = arith.mulf %136, %137 : vector<32x256xf32>
    %c64_142 = arith.constant 64 : index
    %c128_143 = arith.constant 128 : index
    %139 = vector.load %arg5[%c64_142, %c128_143] : memref<96x512xf32, #tpu.memory_space<vmem>>, vector<32x256xf32>
    tpu.vector_store %arg5[%c64_142, %c128_143], %138 {strides = array<i32>} : memref<96x512xf32, #tpu.memory_space<vmem>>, vector<32x256xf32>,
    %c4 = arith.constant 4 : index
    %c0_144 = arith.constant 0 : index
    %c0_145 = arith.constant 0 : index
    %c0_146 = arith.constant 0 : index
    %140 = vector.load %arg2[%c4, %c0_144, %c0_145, %c0_146] : memref<8x3x32x96xf32, #tpu.memory_space<vmem>>, vector<1x1x32x96xf32>
    %141 = vector.shape_cast %140 : vector<1x1x32x96xf32> to vector<32x96xf32>
    %c0_147 = arith.constant 0 : index
    %c112_148 = arith.constant 112 : index
    %142 = vector.load %arg5[%c0_147, %c112_148] : memref<96x512xf32, #tpu.memory_space<vmem>>, vector<96x256xf32>
    %cst_149 = arith.constant dense<0.000000e+00> : vector<32x256xf32>
    %143 = tpu.matmul %141, %142, %cst_149 {dimension_numbers = #tpu.dot_dimension_numbers<[1], [0], [0], [1], [0, 0, 1, 1], [], []>} : vector<32x96xf32>, vector<96x256xf32>, vector<32x256xf32> -> vector<32x256xf32>
    %c4_150 = arith.constant 4 : index
    %c1_151 = arith.constant 1 : index
    %c0_152 = arith.constant 0 : index
    %c0_153 = arith.constant 0 : index
    %144 = vector.load %arg2[%c4_150, %c1_151, %c0_152, %c0_153] : memref<8x3x32x96xf32, #tpu.memory_space<vmem>>, vector<1x1x32x96xf32>
    %145 = vector.shape_cast %144 : vector<1x1x32x96xf32> to vector<32x96xf32>
    %c0_154 = arith.constant 0 : index
    %c128_155 = arith.constant 128 : index
    %146 = vector.load %arg5[%c0_154, %c128_155] : memref<96x512xf32, #tpu.memory_space<vmem>>, vector<96x256xf32>
    %cst_156 = arith.constant dense<0.000000e+00> : vector<32x256xf32>
    %147 = tpu.matmul %145, %146, %cst_156 {dimension_numbers = #tpu.dot_dimension_numbers<[1], [0], [0], [1], [0, 0, 1, 1], [], []>} : vector<32x96xf32>, vector<96x256xf32>, vector<32x256xf32> -> vector<32x256xf32>
    %148 = arith.addf %143, %147 : vector<32x256xf32>
    %c4_157 = arith.constant 4 : index
    %c2_158 = arith.constant 2 : index
    %c0_159 = arith.constant 0 : index
    %c0_160 = arith.constant 0 : index
    %149 = vector.load %arg2[%c4_157, %c2_158, %c0_159, %c0_160] : memref<8x3x32x96xf32, #tpu.memory_space<vmem>>, vector<1x1x32x96xf32>
    %150 = vector.shape_cast %149 : vector<1x1x32x96xf32> to vector<32x96xf32>
    %c0_161 = arith.constant 0 : index
    %c144_162 = arith.constant 144 : index
    %151 = vector.load %arg5[%c0_161, %c144_162] : memref<96x512xf32, #tpu.memory_space<vmem>>, vector<96x256xf32>
    %cst_163 = arith.constant dense<0.000000e+00> : vector<32x256xf32>
    %152 = tpu.matmul %150, %151, %cst_163 {dimension_numbers = #tpu.dot_dimension_numbers<[1], [0], [0], [1], [0, 0, 1, 1], [], []>} : vector<32x96xf32>, vector<96x256xf32>, vector<32x256xf32> -> vector<32x256xf32>
    %153 = arith.addf %148, %152 : vector<32x256xf32>
    %c4_164 = arith.constant 4 : index
    %c0_165 = arith.constant 0 : index
    %c0_166 = arith.constant 0 : index
    %154 = vector.load %arg3[%c4_164, %c0_165, %c0_166] : memref<8x32x1xf32, #tpu.memory_space<vmem>>, vector<1x32x1xf32>
    %155 = vector.shape_cast %154 : vector<1x32x1xf32> to vector<32x1xf32>
    %156 = vector.broadcast %155 : vector<32x1xf32> to vector<32x256xf32>
    %157 = arith.addf %153, %156 : vector<32x256xf32>
    %cst_167 = arith.constant 0.000000e+00 : f32
    %158 = vector.broadcast %cst_167 : f32 to vector<32x256xf32>
    %159 = arith.maximumf %157, %158 : vector<32x256xf32>
    %c32_168 = arith.constant 32 : index
    %c128_169 = arith.constant 128 : index
    %160 = vector.load %arg5[%c32_168, %c128_169] : memref<96x512xf32, #tpu.memory_space<vmem>>, vector<32x256xf32>
    tpu.vector_store %arg5[%c32_168, %c128_169], %159 {strides = array<i32>} : memref<96x512xf32, #tpu.memory_space<vmem>>, vector<32x256xf32>,
    %c32_170 = arith.constant 32 : index
    %c127_171 = arith.constant 127 : index
    %161 = vector.load %arg5[%c32_170, %c127_171] : memref<96x512xf32, #tpu.memory_space<vmem>>, vector<32x256xf32>
    %162 = vector.broadcast %11 : vector<1x256xf32> to vector<32x256xf32>
    %163 = arith.mulf %161, %162 : vector<32x256xf32>
    %c0_172 = arith.constant 0 : index
    %c128_173 = arith.constant 128 : index
    %164 = vector.load %arg5[%c0_172, %c128_173] : memref<96x512xf32, #tpu.memory_space<vmem>>, vector<32x256xf32>
    tpu.vector_store %arg5[%c0_172, %c128_173], %163 {strides = array<i32>} : memref<96x512xf32, #tpu.memory_space<vmem>>, vector<32x256xf32>,
    %c32_174 = arith.constant 32 : index
    %c129_175 = arith.constant 129 : index
    %165 = vector.load %arg5[%c32_174, %c129_175] : memref<96x512xf32, #tpu.memory_space<vmem>>, vector<32x256xf32>
    %166 = vector.broadcast %15 : vector<1x256xf32> to vector<32x256xf32>
    %167 = arith.mulf %165, %166 : vector<32x256xf32>
    %c64_176 = arith.constant 64 : index
    %c128_177 = arith.constant 128 : index
    %168 = vector.load %arg5[%c64_176, %c128_177] : memref<96x512xf32, #tpu.memory_space<vmem>>, vector<32x256xf32>
    tpu.vector_store %arg5[%c64_176, %c128_177], %167 {strides = array<i32>} : memref<96x512xf32, #tpu.memory_space<vmem>>, vector<32x256xf32>,
    %c5 = arith.constant 5 : index
    %c0_178 = arith.constant 0 : index
    %c0_179 = arith.constant 0 : index
    %c0_180 = arith.constant 0 : index
    %169 = vector.load %arg2[%c5, %c0_178, %c0_179, %c0_180] : memref<8x3x32x96xf32, #tpu.memory_space<vmem>>, vector<1x1x32x96xf32>
    %170 = vector.shape_cast %169 : vector<1x1x32x96xf32> to vector<32x96xf32>
    %c0_181 = arith.constant 0 : index
    %c112_182 = arith.constant 112 : index
    %171 = vector.load %arg5[%c0_181, %c112_182] : memref<96x512xf32, #tpu.memory_space<vmem>>, vector<96x256xf32>
    %cst_183 = arith.constant dense<0.000000e+00> : vector<32x256xf32>
    %172 = tpu.matmul %170, %171, %cst_183 {dimension_numbers = #tpu.dot_dimension_numbers<[1], [0], [0], [1], [0, 0, 1, 1], [], []>} : vector<32x96xf32>, vector<96x256xf32>, vector<32x256xf32> -> vector<32x256xf32>
    %c5_184 = arith.constant 5 : index
    %c1_185 = arith.constant 1 : index
    %c0_186 = arith.constant 0 : index
    %c0_187 = arith.constant 0 : index
    %173 = vector.load %arg2[%c5_184, %c1_185, %c0_186, %c0_187] : memref<8x3x32x96xf32, #tpu.memory_space<vmem>>, vector<1x1x32x96xf32>
    %174 = vector.shape_cast %173 : vector<1x1x32x96xf32> to vector<32x96xf32>
    %c0_188 = arith.constant 0 : index
    %c128_189 = arith.constant 128 : index
    %175 = vector.load %arg5[%c0_188, %c128_189] : memref<96x512xf32, #tpu.memory_space<vmem>>, vector<96x256xf32>
    %cst_190 = arith.constant dense<0.000000e+00> : vector<32x256xf32>
    %176 = tpu.matmul %174, %175, %cst_190 {dimension_numbers = #tpu.dot_dimension_numbers<[1], [0], [0], [1], [0, 0, 1, 1], [], []>} : vector<32x96xf32>, vector<96x256xf32>, vector<32x256xf32> -> vector<32x256xf32>
    %177 = arith.addf %172, %176 : vector<32x256xf32>
    %c5_191 = arith.constant 5 : index
    %c2_192 = arith.constant 2 : index
    %c0_193 = arith.constant 0 : index
    %c0_194 = arith.constant 0 : index
    %178 = vector.load %arg2[%c5_191, %c2_192, %c0_193, %c0_194] : memref<8x3x32x96xf32, #tpu.memory_space<vmem>>, vector<1x1x32x96xf32>
    %179 = vector.shape_cast %178 : vector<1x1x32x96xf32> to vector<32x96xf32>
    %c0_195 = arith.constant 0 : index
    %c144_196 = arith.constant 144 : index
    %180 = vector.load %arg5[%c0_195, %c144_196] : memref<96x512xf32, #tpu.memory_space<vmem>>, vector<96x256xf32>
    %cst_197 = arith.constant dense<0.000000e+00> : vector<32x256xf32>
    %181 = tpu.matmul %179, %180, %cst_197 {dimension_numbers = #tpu.dot_dimension_numbers<[1], [0], [0], [1], [0, 0, 1, 1], [], []>} : vector<32x96xf32>, vector<96x256xf32>, vector<32x256xf32> -> vector<32x256xf32>
    %182 = arith.addf %177, %181 : vector<32x256xf32>
    %c5_198 = arith.constant 5 : index
    %c0_199 = arith.constant 0 : index
    %c0_200 = arith.constant 0 : index
    %183 = vector.load %arg3[%c5_198, %c0_199, %c0_200] : memref<8x32x1xf32, #tpu.memory_space<vmem>>, vector<1x32x1xf32>
    %184 = vector.shape_cast %183 : vector<1x32x1xf32> to vector<32x1xf32>
    %185 = vector.broadcast %184 : vector<32x1xf32> to vector<32x256xf32>
    %186 = arith.addf %182, %185 : vector<32x256xf32>
    %cst_201 = arith.constant 0.000000e+00 : f32
    %187 = vector.broadcast %cst_201 : f32 to vector<32x256xf32>
    %188 = arith.maximumf %186, %187 : vector<32x256xf32>
    %c32_202 = arith.constant 32 : index
    %c128_203 = arith.constant 128 : index
    %189 = vector.load %arg5[%c32_202, %c128_203] : memref<96x512xf32, #tpu.memory_space<vmem>>, vector<32x256xf32>
    tpu.vector_store %arg5[%c32_202, %c128_203], %188 {strides = array<i32>} : memref<96x512xf32, #tpu.memory_space<vmem>>, vector<32x256xf32>,
    %c32_204 = arith.constant 32 : index
    %c127_205 = arith.constant 127 : index
    %190 = vector.load %arg5[%c32_204, %c127_205] : memref<96x512xf32, #tpu.memory_space<vmem>>, vector<32x256xf32>
    %191 = vector.broadcast %11 : vector<1x256xf32> to vector<32x256xf32>
    %192 = arith.mulf %190, %191 : vector<32x256xf32>
    %c0_206 = arith.constant 0 : index
    %c128_207 = arith.constant 128 : index
    %193 = vector.load %arg5[%c0_206, %c128_207] : memref<96x512xf32, #tpu.memory_space<vmem>>, vector<32x256xf32>
    tpu.vector_store %arg5[%c0_206, %c128_207], %192 {strides = array<i32>} : memref<96x512xf32, #tpu.memory_space<vmem>>, vector<32x256xf32>,
    %c32_208 = arith.constant 32 : index
    %c129_209 = arith.constant 129 : index
    %194 = vector.load %arg5[%c32_208, %c129_209] : memref<96x512xf32, #tpu.memory_space<vmem>>, vector<32x256xf32>
    %195 = vector.broadcast %15 : vector<1x256xf32> to vector<32x256xf32>
    %196 = arith.mulf %194, %195 : vector<32x256xf32>
    %c64_210 = arith.constant 64 : index
    %c128_211 = arith.constant 128 : index
    %197 = vector.load %arg5[%c64_210, %c128_211] : memref<96x512xf32, #tpu.memory_space<vmem>>, vector<32x256xf32>
    tpu.vector_store %arg5[%c64_210, %c128_211], %196 {strides = array<i32>} : memref<96x512xf32, #tpu.memory_space<vmem>>, vector<32x256xf32>,
    %c6 = arith.constant 6 : index
    %c0_212 = arith.constant 0 : index
    %c0_213 = arith.constant 0 : index
    %c0_214 = arith.constant 0 : index
    %198 = vector.load %arg2[%c6, %c0_212, %c0_213, %c0_214] : memref<8x3x32x96xf32, #tpu.memory_space<vmem>>, vector<1x1x32x96xf32>
    %199 = vector.shape_cast %198 : vector<1x1x32x96xf32> to vector<32x96xf32>
    %c0_215 = arith.constant 0 : index
    %c112_216 = arith.constant 112 : index
    %200 = vector.load %arg5[%c0_215, %c112_216] : memref<96x512xf32, #tpu.memory_space<vmem>>, vector<96x256xf32>
    %cst_217 = arith.constant dense<0.000000e+00> : vector<32x256xf32>
    %201 = tpu.matmul %199, %200, %cst_217 {dimension_numbers = #tpu.dot_dimension_numbers<[1], [0], [0], [1], [0, 0, 1, 1], [], []>} : vector<32x96xf32>, vector<96x256xf32>, vector<32x256xf32> -> vector<32x256xf32>
    %c6_218 = arith.constant 6 : index
    %c1_219 = arith.constant 1 : index
    %c0_220 = arith.constant 0 : index
    %c0_221 = arith.constant 0 : index
    %202 = vector.load %arg2[%c6_218, %c1_219, %c0_220, %c0_221] : memref<8x3x32x96xf32, #tpu.memory_space<vmem>>, vector<1x1x32x96xf32>
    %203 = vector.shape_cast %202 : vector<1x1x32x96xf32> to vector<32x96xf32>
    %c0_222 = arith.constant 0 : index
    %c128_223 = arith.constant 128 : index
    %204 = vector.load %arg5[%c0_222, %c128_223] : memref<96x512xf32, #tpu.memory_space<vmem>>, vector<96x256xf32>
    %cst_224 = arith.constant dense<0.000000e+00> : vector<32x256xf32>
    %205 = tpu.matmul %203, %204, %cst_224 {dimension_numbers = #tpu.dot_dimension_numbers<[1], [0], [0], [1], [0, 0, 1, 1], [], []>} : vector<32x96xf32>, vector<96x256xf32>, vector<32x256xf32> -> vector<32x256xf32>
    %206 = arith.addf %201, %205 : vector<32x256xf32>
    %c6_225 = arith.constant 6 : index
    %c2_226 = arith.constant 2 : index
    %c0_227 = arith.constant 0 : index
    %c0_228 = arith.constant 0 : index
    %207 = vector.load %arg2[%c6_225, %c2_226, %c0_227, %c0_228] : memref<8x3x32x96xf32, #tpu.memory_space<vmem>>, vector<1x1x32x96xf32>
    %208 = vector.shape_cast %207 : vector<1x1x32x96xf32> to vector<32x96xf32>
    %c0_229 = arith.constant 0 : index
    %c144_230 = arith.constant 144 : index
    %209 = vector.load %arg5[%c0_229, %c144_230] : memref<96x512xf32, #tpu.memory_space<vmem>>, vector<96x256xf32>
    %cst_231 = arith.constant dense<0.000000e+00> : vector<32x256xf32>
    %210 = tpu.matmul %208, %209, %cst_231 {dimension_numbers = #tpu.dot_dimension_numbers<[1], [0], [0], [1], [0, 0, 1, 1], [], []>} : vector<32x96xf32>, vector<96x256xf32>, vector<32x256xf32> -> vector<32x256xf32>
    %211 = arith.addf %206, %210 : vector<32x256xf32>
    %c6_232 = arith.constant 6 : index
    %c0_233 = arith.constant 0 : index
    %c0_234 = arith.constant 0 : index
    %212 = vector.load %arg3[%c6_232, %c0_233, %c0_234] : memref<8x32x1xf32, #tpu.memory_space<vmem>>, vector<1x32x1xf32>
    %213 = vector.shape_cast %212 : vector<1x32x1xf32> to vector<32x1xf32>
    %214 = vector.broadcast %213 : vector<32x1xf32> to vector<32x256xf32>
    %215 = arith.addf %211, %214 : vector<32x256xf32>
    %cst_235 = arith.constant 0.000000e+00 : f32
    %216 = vector.broadcast %cst_235 : f32 to vector<32x256xf32>
    %217 = arith.maximumf %215, %216 : vector<32x256xf32>
    %c32_236 = arith.constant 32 : index
    %c128_237 = arith.constant 128 : index
    %218 = vector.load %arg5[%c32_236, %c128_237] : memref<96x512xf32, #tpu.memory_space<vmem>>, vector<32x256xf32>
    tpu.vector_store %arg5[%c32_236, %c128_237], %217 {strides = array<i32>} : memref<96x512xf32, #tpu.memory_space<vmem>>, vector<32x256xf32>,
    %c32_238 = arith.constant 32 : index
    %c127_239 = arith.constant 127 : index
    %219 = vector.load %arg5[%c32_238, %c127_239] : memref<96x512xf32, #tpu.memory_space<vmem>>, vector<32x256xf32>
    %220 = vector.broadcast %11 : vector<1x256xf32> to vector<32x256xf32>
    %221 = arith.mulf %219, %220 : vector<32x256xf32>
    %c0_240 = arith.constant 0 : index
    %c128_241 = arith.constant 128 : index
    %222 = vector.load %arg5[%c0_240, %c128_241] : memref<96x512xf32, #tpu.memory_space<vmem>>, vector<32x256xf32>
    tpu.vector_store %arg5[%c0_240, %c128_241], %221 {strides = array<i32>} : memref<96x512xf32, #tpu.memory_space<vmem>>, vector<32x256xf32>,
    %c32_242 = arith.constant 32 : index
    %c129_243 = arith.constant 129 : index
    %223 = vector.load %arg5[%c32_242, %c129_243] : memref<96x512xf32, #tpu.memory_space<vmem>>, vector<32x256xf32>
    %224 = vector.broadcast %15 : vector<1x256xf32> to vector<32x256xf32>
    %225 = arith.mulf %223, %224 : vector<32x256xf32>
    %c64_244 = arith.constant 64 : index
    %c128_245 = arith.constant 128 : index
    %226 = vector.load %arg5[%c64_244, %c128_245] : memref<96x512xf32, #tpu.memory_space<vmem>>, vector<32x256xf32>
    tpu.vector_store %arg5[%c64_244, %c128_245], %225 {strides = array<i32>} : memref<96x512xf32, #tpu.memory_space<vmem>>, vector<32x256xf32>,
    %c7 = arith.constant 7 : index
    %c0_246 = arith.constant 0 : index
    %c0_247 = arith.constant 0 : index
    %c0_248 = arith.constant 0 : index
    %227 = vector.load %arg2[%c7, %c0_246, %c0_247, %c0_248] : memref<8x3x32x96xf32, #tpu.memory_space<vmem>>, vector<1x1x32x96xf32>
    %228 = vector.shape_cast %227 : vector<1x1x32x96xf32> to vector<32x96xf32>
    %c0_249 = arith.constant 0 : index
    %c112_250 = arith.constant 112 : index
    %229 = vector.load %arg5[%c0_249, %c112_250] : memref<96x512xf32, #tpu.memory_space<vmem>>, vector<96x256xf32>
    %cst_251 = arith.constant dense<0.000000e+00> : vector<32x256xf32>
    %230 = tpu.matmul %228, %229, %cst_251 {dimension_numbers = #tpu.dot_dimension_numbers<[1], [0], [0], [1], [0, 0, 1, 1], [], []>} : vector<32x96xf32>, vector<96x256xf32>, vector<32x256xf32> -> vector<32x256xf32>
    %c7_252 = arith.constant 7 : index
    %c1_253 = arith.constant 1 : index
    %c0_254 = arith.constant 0 : index
    %c0_255 = arith.constant 0 : index
    %231 = vector.load %arg2[%c7_252, %c1_253, %c0_254, %c0_255] : memref<8x3x32x96xf32, #tpu.memory_space<vmem>>, vector<1x1x32x96xf32>
    %232 = vector.shape_cast %231 : vector<1x1x32x96xf32> to vector<32x96xf32>
    %c0_256 = arith.constant 0 : index
    %c128_257 = arith.constant 128 : index
    %233 = vector.load %arg5[%c0_256, %c128_257] : memref<96x512xf32, #tpu.memory_space<vmem>>, vector<96x256xf32>
    %cst_258 = arith.constant dense<0.000000e+00> : vector<32x256xf32>
    %234 = tpu.matmul %232, %233, %cst_258 {dimension_numbers = #tpu.dot_dimension_numbers<[1], [0], [0], [1], [0, 0, 1, 1], [], []>} : vector<32x96xf32>, vector<96x256xf32>, vector<32x256xf32> -> vector<32x256xf32>
    %235 = arith.addf %230, %234 : vector<32x256xf32>
    %c7_259 = arith.constant 7 : index
    %c2_260 = arith.constant 2 : index
    %c0_261 = arith.constant 0 : index
    %c0_262 = arith.constant 0 : index
    %236 = vector.load %arg2[%c7_259, %c2_260, %c0_261, %c0_262] : memref<8x3x32x96xf32, #tpu.memory_space<vmem>>, vector<1x1x32x96xf32>
    %237 = vector.shape_cast %236 : vector<1x1x32x96xf32> to vector<32x96xf32>
    %c0_263 = arith.constant 0 : index
    %c144_264 = arith.constant 144 : index
    %238 = vector.load %arg5[%c0_263, %c144_264] : memref<96x512xf32, #tpu.memory_space<vmem>>, vector<96x256xf32>
    %cst_265 = arith.constant dense<0.000000e+00> : vector<32x256xf32>
    %239 = tpu.matmul %237, %238, %cst_265 {dimension_numbers = #tpu.dot_dimension_numbers<[1], [0], [0], [1], [0, 0, 1, 1], [], []>} : vector<32x96xf32>, vector<96x256xf32>, vector<32x256xf32> -> vector<32x256xf32>
    %240 = arith.addf %235, %239 : vector<32x256xf32>
    %c7_266 = arith.constant 7 : index
    %c0_267 = arith.constant 0 : index
    %c0_268 = arith.constant 0 : index
    %241 = vector.load %arg3[%c7_266, %c0_267, %c0_268] : memref<8x32x1xf32, #tpu.memory_space<vmem>>, vector<1x32x1xf32>
    %242 = vector.shape_cast %241 : vector<1x32x1xf32> to vector<32x1xf32>
    %243 = vector.broadcast %242 : vector<32x1xf32> to vector<32x256xf32>
    %244 = arith.addf %240, %243 : vector<32x256xf32>
    %c0_269 = arith.constant 0 : index
    %c0_270 = arith.constant 0 : index
    %c0_271 = arith.constant 0 : index
    %245 = vector.load %arg4[%c0_269, %c0_270, %c0_271] : memref<1x32x256xf32, #tpu.memory_space<vmem>>, vector<1x32x256xf32>
    %246 = vector.shape_cast %245 : vector<1x32x256xf32> to vector<32x256xf32>
    %247 = vector.shape_cast %244 : vector<32x256xf32> to vector<1x32x256xf32>
    tpu.vector_store %arg4[%c0_269, %c0_270, %c0_271], %247 {strides = array<i32>} : memref<1x32x256xf32, #tpu.memory_space<vmem>>, vector<1x32x256xf32>,
    return
  }
  func.func @transform_0(%arg0: i32) -> (i32, i32, i32) {
    %c0_i32 = arith.constant 0 : i32
    %c0_i32_0 = arith.constant 0 : i32
    %c0_i32_1 = arith.constant 0 : i32
    return %arg0, %c0_i32, %c0_i32_0 : i32, i32, i32
  }
  func.func @transform_1(%arg0: i32) -> (i32, i32, i32, i32) {
    %c0_i32 = arith.constant 0 : i32
    %c0_i32_0 = arith.constant 0 : i32
    %c0_i32_1 = arith.constant 0 : i32
    %c0_i32_2 = arith.constant 0 : i32
    %c0_i32_3 = arith.constant 0 : i32
    return %c0_i32, %c0_i32_0, %c0_i32_1, %c0_i32_2 : i32, i32, i32, i32
  }
  func.func @transform_2(%arg0: i32) -> (i32, i32, i32) {
    %c0_i32 = arith.constant 0 : i32
    %c0_i32_0 = arith.constant 0 : i32
    %c0_i32_1 = arith.constant 0 : i32
    %c0_i32_2 = arith.constant 0 : i32
    return %c0_i32, %c0_i32_0, %c0_i32_1 : i32, i32, i32
  }
  func.func @transform_3(%arg0: i32) -> (i32, i32, i32) {
    %c0_i32 = arith.constant 0 : i32
    %c0_i32_0 = arith.constant 0 : i32
    %c0_i32_1 = arith.constant 0 : i32
    return %arg0, %c0_i32, %c0_i32_0 : i32, i32, i32
  }
}

</mosaic_0001>

<llo_original>
// kernel: forward.1
$region0: #{forward.1}
  #allocation0 [shape = 'u32[]', space=smem, size = 0x4, offset = 0x4, fixed_abs, tag = 'smem constant byte address 0x4 - core index']
  #allocation1 [shape = 'u32[72,128]{1,0:T(1,128)}', space=vmem, size = 0x9000, scoped, tag = 'internal scratch']
  #allocation2 [shape = 'f32[96,512]{1,0:T(8,128)}', space=vmem, size = 0x30000, scoped, tag = 'scratch operand']
  %s0 = inlined_call_operand.vmem [shape: f32[2,32,256], index: 0, kind: input, shape index: {}]
  %s1 = inlined_call_operand.hbm [shape: f32[8,3,32,96], index: 1, kind: input, shape index: {}]
  %s2 = inlined_call_operand.vmem [shape: f32[8,32,1], index: 2, kind: input, shape index: {}]
  %s3 = inlined_call_operand.vmem [shape: f32[2,32,256], index: 3, kind: output, shape index: {}]
  %s4 = sld [smem:[#allocation0]]
  $region49: #{forward.1} parent=0
    _
  %s6 = ssub.s32 1, %s4
  %s7 = scalar_select 0, %s6, %s4
  $region1: #{forward.1} parent=0
    #allocation3 [shape = 'u8[393216]{0}', space=vmem, size = 0x60000, scoped, tag = 'input window, operand 1, single buffered']
    #allocation4 [shape = 's32[2]{0}', space=sflag, size = 0x8, scoped, tag = 'scoped memory for forward.1']
    %8 = vsyncpa [#allocation4], 0
    loop: start=0, step=1, limit=4
    $region2: #{forward.1} parent=1 // loop_pre_header
      _
    $region3: #{forward.1} parent=1 // loop_header
      %s10 = sphi 0, %s14
      %p11 = scmp.ge.s32.totalorder %s10, 4
      %s20 = sphi 0, %s22
      %s23 = sphi 0, %s20
      %s24 = sphi 0, %s23
      %s40 = sphi 0, %s24
      %s44 = sphi 0, %s44
      %s46 = sphi 0, %s44
      %s47 = sphi 0, %s46
      %s61 = sphi 0, %s47
      %s65 = sphi 0, %s65
      %s67 = sphi 0, %s65
      %s68 = sphi 0, %s67
      %s82 = sphi 0, %s68
      %s88 = sphi 0, %s90
      %s91 = sphi 0, %s88
      %s92 = sphi 0, %s91
      %s108 = sphi 0, %s92
    $region4: #{forward.1} parent=1 // loop_header_branch
      %13 = sbr.rel (%p11) target = $region8
    $region5: #{forward.1} parent=1 // loop_body
      %s15 = ssub.s32 %s10, 1
      %s16 = ssub.s32 %s10, 2
      %s17 = sadd.s32 %s10, 1
      %s18 = ssub.s32 %s10, %s17
      %p19 = scmp.eq.s32.totalorder %s18, 0
      %s21 = sadd.s32 %s20, 1
      %s22 = scalar_select %p19, %s20, %s21
      %p25 = pneg %p19
      %p26 = scmp.eq.s32.totalorder %s10, 1
      %p27 = por %p25, %p26
      %p28 = scmp.ne.s32.totalorder %s20, %s23
      %p29 = scmp.eq.s32.totalorder %s10, 0
      %p30 = por %p28, %p29
      %p31 = scmp.ne.s32.totalorder %s20, %s23
      %p32 = scmp.eq.s32.totalorder %s15, 1
      %p33 = por %p31, %p32
      %p34 = scmp.ne.s32.totalorder %s23, %s24
      %p35 = scmp.eq.s32.totalorder %s15, 0
      %p36 = por %p34, %p35
      %p37 = scmp.ne.s32.totalorder %s23, %s24
      %p38 = scmp.eq.s32.totalorder %s16, 1
      %p39 = por %p37, %p38
      %p41 = scmp.ne.s32.totalorder %s24, %s40
      %p42 = scmp.eq.s32.totalorder %s16, 0
      %p43 = por %p41, %p42
      %s45 = sadd.s32 %s44, 1
      %p48 = scmp.eq.s32.totalorder %s10, 1
      %p49 = scmp.ne.s32.totalorder %s44, %s46
      %p50 = scmp.eq.s32.totalorder %s10, 0
      %p51 = por %p49, %p50
      %p52 = scmp.ne.s32.totalorder %s44, %s46
      %p53 = scmp.eq.s32.totalorder %s15, 1
      %p54 = por %p52, %p53
      %p55 = scmp.ne.s32.totalorder %s46, %s47
      %p56 = scmp.eq.s32.totalorder %s15, 0
      %p57 = por %p55, %p56
      %p58 = scmp.ne.s32.totalorder %s46, %s47
      %p59 = scmp.eq.s32.totalorder %s16, 1
      %p60 = por %p58, %p59
      %p62 = scmp.ne.s32.totalorder %s47, %s61
      %p63 = scmp.eq.s32.totalorder %s16, 0
      %p64 = por %p62, %p63
      %s66 = sadd.s32 %s65, 1
      %p69 = scmp.eq.s32.totalorder %s10, 1
      %p70 = scmp.ne.s32.totalorder %s65, %s67
      %p71 = scmp.eq.s32.totalorder %s10, 0
      %p72 = por %p70, %p71
      %p73 = scmp.ne.s32.totalorder %s65, %s67
      %p74 = scmp.eq.s32.totalorder %s15, 1
      %p75 = por %p73, %p74
      %p76 = scmp.ne.s32.totalorder %s67, %s68
      %p77 = scmp.eq.s32.totalorder %s15, 0
      %p78 = por %p76, %p77
      %p79 = scmp.ne.s32.totalorder %s67, %s68
      %p80 = scmp.eq.s32.totalorder %s16, 1
      %p81 = por %p79, %p80
      %p83 = scmp.ne.s32.totalorder %s68, %s82
      %p84 = scmp.eq.s32.totalorder %s16, 0
      %p85 = por %p83, %p84
      %s86 = ssub.s32 %s10, %s17
      %p87 = scmp.eq.s32.totalorder %s86, 0
      %s89 = sadd.s32 %s88, 1
      %s90 = scalar_select %p87, %s88, %s89
      %p93 = pneg %p87
      %p94 = scmp.eq.s32.totalorder %s10, 1
      %p95 = por %p93, %p94
      %p96 = scmp.ne.s32.totalorder %s88, %s91
      %p97 = scmp.eq.s32.totalorder %s10, 0
      %p98 = por %p96, %p97
      %p99 = scmp.ne.s32.totalorder %s88, %s91
      %p100 = scmp.eq.s32.totalorder %s15, 1
      %p101 = por %p99, %p100
      %p102 = scmp.ne.s32.totalorder %s91, %s92
      %p103 = scmp.eq.s32.totalorder %s15, 0
      %p104 = por %p102, %p103
      %p105 = scmp.ne.s32.totalorder %s91, %s92
      %p106 = scmp.eq.s32.totalorder %s16, 1
      %p107 = por %p105, %p106
      %p109 = scmp.ne.s32.totalorder %s92, %s108
      %p110 = scmp.eq.s32.totalorder %s16, 0
      %p111 = por %p109, %p110
      %p112 = scmp.le.s32.totalorder 1, %s10
      %p113 = scmp.lt.s32.totalorder %s10, 3
      %p114 = pnand %p112, %p113
      %p115 = pneg %p114
      // Predicated region
      $region9: #{forward.1} parent=5 // pred_check
        _
      $region10: #{forward.1} parent=5 // pred_check_branch
        %117 = sbr.rel (%p114) target = $region12
      $region11: #{forward.1} parent=5 // pred_region
        %s118 = ssub.s32 %s10, 1
        // Predicated region
        $region13: #{forward.1} parent=11 // pred_check
          %p119 = pneg %p57
        $region14: #{forward.1} parent=11 // pred_check_branch
          %121 = sbr.rel (%p119) target = $region16
        $region15: #{forward.1} parent=11 // pred_region
          %123 = vsyncadd [#allocation4], 0
          %s124 = sshll.u32 %s1, 4
          %s125 = int_to_ptr.hbm [resolvable:$true] %s124
          %s126 = sshll.u32 [#allocation3], 4
          %s127 = int_to_ptr.vmem [resolvable:$true] %s126
          %132 = dma.hbm_to_vmem [thread:$0]  %s125, 12288, %s127, [#allocation4], 128, 128, 8
        $region16: #{forward.1} parent=11 // pred_fallthru
          _
        // Predicated region
        $region17: #{forward.1} parent=11 // pred_check
          %p133 = pneg %p78
        $region18: #{forward.1} parent=11 // pred_check_branch
          %135 = sbr.rel (%p133) target = $region20
        $region19: #{forward.1} parent=11 // pred_region
          _
        $region20: #{forward.1} parent=11 // pred_fallthru
          _
      $region12: #{forward.1} parent=5 // pred_fallthru
        _
      %p136 = scmp.lt.s32.totalorder %s10, 2
      // Predicated region
      $region21: #{forward.1} parent=5 // pred_check
        %p137 = pneg %p136
      $region22: #{forward.1} parent=5 // pred_check_branch
        %139 = sbr.rel (%p137) target = $region24
      $region23: #{forward.1} parent=5 // pred_region
        // Predicated region
        $region25: #{forward.1} parent=23 // pred_check
          %p140 = pneg %p30
        $region26: #{forward.1} parent=23 // pred_check_branch
          %142 = sbr.rel (%p140) target = $region28
        $region27: #{forward.1} parent=23 // pred_region
          %p143 = scmp.lt.s32.totalorder %s10, 1
          %s144 = scalar_select %p143, %s10, 1
          %s145 = smul.addr %s144, 8
          %s146 = smul.addr %s145, 8
          %s147 = scalar_lea.vmem %s0, %s146
        $region28: #{forward.1} parent=23 // pred_fallthru
          _
      $region24: #{forward.1} parent=5 // pred_fallthru
        _
      %p148 = scmp.le.s32.totalorder 1, %s10
      %p149 = scmp.lt.s32.totalorder %s10, 3
      %p150 = pnand %p148, %p149
      %p151 = pneg %p150
      // Predicated region
      $region29: #{forward.1} parent=5 // pred_check
        _
      $region30: #{forward.1} parent=5 // pred_check_branch
        %153 = sbr.rel (%p150) target = $region32
      $region31: #{forward.1} parent=5 // pred_region
        %s154 = ssub.s32 %s10, 1
        // Predicated region
        $region33: #{forward.1} parent=31 // pred_check
          %p155 = pneg %p57
        $region34: #{forward.1} parent=31 // pred_check_branch
          %157 = sbr.rel (%p155) target = $region36
        $region35: #{forward.1} parent=31 // pred_region
          %159 = dma.done [#allocation4], 12288
        $region36: #{forward.1} parent=31 // pred_fallthru
          _
        %p160 = scmp.lt.s32.totalorder %s15, 1
        %s161 = scalar_select %p160, %s15, 1
        %s162 = smul.addr %s161, 8
        %s163 = smul.addr %s162, 8
        %s164 = scalar_lea.vmem %s0, %s163
        %p165 = pneg %p36
        %p166 = pneg %p33
        %p167 = pneg %p57
        %p168 = pneg %p54
        %p169 = pneg %p78
        %p170 = pneg %p75
        %p171 = pneg %p104
        %p172 = pneg %p101
        %p173 = scmp.lt.s32.totalorder %s15, 1
        %s174 = scalar_select %p173, %s15, 1
        %s175 = smul.addr %s174, 8
        %s176 = smul.addr %s175, 8
        %s177 = scalar_lea.vmem %s3, %s176
        %p178 = scmp.lt.s32.totalorder %s15, 1
        %s179 = scalar_select %p178, %s15, 1
        %s180 = smul.addr %s179, 8
        %s181 = smul.addr %s180, 8
        %s182 = scalar_lea.vmem %s0, %s181
        %p183 = scmp.lt.s32.totalorder %s15, 1
        %s184 = scalar_select %p183, %s15, 1
        %s185 = smul.addr %s184, 8
        %s186 = smul.addr %s185, 8
        %s187 = scalar_lea.vmem %s3, %s186
        %188 = vst [vmem:[#allocation2] sm:$0xff] 0.0
        %189 = vst [vmem:[#allocation2 + $0x8] sm:$0xff] 0.0
        %190 = vst [vmem:[#allocation2 + $0x10] sm:$0xff] 0.0
        %191 = vst [vmem:[#allocation2 + $0x18] sm:$0xff] 0.0
        %192 = vst [vmem:[#allocation2 + $0x20] sm:$0xff] 0.0
        %193 = vst [vmem:[#allocation2 + $0x28] sm:$0xff] 0.0
        %194 = vst [vmem:[#allocation2 + $0x30] sm:$0xff] 0.0
        %195 = vst [vmem:[#allocation2 + $0x38] sm:$0xff] 0.0
        %196 = vst [vmem:[#allocation2 + $0x40] sm:$0xff] 0.0
        %197 = vst [vmem:[#allocation2 + $0x48] sm:$0xff] 0.0
        %198 = vst [vmem:[#allocation2 + $0x50] sm:$0xff] 0.0
        %199 = vst [vmem:[#allocation2 + $0x58] sm:$0xff] 0.0
        %200 = vst [vmem:[#allocation2 + $0x60] sm:$0xff] 0.0
        %201 = vst [vmem:[#allocation2 + $0x68] sm:$0xff] 0.0
        %202 = vst [vmem:[#allocation2 + $0x70] sm:$0xff] 0.0
        %203 = vst [vmem:[#allocation2 + $0x78] sm:$0xff] 0.0
        %204 = vst [vmem:[#allocation2 + $0x80] sm:$0xff] 0.0
        %205 = vst [vmem:[#allocation2 + $0x88] sm:$0xff] 0.0
        %206 = vst [vmem:[#allocation2 + $0x90] sm:$0xff] 0.0
        %207 = vst [vmem:[#allocation2 + $0x98] sm:$0xff] 0.0
        %208 = vst [vmem:[#allocation2 + $0xa0] sm:$0xff] 0.0
        %209 = vst [vmem:[#allocation2 + $0xa8] sm:$0xff] 0.0
        %210 = vst [vmem:[#allocation2 + $0xb0] sm:$0xff] 0.0
        %211 = vst [vmem:[#allocation2 + $0xb8] sm:$0xff] 0.0
        %212 = vst [vmem:[#allocation2 + $0xc0] sm:$0xff] 0.0
        %213 = vst [vmem:[#allocation2 + $0xc8] sm:$0xff] 0.0
        %214 = vst [vmem:[#allocation2 + $0xd0] sm:$0xff] 0.0
        %215 = vst [vmem:[#allocation2 + $0xd8] sm:$0xff] 0.0
        %216 = vst [vmem:[#allocation2 + $0xe0] sm:$0xff] 0.0
        %217 = vst [vmem:[#allocation2 + $0xe8] sm:$0xff] 0.0
        %218 = vst [vmem:[#allocation2 + $0xf0] sm:$0xff] 0.0
        %219 = vst [vmem:[#allocation2 + $0xf8] sm:$0xff] 0.0
        %220 = vst [vmem:[#allocation2 + $0x100] sm:$0xff] 0.0
        %221 = vst [vmem:[#allocation2 + $0x108] sm:$0xff] 0.0
        %222 = vst [vmem:[#allocation2 + $0x110] sm:$0xff] 0.0
        %223 = vst [vmem:[#allocation2 + $0x118] sm:$0xff] 0.0
        %224 = vst [vmem:[#allocation2 + $0x120] sm:$0xff] 0.0
        %225 = vst [vmem:[#allocation2 + $0x128] sm:$0xff] 0.0
        %226 = vst [vmem:[#allocation2 + $0x130] sm:$0xff] 0.0
        %227 = vst [vmem:[#allocation2 + $0x138] sm:$0xff] 0.0
        %228 = vst [vmem:[#allocation2 + $0x140] sm:$0xff] 0.0
        %229 = vst [vmem:[#allocation2 + $0x148] sm:$0xff] 0.0
        %230 = vst [vmem:[#allocation2 + $0x150] sm:$0xff] 0.0
        %231 = vst [vmem:[#allocation2 + $0x158] sm:$0xff] 0.0
        %232 = vst [vmem:[#allocation2 + $0x160] sm:$0xff] 0.0
        %233 = vst [vmem:[#allocation2 + $0x168] sm:$0xff] 0.0
        %234 = vst [vmem:[#allocation2 + $0x170] sm:$0xff] 0.0
        %235 = vst [vmem:[#allocation2 + $0x178] sm:$0xff] 0.0
        %v236 = vld [vmem:[%s182] sm:$0xff]
        %v237 = vld [vmem:[%s182 + $0x8] sm:$0xff]
        %v238 = vld [vmem:[%s182 + $0x10] sm:$0xff]
        %v239 = vld [vmem:[%s182 + $0x18] sm:$0xff]
        %v240 = vld [vmem:[%s182 + $0x20] sm:$0xff]
        %v241 = vld [vmem:[%s182 + $0x28] sm:$0xff]
        %v242 = vld [vmem:[%s182 + $0x30] sm:$0xff]
        %v243 = vld [vmem:[%s182 + $0x38] sm:$0xff]
        %244 = vst [vmem:[#allocation2 + $0x88] sm:$0xff] %v236
        %245 = vst [vmem:[#allocation2 + $0x90] sm:$0xff] %v237
        %246 = vst [vmem:[#allocation2 + $0xa8] sm:$0xff] %v238
        %247 = vst [vmem:[#allocation2 + $0xb0] sm:$0xff] %v239
        %248 = vst [vmem:[#allocation2 + $0xc8] sm:$0xff] %v240
        %249 = vst [vmem:[#allocation2 + $0xd0] sm:$0xff] %v241
        %250 = vst [vmem:[#allocation2 + $0xe8] sm:$0xff] %v242
        %251 = vst [vmem:[#allocation2 + $0xf0] sm:$0xff] %v243
        %v252 = vlaneseq
        %v253 = vand.u32 %v252, 127
        %v254 = vadd.s32 %v253, 128
        %v255 = vand.u32 %v253, 15
        %v256 = vand.u32 %v254, 15
        %vm257 = vcmp.ge.s32.totalorder %v255, 1
        %vm258 = vcmp.ge.s32.totalorder %v256, 1
        %v259 = vsel %vm257, 1, 0
        %v260 = vsel %vm258, 1, 0
        %v261 = vcvt.s32.f32 %v259
        %v262 = vcvt.s32.f32 %v260
        %vm263 = vcmp.le.s32.totalorder %v255, 14
        %vm264 = vcmp.le.s32.totalorder %v256, 14
        %v265 = vsel %vm263, 1, 0
        %v266 = vsel %vm264, 1, 0
        %v267 = vcvt.s32.f32 %v265
        %v268 = vcvt.s32.f32 %v266
        %v269 = vld [vmem:[#allocation2 + $0x80] sm:$0xff]
        %v270 = vld [vmem:[#allocation2 + $0x88] sm:$0xff]
        %v271 = vld [vmem:[#allocation2 + $0x90] sm:$0xff]
        %v272 = vld [vmem:[#allocation2 + $0xa0] sm:$0xff]
        %v273 = vld [vmem:[#allocation2 + $0xa8] sm:$0xff]
        %v274 = vld [vmem:[#allocation2 + $0xb0] sm:$0xff]
        %v275 = vld [vmem:[#allocation2 + $0xc0] sm:$0xff]
        %v276 = vld [vmem:[#allocation2 + $0xc8] sm:$0xff]
        %v277 = vld [vmem:[#allocation2 + $0xd0] sm:$0xff]
        %v278 = vld [vmem:[#allocation2 + $0xe0] sm:$0xff]
        %v279 = vld [vmem:[#allocation2 + $0xe8] sm:$0xff]
        %v280 = vld [vmem:[#allocation2 + $0xf0] sm:$0xff]
        %283 = vrot.lane.b32.xlu0 %v261, 127
        %v284 = vpop.permute.xlu0 %283
        %285 = vrot.lane.b32.xlu0 %v262, 127
        %v286 = vpop.permute.xlu0 %285
        %vm287 = vcmask 1039360
        %v288 = vsel %vm287, %v284, %v286
        %v292 = vmul.f32 %v269, %v284
        %v293 = vmul.f32 %v270, %v288
        %v294 = vmul.f32 %v271, %v286
        %v295 = vmul.f32 %v272, %v284
        %v296 = vmul.f32 %v273, %v288
        %v297 = vmul.f32 %v274, %v286
        %v298 = vmul.f32 %v275, %v284
        %v299 = vmul.f32 %v276, %v288
        %v300 = vmul.f32 %v277, %v286
        %v301 = vmul.f32 %v278, %v284
        %v302 = vmul.f32 %v279, %v288
        %v303 = vmul.f32 %v280, %v286
        %316 = vrot.lane.b32.xlu0 %v292, 1
        %v317 = vpop.permute.xlu0 %316
        %318 = vrot.lane.b32.xlu0 %v293, 1
        %v319 = vpop.permute.xlu0 %318
        %320 = vrot.lane.b32.xlu0 %v294, 1
        %v321 = vpop.permute.xlu0 %320
        %322 = vrot.lane.b32.xlu0 %v295, 1
        %v323 = vpop.permute.xlu0 %322
        %324 = vrot.lane.b32.xlu0 %v296, 1
        %v325 = vpop.permute.xlu0 %324
        %326 = vrot.lane.b32.xlu0 %v297, 1
        %v327 = vpop.permute.xlu0 %326
        %328 = vrot.lane.b32.xlu0 %v298, 1
        %v329 = vpop.permute.xlu0 %328
        %330 = vrot.lane.b32.xlu0 %v299, 1
        %v331 = vpop.permute.xlu0 %330
        %332 = vrot.lane.b32.xlu0 %v300, 1
        %v333 = vpop.permute.xlu0 %332
        %334 = vrot.lane.b32.xlu0 %v301, 1
        %v335 = vpop.permute.xlu0 %334
        %336 = vrot.lane.b32.xlu0 %v302, 1
        %v337 = vpop.permute.xlu0 %336
        %338 = vrot.lane.b32.xlu0 %v303, 1
        %v339 = vpop.permute.xlu0 %338
        %vm340 = vcmask 7168
        %v341 = vsel %vm340, %v317, %v319
        %v342 = vsel %vm340, %v319, %v321
        %v343 = vsel %vm340, %v323, %v325
        %v344 = vsel %vm340, %v325, %v327
        %v345 = vsel %vm340, %v329, %v331
        %v346 = vsel %vm340, %v331, %v333
        %v347 = vsel %vm340, %v335, %v337
        %v348 = vsel %vm340, %v337, %v339
        %357 = vst [vmem:[#allocation2 + $0x8] sm:$0xff] %v341
        %358 = vst [vmem:[#allocation2 + $0x10] sm:$0xff] %v342
        %359 = vst [vmem:[#allocation2 + $0x28] sm:$0xff] %v343
        %360 = vst [vmem:[#allocation2 + $0x30] sm:$0xff] %v344
        %361 = vst [vmem:[#allocation2 + $0x48] sm:$0xff] %v345
        %362 = vst [vmem:[#allocation2 + $0x50] sm:$0xff] %v346
        %363 = vst [vmem:[#allocation2 + $0x68] sm:$0xff] %v347
        %364 = vst [vmem:[#allocation2 + $0x70] sm:$0xff] %v348
        %v365 = vld [vmem:[#allocation2 + $0x88] sm:$0xff]
        %v366 = vld [vmem:[#allocation2 + $0x90] sm:$0xff]
        %v367 = vld [vmem:[#allocation2 + $0x98] sm:$0xff]
        %v368 = vld [vmem:[#allocation2 + $0xa8] sm:$0xff]
        %v369 = vld [vmem:[#allocation2 + $0xb0] sm:$0xff]
        %v370 = vld [vmem:[#allocation2 + $0xb8] sm:$0xff]
        %v371 = vld [vmem:[#allocation2 + $0xc8] sm:$0xff]
        %v372 = vld [vmem:[#allocation2 + $0xd0] sm:$0xff]
        %v373 = vld [vmem:[#allocation2 + $0xd8] sm:$0xff]
        %v374 = vld [vmem:[#allocation2 + $0xe8] sm:$0xff]
        %v375 = vld [vmem:[#allocation2 + $0xf0] sm:$0xff]
        %v376 = vld [vmem:[#allocation2 + $0xf8] sm:$0xff]
        %379 = vrot.lane.b32.xlu0 %v267, 1
        %v380 = vpop.permute.xlu0 %379
        %381 = vrot.lane.b32.xlu0 %v268, 1
        %v382 = vpop.permute.xlu0 %381
        %v383 = vsel %vm340, %v380, %v382
        %v387 = vmul.f32 %v365, %v380
        %v388 = vmul.f32 %v366, %v383
        %v389 = vmul.f32 %v367, %v382
        %v390 = vmul.f32 %v368, %v380
        %v391 = vmul.f32 %v369, %v383
        %v392 = vmul.f32 %v370, %v382
        %v393 = vmul.f32 %v371, %v380
        %v394 = vmul.f32 %v372, %v383
        %v395 = vmul.f32 %v373, %v382
        %v396 = vmul.f32 %v374, %v380
        %v397 = vmul.f32 %v375, %v383
        %v398 = vmul.f32 %v376, %v382
        %411 = vrot.lane.b32.xlu0 %v387, 127
        %v412 = vpop.permute.xlu0 %411
        %413 = vrot.lane.b32.xlu0 %v388, 127
        %v414 = vpop.permute.xlu0 %413
        %415 = vrot.lane.b32.xlu0 %v389, 127
        %v416 = vpop.permute.xlu0 %415
        %417 = vrot.lane.b32.xlu0 %v390, 127
        %v418 = vpop.permute.xlu0 %417
        %419 = vrot.lane.b32.xlu0 %v391, 127
        %v420 = vpop.permute.xlu0 %419
        %421 = vrot.lane.b32.xlu0 %v392, 127
        %v422 = vpop.permute.xlu0 %421
        %423 = vrot.lane.b32.xlu0 %v393, 127
        %v424 = vpop.permute.xlu0 %423
        %425 = vrot.lane.b32.xlu0 %v394, 127
        %v426 = vpop.permute.xlu0 %425
        %427 = vrot.lane.b32.xlu0 %v395, 127
        %v428 = vpop.permute.xlu0 %427
        %429 = vrot.lane.b32.xlu0 %v396, 127
        %v430 = vpop.permute.xlu0 %429
        %431 = vrot.lane.b32.xlu0 %v397, 127
        %v432 = vpop.permute.xlu0 %431
        %433 = vrot.lane.b32.xlu0 %v398, 127
        %v434 = vpop.permute.xlu0 %433
        %v435 = vsel %vm287, %v412, %v414
        %v436 = vsel %vm287, %v414, %v416
        %v437 = vsel %vm287, %v418, %v420
        %v438 = vsel %vm287, %v420, %v422
        %v439 = vsel %vm287, %v424, %v426
        %v440 = vsel %vm287, %v426, %v428
        %v441 = vsel %vm287, %v430, %v432
        %v442 = vsel %vm287, %v432, %v434
        %451 = vst [vmem:[#allocation2 + $0x108] sm:$0xff] %v435
        %452 = vst [vmem:[#allocation2 + $0x110] sm:$0xff] %v436
        %453 = vst [vmem:[#allocation2 + $0x128] sm:$0xff] %v437
        %454 = vst [vmem:[#allocation2 + $0x130] sm:$0xff] %v438
        %455 = vst [vmem:[#allocation2 + $0x148] sm:$0xff] %v439
        %456 = vst [vmem:[#allocation2 + $0x150] sm:$0xff] %v440
        %457 = vst [vmem:[#allocation2 + $0x168] sm:$0xff] %v441
        %458 = vst [vmem:[#allocation2 + $0x170] sm:$0xff] %v442
        %v459 = vld [vmem:[#allocation3] sm:$0xff]
        %v460 = vld [vmem:[#allocation3 + $0x8] sm:$0xff]
        %v461 = vld [vmem:[#allocation3 + $0x10] sm:$0xff]
        %v462 = vld [vmem:[#allocation3 + $0x18] sm:$0xff]
        %v463 = vld [vmem:[#allocation2] sm:$0xff]
        %v464 = vld [vmem:[#allocation2 + $0x8] sm:$0xff]
        %v465 = vld [vmem:[#allocation2 + $0x10] sm:$0xff]
        %v466 = vld [vmem:[#allocation2 + $0x20] sm:$0xff]
        %v467 = vld [vmem:[#allocation2 + $0x28] sm:$0xff]
        %v468 = vld [vmem:[#allocation2 + $0x30] sm:$0xff]
        %v469 = vld [vmem:[#allocation2 + $0x40] sm:$0xff]
        %v470 = vld [vmem:[#allocation2 + $0x48] sm:$0xff]
        %v471 = vld [vmem:[#allocation2 + $0x50] sm:$0xff]
        %v472 = vld [vmem:[#allocation2 + $0x60] sm:$0xff]
        %v473 = vld [vmem:[#allocation2 + $0x68] sm:$0xff]
        %v474 = vld [vmem:[#allocation2 + $0x70] sm:$0xff]
        %v475 = vld [vmem:[#allocation2 + $0x80] sm:$0xff]
        %v476 = vld [vmem:[#allocation2 + $0x88] sm:$0xff]
        %v477 = vld [vmem:[#allocation2 + $0x90] sm:$0xff]
        %v478 = vld [vmem:[#allocation2 + $0xa0] sm:$0xff]
        %v479 = vld [vmem:[#allocation2 + $0xa8] sm:$0xff]
        %v480 = vld [vmem:[#allocation2 + $0xb0] sm:$0xff]
        %v481 = vld [vmem:[#allocation2 + $0xc0] sm:$0xff]
        %v482 = vld [vmem:[#allocation2 + $0xc8] sm:$0xff]
        %v483 = vld [vmem:[#allocation2 + $0xd0] sm:$0xff]
        %v484 = vld [vmem:[#allocation2 + $0xe0] sm:$0xff]
        %v485 = vld [vmem:[#allocation2 + $0xe8] sm:$0xff]
        %v486 = vld [vmem:[#allocation2 + $0xf0] sm:$0xff]
        %v487 = vld [vmem:[#allocation2 + $0x100] sm:$0xff]
        %v488 = vld [vmem:[#allocation2 + $0x108] sm:$0xff]
        %v489 = vld [vmem:[#allocation2 + $0x110] sm:$0xff]
        %v490 = vld [vmem:[#allocation2 + $0x120] sm:$0xff]
        %v491 = vld [vmem:[#allocation2 + $0x128] sm:$0xff]
        %v492 = vld [vmem:[#allocation2 + $0x130] sm:$0xff]
        %v493 = vld [vmem:[#allocation2 + $0x140] sm:$0xff]
        %v494 = vld [vmem:[#allocation2 + $0x148] sm:$0xff]
        %v495 = vld [vmem:[#allocation2 + $0x150] sm:$0xff]
        %v496 = vld [vmem:[#allocation2 + $0x160] sm:$0xff]
        %v497 = vld [vmem:[#allocation2 + $0x168] sm:$0xff]
        %v498 = vld [vmem:[#allocation2 + $0x170] sm:$0xff]
        %s499 = scalar_lea.vmem [#allocation3], 32
        %v500 = vld [vmem:[%s499] sm:$0xff]
        %v501 = vld [vmem:[%s499 + $0x8] sm:$0xff]
        %v502 = vld [vmem:[%s499 + $0x10] sm:$0xff]
        %v503 = vld [vmem:[%s499 + $0x18] sm:$0xff]
        %vm504 = vcmask 785408
        %v506 = vsel %vm504, %v500, 0
        %v509 = vsel %vm504, %v501, 0
        %v512 = vsel %vm504, %v502, 0
        %v515 = vsel %vm504, %v503, 0
        %517 = vmatpush.msra.mxu0 0.0
        %518 = vmatpush.msra.mxu0 0.0
        %519 = vmatpush.msra.mxu0 0.0
        %520 = vmatpush.msra.mxu0 0.0
        %521 = vmatpush.msra.mxu0 %v497
        %522 = vmatpush.msra.mxu0 %v494
        %523 = vmatpush.msra.mxu0 %v491
        %524 = vmatpush.msra.mxu0 %v488
        %525 = vmatpush.msra.mxu0 %v485
        %526 = vmatpush.msra.mxu0 %v482
        %527 = vmatpush.msra.mxu0 %v479
        %528 = vmatpush.msra.mxu0 %v476
        %529 = vmatpush.msra.mxu0 %v473
        %530 = vmatpush.msra.mxu0 %v470
        %531 = vmatpush.msra.mxu0 %v467
        %532 = vmatpush.msra.mxu0 %v464
        %533 = vmatmul.f32.gmra.mxu0 %v506
        %v534 = vpop.f32.mrf.mxu0
        %v535 = vadd.f32 0.0, %v534
        %536 = vmatmul.f32.gmra.mxu0 %v509
        %v537 = vpop.f32.mrf.mxu0
        %v538 = vadd.f32 0.0, %v537
        %539 = vmatmul.f32.gmra.mxu0 %v512
        %v540 = vpop.f32.mrf.mxu0
        %v541 = vadd.f32 0.0, %v540
        %542 = vmatmul.f32.gmra.mxu0 %v515
        %v543 = vpop.f32.mrf.mxu0
        %v544 = vadd.f32 0.0, %v543
        %545 = vdwg.mxu0
        %546 = vmatpush.msra.mxu0 0.0
        %547 = vmatpush.msra.mxu0 0.0
        %548 = vmatpush.msra.mxu0 0.0
        %549 = vmatpush.msra.mxu0 0.0
        %550 = vmatpush.msra.mxu0 %v498
        %551 = vmatpush.msra.mxu0 %v495
        %552 = vmatpush.msra.mxu0 %v492
        %553 = vmatpush.msra.mxu0 %v489
        %554 = vmatpush.msra.mxu0 %v486
        %555 = vmatpush.msra.mxu0 %v483
        %556 = vmatpush.msra.mxu0 %v480
        %557 = vmatpush.msra.mxu0 %v477
        %558 = vmatpush.msra.mxu0 %v474
        %559 = vmatpush.msra.mxu0 %v471
        %560 = vmatpush.msra.mxu0 %v468
        %561 = vmatpush.msra.mxu0 %v465
        %562 = vmatmul.f32.gmra.mxu0 %v506
        %v563 = vpop.f32.mrf.mxu0
        %v564 = vadd.f32 0.0, %v563
        %565 = vmatmul.f32.gmra.mxu0 %v509
        %v566 = vpop.f32.mrf.mxu0
        %v567 = vadd.f32 0.0, %v566
        %568 = vmatmul.f32.gmra.mxu0 %v512
        %v569 = vpop.f32.mrf.mxu0
        %v570 = vadd.f32 0.0, %v569
        %571 = vmatmul.f32.gmra.mxu0 %v515
        %v572 = vpop.f32.mrf.mxu0
        %v573 = vadd.f32 0.0, %v572
        %574 = vdwg.mxu0
        %611 = vrot.lane.b32.xlu0 %v463, 16
        %v612 = vpop.permute.xlu0 %611
        %613 = vrot.lane.b32.xlu0 %v464, 16
        %v614 = vpop.permute.xlu0 %613
        %615 = vrot.lane.b32.xlu0 %v465, 16
        %v616 = vpop.permute.xlu0 %615
        %617 = vrot.lane.b32.xlu0 %v466, 16
        %v618 = vpop.permute.xlu0 %617
        %619 = vrot.lane.b32.xlu0 %v467, 16
        %v620 = vpop.permute.xlu0 %619
        %621 = vrot.lane.b32.xlu0 %v468, 16
        %v622 = vpop.permute.xlu0 %621
        %623 = vrot.lane.b32.xlu0 %v469, 16
        %v624 = vpop.permute.xlu0 %623
        %625 = vrot.lane.b32.xlu0 %v470, 16
        %v626 = vpop.permute.xlu0 %625
        %627 = vrot.lane.b32.xlu0 %v471, 16
        %v628 = vpop.permute.xlu0 %627
        %629 = vrot.lane.b32.xlu0 %v472, 16
        %v630 = vpop.permute.xlu0 %629
        %631 = vrot.lane.b32.xlu0 %v473, 16
        %v632 = vpop.permute.xlu0 %631
        %633 = vrot.lane.b32.xlu0 %v474, 16
        %v634 = vpop.permute.xlu0 %633
        %635 = vrot.lane.b32.xlu0 %v475, 16
        %v636 = vpop.permute.xlu0 %635
        %637 = vrot.lane.b32.xlu0 %v476, 16
        %v638 = vpop.permute.xlu0 %637
        %639 = vrot.lane.b32.xlu0 %v477, 16
        %v640 = vpop.permute.xlu0 %639
        %641 = vrot.lane.b32.xlu0 %v478, 16
        %v642 = vpop.permute.xlu0 %641
        %643 = vrot.lane.b32.xlu0 %v479, 16
        %v644 = vpop.permute.xlu0 %643
        %645 = vrot.lane.b32.xlu0 %v480, 16
        %v646 = vpop.permute.xlu0 %645
        %647 = vrot.lane.b32.xlu0 %v481, 16
        %v648 = vpop.permute.xlu0 %647
        %649 = vrot.lane.b32.xlu0 %v482, 16
        %v650 = vpop.permute.xlu0 %649
        %651 = vrot.lane.b32.xlu0 %v483, 16
        %v652 = vpop.permute.xlu0 %651
        %653 = vrot.lane.b32.xlu0 %v484, 16
        %v654 = vpop.permute.xlu0 %653
        %655 = vrot.lane.b32.xlu0 %v485, 16
        %v656 = vpop.permute.xlu0 %655
        %657 = vrot.lane.b32.xlu0 %v486, 16
        %v658 = vpop.permute.xlu0 %657
        %659 = vrot.lane.b32.xlu0 %v487, 16
        %v660 = vpop.permute.xlu0 %659
        %661 = vrot.lane.b32.xlu0 %v488, 16
        %v662 = vpop.permute.xlu0 %661
        %663 = vrot.lane.b32.xlu0 %v489, 16
        %v664 = vpop.permute.xlu0 %663
        %665 = vrot.lane.b32.xlu0 %v490, 16
        %v666 = vpop.permute.xlu0 %665
        %667 = vrot.lane.b32.xlu0 %v491, 16
        %v668 = vpop.permute.xlu0 %667
        %669 = vrot.lane.b32.xlu0 %v492, 16
        %v670 = vpop.permute.xlu0 %669
        %671 = vrot.lane.b32.xlu0 %v493, 16
        %v672 = vpop.permute.xlu0 %671
        %673 = vrot.lane.b32.xlu0 %v494, 16
        %v674 = vpop.permute.xlu0 %673
        %675 = vrot.lane.b32.xlu0 %v495, 16
        %v676 = vpop.permute.xlu0 %675
        %677 = vrot.lane.b32.xlu0 %v496, 16
        %v678 = vpop.permute.xlu0 %677
        %679 = vrot.lane.b32.xlu0 %v497, 16
        %v680 = vpop.permute.xlu0 %679
        %681 = vrot.lane.b32.xlu0 %v498, 16
        %v682 = vpop.permute.xlu0 %681
        %vm683 = vcmask 130048
        %v684 = vsel %vm683, %v612, %v614
        %v685 = vsel %vm683, %v614, %v616
        %v686 = vsel %vm683, %v618, %v620
        %v687 = vsel %vm683, %v620, %v622
        %v688 = vsel %vm683, %v624, %v626
        %v689 = vsel %vm683, %v626, %v628
        %v690 = vsel %vm683, %v630, %v632
        %v691 = vsel %vm683, %v632, %v634
        %v692 = vsel %vm683, %v636, %v638
        %v693 = vsel %vm683, %v638, %v640
        %v694 = vsel %vm683, %v642, %v644
        %v695 = vsel %vm683, %v644, %v646
        %v696 = vsel %vm683, %v648, %v650
        %v697 = vsel %vm683, %v650, %v652
        %v698 = vsel %vm683, %v654, %v656
        %v699 = vsel %vm683, %v656, %v658
        %v700 = vsel %vm683, %v660, %v662
        %v701 = vsel %vm683, %v662, %v664
        %v702 = vsel %vm683, %v666, %v668
        %v703 = vsel %vm683, %v668, %v670
        %v704 = vsel %vm683, %v672, %v674
        %v705 = vsel %vm683, %v674, %v676
        %v706 = vsel %vm683, %v678, %v680
        %v707 = vsel %vm683, %v680, %v682
        %v733 = vsel %vm504, %v459, 0
        %v736 = vsel %vm504, %v460, 0
        %v739 = vsel %vm504, %v461, 0
        %v742 = vsel %vm504, %v462, 0
        %744 = vmatpush.msra.mxu0 0.0
        %745 = vmatpush.msra.mxu0 0.0
        %746 = vmatpush.msra.mxu0 0.0
        %747 = vmatpush.msra.mxu0 0.0
        %748 = vmatpush.msra.mxu0 %v706
        %749 = vmatpush.msra.mxu0 %v704
        %750 = vmatpush.msra.mxu0 %v702
        %751 = vmatpush.msra.mxu0 %v700
        %752 = vmatpush.msra.mxu0 %v698
        %753 = vmatpush.msra.mxu0 %v696
        %754 = vmatpush.msra.mxu0 %v694
        %755 = vmatpush.msra.mxu0 %v692
        %756 = vmatpush.msra.mxu0 %v690
        %757 = vmatpush.msra.mxu0 %v688
        %758 = vmatpush.msra.mxu0 %v686
        %759 = vmatpush.msra.mxu0 %v684
        %760 = vmatmul.f32.gmra.mxu0 %v733
        %v761 = vpop.f32.mrf.mxu0
        %v762 = vadd.f32 %v535, %v761
        %763 = vmatmul.f32.gmra.mxu0 %v736
        %v764 = vpop.f32.mrf.mxu0
        %v765 = vadd.f32 %v538, %v764
        %766 = vmatmul.f32.gmra.mxu0 %v739
        %v767 = vpop.f32.mrf.mxu0
        %v768 = vadd.f32 %v541, %v767
        %769 = vmatmul.f32.gmra.mxu0 %v742
        %v770 = vpop.f32.mrf.mxu0
        %v771 = vadd.f32 %v544, %v770
        %772 = vdwg.mxu0
        %773 = vmatpush.msra.mxu0 0.0
        %774 = vmatpush.msra.mxu0 0.0
        %775 = vmatpush.msra.mxu0 0.0
        %776 = vmatpush.msra.mxu0 0.0
        %777 = vmatpush.msra.mxu0 %v707
        %778 = vmatpush.msra.mxu0 %v705
        %779 = vmatpush.msra.mxu0 %v703
        %780 = vmatpush.msra.mxu0 %v701
        %781 = vmatpush.msra.mxu0 %v699
        %782 = vmatpush.msra.mxu0 %v697
        %783 = vmatpush.msra.mxu0 %v695
        %784 = vmatpush.msra.mxu0 %v693
        %785 = vmatpush.msra.mxu0 %v691
        %786 = vmatpush.msra.mxu0 %v689
        %787 = vmatpush.msra.mxu0 %v687
        %788 = vmatpush.msra.mxu0 %v685
        %789 = vmatmul.f32.gmra.mxu0 %v733
        %v790 = vpop.f32.mrf.mxu0
        %v791 = vadd.f32 %v564, %v790
        %792 = vmatmul.f32.gmra.mxu0 %v736
        %v793 = vpop.f32.mrf.mxu0
        %v794 = vadd.f32 %v567, %v793
        %795 = vmatmul.f32.gmra.mxu0 %v739
        %v796 = vpop.f32.mrf.mxu0
        %v797 = vadd.f32 %v570, %v796
        %798 = vmatmul.f32.gmra.mxu0 %v742
        %v799 = vpop.f32.mrf.mxu0
        %v800 = vadd.f32 %v573, %v799
        %801 = vdwg.mxu0
        %s802 = scalar_lea.vmem [#allocation3], 64
        %v803 = vld [vmem:[%s802] sm:$0xff]
        %v804 = vld [vmem:[%s802 + $0x8] sm:$0xff]
        %v805 = vld [vmem:[%s802 + $0x10] sm:$0xff]
        %v806 = vld [vmem:[%s802 + $0x18] sm:$0xff]
        %v807 = vld [vmem:[#allocation2 + $0x8] sm:$0xff]
        %v808 = vld [vmem:[#allocation2 + $0x10] sm:$0xff]
        %v809 = vld [vmem:[#allocation2 + $0x18] sm:$0xff]
        %v810 = vld [vmem:[#allocation2 + $0x28] sm:$0xff]
        %v811 = vld [vmem:[#allocation2 + $0x30] sm:$0xff]
        %v812 = vld [vmem:[#allocation2 + $0x38] sm:$0xff]
        %v813 = vld [vmem:[#allocation2 + $0x48] sm:$0xff]
        %v814 = vld [vmem:[#allocation2 + $0x50] sm:$0xff]
        %v815 = vld [vmem:[#allocation2 + $0x58] sm:$0xff]
        %v816 = vld [vmem:[#allocation2 + $0x68] sm:$0xff]
        %v817 = vld [vmem:[#allocation2 + $0x70] sm:$0xff]
        %v818 = vld [vmem:[#allocation2 + $0x78] sm:$0xff]
        %v819 = vld [vmem:[#allocation2 + $0x88] sm:$0xff]
        %v820 = vld [vmem:[#allocation2 + $0x90] sm:$0xff]
        %v821 = vld [vmem:[#allocation2 + $0x98] sm:$0xff]
        %v822 = vld [vmem:[#allocation2 + $0xa8] sm:$0xff]
        %v823 = vld [vmem:[#allocation2 + $0xb0] sm:$0xff]
        %v824 = vld [vmem:[#allocation2 + $0xb8] sm:$0xff]
        %v825 = vld [vmem:[#allocation2 + $0xc8] sm:$0xff]
        %v826 = vld [vmem:[#allocation2 + $0xd0] sm:$0xff]
        %v827 = vld [vmem:[#allocation2 + $0xd8] sm:$0xff]
        %v828 = vld [vmem:[#allocation2 + $0xe8] sm:$0xff]
        %v829 = vld [vmem:[#allocation2 + $0xf0] sm:$0xff]
        %v830 = vld [vmem:[#allocation2 + $0xf8] sm:$0xff]
        %v831 = vld [vmem:[#allocation2 + $0x108] sm:$0xff]
        %v832 = vld [vmem:[#allocation2 + $0x110] sm:$0xff]
        %v833 = vld [vmem:[#allocation2 + $0x118] sm:$0xff]
        %v834 = vld [vmem:[#allocation2 + $0x128] sm:$0xff]
        %v835 = vld [vmem:[#allocation2 + $0x130] sm:$0xff]
        %v836 = vld [vmem:[#allocation2 + $0x138] sm:$0xff]
        %v837 = vld [vmem:[#allocation2 + $0x148] sm:$0xff]
        %v838 = vld [vmem:[#allocation2 + $0x150] sm:$0xff]
        %v839 = vld [vmem:[#allocation2 + $0x158] sm:$0xff]
        %v840 = vld [vmem:[#allocation2 + $0x168] sm:$0xff]
        %v841 = vld [vmem:[#allocation2 + $0x170] sm:$0xff]
        %v842 = vld [vmem:[#allocation2 + $0x178] sm:$0xff]
        %879 = vrot.lane.b32.xlu0 %v807, 112
        %v880 = vpop.permute.xlu0 %879
        %881 = vrot.lane.b32.xlu0 %v808, 112
        %v882 = vpop.permute.xlu0 %881
        %883 = vrot.lane.b32.xlu0 %v809, 112
        %v884 = vpop.permute.xlu0 %883
        %885 = vrot.lane.b32.xlu0 %v810, 112
        %v886 = vpop.permute.xlu0 %885
        %887 = vrot.lane.b32.xlu0 %v811, 112
        %v888 = vpop.permute.xlu0 %887
        %889 = vrot.lane.b32.xlu0 %v812, 112
        %v890 = vpop.permute.xlu0 %889
        %891 = vrot.lane.b32.xlu0 %v813, 112
        %v892 = vpop.permute.xlu0 %891
        %893 = vrot.lane.b32.xlu0 %v814, 112
        %v894 = vpop.permute.xlu0 %893
        %895 = vrot.lane.b32.xlu0 %v815, 112
        %v896 = vpop.permute.xlu0 %895
        %897 = vrot.lane.b32.xlu0 %v816, 112
        %v898 = vpop.permute.xlu0 %897
        %899 = vrot.lane.b32.xlu0 %v817, 112
        %v900 = vpop.permute.xlu0 %899
        %901 = vrot.lane.b32.xlu0 %v818, 112
        %v902 = vpop.permute.xlu0 %901
        %903 = vrot.lane.b32.xlu0 %v819, 112
        %v904 = vpop.permute.xlu0 %903
        %905 = vrot.lane.b32.xlu0 %v820, 112
        %v906 = vpop.permute.xlu0 %905
        %907 = vrot.lane.b32.xlu0 %v821, 112
        %v908 = vpop.permute.xlu0 %907
        %909 = vrot.lane.b32.xlu0 %v822, 112
        %v910 = vpop.permute.xlu0 %909
        %911 = vrot.lane.b32.xlu0 %v823, 112
        %v912 = vpop.permute.xlu0 %911
        %913 = vrot.lane.b32.xlu0 %v824, 112
        %v914 = vpop.permute.xlu0 %913
        %915 = vrot.lane.b32.xlu0 %v825, 112
        %v916 = vpop.permute.xlu0 %915
        %917 = vrot.lane.b32.xlu0 %v826, 112
        %v918 = vpop.permute.xlu0 %917
        %919 = vrot.lane.b32.xlu0 %v827, 112
        %v920 = vpop.permute.xlu0 %919
        %921 = vrot.lane.b32.xlu0 %v828, 112
        %v922 = vpop.permute.xlu0 %921
        %923 = vrot.lane.b32.xlu0 %v829, 112
        %v924 = vpop.permute.xlu0 %923
        %925 = vrot.lane.b32.xlu0 %v830, 112
        %v926 = vpop.permute.xlu0 %925
        %927 = vrot.lane.b32.xlu0 %v831, 112
        %v928 = vpop.permute.xlu0 %927
        %929 = vrot.lane.b32.xlu0 %v832, 112
        %v930 = vpop.permute.xlu0 %929
        %931 = vrot.lane.b32.xlu0 %v833, 112
        %v932 = vpop.permute.xlu0 %931
        %933 = vrot.lane.b32.xlu0 %v834, 112
        %v934 = vpop.permute.xlu0 %933
        %935 = vrot.lane.b32.xlu0 %v835, 112
        %v936 = vpop.permute.xlu0 %935
        %937 = vrot.lane.b32.xlu0 %v836, 112
        %v938 = vpop.permute.xlu0 %937
        %939 = vrot.lane.b32.xlu0 %v837, 112
        %v940 = vpop.permute.xlu0 %939
        %941 = vrot.lane.b32.xlu0 %v838, 112
        %v942 = vpop.permute.xlu0 %941
        %943 = vrot.lane.b32.xlu0 %v839, 112
        %v944 = vpop.permute.xlu0 %943
        %945 = vrot.lane.b32.xlu0 %v840, 112
        %v946 = vpop.permute.xlu0 %945
        %947 = vrot.lane.b32.xlu0 %v841, 112
        %v948 = vpop.permute.xlu0 %947
        %949 = vrot.lane.b32.xlu0 %v842, 112
        %v950 = vpop.permute.xlu0 %949
        %vm951 = vcmask 916480
        %v952 = vsel %vm951, %v880, %v882
        %v953 = vsel %vm951, %v882, %v884
        %v954 = vsel %vm951, %v886, %v888
        %v955 = vsel %vm951, %v888, %v890
        %v956 = vsel %vm951, %v892, %v894
        %v957 = vsel %vm951, %v894, %v896
        %v958 = vsel %vm951, %v898, %v900
        %v959 = vsel %vm951, %v900, %v902
        %v960 = vsel %vm951, %v904, %v906
        %v961 = vsel %vm951, %v906, %v908
        %v962 = vsel %vm951, %v910, %v912
        %v963 = vsel %vm951, %v912, %v914
        %v964 = vsel %vm951, %v916, %v918
        %v965 = vsel %vm951, %v918, %v920
        %v966 = vsel %vm951, %v922, %v924
        %v967 = vsel %vm951, %v924, %v926
        %v968 = vsel %vm951, %v928, %v930
        %v969 = vsel %vm951, %v930, %v932
        %v970 = vsel %vm951, %v934, %v936
        %v971 = vsel %vm951, %v936, %v938
        %v972 = vsel %vm951, %v940, %v942
        %v973 = vsel %vm951, %v942, %v944
        %v974 = vsel %vm951, %v946, %v948
        %v975 = vsel %vm951, %v948, %v950
        %v1001 = vsel %vm504, %v803, 0
        %v1004 = vsel %vm504, %v804, 0
        %v1007 = vsel %vm504, %v805, 0
        %v1010 = vsel %vm504, %v806, 0
        %1012 = vmatpush.msra.mxu0 0.0
        %1013 = vmatpush.msra.mxu0 0.0
        %1014 = vmatpush.msra.mxu0 0.0
        %1015 = vmatpush.msra.mxu0 0.0
        %1016 = vmatpush.msra.mxu0 %v974
        %1017 = vmatpush.msra.mxu0 %v972
        %1018 = vmatpush.msra.mxu0 %v970
        %1019 = vmatpush.msra.mxu0 %v968
        %1020 = vmatpush.msra.mxu0 %v966
        %1021 = vmatpush.msra.mxu0 %v964
        %1022 = vmatpush.msra.mxu0 %v962
        %1023 = vmatpush.msra.mxu0 %v960
        %1024 = vmatpush.msra.mxu0 %v958
        %1025 = vmatpush.msra.mxu0 %v956
        %1026 = vmatpush.msra.mxu0 %v954
        %1027 = vmatpush.msra.mxu0 %v952
        %1028 = vmatmul.f32.gmra.mxu0 %v1001
        %v1029 = vpop.f32.mrf.mxu0
        %v1030 = vadd.f32 0.0, %v1029
        %1031 = vmatmul.f32.gmra.mxu0 %v1004
        %v1032 = vpop.f32.mrf.mxu0
        %v1033 = vadd.f32 0.0, %v1032
        %1034 = vmatmul.f32.gmra.mxu0 %v1007
        %v1035 = vpop.f32.mrf.mxu0
        %v1036 = vadd.f32 0.0, %v1035
        %1037 = vmatmul.f32.gmra.mxu0 %v1010
        %v1038 = vpop.f32.mrf.mxu0
        %v1039 = vadd.f32 0.0, %v1038
        %1040 = vdwg.mxu0
        %1041 = vmatpush.msra.mxu0 0.0
        %1042 = vmatpush.msra.mxu0 0.0
        %1043 = vmatpush.msra.mxu0 0.0
        %1044 = vmatpush.msra.mxu0 0.0
        %1045 = vmatpush.msra.mxu0 %v975
        %1046 = vmatpush.msra.mxu0 %v973
        %1047 = vmatpush.msra.mxu0 %v971
        %1048 = vmatpush.msra.mxu0 %v969
        %1049 = vmatpush.msra.mxu0 %v967
        %1050 = vmatpush.msra.mxu0 %v965
        %1051 = vmatpush.msra.mxu0 %v963
        %1052 = vmatpush.msra.mxu0 %v961
        %1053 = vmatpush.msra.mxu0 %v959
        %1054 = vmatpush.msra.mxu0 %v957
        %1055 = vmatpush.msra.mxu0 %v955
        %1056 = vmatpush.msra.mxu0 %v953
        %1057 = vmatmul.f32.gmra.mxu0 %v1001
        %v1058 = vpop.f32.mrf.mxu0
        %v1059 = vadd.f32 0.0, %v1058
        %1060 = vmatmul.f32.gmra.mxu0 %v1004
        %v1061 = vpop.f32.mrf.mxu0
        %v1062 = vadd.f32 0.0, %v1061
        %1063 = vmatmul.f32.gmra.mxu0 %v1007
        %v1064 = vpop.f32.mrf.mxu0
        %v1065 = vadd.f32 0.0, %v1064
        %1066 = vmatmul.f32.gmra.mxu0 %v1010
        %v1067 = vpop.f32.mrf.mxu0
        %v1068 = vadd.f32 0.0, %v1067
        %1069 = vdwg.mxu0
        %v1070 = vadd.f32 %v762, %v1030
        %v1071 = vadd.f32 %v791, %v1059
        %v1072 = vadd.f32 %v765, %v1033
        %v1073 = vadd.f32 %v794, %v1062
        %v1074 = vadd.f32 %v768, %v1036
        %v1075 = vadd.f32 %v797, %v1065
        %v1076 = vadd.f32 %v771, %v1039
        %v1077 = vadd.f32 %v800, %v1068
        %v1078 = vld [vmem:[%s2] sm:$0xff]
        %v1079 = vld [vmem:[%s2 + $0x8] sm:$0xff]
        %v1080 = vld [vmem:[%s2 + $0x10] sm:$0xff]
        %v1081 = vld [vmem:[%s2 + $0x18] sm:$0xff]
        %1083 = vset.pattern.permute.xlu0 0
        %1084 = vperm.xlu0 %1083, %v1078
        %v1085 = vpop.permute.xlu0 %1084
        %1088 = vset.pattern.permute.xlu0 0
        %1089 = vperm.xlu0 %1088, %v1079
        %v1090 = vpop.permute.xlu0 %1089
        %1093 = vset.pattern.permute.xlu0 0
        %1094 = vperm.xlu0 %1093, %v1080
        %v1095 = vpop.permute.xlu0 %1094
        %1098 = vset.pattern.permute.xlu0 0
        %1099 = vperm.xlu0 %1098, %v1081
        %v1100 = vpop.permute.xlu0 %1099
        %v1102 = vadd.f32 %v1070, %v1085
        %v1103 = vadd.f32 %v1071, %v1085
        %v1104 = vadd.f32 %v1072, %v1090
        %v1105 = vadd.f32 %v1073, %v1090
        %v1106 = vadd.f32 %v1074, %v1095
        %v1107 = vadd.f32 %v1075, %v1095
        %v1108 = vadd.f32 %v1076, %v1100
        %v1109 = vadd.f32 %v1077, %v1100
        %v1110 = vmax.f32 %v1102, 0.0
        %v1111 = vmax.f32 %v1103, 0.0
        %v1112 = vmax.f32 %v1104, 0.0
        %v1113 = vmax.f32 %v1105, 0.0
        %v1114 = vmax.f32 %v1106, 0.0
        %v1115 = vmax.f32 %v1107, 0.0
        %v1116 = vmax.f32 %v1108, 0.0
        %v1117 = vmax.f32 %v1109, 0.0
        %1118 = vst [vmem:[#allocation2 + $0x88] sm:$0xff] %v1110
        %1119 = vst [vmem:[#allocation2 + $0x90] sm:$0xff] %v1111
        %1120 = vst [vmem:[#allocation2 + $0xa8] sm:$0xff] %v1112
        %1121 = vst [vmem:[#allocation2 + $0xb0] sm:$0xff] %v1113
        %1122 = vst [vmem:[#allocation2 + $0xc8] sm:$0xff] %v1114
        %1123 = vst [vmem:[#allocation2 + $0xd0] sm:$0xff] %v1115
        %1124 = vst [vmem:[#allocation2 + $0xe8] sm:$0xff] %v1116
        %1125 = vst [vmem:[#allocation2 + $0xf0] sm:$0xff] %v1117
        %v1126 = vld [vmem:[#allocation2 + $0x80] sm:$0xff]
        %v1127 = vld [vmem:[#allocation2 + $0x88] sm:$0xff]
        %v1128 = vld [vmem:[#allocation2 + $0x90] sm:$0xff]
        %v1129 = vld [vmem:[#allocation2 + $0xa0] sm:$0xff]
        %v1130 = vld [vmem:[#allocation2 + $0xa8] sm:$0xff]
        %v1131 = vld [vmem:[#allocation2 + $0xb0] sm:$0xff]
        %v1132 = vld [vmem:[#allocation2 + $0xc0] sm:$0xff]
        %v1133 = vld [vmem:[#allocation2 + $0xc8] sm:$0xff]
        %v1134 = vld [vmem:[#allocation2 + $0xd0] sm:$0xff]
        %v1135 = vld [vmem:[#allocation2 + $0xe0] sm:$0xff]
        %v1136 = vld [vmem:[#allocation2 + $0xe8] sm:$0xff]
        %v1137 = vld [vmem:[#allocation2 + $0xf0] sm:$0xff]
        %v1138 = vmul.f32 %v1126, %v284
        %v1139 = vmul.f32 %v1127, %v288
        %v1140 = vmul.f32 %v1128, %v286
        %v1141 = vmul.f32 %v1129, %v284
        %v1142 = vmul.f32 %v1130, %v288
        %v1143 = vmul.f32 %v1131, %v286
        %v1144 = vmul.f32 %v1132, %v284
        %v1145 = vmul.f32 %v1133, %v288
        %v1146 = vmul.f32 %v1134, %v286
        %v1147 = vmul.f32 %v1135, %v284
        %v1148 = vmul.f32 %v1136, %v288
        %v1149 = vmul.f32 %v1137, %v286
        %1162 = vrot.lane.b32.xlu0 %v1138, 1
        %v1163 = vpop.permute.xlu0 %1162
        %1164 = vrot.lane.b32.xlu0 %v1139, 1
        %v1165 = vpop.permute.xlu0 %1164
        %1166 = vrot.lane.b32.xlu0 %v1140, 1
        %v1167 = vpop.permute.xlu0 %1166
        %1168 = vrot.lane.b32.xlu0 %v1141, 1
        %v1169 = vpop.permute.xlu0 %1168
        %1170 = vrot.lane.b32.xlu0 %v1142, 1
        %v1171 = vpop.permute.xlu0 %1170
        %1172 = vrot.lane.b32.xlu0 %v1143, 1
        %v1173 = vpop.permute.xlu0 %1172
        %1174 = vrot.lane.b32.xlu0 %v1144, 1
        %v1175 = vpop.permute.xlu0 %1174
        %1176 = vrot.lane.b32.xlu0 %v1145, 1
        %v1177 = vpop.permute.xlu0 %1176
        %1178 = vrot.lane.b32.xlu0 %v1146, 1
        %v1179 = vpop.permute.xlu0 %1178
        %1180 = vrot.lane.b32.xlu0 %v1147, 1
        %v1181 = vpop.permute.xlu0 %1180
        %1182 = vrot.lane.b32.xlu0 %v1148, 1
        %v1183 = vpop.permute.xlu0 %1182
        %1184 = vrot.lane.b32.xlu0 %v1149, 1
        %v1185 = vpop.permute.xlu0 %1184
        %v1186 = vsel %vm340, %v1163, %v1165
        %v1187 = vsel %vm340, %v1165, %v1167
        %v1188 = vsel %vm340, %v1169, %v1171
        %v1189 = vsel %vm340, %v1171, %v1173
        %v1190 = vsel %vm340, %v1175, %v1177
        %v1191 = vsel %vm340, %v1177, %v1179
        %v1192 = vsel %vm340, %v1181, %v1183
        %v1193 = vsel %vm340, %v1183, %v1185
        %1202 = vst [vmem:[#allocation2 + $0x8] sm:$0xff] %v1186
        %1203 = vst [vmem:[#allocation2 + $0x10] sm:$0xff] %v1187
        %1204 = vst [vmem:[#allocation2 + $0x28] sm:$0xff] %v1188
        %1205 = vst [vmem:[#allocation2 + $0x30] sm:$0xff] %v1189
        %1206 = vst [vmem:[#allocation2 + $0x48] sm:$0xff] %v1190
        %1207 = vst [vmem:[#allocation2 + $0x50] sm:$0xff] %v1191
        %1208 = vst [vmem:[#allocation2 + $0x68] sm:$0xff] %v1192
        %1209 = vst [vmem:[#allocation2 + $0x70] sm:$0xff] %v1193
        %v1210 = vld [vmem:[#allocation2 + $0x88] sm:$0xff]
        %v1211 = vld [vmem:[#allocation2 + $0x90] sm:$0xff]
        %v1212 = vld [vmem:[#allocation2 + $0x98] sm:$0xff]
        %v1213 = vld [vmem:[#allocation2 + $0xa8] sm:$0xff]
        %v1214 = vld [vmem:[#allocation2 + $0xb0] sm:$0xff]
        %v1215 = vld [vmem:[#allocation2 + $0xb8] sm:$0xff]
        %v1216 = vld [vmem:[#allocation2 + $0xc8] sm:$0xff]
        %v1217 = vld [vmem:[#allocation2 + $0xd0] sm:$0xff]
        %v1218 = vld [vmem:[#allocation2 + $0xd8] sm:$0xff]
        %v1219 = vld [vmem:[#allocation2 + $0xe8] sm:$0xff]
        %v1220 = vld [vmem:[#allocation2 + $0xf0] sm:$0xff]
        %v1221 = vld [vmem:[#allocation2 + $0xf8] sm:$0xff]
        %v1222 = vmul.f32 %v1210, %v380
        %v1223 = vmul.f32 %v1211, %v383
        %v1224 = vmul.f32 %v1212, %v382
        %v1225 = vmul.f32 %v1213, %v380
        %v1226 = vmul.f32 %v1214, %v383
        %v1227 = vmul.f32 %v1215, %v382
        %v1228 = vmul.f32 %v1216, %v380
        %v1229 = vmul.f32 %v1217, %v383
        %v1230 = vmul.f32 %v1218, %v382
        %v1231 = vmul.f32 %v1219, %v380
        %v1232 = vmul.f32 %v1220, %v383
        %v1233 = vmul.f32 %v1221, %v382
        %1246 = vrot.lane.b32.xlu0 %v1222, 127
        %v1247 = vpop.permute.xlu0 %1246
        %1248 = vrot.lane.b32.xlu0 %v1223, 127
        %v1249 = vpop.permute.xlu0 %1248
        %1250 = vrot.lane.b32.xlu0 %v1224, 127
        %v1251 = vpop.permute.xlu0 %1250
        %1252 = vrot.lane.b32.xlu0 %v1225, 127
        %v1253 = vpop.permute.xlu0 %1252
        %1254 = vrot.lane.b32.xlu0 %v1226, 127
        %v1255 = vpop.permute.xlu0 %1254
        %1256 = vrot.lane.b32.xlu0 %v1227, 127
        %v1257 = vpop.permute.xlu0 %1256
        %1258 = vrot.lane.b32.xlu0 %v1228, 127
        %v1259 = vpop.permute.xlu0 %1258
        %1260 = vrot.lane.b32.xlu0 %v1229, 127
        %v1261 = vpop.permute.xlu0 %1260
        %1262 = vrot.lane.b32.xlu0 %v1230, 127
        %v1263 = vpop.permute.xlu0 %1262
        %1264 = vrot.lane.b32.xlu0 %v1231, 127
        %v1265 = vpop.permute.xlu0 %1264
        %1266 = vrot.lane.b32.xlu0 %v1232, 127
        %v1267 = vpop.permute.xlu0 %1266
        %1268 = vrot.lane.b32.xlu0 %v1233, 127
        %v1269 = vpop.permute.xlu0 %1268
        %v1270 = vsel %vm287, %v1247, %v1249
        %v1271 = vsel %vm287, %v1249, %v1251
        %v1272 = vsel %vm287, %v1253, %v1255
        %v1273 = vsel %vm287, %v1255, %v1257
        %v1274 = vsel %vm287, %v1259, %v1261
        %v1275 = vsel %vm287, %v1261, %v1263
        %v1276 = vsel %vm287, %v1265, %v1267
        %v1277 = vsel %vm287, %v1267, %v1269
        %1286 = vst [vmem:[#allocation2 + $0x108] sm:$0xff] %v1270
        %1287 = vst [vmem:[#allocation2 + $0x110] sm:$0xff] %v1271
        %1288 = vst [vmem:[#allocation2 + $0x128] sm:$0xff] %v1272
        %1289 = vst [vmem:[#allocation2 + $0x130] sm:$0xff] %v1273
        %1290 = vst [vmem:[#allocation2 + $0x148] sm:$0xff] %v1274
        %1291 = vst [vmem:[#allocation2 + $0x150] sm:$0xff] %v1275
        %1292 = vst [vmem:[#allocation2 + $0x168] sm:$0xff] %v1276
        %1293 = vst [vmem:[#allocation2 + $0x170] sm:$0xff] %v1277
        %s1294 = scalar_lea.vmem [#allocation3], 96
        %v1295 = vld [vmem:[%s1294] sm:$0xff]
        %v1296 = vld [vmem:[%s1294 + $0x8] sm:$0xff]
        %v1297 = vld [vmem:[%s1294 + $0x10] sm:$0xff]
        %v1298 = vld [vmem:[%s1294 + $0x18] sm:$0xff]
        %v1299 = vld [vmem:[#allocation2] sm:$0xff]
        %v1300 = vld [vmem:[#allocation2 + $0x8] sm:$0xff]
        %v1301 = vld [vmem:[#allocation2 + $0x10] sm:$0xff]
        %v1302 = vld [vmem:[#allocation2 + $0x20] sm:$0xff]
        %v1303 = vld [vmem:[#allocation2 + $0x28] sm:$0xff]
        %v1304 = vld [vmem:[#allocation2 + $0x30] sm:$0xff]
        %v1305 = vld [vmem:[#allocation2 + $0x40] sm:$0xff]
        %v1306 = vld [vmem:[#allocation2 + $0x48] sm:$0xff]
        %v1307 = vld [vmem:[#allocation2 + $0x50] sm:$0xff]
        %v1308 = vld [vmem:[#allocation2 + $0x60] sm:$0xff]
        %v1309 = vld [vmem:[#allocation2 + $0x68] sm:$0xff]
        %v1310 = vld [vmem:[#allocation2 + $0x70] sm:$0xff]
        %v1311 = vld [vmem:[#allocation2 + $0x80] sm:$0xff]
        %v1312 = vld [vmem:[#allocation2 + $0x88] sm:$0xff]
        %v1313 = vld [vmem:[#allocation2 + $0x90] sm:$0xff]
        %v1314 = vld [vmem:[#allocation2 + $0xa0] sm:$0xff]
        %v1315 = vld [vmem:[#allocation2 + $0xa8] sm:$0xff]
        %v1316 = vld [vmem:[#allocation2 + $0xb0] sm:$0xff]
        %v1317 = vld [vmem:[#allocation2 + $0xc0] sm:$0xff]
        %v1318 = vld [vmem:[#allocation2 + $0xc8] sm:$0xff]
        %v1319 = vld [vmem:[#allocation2 + $0xd0] sm:$0xff]
        %v1320 = vld [vmem:[#allocation2 + $0xe0] sm:$0xff]
        %v1321 = vld [vmem:[#allocation2 + $0xe8] sm:$0xff]
        %v1322 = vld [vmem:[#allocation2 + $0xf0] sm:$0xff]
        %v1323 = vld [vmem:[#allocation2 + $0x100] sm:$0xff]
        %v1324 = vld [vmem:[#allocation2 + $0x108] sm:$0xff]
        %v1325 = vld [vmem:[#allocation2 + $0x110] sm:$0xff]
        %v1326 = vld [vmem:[#allocation2 + $0x120] sm:$0xff]
        %v1327 = vld [vmem:[#allocation2 + $0x128] sm:$0xff]
        %v1328 = vld [vmem:[#allocation2 + $0x130] sm:$0xff]
        %v1329 = vld [vmem:[#allocation2 + $0x140] sm:$0xff]
        %v1330 = vld [vmem:[#allocation2 + $0x148] sm:$0xff]
        %v1331 = vld [vmem:[#allocation2 + $0x150] sm:$0xff]
        %v1332 = vld [vmem:[#allocation2 + $0x160] sm:$0xff]
        %v1333 = vld [vmem:[#allocation2 + $0x168] sm:$0xff]
        %v1334 = vld [vmem:[#allocation2 + $0x170] sm:$0xff]
        %s1335 = scalar_lea.vmem [#allocation3], 128
        %v1336 = vld [vmem:[%s1335] sm:$0xff]
        %v1337 = vld [vmem:[%s1335 + $0x8] sm:$0xff]
        %v1338 = vld [vmem:[%s1335 + $0x10] sm:$0xff]
        %v1339 = vld [vmem:[%s1335 + $0x18] sm:$0xff]
        %v1341 = vsel %vm504, %v1336, 0
        %v1344 = vsel %vm504, %v1337, 0
        %v1347 = vsel %vm504, %v1338, 0
        %v1350 = vsel %vm504, %v1339, 0
        %1352 = vmatpush.msra.mxu0 0.0
        %1353 = vmatpush.msra.mxu0 0.0
        %1354 = vmatpush.msra.mxu0 0.0
        %1355 = vmatpush.msra.mxu0 0.0
        %1356 = vmatpush.msra.mxu0 %v1333
        %1357 = vmatpush.msra.mxu0 %v1330
        %1358 = vmatpush.msra.mxu0 %v1327
        %1359 = vmatpush.msra.mxu0 %v1324
        %1360 = vmatpush.msra.mxu0 %v1321
        %1361 = vmatpush.msra.mxu0 %v1318
        %1362 = vmatpush.msra.mxu0 %v1315
        %1363 = vmatpush.msra.mxu0 %v1312
        %1364 = vmatpush.msra.mxu0 %v1309
        %1365 = vmatpush.msra.mxu0 %v1306
        %1366 = vmatpush.msra.mxu0 %v1303
        %1367 = vmatpush.msra.mxu0 %v1300
        %1368 = vmatmul.f32.gmra.mxu0 %v1341
        %v1369 = vpop.f32.mrf.mxu0
        %v1370 = vadd.f32 0.0, %v1369
        %1371 = vmatmul.f32.gmra.mxu0 %v1344
        %v1372 = vpop.f32.mrf.mxu0
        %v1373 = vadd.f32 0.0, %v1372
        %1374 = vmatmul.f32.gmra.mxu0 %v1347
        %v1375 = vpop.f32.mrf.mxu0
        %v1376 = vadd.f32 0.0, %v1375
        %1377 = vmatmul.f32.gmra.mxu0 %v1350
        %v1378 = vpop.f32.mrf.mxu0
        %v1379 = vadd.f32 0.0, %v1378
        %1380 = vdwg.mxu0
        %1381 = vmatpush.msra.mxu0 0.0
        %1382 = vmatpush.msra.mxu0 0.0
        %1383 = vmatpush.msra.mxu0 0.0
        %1384 = vmatpush.msra.mxu0 0.0
        %1385 = vmatpush.msra.mxu0 %v1334
        %1386 = vmatpush.msra.mxu0 %v1331
        %1387 = vmatpush.msra.mxu0 %v1328
        %1388 = vmatpush.msra.mxu0 %v1325
        %1389 = vmatpush.msra.mxu0 %v1322
        %1390 = vmatpush.msra.mxu0 %v1319
        %1391 = vmatpush.msra.mxu0 %v1316
        %1392 = vmatpush.msra.mxu0 %v1313
        %1393 = vmatpush.msra.mxu0 %v1310
        %1394 = vmatpush.msra.mxu0 %v1307
        %1395 = vmatpush.msra.mxu0 %v1304
        %1396 = vmatpush.msra.mxu0 %v1301
        %1397 = vmatmul.f32.gmra.mxu0 %v1341
        %v1398 = vpop.f32.mrf.mxu0
        %v1399 = vadd.f32 0.0, %v1398
        %1400 = vmatmul.f32.gmra.mxu0 %v1344
        %v1401 = vpop.f32.mrf.mxu0
        %v1402 = vadd.f32 0.0, %v1401
        %1403 = vmatmul.f32.gmra.mxu0 %v1347
        %v1404 = vpop.f32.mrf.mxu0
        %v1405 = vadd.f32 0.0, %v1404
        %1406 = vmatmul.f32.gmra.mxu0 %v1350
        %v1407 = vpop.f32.mrf.mxu0
        %v1408 = vadd.f32 0.0, %v1407
        %1409 = vdwg.mxu0
        %1446 = vrot.lane.b32.xlu0 %v1299, 16
        %v1447 = vpop.permute.xlu0 %1446
        %1448 = vrot.lane.b32.xlu0 %v1300, 16
        %v1449 = vpop.permute.xlu0 %1448
        %1450 = vrot.lane.b32.xlu0 %v1301, 16
        %v1451 = vpop.permute.xlu0 %1450
        %1452 = vrot.lane.b32.xlu0 %v1302, 16
        %v1453 = vpop.permute.xlu0 %1452
        %1454 = vrot.lane.b32.xlu0 %v1303, 16
        %v1455 = vpop.permute.xlu0 %1454
        %1456 = vrot.lane.b32.xlu0 %v1304, 16
        %v1457 = vpop.permute.xlu0 %1456
        %1458 = vrot.lane.b32.xlu0 %v1305, 16
        %v1459 = vpop.permute.xlu0 %1458
        %1460 = vrot.lane.b32.xlu0 %v1306, 16
        %v1461 = vpop.permute.xlu0 %1460
        %1462 = vrot.lane.b32.xlu0 %v1307, 16
        %v1463 = vpop.permute.xlu0 %1462
        %1464 = vrot.lane.b32.xlu0 %v1308, 16
        %v1465 = vpop.permute.xlu0 %1464
        %1466 = vrot.lane.b32.xlu0 %v1309, 16
        %v1467 = vpop.permute.xlu0 %1466
        %1468 = vrot.lane.b32.xlu0 %v1310, 16
        %v1469 = vpop.permute.xlu0 %1468
        %1470 = vrot.lane.b32.xlu0 %v1311, 16
        %v1471 = vpop.permute.xlu0 %1470
        %1472 = vrot.lane.b32.xlu0 %v1312, 16
        %v1473 = vpop.permute.xlu0 %1472
        %1474 = vrot.lane.b32.xlu0 %v1313, 16
        %v1475 = vpop.permute.xlu0 %1474
        %1476 = vrot.lane.b32.xlu0 %v1314, 16
        %v1477 = vpop.permute.xlu0 %1476
        %1478 = vrot.lane.b32.xlu0 %v1315, 16
        %v1479 = vpop.permute.xlu0 %1478
        %1480 = vrot.lane.b32.xlu0 %v1316, 16
        %v1481 = vpop.permute.xlu0 %1480
        %1482 = vrot.lane.b32.xlu0 %v1317, 16
        %v1483 = vpop.permute.xlu0 %1482
        %1484 = vrot.lane.b32.xlu0 %v1318, 16
        %v1485 = vpop.permute.xlu0 %1484
        %1486 = vrot.lane.b32.xlu0 %v1319, 16
        %v1487 = vpop.permute.xlu0 %1486
        %1488 = vrot.lane.b32.xlu0 %v1320, 16
        %v1489 = vpop.permute.xlu0 %1488
        %1490 = vrot.lane.b32.xlu0 %v1321, 16
        %v1491 = vpop.permute.xlu0 %1490
        %1492 = vrot.lane.b32.xlu0 %v1322, 16
        %v1493 = vpop.permute.xlu0 %1492
        %1494 = vrot.lane.b32.xlu0 %v1323, 16
        %v1495 = vpop.permute.xlu0 %1494
        %1496 = vrot.lane.b32.xlu0 %v1324, 16
        %v1497 = vpop.permute.xlu0 %1496
        %1498 = vrot.lane.b32.xlu0 %v1325, 16
        %v1499 = vpop.permute.xlu0 %1498
        %1500 = vrot.lane.b32.xlu0 %v1326, 16
        %v1501 = vpop.permute.xlu0 %1500
        %1502 = vrot.lane.b32.xlu0 %v1327, 16
        %v1503 = vpop.permute.xlu0 %1502
        %1504 = vrot.lane.b32.xlu0 %v1328, 16
        %v1505 = vpop.permute.xlu0 %1504
        %1506 = vrot.lane.b32.xlu0 %v1329, 16
        %v1507 = vpop.permute.xlu0 %1506
        %1508 = vrot.lane.b32.xlu0 %v1330, 16
        %v1509 = vpop.permute.xlu0 %1508
        %1510 = vrot.lane.b32.xlu0 %v1331, 16
        %v1511 = vpop.permute.xlu0 %1510
        %1512 = vrot.lane.b32.xlu0 %v1332, 16
        %v1513 = vpop.permute.xlu0 %1512
        %1514 = vrot.lane.b32.xlu0 %v1333, 16
        %v1515 = vpop.permute.xlu0 %1514
        %1516 = vrot.lane.b32.xlu0 %v1334, 16
        %v1517 = vpop.permute.xlu0 %1516
        %v1518 = vsel %vm683, %v1447, %v1449
        %v1519 = vsel %vm683, %v1449, %v1451
        %v1520 = vsel %vm683, %v1453, %v1455
        %v1521 = vsel %vm683, %v1455, %v1457
        %v1522 = vsel %vm683, %v1459, %v1461
        %v1523 = vsel %vm683, %v1461, %v1463
        %v1524 = vsel %vm683, %v1465, %v1467
        %v1525 = vsel %vm683, %v1467, %v1469
        %v1526 = vsel %vm683, %v1471, %v1473
        %v1527 = vsel %vm683, %v1473, %v1475
        %v1528 = vsel %vm683, %v1477, %v1479
        %v1529 = vsel %vm683, %v1479, %v1481
        %v1530 = vsel %vm683, %v1483, %v1485
        %v1531 = vsel %vm683, %v1485, %v1487
        %v1532 = vsel %vm683, %v1489, %v1491
        %v1533 = vsel %vm683, %v1491, %v1493
        %v1534 = vsel %vm683, %v1495, %v1497
        %v1535 = vsel %vm683, %v1497, %v1499
        %v1536 = vsel %vm683, %v1501, %v1503
        %v1537 = vsel %vm683, %v1503, %v1505
        %v1538 = vsel %vm683, %v1507, %v1509
        %v1539 = vsel %vm683, %v1509, %v1511
        %v1540 = vsel %vm683, %v1513, %v1515
        %v1541 = vsel %vm683, %v1515, %v1517
        %v1567 = vsel %vm504, %v1295, 0
        %v1570 = vsel %vm504, %v1296, 0
        %v1573 = vsel %vm504, %v1297, 0
        %v1576 = vsel %vm504, %v1298, 0
        %1578 = vmatpush.msra.mxu0 0.0
        %1579 = vmatpush.msra.mxu0 0.0
        %1580 = vmatpush.msra.mxu0 0.0
        %1581 = vmatpush.msra.mxu0 0.0
        %1582 = vmatpush.msra.mxu0 %v1540
        %1583 = vmatpush.msra.mxu0 %v1538
        %1584 = vmatpush.msra.mxu0 %v1536
        %1585 = vmatpush.msra.mxu0 %v1534
        %1586 = vmatpush.msra.mxu0 %v1532
        %1587 = vmatpush.msra.mxu0 %v1530
        %1588 = vmatpush.msra.mxu0 %v1528
        %1589 = vmatpush.msra.mxu0 %v1526
        %1590 = vmatpush.msra.mxu0 %v1524
        %1591 = vmatpush.msra.mxu0 %v1522
        %1592 = vmatpush.msra.mxu0 %v1520
        %1593 = vmatpush.msra.mxu0 %v1518
        %1594 = vmatmul.f32.gmra.mxu0 %v1567
        %v1595 = vpop.f32.mrf.mxu0
        %v1596 = vadd.f32 %v1370, %v1595
        %1597 = vmatmul.f32.gmra.mxu0 %v1570
        %v1598 = vpop.f32.mrf.mxu0
        %v1599 = vadd.f32 %v1373, %v1598
        %1600 = vmatmul.f32.gmra.mxu0 %v1573
        %v1601 = vpop.f32.mrf.mxu0
        %v1602 = vadd.f32 %v1376, %v1601
        %1603 = vmatmul.f32.gmra.mxu0 %v1576
        %v1604 = vpop.f32.mrf.mxu0
        %v1605 = vadd.f32 %v1379, %v1604
        %1606 = vdwg.mxu0
        %1607 = vmatpush.msra.mxu0 0.0
        %1608 = vmatpush.msra.mxu0 0.0
        %1609 = vmatpush.msra.mxu0 0.0
        %1610 = vmatpush.msra.mxu0 0.0
        %1611 = vmatpush.msra.mxu0 %v1541
        %1612 = vmatpush.msra.mxu0 %v1539
        %1613 = vmatpush.msra.mxu0 %v1537
        %1614 = vmatpush.msra.mxu0 %v1535
        %1615 = vmatpush.msra.mxu0 %v1533
        %1616 = vmatpush.msra.mxu0 %v1531
        %1617 = vmatpush.msra.mxu0 %v1529
        %1618 = vmatpush.msra.mxu0 %v1527
        %1619 = vmatpush.msra.mxu0 %v1525
        %1620 = vmatpush.msra.mxu0 %v1523
        %1621 = vmatpush.msra.mxu0 %v1521
        %1622 = vmatpush.msra.mxu0 %v1519
        %1623 = vmatmul.f32.gmra.mxu0 %v1567
        %v1624 = vpop.f32.mrf.mxu0
        %v1625 = vadd.f32 %v1399, %v1624
        %1626 = vmatmul.f32.gmra.mxu0 %v1570
        %v1627 = vpop.f32.mrf.mxu0
        %v1628 = vadd.f32 %v1402, %v1627
        %1629 = vmatmul.f32.gmra.mxu0 %v1573
        %v1630 = vpop.f32.mrf.mxu0
        %v1631 = vadd.f32 %v1405, %v1630
        %1632 = vmatmul.f32.gmra.mxu0 %v1576
        %v1633 = vpop.f32.mrf.mxu0
        %v1634 = vadd.f32 %v1408, %v1633
        %1635 = vdwg.mxu0
        %s1636 = scalar_lea.vmem [#allocation3], 160
        %v1637 = vld [vmem:[%s1636] sm:$0xff]
        %v1638 = vld [vmem:[%s1636 + $0x8] sm:$0xff]
        %v1639 = vld [vmem:[%s1636 + $0x10] sm:$0xff]
        %v1640 = vld [vmem:[%s1636 + $0x18] sm:$0xff]
        %v1641 = vld [vmem:[#allocation2 + $0x8] sm:$0xff]
        %v1642 = vld [vmem:[#allocation2 + $0x10] sm:$0xff]
        %v1643 = vld [vmem:[#allocation2 + $0x18] sm:$0xff]
        %v1644 = vld [vmem:[#allocation2 + $0x28] sm:$0xff]
        %v1645 = vld [vmem:[#allocation2 + $0x30] sm:$0xff]
        %v1646 = vld [vmem:[#allocation2 + $0x38] sm:$0xff]
        %v1647 = vld [vmem:[#allocation2 + $0x48] sm:$0xff]
        %v1648 = vld [vmem:[#allocation2 + $0x50] sm:$0xff]
        %v1649 = vld [vmem:[#allocation2 + $0x58] sm:$0xff]
        %v1650 = vld [vmem:[#allocation2 + $0x68] sm:$0xff]
        %v1651 = vld [vmem:[#allocation2 + $0x70] sm:$0xff]
        %v1652 = vld [vmem:[#allocation2 + $0x78] sm:$0xff]
        %v1653 = vld [vmem:[#allocation2 + $0x88] sm:$0xff]
        %v1654 = vld [vmem:[#allocation2 + $0x90] sm:$0xff]
        %v1655 = vld [vmem:[#allocation2 + $0x98] sm:$0xff]
        %v1656 = vld [vmem:[#allocation2 + $0xa8] sm:$0xff]
        %v1657 = vld [vmem:[#allocation2 + $0xb0] sm:$0xff]
        %v1658 = vld [vmem:[#allocation2 + $0xb8] sm:$0xff]
        %v1659 = vld [vmem:[#allocation2 + $0xc8] sm:$0xff]
        %v1660 = vld [vmem:[#allocation2 + $0xd0] sm:$0xff]
        %v1661 = vld [vmem:[#allocation2 + $0xd8] sm:$0xff]
        %v1662 = vld [vmem:[#allocation2 + $0xe8] sm:$0xff]
        %v1663 = vld [vmem:[#allocation2 + $0xf0] sm:$0xff]
        %v1664 = vld [vmem:[#allocation2 + $0xf8] sm:$0xff]
        %v1665 = vld [vmem:[#allocation2 + $0x108] sm:$0xff]
        %v1666 = vld [vmem:[#allocation2 + $0x110] sm:$0xff]
        %v1667 = vld [vmem:[#allocation2 + $0x118] sm:$0xff]
        %v1668 = vld [vmem:[#allocation2 + $0x128] sm:$0xff]
        %v1669 = vld [vmem:[#allocation2 + $0x130] sm:$0xff]
        %v1670 = vld [vmem:[#allocation2 + $0x138] sm:$0xff]
        %v1671 = vld [vmem:[#allocation2 + $0x148] sm:$0xff]
        %v1672 = vld [vmem:[#allocation2 + $0x150] sm:$0xff]
        %v1673 = vld [vmem:[#allocation2 + $0x158] sm:$0xff]
        %v1674 = vld [vmem:[#allocation2 + $0x168] sm:$0xff]
        %v1675 = vld [vmem:[#allocation2 + $0x170] sm:$0xff]
        %v1676 = vld [vmem:[#allocation2 + $0x178] sm:$0xff]
        %1713 = vrot.lane.b32.xlu0 %v1641, 112
        %v1714 = vpop.permute.xlu0 %1713
        %1715 = vrot.lane.b32.xlu0 %v1642, 112
        %v1716 = vpop.permute.xlu0 %1715
        %1717 = vrot.lane.b32.xlu0 %v1643, 112
        %v1718 = vpop.permute.xlu0 %1717
        %1719 = vrot.lane.b32.xlu0 %v1644, 112
        %v1720 = vpop.permute.xlu0 %1719
        %1721 = vrot.lane.b32.xlu0 %v1645, 112
        %v1722 = vpop.permute.xlu0 %1721
        %1723 = vrot.lane.b32.xlu0 %v1646, 112
        %v1724 = vpop.permute.xlu0 %1723
        %1725 = vrot.lane.b32.xlu0 %v1647, 112
        %v1726 = vpop.permute.xlu0 %1725
        %1727 = vrot.lane.b32.xlu0 %v1648, 112
        %v1728 = vpop.permute.xlu0 %1727
        %1729 = vrot.lane.b32.xlu0 %v1649, 112
        %v1730 = vpop.permute.xlu0 %1729
        %1731 = vrot.lane.b32.xlu0 %v1650, 112
        %v1732 = vpop.permute.xlu0 %1731
        %1733 = vrot.lane.b32.xlu0 %v1651, 112
        %v1734 = vpop.permute.xlu0 %1733
        %1735 = vrot.lane.b32.xlu0 %v1652, 112
        %v1736 = vpop.permute.xlu0 %1735
        %1737 = vrot.lane.b32.xlu0 %v1653, 112
        %v1738 = vpop.permute.xlu0 %1737
        %1739 = vrot.lane.b32.xlu0 %v1654, 112
        %v1740 = vpop.permute.xlu0 %1739
        %1741 = vrot.lane.b32.xlu0 %v1655, 112
        %v1742 = vpop.permute.xlu0 %1741
        %1743 = vrot.lane.b32.xlu0 %v1656, 112
        %v1744 = vpop.permute.xlu0 %1743
        %1745 = vrot.lane.b32.xlu0 %v1657, 112
        %v1746 = vpop.permute.xlu0 %1745
        %1747 = vrot.lane.b32.xlu0 %v1658, 112
        %v1748 = vpop.permute.xlu0 %1747
        %1749 = vrot.lane.b32.xlu0 %v1659, 112
        %v1750 = vpop.permute.xlu0 %1749
        %1751 = vrot.lane.b32.xlu0 %v1660, 112
        %v1752 = vpop.permute.xlu0 %1751
        %1753 = vrot.lane.b32.xlu0 %v1661, 112
        %v1754 = vpop.permute.xlu0 %1753
        %1755 = vrot.lane.b32.xlu0 %v1662, 112
        %v1756 = vpop.permute.xlu0 %1755
        %1757 = vrot.lane.b32.xlu0 %v1663, 112
        %v1758 = vpop.permute.xlu0 %1757
        %1759 = vrot.lane.b32.xlu0 %v1664, 112
        %v1760 = vpop.permute.xlu0 %1759
        %1761 = vrot.lane.b32.xlu0 %v1665, 112
        %v1762 = vpop.permute.xlu0 %1761
        %1763 = vrot.lane.b32.xlu0 %v1666, 112
        %v1764 = vpop.permute.xlu0 %1763
        %1765 = vrot.lane.b32.xlu0 %v1667, 112
        %v1766 = vpop.permute.xlu0 %1765
        %1767 = vrot.lane.b32.xlu0 %v1668, 112
        %v1768 = vpop.permute.xlu0 %1767
        %1769 = vrot.lane.b32.xlu0 %v1669, 112
        %v1770 = vpop.permute.xlu0 %1769
        %1771 = vrot.lane.b32.xlu0 %v1670, 112
        %v1772 = vpop.permute.xlu0 %1771
        %1773 = vrot.lane.b32.xlu0 %v1671, 112
        %v1774 = vpop.permute.xlu0 %1773
        %1775 = vrot.lane.b32.xlu0 %v1672, 112
        %v1776 = vpop.permute.xlu0 %1775
        %1777 = vrot.lane.b32.xlu0 %v1673, 112
        %v1778 = vpop.permute.xlu0 %1777
        %1779 = vrot.lane.b32.xlu0 %v1674, 112
        %v1780 = vpop.permute.xlu0 %1779
        %1781 = vrot.lane.b32.xlu0 %v1675, 112
        %v1782 = vpop.permute.xlu0 %1781
        %1783 = vrot.lane.b32.xlu0 %v1676, 112
        %v1784 = vpop.permute.xlu0 %1783
        %v1785 = vsel %vm951, %v1714, %v1716
        %v1786 = vsel %vm951, %v1716, %v1718
        %v1787 = vsel %vm951, %v1720, %v1722
        %v1788 = vsel %vm951, %v1722, %v1724
        %v1789 = vsel %vm951, %v1726, %v1728
        %v1790 = vsel %vm951, %v1728, %v1730
        %v1791 = vsel %vm951, %v1732, %v1734
        %v1792 = vsel %vm951, %v1734, %v1736
        %v1793 = vsel %vm951, %v1738, %v1740
        %v1794 = vsel %vm951, %v1740, %v1742
        %v1795 = vsel %vm951, %v1744, %v1746
        %v1796 = vsel %vm951, %v1746, %v1748
        %v1797 = vsel %vm951, %v1750, %v1752
        %v1798 = vsel %vm951, %v1752, %v1754
        %v1799 = vsel %vm951, %v1756, %v1758
        %v1800 = vsel %vm951, %v1758, %v1760
        %v1801 = vsel %vm951, %v1762, %v1764
        %v1802 = vsel %vm951, %v1764, %v1766
        %v1803 = vsel %vm951, %v1768, %v1770
        %v1804 = vsel %vm951, %v1770, %v1772
        %v1805 = vsel %vm951, %v1774, %v1776
        %v1806 = vsel %vm951, %v1776, %v1778
        %v1807 = vsel %vm951, %v1780, %v1782
        %v1808 = vsel %vm951, %v1782, %v1784
        %v1834 = vsel %vm504, %v1637, 0
        %v1837 = vsel %vm504, %v1638, 0
        %v1840 = vsel %vm504, %v1639, 0
        %v1843 = vsel %vm504, %v1640, 0
        %1845 = vmatpush.msra.mxu0 0.0
        %1846 = vmatpush.msra.mxu0 0.0
        %1847 = vmatpush.msra.mxu0 0.0
        %1848 = vmatpush.msra.mxu0 0.0
        %1849 = vmatpush.msra.mxu0 %v1807
        %1850 = vmatpush.msra.mxu0 %v1805
        %1851 = vmatpush.msra.mxu0 %v1803
        %1852 = vmatpush.msra.mxu0 %v1801
        %1853 = vmatpush.msra.mxu0 %v1799
        %1854 = vmatpush.msra.mxu0 %v1797
        %1855 = vmatpush.msra.mxu0 %v1795
        %1856 = vmatpush.msra.mxu0 %v1793
        %1857 = vmatpush.msra.mxu0 %v1791
        %1858 = vmatpush.msra.mxu0 %v1789
        %1859 = vmatpush.msra.mxu0 %v1787
        %1860 = vmatpush.msra.mxu0 %v1785
        %1861 = vmatmul.f32.gmra.mxu0 %v1834
        %v1862 = vpop.f32.mrf.mxu0
        %v1863 = vadd.f32 0.0, %v1862
        %1864 = vmatmul.f32.gmra.mxu0 %v1837
        %v1865 = vpop.f32.mrf.mxu0
        %v1866 = vadd.f32 0.0, %v1865
        %1867 = vmatmul.f32.gmra.mxu0 %v1840
        %v1868 = vpop.f32.mrf.mxu0
        %v1869 = vadd.f32 0.0, %v1868
        %1870 = vmatmul.f32.gmra.mxu0 %v1843
        %v1871 = vpop.f32.mrf.mxu0
        %v1872 = vadd.f32 0.0, %v1871
        %1873 = vdwg.mxu0
        %1874 = vmatpush.msra.mxu0 0.0
        %1875 = vmatpush.msra.mxu0 0.0
        %1876 = vmatpush.msra.mxu0 0.0
        %1877 = vmatpush.msra.mxu0 0.0
        %1878 = vmatpush.msra.mxu0 %v1808
        %1879 = vmatpush.msra.mxu0 %v1806
        %1880 = vmatpush.msra.mxu0 %v1804
        %1881 = vmatpush.msra.mxu0 %v1802
        %1882 = vmatpush.msra.mxu0 %v1800
        %1883 = vmatpush.msra.mxu0 %v1798
        %1884 = vmatpush.msra.mxu0 %v1796
        %1885 = vmatpush.msra.mxu0 %v1794
        %1886 = vmatpush.msra.mxu0 %v1792
        %1887 = vmatpush.msra.mxu0 %v1790
        %1888 = vmatpush.msra.mxu0 %v1788
        %1889 = vmatpush.msra.mxu0 %v1786
        %1890 = vmatmul.f32.gmra.mxu0 %v1834
        %v1891 = vpop.f32.mrf.mxu0
        %v1892 = vadd.f32 0.0, %v1891
        %1893 = vmatmul.f32.gmra.mxu0 %v1837
        %v1894 = vpop.f32.mrf.mxu0
        %v1895 = vadd.f32 0.0, %v1894
        %1896 = vmatmul.f32.gmra.mxu0 %v1840
        %v1897 = vpop.f32.mrf.mxu0
        %v1898 = vadd.f32 0.0, %v1897
        %1899 = vmatmul.f32.gmra.mxu0 %v1843
        %v1900 = vpop.f32.mrf.mxu0
        %v1901 = vadd.f32 0.0, %v1900
        %1902 = vdwg.mxu0
        %v1903 = vadd.f32 %v1596, %v1863
        %v1904 = vadd.f32 %v1625, %v1892
        %v1905 = vadd.f32 %v1599, %v1866
        %v1906 = vadd.f32 %v1628, %v1895
        %v1907 = vadd.f32 %v1602, %v1869
        %v1908 = vadd.f32 %v1631, %v1898
        %v1909 = vadd.f32 %v1605, %v1872
        %v1910 = vadd.f32 %v1634, %v1901
        %s1911 = scalar_lea.vmem %s2, 32
        %v1912 = vld [vmem:[%s1911] sm:$0xff]
        %v1913 = vld [vmem:[%s1911 + $0x8] sm:$0xff]
        %v1914 = vld [vmem:[%s1911 + $0x10] sm:$0xff]
        %v1915 = vld [vmem:[%s1911 + $0x18] sm:$0xff]
        %1917 = vset.pattern.permute.xlu0 0
        %1918 = vperm.xlu0 %1917, %v1912
        %v1919 = vpop.permute.xlu0 %1918
        %1922 = vset.pattern.permute.xlu0 0
        %1923 = vperm.xlu0 %1922, %v1913
        %v1924 = vpop.permute.xlu0 %1923
        %1927 = vset.pattern.permute.xlu0 0
        %1928 = vperm.xlu0 %1927, %v1914
        %v1929 = vpop.permute.xlu0 %1928
        %1932 = vset.pattern.permute.xlu0 0
        %1933 = vperm.xlu0 %1932, %v1915
        %v1934 = vpop.permute.xlu0 %1933
        %v1936 = vadd.f32 %v1903, %v1919
        %v1937 = vadd.f32 %v1904, %v1919
        %v1938 = vadd.f32 %v1905, %v1924
        %v1939 = vadd.f32 %v1906, %v1924
        %v1940 = vadd.f32 %v1907, %v1929
        %v1941 = vadd.f32 %v1908, %v1929
        %v1942 = vadd.f32 %v1909, %v1934
        %v1943 = vadd.f32 %v1910, %v1934
        %v1944 = vmax.f32 %v1936, 0.0
        %v1945 = vmax.f32 %v1937, 0.0
        %v1946 = vmax.f32 %v1938, 0.0
        %v1947 = vmax.f32 %v1939, 0.0
        %v1948 = vmax.f32 %v1940, 0.0
        %v1949 = vmax.f32 %v1941, 0.0
        %v1950 = vmax.f32 %v1942, 0.0
        %v1951 = vmax.f32 %v1943, 0.0
        %1952 = vst [vmem:[#allocation2 + $0x88] sm:$0xff] %v1944
        %1953 = vst [vmem:[#allocation2 + $0x90] sm:$0xff] %v1945
        %1954 = vst [vmem:[#allocation2 + $0xa8] sm:$0xff] %v1946
        %1955 = vst [vmem:[#allocation2 + $0xb0] sm:$0xff] %v1947
        %1956 = vst [vmem:[#allocation2 + $0xc8] sm:$0xff] %v1948
        %1957 = vst [vmem:[#allocation2 + $0xd0] sm:$0xff] %v1949
        %1958 = vst [vmem:[#allocation2 + $0xe8] sm:$0xff] %v1950
        %1959 = vst [vmem:[#allocation2 + $0xf0] sm:$0xff] %v1951
        %v1960 = vld [vmem:[#allocation2 + $0x80] sm:$0xff]
        %v1961 = vld [vmem:[#allocation2 + $0x88] sm:$0xff]
        %v1962 = vld [vmem:[#allocation2 + $0x90] sm:$0xff]
        %v1963 = vld [vmem:[#allocation2 + $0xa0] sm:$0xff]
        %v1964 = vld [vmem:[#allocation2 + $0xa8] sm:$0xff]
        %v1965 = vld [vmem:[#allocation2 + $0xb0] sm:$0xff]
        %v1966 = vld [vmem:[#allocation2 + $0xc0] sm:$0xff]
        %v1967 = vld [vmem:[#allocation2 + $0xc8] sm:$0xff]
        %v1968 = vld [vmem:[#allocation2 + $0xd0] sm:$0xff]
        %v1969 = vld [vmem:[#allocation2 + $0xe0] sm:$0xff]
        %v1970 = vld [vmem:[#allocation2 + $0xe8] sm:$0xff]
        %v1971 = vld [vmem:[#allocation2 + $0xf0] sm:$0xff]
        %v1972 = vmul.f32 %v1960, %v284
        %v1973 = vmul.f32 %v1961, %v288
        %v1974 = vmul.f32 %v1962, %v286
        %v1975 = vmul.f32 %v1963, %v284
        %v1976 = vmul.f32 %v1964, %v288
        %v1977 = vmul.f32 %v1965, %v286
        %v1978 = vmul.f32 %v1966, %v284
        %v1979 = vmul.f32 %v1967, %v288
        %v1980 = vmul.f32 %v1968, %v286
        %v1981 = vmul.f32 %v1969, %v284
        %v1982 = vmul.f32 %v1970, %v288
        %v1983 = vmul.f32 %v1971, %v286
        %1996 = vrot.lane.b32.xlu0 %v1972, 1
        %v1997 = vpop.permute.xlu0 %1996
        %1998 = vrot.lane.b32.xlu0 %v1973, 1
        %v1999 = vpop.permute.xlu0 %1998
        %2000 = vrot.lane.b32.xlu0 %v1974, 1
        %v2001 = vpop.permute.xlu0 %2000
        %2002 = vrot.lane.b32.xlu0 %v1975, 1
        %v2003 = vpop.permute.xlu0 %2002
        %2004 = vrot.lane.b32.xlu0 %v1976, 1
        %v2005 = vpop.permute.xlu0 %2004
        %2006 = vrot.lane.b32.xlu0 %v1977, 1
        %v2007 = vpop.permute.xlu0 %2006
        %2008 = vrot.lane.b32.xlu0 %v1978, 1
        %v2009 = vpop.permute.xlu0 %2008
        %2010 = vrot.lane.b32.xlu0 %v1979, 1
        %v2011 = vpop.permute.xlu0 %2010
        %2012 = vrot.lane.b32.xlu0 %v1980, 1
        %v2013 = vpop.permute.xlu0 %2012
        %2014 = vrot.lane.b32.xlu0 %v1981, 1
        %v2015 = vpop.permute.xlu0 %2014
        %2016 = vrot.lane.b32.xlu0 %v1982, 1
        %v2017 = vpop.permute.xlu0 %2016
        %2018 = vrot.lane.b32.xlu0 %v1983, 1
        %v2019 = vpop.permute.xlu0 %2018
        %v2020 = vsel %vm340, %v1997, %v1999
        %v2021 = vsel %vm340, %v1999, %v2001
        %v2022 = vsel %vm340, %v2003, %v2005
        %v2023 = vsel %vm340, %v2005, %v2007
        %v2024 = vsel %vm340, %v2009, %v2011
        %v2025 = vsel %vm340, %v2011, %v2013
        %v2026 = vsel %vm340, %v2015, %v2017
        %v2027 = vsel %vm340, %v2017, %v2019
        %2036 = vst [vmem:[#allocation2 + $0x8] sm:$0xff] %v2020
        %2037 = vst [vmem:[#allocation2 + $0x10] sm:$0xff] %v2021
        %2038 = vst [vmem:[#allocation2 + $0x28] sm:$0xff] %v2022
        %2039 = vst [vmem:[#allocation2 + $0x30] sm:$0xff] %v2023
        %2040 = vst [vmem:[#allocation2 + $0x48] sm:$0xff] %v2024
        %2041 = vst [vmem:[#allocation2 + $0x50] sm:$0xff] %v2025
        %2042 = vst [vmem:[#allocation2 + $0x68] sm:$0xff] %v2026
        %2043 = vst [vmem:[#allocation2 + $0x70] sm:$0xff] %v2027
        %v2044 = vld [vmem:[#allocation2 + $0x88] sm:$0xff]
        %v2045 = vld [vmem:[#allocation2 + $0x90] sm:$0xff]
        %v2046 = vld [vmem:[#allocation2 + $0x98] sm:$0xff]
        %v2047 = vld [vmem:[#allocation2 + $0xa8] sm:$0xff]
        %v2048 = vld [vmem:[#allocation2 + $0xb0] sm:$0xff]
        %v2049 = vld [vmem:[#allocation2 + $0xb8] sm:$0xff]
        %v2050 = vld [vmem:[#allocation2 + $0xc8] sm:$0xff]
        %v2051 = vld [vmem:[#allocation2 + $0xd0] sm:$0xff]
        %v2052 = vld [vmem:[#allocation2 + $0xd8] sm:$0xff]
        %v2053 = vld [vmem:[#allocation2 + $0xe8] sm:$0xff]
        %v2054 = vld [vmem:[#allocation2 + $0xf0] sm:$0xff]
        %v2055 = vld [vmem:[#allocation2 + $0xf8] sm:$0xff]
        %v2056 = vmul.f32 %v2044, %v380
        %v2057 = vmul.f32 %v2045, %v383
        %v2058 = vmul.f32 %v2046, %v382
        %v2059 = vmul.f32 %v2047, %v380
        %v2060 = vmul.f32 %v2048, %v383
        %v2061 = vmul.f32 %v2049, %v382
        %v2062 = vmul.f32 %v2050, %v380
        %v2063 = vmul.f32 %v2051, %v383
        %v2064 = vmul.f32 %v2052, %v382
        %v2065 = vmul.f32 %v2053, %v380
        %v2066 = vmul.f32 %v2054, %v383
        %v2067 = vmul.f32 %v2055, %v382
        %2080 = vrot.lane.b32.xlu0 %v2056, 127
        %v2081 = vpop.permute.xlu0 %2080
        %2082 = vrot.lane.b32.xlu0 %v2057, 127
        %v2083 = vpop.permute.xlu0 %2082
        %2084 = vrot.lane.b32.xlu0 %v2058, 127
        %v2085 = vpop.permute.xlu0 %2084
        %2086 = vrot.lane.b32.xlu0 %v2059, 127
        %v2087 = vpop.permute.xlu0 %2086
        %2088 = vrot.lane.b32.xlu0 %v2060, 127
        %v2089 = vpop.permute.xlu0 %2088
        %2090 = vrot.lane.b32.xlu0 %v2061, 127
        %v2091 = vpop.permute.xlu0 %2090
        %2092 = vrot.lane.b32.xlu0 %v2062, 127
        %v2093 = vpop.permute.xlu0 %2092
        %2094 = vrot.lane.b32.xlu0 %v2063, 127
        %v2095 = vpop.permute.xlu0 %2094
        %2096 = vrot.lane.b32.xlu0 %v2064, 127
        %v2097 = vpop.permute.xlu0 %2096
        %2098 = vrot.lane.b32.xlu0 %v2065, 127
        %v2099 = vpop.permute.xlu0 %2098
        %2100 = vrot.lane.b32.xlu0 %v2066, 127
        %v2101 = vpop.permute.xlu0 %2100
        %2102 = vrot.lane.b32.xlu0 %v2067, 127
        %v2103 = vpop.permute.xlu0 %2102
        %v2104 = vsel %vm287, %v2081, %v2083
        %v2105 = vsel %vm287, %v2083, %v2085
        %v2106 = vsel %vm287, %v2087, %v2089
        %v2107 = vsel %vm287, %v2089, %v2091
        %v2108 = vsel %vm287, %v2093, %v2095
        %v2109 = vsel %vm287, %v2095, %v2097
        %v2110 = vsel %vm287, %v2099, %v2101
        %v2111 = vsel %vm287, %v2101, %v2103
        %2120 = vst [vmem:[#allocation2 + $0x108] sm:$0xff] %v2104
        %2121 = vst [vmem:[#allocation2 + $0x110] sm:$0xff] %v2105
        %2122 = vst [vmem:[#allocation2 + $0x128] sm:$0xff] %v2106
        %2123 = vst [vmem:[#allocation2 + $0x130] sm:$0xff] %v2107
        %2124 = vst [vmem:[#allocation2 + $0x148] sm:$0xff] %v2108
        %2125 = vst [vmem:[#allocation2 + $0x150] sm:$0xff] %v2109
        %2126 = vst [vmem:[#allocation2 + $0x168] sm:$0xff] %v2110
        %2127 = vst [vmem:[#allocation2 + $0x170] sm:$0xff] %v2111
        %s2128 = scalar_lea.vmem [#allocation3], 192
        %v2129 = vld [vmem:[%s2128] sm:$0xff]
        %v2130 = vld [vmem:[%s2128 + $0x8] sm:$0xff]
        %v2131 = vld [vmem:[%s2128 + $0x10] sm:$0xff]
        %v2132 = vld [vmem:[%s2128 + $0x18] sm:$0xff]
        %v2133 = vld [vmem:[#allocation2] sm:$0xff]
        %v2134 = vld [vmem:[#allocation2 + $0x8] sm:$0xff]
        %v2135 = vld [vmem:[#allocation2 + $0x10] sm:$0xff]
        %v2136 = vld [vmem:[#allocation2 + $0x20] sm:$0xff]
        %v2137 = vld [vmem:[#allocation2 + $0x28] sm:$0xff]
        %v2138 = vld [vmem:[#allocation2 + $0x30] sm:$0xff]
        %v2139 = vld [vmem:[#allocation2 + $0x40] sm:$0xff]
        %v2140 = vld [vmem:[#allocation2 + $0x48] sm:$0xff]
        %v2141 = vld [vmem:[#allocation2 + $0x50] sm:$0xff]
        %v2142 = vld [vmem:[#allocation2 + $0x60] sm:$0xff]
        %v2143 = vld [vmem:[#allocation2 + $0x68] sm:$0xff]
        %v2144 = vld [vmem:[#allocation2 + $0x70] sm:$0xff]
        %v2145 = vld [vmem:[#allocation2 + $0x80] sm:$0xff]
        %v2146 = vld [vmem:[#allocation2 + $0x88] sm:$0xff]
        %v2147 = vld [vmem:[#allocation2 + $0x90] sm:$0xff]
        %v2148 = vld [vmem:[#allocation2 + $0xa0] sm:$0xff]
        %v2149 = vld [vmem:[#allocation2 + $0xa8] sm:$0xff]
        %v2150 = vld [vmem:[#allocation2 + $0xb0] sm:$0xff]
        %v2151 = vld [vmem:[#allocation2 + $0xc0] sm:$0xff]
        %v2152 = vld [vmem:[#allocation2 + $0xc8] sm:$0xff]
        %v2153 = vld [vmem:[#allocation2 + $0xd0] sm:$0xff]
        %v2154 = vld [vmem:[#allocation2 + $0xe0] sm:$0xff]
        %v2155 = vld [vmem:[#allocation2 + $0xe8] sm:$0xff]
        %v2156 = vld [vmem:[#allocation2 + $0xf0] sm:$0xff]
        %v2157 = vld [vmem:[#allocation2 + $0x100] sm:$0xff]
        %v2158 = vld [vmem:[#allocation2 + $0x108] sm:$0xff]
        %v2159 = vld [vmem:[#allocation2 + $0x110] sm:$0xff]
        %v2160 = vld [vmem:[#allocation2 + $0x120] sm:$0xff]
        %v2161 = vld [vmem:[#allocation2 + $0x128] sm:$0xff]
        %v2162 = vld [vmem:[#allocation2 + $0x130] sm:$0xff]
        %v2163 = vld [vmem:[#allocation2 + $0x140] sm:$0xff]
        %v2164 = vld [vmem:[#allocation2 + $0x148] sm:$0xff]
        %v2165 = vld [vmem:[#allocation2 + $0x150] sm:$0xff]
        %v2166 = vld [vmem:[#allocation2 + $0x160] sm:$0xff]
        %v2167 = vld [vmem:[#allocation2 + $0x168] sm:$0xff]
        %v2168 = vld [vmem:[#allocation2 + $0x170] sm:$0xff]
        %s2169 = scalar_lea.vmem [#allocation3], 224
        %v2170 = vld [vmem:[%s2169] sm:$0xff]
        %v2171 = vld [vmem:[%s2169 + $0x8] sm:$0xff]
        %v2172 = vld [vmem:[%s2169 + $0x10] sm:$0xff]
        %v2173 = vld [vmem:[%s2169 + $0x18] sm:$0xff]
        %v2175 = vsel %vm504, %v2170, 0
        %v2178 = vsel %vm504, %v2171, 0
        %v2181 = vsel %vm504, %v2172, 0
        %v2184 = vsel %vm504, %v2173, 0
        %2186 = vmatpush.msra.mxu0 0.0
        %2187 = vmatpush.msra.mxu0 0.0
        %2188 = vmatpush.msra.mxu0 0.0
        %2189 = vmatpush.msra.mxu0 0.0
        %2190 = vmatpush.msra.mxu0 %v2167
        %2191 = vmatpush.msra.mxu0 %v2164
        %2192 = vmatpush.msra.mxu0 %v2161
        %2193 = vmatpush.msra.mxu0 %v2158
        %2194 = vmatpush.msra.mxu0 %v2155
        %2195 = vmatpush.msra.mxu0 %v2152
        %2196 = vmatpush.msra.mxu0 %v2149
        %2197 = vmatpush.msra.mxu0 %v2146
        %2198 = vmatpush.msra.mxu0 %v2143
        %2199 = vmatpush.msra.mxu0 %v2140
        %2200 = vmatpush.msra.mxu0 %v2137
        %2201 = vmatpush.msra.mxu0 %v2134
        %2202 = vmatmul.f32.gmra.mxu0 %v2175
        %v2203 = vpop.f32.mrf.mxu0
        %v2204 = vadd.f32 0.0, %v2203
        %2205 = vmatmul.f32.gmra.mxu0 %v2178
        %v2206 = vpop.f32.mrf.mxu0
        %v2207 = vadd.f32 0.0, %v2206
        %2208 = vmatmul.f32.gmra.mxu0 %v2181
        %v2209 = vpop.f32.mrf.mxu0
        %v2210 = vadd.f32 0.0, %v2209
        %2211 = vmatmul.f32.gmra.mxu0 %v2184
        %v2212 = vpop.f32.mrf.mxu0
        %v2213 = vadd.f32 0.0, %v2212
        %2214 = vdwg.mxu0
        %2215 = vmatpush.msra.mxu0 0.0
        %2216 = vmatpush.msra.mxu0 0.0
        %2217 = vmatpush.msra.mxu0 0.0
        %2218 = vmatpush.msra.mxu0 0.0
        %2219 = vmatpush.msra.mxu0 %v2168
        %2220 = vmatpush.msra.mxu0 %v2165
        %2221 = vmatpush.msra.mxu0 %v2162
        %2222 = vmatpush.msra.mxu0 %v2159
        %2223 = vmatpush.msra.mxu0 %v2156
        %2224 = vmatpush.msra.mxu0 %v2153
        %2225 = vmatpush.msra.mxu0 %v2150
        %2226 = vmatpush.msra.mxu0 %v2147
        %2227 = vmatpush.msra.mxu0 %v2144
        %2228 = vmatpush.msra.mxu0 %v2141
        %2229 = vmatpush.msra.mxu0 %v2138
        %2230 = vmatpush.msra.mxu0 %v2135
        %2231 = vmatmul.f32.gmra.mxu0 %v2175
        %v2232 = vpop.f32.mrf.mxu0
        %v2233 = vadd.f32 0.0, %v2232
        %2234 = vmatmul.f32.gmra.mxu0 %v2178
        %v2235 = vpop.f32.mrf.mxu0
        %v2236 = vadd.f32 0.0, %v2235
        %2237 = vmatmul.f32.gmra.mxu0 %v2181
        %v2238 = vpop.f32.mrf.mxu0
        %v2239 = vadd.f32 0.0, %v2238
        %2240 = vmatmul.f32.gmra.mxu0 %v2184
        %v2241 = vpop.f32.mrf.mxu0
        %v2242 = vadd.f32 0.0, %v2241
        %2243 = vdwg.mxu0
        %2280 = vrot.lane.b32.xlu0 %v2133, 16
        %v2281 = vpop.permute.xlu0 %2280
        %2282 = vrot.lane.b32.xlu0 %v2134, 16
        %v2283 = vpop.permute.xlu0 %2282
        %2284 = vrot.lane.b32.xlu0 %v2135, 16
        %v2285 = vpop.permute.xlu0 %2284
        %2286 = vrot.lane.b32.xlu0 %v2136, 16
        %v2287 = vpop.permute.xlu0 %2286
        %2288 = vrot.lane.b32.xlu0 %v2137, 16
        %v2289 = vpop.permute.xlu0 %2288
        %2290 = vrot.lane.b32.xlu0 %v2138, 16
        %v2291 = vpop.permute.xlu0 %2290
        %2292 = vrot.lane.b32.xlu0 %v2139, 16
        %v2293 = vpop.permute.xlu0 %2292
        %2294 = vrot.lane.b32.xlu0 %v2140, 16
        %v2295 = vpop.permute.xlu0 %2294
        %2296 = vrot.lane.b32.xlu0 %v2141, 16
        %v2297 = vpop.permute.xlu0 %2296
        %2298 = vrot.lane.b32.xlu0 %v2142, 16
        %v2299 = vpop.permute.xlu0 %2298
        %2300 = vrot.lane.b32.xlu0 %v2143, 16
        %v2301 = vpop.permute.xlu0 %2300
        %2302 = vrot.lane.b32.xlu0 %v2144, 16
        %v2303 = vpop.permute.xlu0 %2302
        %2304 = vrot.lane.b32.xlu0 %v2145, 16
        %v2305 = vpop.permute.xlu0 %2304
        %2306 = vrot.lane.b32.xlu0 %v2146, 16
        %v2307 = vpop.permute.xlu0 %2306
        %2308 = vrot.lane.b32.xlu0 %v2147, 16
        %v2309 = vpop.permute.xlu0 %2308
        %2310 = vrot.lane.b32.xlu0 %v2148, 16
        %v2311 = vpop.permute.xlu0 %2310
        %2312 = vrot.lane.b32.xlu0 %v2149, 16
        %v2313 = vpop.permute.xlu0 %2312
        %2314 = vrot.lane.b32.xlu0 %v2150, 16
        %v2315 = vpop.permute.xlu0 %2314
        %2316 = vrot.lane.b32.xlu0 %v2151, 16
        %v2317 = vpop.permute.xlu0 %2316
        %2318 = vrot.lane.b32.xlu0 %v2152, 16
        %v2319 = vpop.permute.xlu0 %2318
        %2320 = vrot.lane.b32.xlu0 %v2153, 16
        %v2321 = vpop.permute.xlu0 %2320
        %2322 = vrot.lane.b32.xlu0 %v2154, 16
        %v2323 = vpop.permute.xlu0 %2322
        %2324 = vrot.lane.b32.xlu0 %v2155, 16
        %v2325 = vpop.permute.xlu0 %2324
        %2326 = vrot.lane.b32.xlu0 %v2156, 16
        %v2327 = vpop.permute.xlu0 %2326
        %2328 = vrot.lane.b32.xlu0 %v2157, 16
        %v2329 = vpop.permute.xlu0 %2328
        %2330 = vrot.lane.b32.xlu0 %v2158, 16
        %v2331 = vpop.permute.xlu0 %2330
        %2332 = vrot.lane.b32.xlu0 %v2159, 16
        %v2333 = vpop.permute.xlu0 %2332
        %2334 = vrot.lane.b32.xlu0 %v2160, 16
        %v2335 = vpop.permute.xlu0 %2334
        %2336 = vrot.lane.b32.xlu0 %v2161, 16
        %v2337 = vpop.permute.xlu0 %2336
        %2338 = vrot.lane.b32.xlu0 %v2162, 16
        %v2339 = vpop.permute.xlu0 %2338
        %2340 = vrot.lane.b32.xlu0 %v2163, 16
        %v2341 = vpop.permute.xlu0 %2340
        %2342 = vrot.lane.b32.xlu0 %v2164, 16
        %v2343 = vpop.permute.xlu0 %2342
        %2344 = vrot.lane.b32.xlu0 %v2165, 16
        %v2345 = vpop.permute.xlu0 %2344
        %2346 = vrot.lane.b32.xlu0 %v2166, 16
        %v2347 = vpop.permute.xlu0 %2346
        %2348 = vrot.lane.b32.xlu0 %v2167, 16
        %v2349 = vpop.permute.xlu0 %2348
        %2350 = vrot.lane.b32.xlu0 %v2168, 16
        %v2351 = vpop.permute.xlu0 %2350
        %v2352 = vsel %vm683, %v2281, %v2283
        %v2353 = vsel %vm683, %v2283, %v2285
        %v2354 = vsel %vm683, %v2287, %v2289
        %v2355 = vsel %vm683, %v2289, %v2291
        %v2356 = vsel %vm683, %v2293, %v2295
        %v2357 = vsel %vm683, %v2295, %v2297
        %v2358 = vsel %vm683, %v2299, %v2301
        %v2359 = vsel %vm683, %v2301, %v2303
        %v2360 = vsel %vm683, %v2305, %v2307
        %v2361 = vsel %vm683, %v2307, %v2309
        %v2362 = vsel %vm683, %v2311, %v2313
        %v2363 = vsel %vm683, %v2313, %v2315
        %v2364 = vsel %vm683, %v2317, %v2319
        %v2365 = vsel %vm683, %v2319, %v2321
        %v2366 = vsel %vm683, %v2323, %v2325
        %v2367 = vsel %vm683, %v2325, %v2327
        %v2368 = vsel %vm683, %v2329, %v2331
        %v2369 = vsel %vm683, %v2331, %v2333
        %v2370 = vsel %vm683, %v2335, %v2337
        %v2371 = vsel %vm683, %v2337, %v2339
        %v2372 = vsel %vm683, %v2341, %v2343
        %v2373 = vsel %vm683, %v2343, %v2345
        %v2374 = vsel %vm683, %v2347, %v2349
        %v2375 = vsel %vm683, %v2349, %v2351
        %v2401 = vsel %vm504, %v2129, 0
        %v2404 = vsel %vm504, %v2130, 0
        %v2407 = vsel %vm504, %v2131, 0
        %v2410 = vsel %vm504, %v2132, 0
        %2412 = vmatpush.msra.mxu0 0.0
        %2413 = vmatpush.msra.mxu0 0.0
        %2414 = vmatpush.msra.mxu0 0.0
        %2415 = vmatpush.msra.mxu0 0.0
        %2416 = vmatpush.msra.mxu0 %v2374
        %2417 = vmatpush.msra.mxu0 %v2372
        %2418 = vmatpush.msra.mxu0 %v2370
        %2419 = vmatpush.msra.mxu0 %v2368
        %2420 = vmatpush.msra.mxu0 %v2366
        %2421 = vmatpush.msra.mxu0 %v2364
        %2422 = vmatpush.msra.mxu0 %v2362
        %2423 = vmatpush.msra.mxu0 %v2360
        %2424 = vmatpush.msra.mxu0 %v2358
        %2425 = vmatpush.msra.mxu0 %v2356
        %2426 = vmatpush.msra.mxu0 %v2354
        %2427 = vmatpush.msra.mxu0 %v2352
        %2428 = vmatmul.f32.gmra.mxu0 %v2401
        %v2429 = vpop.f32.mrf.mxu0
        %v2430 = vadd.f32 %v2204, %v2429
        %2431 = vmatmul.f32.gmra.mxu0 %v2404
        %v2432 = vpop.f32.mrf.mxu0
        %v2433 = vadd.f32 %v2207, %v2432
        %2434 = vmatmul.f32.gmra.mxu0 %v2407
        %v2435 = vpop.f32.mrf.mxu0
        %v2436 = vadd.f32 %v2210, %v2435
        %2437 = vmatmul.f32.gmra.mxu0 %v2410
        %v2438 = vpop.f32.mrf.mxu0
        %v2439 = vadd.f32 %v2213, %v2438
        %2440 = vdwg.mxu0
        %2441 = vmatpush.msra.mxu0 0.0
        %2442 = vmatpush.msra.mxu0 0.0
        %2443 = vmatpush.msra.mxu0 0.0
        %2444 = vmatpush.msra.mxu0 0.0
        %2445 = vmatpush.msra.mxu0 %v2375
        %2446 = vmatpush.msra.mxu0 %v2373
        %2447 = vmatpush.msra.mxu0 %v2371
        %2448 = vmatpush.msra.mxu0 %v2369
        %2449 = vmatpush.msra.mxu0 %v2367
        %2450 = vmatpush.msra.mxu0 %v2365
        %2451 = vmatpush.msra.mxu0 %v2363
        %2452 = vmatpush.msra.mxu0 %v2361
        %2453 = vmatpush.msra.mxu0 %v2359
        %2454 = vmatpush.msra.mxu0 %v2357
        %2455 = vmatpush.msra.mxu0 %v2355
        %2456 = vmatpush.msra.mxu0 %v2353
        %2457 = vmatmul.f32.gmra.mxu0 %v2401
        %v2458 = vpop.f32.mrf.mxu0
        %v2459 = vadd.f32 %v2233, %v2458
        %2460 = vmatmul.f32.gmra.mxu0 %v2404
        %v2461 = vpop.f32.mrf.mxu0
        %v2462 = vadd.f32 %v2236, %v2461
        %2463 = vmatmul.f32.gmra.mxu0 %v2407
        %v2464 = vpop.f32.mrf.mxu0
        %v2465 = vadd.f32 %v2239, %v2464
        %2466 = vmatmul.f32.gmra.mxu0 %v2410
        %v2467 = vpop.f32.mrf.mxu0
        %v2468 = vadd.f32 %v2242, %v2467
        %2469 = vdwg.mxu0
        %s2470 = scalar_lea.vmem [#allocation3], 256
        %v2471 = vld [vmem:[%s2470] sm:$0xff]
        %v2472 = vld [vmem:[%s2470 + $0x8] sm:$0xff]
        %v2473 = vld [vmem:[%s2470 + $0x10] sm:$0xff]
        %v2474 = vld [vmem:[%s2470 + $0x18] sm:$0xff]
        %v2475 = vld [vmem:[#allocation2 + $0x8] sm:$0xff]
        %v2476 = vld [vmem:[#allocation2 + $0x10] sm:$0xff]
        %v2477 = vld [vmem:[#allocation2 + $0x18] sm:$0xff]
        %v2478 = vld [vmem:[#allocation2 + $0x28] sm:$0xff]
        %v2479 = vld [vmem:[#allocation2 + $0x30] sm:$0xff]
        %v2480 = vld [vmem:[#allocation2 + $0x38] sm:$0xff]
        %v2481 = vld [vmem:[#allocation2 + $0x48] sm:$0xff]
        %v2482 = vld [vmem:[#allocation2 + $0x50] sm:$0xff]
        %v2483 = vld [vmem:[#allocation2 + $0x58] sm:$0xff]
        %v2484 = vld [vmem:[#allocation2 + $0x68] sm:$0xff]
        %v2485 = vld [vmem:[#allocation2 + $0x70] sm:$0xff]
        %v2486 = vld [vmem:[#allocation2 + $0x78] sm:$0xff]
        %v2487 = vld [vmem:[#allocation2 + $0x88] sm:$0xff]
        %v2488 = vld [vmem:[#allocation2 + $0x90] sm:$0xff]
        %v2489 = vld [vmem:[#allocation2 + $0x98] sm:$0xff]
        %v2490 = vld [vmem:[#allocation2 + $0xa8] sm:$0xff]
        %v2491 = vld [vmem:[#allocation2 + $0xb0] sm:$0xff]
        %v2492 = vld [vmem:[#allocation2 + $0xb8] sm:$0xff]
        %v2493 = vld [vmem:[#allocation2 + $0xc8] sm:$0xff]
        %v2494 = vld [vmem:[#allocation2 + $0xd0] sm:$0xff]
        %v2495 = vld [vmem:[#allocation2 + $0xd8] sm:$0xff]
        %v2496 = vld [vmem:[#allocation2 + $0xe8] sm:$0xff]
        %v2497 = vld [vmem:[#allocation2 + $0xf0] sm:$0xff]
        %v2498 = vld [vmem:[#allocation2 + $0xf8] sm:$0xff]
        %v2499 = vld [vmem:[#allocation2 + $0x108] sm:$0xff]
        %v2500 = vld [vmem:[#allocation2 + $0x110] sm:$0xff]
        %v2501 = vld [vmem:[#allocation2 + $0x118] sm:$0xff]
        %v2502 = vld [vmem:[#allocation2 + $0x128] sm:$0xff]
        %v2503 = vld [vmem:[#allocation2 + $0x130] sm:$0xff]
        %v2504 = vld [vmem:[#allocation2 + $0x138] sm:$0xff]
        %v2505 = vld [vmem:[#allocation2 + $0x148] sm:$0xff]
        %v2506 = vld [vmem:[#allocation2 + $0x150] sm:$0xff]
        %v2507 = vld [vmem:[#allocation2 + $0x158] sm:$0xff]
        %v2508 = vld [vmem:[#allocation2 + $0x168] sm:$0xff]
        %v2509 = vld [vmem:[#allocation2 + $0x170] sm:$0xff]
        %v2510 = vld [vmem:[#allocation2 + $0x178] sm:$0xff]
        %2547 = vrot.lane.b32.xlu0 %v2475, 112
        %v2548 = vpop.permute.xlu0 %2547
        %2549 = vrot.lane.b32.xlu0 %v2476, 112
        %v2550 = vpop.permute.xlu0 %2549
        %2551 = vrot.lane.b32.xlu0 %v2477, 112
        %v2552 = vpop.permute.xlu0 %2551
        %2553 = vrot.lane.b32.xlu0 %v2478, 112
        %v2554 = vpop.permute.xlu0 %2553
        %2555 = vrot.lane.b32.xlu0 %v2479, 112
        %v2556 = vpop.permute.xlu0 %2555
        %2557 = vrot.lane.b32.xlu0 %v2480, 112
        %v2558 = vpop.permute.xlu0 %2557
        %2559 = vrot.lane.b32.xlu0 %v2481, 112
        %v2560 = vpop.permute.xlu0 %2559
        %2561 = vrot.lane.b32.xlu0 %v2482, 112
        %v2562 = vpop.permute.xlu0 %2561
        %2563 = vrot.lane.b32.xlu0 %v2483, 112
        %v2564 = vpop.permute.xlu0 %2563
        %2565 = vrot.lane.b32.xlu0 %v2484, 112
        %v2566 = vpop.permute.xlu0 %2565
        %2567 = vrot.lane.b32.xlu0 %v2485, 112
        %v2568 = vpop.permute.xlu0 %2567
        %2569 = vrot.lane.b32.xlu0 %v2486, 112
        %v2570 = vpop.permute.xlu0 %2569
        %2571 = vrot.lane.b32.xlu0 %v2487, 112
        %v2572 = vpop.permute.xlu0 %2571
        %2573 = vrot.lane.b32.xlu0 %v2488, 112
        %v2574 = vpop.permute.xlu0 %2573
        %2575 = vrot.lane.b32.xlu0 %v2489, 112
        %v2576 = vpop.permute.xlu0 %2575
        %2577 = vrot.lane.b32.xlu0 %v2490, 112
        %v2578 = vpop.permute.xlu0 %2577
        %2579 = vrot.lane.b32.xlu0 %v2491, 112
        %v2580 = vpop.permute.xlu0 %2579
        %2581 = vrot.lane.b32.xlu0 %v2492, 112
        %v2582 = vpop.permute.xlu0 %2581
        %2583 = vrot.lane.b32.xlu0 %v2493, 112
        %v2584 = vpop.permute.xlu0 %2583
        %2585 = vrot.lane.b32.xlu0 %v2494, 112
        %v2586 = vpop.permute.xlu0 %2585
        %2587 = vrot.lane.b32.xlu0 %v2495, 112
        %v2588 = vpop.permute.xlu0 %2587
        %2589 = vrot.lane.b32.xlu0 %v2496, 112
        %v2590 = vpop.permute.xlu0 %2589
        %2591 = vrot.lane.b32.xlu0 %v2497, 112
        %v2592 = vpop.permute.xlu0 %2591
        %2593 = vrot.lane.b32.xlu0 %v2498, 112
        %v2594 = vpop.permute.xlu0 %2593
        %2595 = vrot.lane.b32.xlu0 %v2499, 112
        %v2596 = vpop.permute.xlu0 %2595
        %2597 = vrot.lane.b32.xlu0 %v2500, 112
        %v2598 = vpop.permute.xlu0 %2597
        %2599 = vrot.lane.b32.xlu0 %v2501, 112
        %v2600 = vpop.permute.xlu0 %2599
        %2601 = vrot.lane.b32.xlu0 %v2502, 112
        %v2602 = vpop.permute.xlu0 %2601
        %2603 = vrot.lane.b32.xlu0 %v2503, 112
        %v2604 = vpop.permute.xlu0 %2603
        %2605 = vrot.lane.b32.xlu0 %v2504, 112
        %v2606 = vpop.permute.xlu0 %2605
        %2607 = vrot.lane.b32.xlu0 %v2505, 112
        %v2608 = vpop.permute.xlu0 %2607
        %2609 = vrot.lane.b32.xlu0 %v2506, 112
        %v2610 = vpop.permute.xlu0 %2609
        %2611 = vrot.lane.b32.xlu0 %v2507, 112
        %v2612 = vpop.permute.xlu0 %2611
        %2613 = vrot.lane.b32.xlu0 %v2508, 112
        %v2614 = vpop.permute.xlu0 %2613
        %2615 = vrot.lane.b32.xlu0 %v2509, 112
        %v2616 = vpop.permute.xlu0 %2615
        %2617 = vrot.lane.b32.xlu0 %v2510, 112
        %v2618 = vpop.permute.xlu0 %2617
        %v2619 = vsel %vm951, %v2548, %v2550
        %v2620 = vsel %vm951, %v2550, %v2552
        %v2621 = vsel %vm951, %v2554, %v2556
        %v2622 = vsel %vm951, %v2556, %v2558
        %v2623 = vsel %vm951, %v2560, %v2562
        %v2624 = vsel %vm951, %v2562, %v2564
        %v2625 = vsel %vm951, %v2566, %v2568
        %v2626 = vsel %vm951, %v2568, %v2570
        %v2627 = vsel %vm951, %v2572, %v2574
        %v2628 = vsel %vm951, %v2574, %v2576
        %v2629 = vsel %vm951, %v2578, %v2580
        %v2630 = vsel %vm951, %v2580, %v2582
        %v2631 = vsel %vm951, %v2584, %v2586
        %v2632 = vsel %vm951, %v2586, %v2588
        %v2633 = vsel %vm951, %v2590, %v2592
        %v2634 = vsel %vm951, %v2592, %v2594
        %v2635 = vsel %vm951, %v2596, %v2598
        %v2636 = vsel %vm951, %v2598, %v2600
        %v2637 = vsel %vm951, %v2602, %v2604
        %v2638 = vsel %vm951, %v2604, %v2606
        %v2639 = vsel %vm951, %v2608, %v2610
        %v2640 = vsel %vm951, %v2610, %v2612
        %v2641 = vsel %vm951, %v2614, %v2616
        %v2642 = vsel %vm951, %v2616, %v2618
        %v2668 = vsel %vm504, %v2471, 0
        %v2671 = vsel %vm504, %v2472, 0
        %v2674 = vsel %vm504, %v2473, 0
        %v2677 = vsel %vm504, %v2474, 0
        %2679 = vmatpush.msra.mxu0 0.0
        %2680 = vmatpush.msra.mxu0 0.0
        %2681 = vmatpush.msra.mxu0 0.0
        %2682 = vmatpush.msra.mxu0 0.0
        %2683 = vmatpush.msra.mxu0 %v2641
        %2684 = vmatpush.msra.mxu0 %v2639
        %2685 = vmatpush.msra.mxu0 %v2637
        %2686 = vmatpush.msra.mxu0 %v2635
        %2687 = vmatpush.msra.mxu0 %v2633
        %2688 = vmatpush.msra.mxu0 %v2631
        %2689 = vmatpush.msra.mxu0 %v2629
        %2690 = vmatpush.msra.mxu0 %v2627
        %2691 = vmatpush.msra.mxu0 %v2625
        %2692 = vmatpush.msra.mxu0 %v2623
        %2693 = vmatpush.msra.mxu0 %v2621
        %2694 = vmatpush.msra.mxu0 %v2619
        %2695 = vmatmul.f32.gmra.mxu0 %v2668
        %v2696 = vpop.f32.mrf.mxu0
        %v2697 = vadd.f32 0.0, %v2696
        %2698 = vmatmul.f32.gmra.mxu0 %v2671
        %v2699 = vpop.f32.mrf.mxu0
        %v2700 = vadd.f32 0.0, %v2699
        %2701 = vmatmul.f32.gmra.mxu0 %v2674
        %v2702 = vpop.f32.mrf.mxu0
        %v2703 = vadd.f32 0.0, %v2702
        %2704 = vmatmul.f32.gmra.mxu0 %v2677
        %v2705 = vpop.f32.mrf.mxu0
        %v2706 = vadd.f32 0.0, %v2705
        %2707 = vdwg.mxu0
        %2708 = vmatpush.msra.mxu0 0.0
        %2709 = vmatpush.msra.mxu0 0.0
        %2710 = vmatpush.msra.mxu0 0.0
        %2711 = vmatpush.msra.mxu0 0.0
        %2712 = vmatpush.msra.mxu0 %v2642
        %2713 = vmatpush.msra.mxu0 %v2640
        %2714 = vmatpush.msra.mxu0 %v2638
        %2715 = vmatpush.msra.mxu0 %v2636
        %2716 = vmatpush.msra.mxu0 %v2634
        %2717 = vmatpush.msra.mxu0 %v2632
        %2718 = vmatpush.msra.mxu0 %v2630
        %2719 = vmatpush.msra.mxu0 %v2628
        %2720 = vmatpush.msra.mxu0 %v2626
        %2721 = vmatpush.msra.mxu0 %v2624
        %2722 = vmatpush.msra.mxu0 %v2622
        %2723 = vmatpush.msra.mxu0 %v2620
        %2724 = vmatmul.f32.gmra.mxu0 %v2668
        %v2725 = vpop.f32.mrf.mxu0
        %v2726 = vadd.f32 0.0, %v2725
        %2727 = vmatmul.f32.gmra.mxu0 %v2671
        %v2728 = vpop.f32.mrf.mxu0
        %v2729 = vadd.f32 0.0, %v2728
        %2730 = vmatmul.f32.gmra.mxu0 %v2674
        %v2731 = vpop.f32.mrf.mxu0
        %v2732 = vadd.f32 0.0, %v2731
        %2733 = vmatmul.f32.gmra.mxu0 %v2677
        %v2734 = vpop.f32.mrf.mxu0
        %v2735 = vadd.f32 0.0, %v2734
        %2736 = vdwg.mxu0
        %v2737 = vadd.f32 %v2430, %v2697
        %v2738 = vadd.f32 %v2459, %v2726
        %v2739 = vadd.f32 %v2433, %v2700
        %v2740 = vadd.f32 %v2462, %v2729
        %v2741 = vadd.f32 %v2436, %v2703
        %v2742 = vadd.f32 %v2465, %v2732
        %v2743 = vadd.f32 %v2439, %v2706
        %v2744 = vadd.f32 %v2468, %v2735
        %s2745 = scalar_lea.vmem %s2, 64
        %v2746 = vld [vmem:[%s2745] sm:$0xff]
        %v2747 = vld [vmem:[%s2745 + $0x8] sm:$0xff]
        %v2748 = vld [vmem:[%s2745 + $0x10] sm:$0xff]
        %v2749 = vld [vmem:[%s2745 + $0x18] sm:$0xff]
        %2751 = vset.pattern.permute.xlu0 0
        %2752 = vperm.xlu0 %2751, %v2746
        %v2753 = vpop.permute.xlu0 %2752
        %2756 = vset.pattern.permute.xlu0 0
        %2757 = vperm.xlu0 %2756, %v2747
        %v2758 = vpop.permute.xlu0 %2757
        %2761 = vset.pattern.permute.xlu0 0
        %2762 = vperm.xlu0 %2761, %v2748
        %v2763 = vpop.permute.xlu0 %2762
        %2766 = vset.pattern.permute.xlu0 0
        %2767 = vperm.xlu0 %2766, %v2749
        %v2768 = vpop.permute.xlu0 %2767
        %v2770 = vadd.f32 %v2737, %v2753
        %v2771 = vadd.f32 %v2738, %v2753
        %v2772 = vadd.f32 %v2739, %v2758
        %v2773 = vadd.f32 %v2740, %v2758
        %v2774 = vadd.f32 %v2741, %v2763
        %v2775 = vadd.f32 %v2742, %v2763
        %v2776 = vadd.f32 %v2743, %v2768
        %v2777 = vadd.f32 %v2744, %v2768
        %v2778 = vmax.f32 %v2770, 0.0
        %v2779 = vmax.f32 %v2771, 0.0
        %v2780 = vmax.f32 %v2772, 0.0
        %v2781 = vmax.f32 %v2773, 0.0
        %v2782 = vmax.f32 %v2774, 0.0
        %v2783 = vmax.f32 %v2775, 0.0
        %v2784 = vmax.f32 %v2776, 0.0
        %v2785 = vmax.f32 %v2777, 0.0
        %2786 = vst [vmem:[#allocation2 + $0x88] sm:$0xff] %v2778
        %2787 = vst [vmem:[#allocation2 + $0x90] sm:$0xff] %v2779
        %2788 = vst [vmem:[#allocation2 + $0xa8] sm:$0xff] %v2780
        %2789 = vst [vmem:[#allocation2 + $0xb0] sm:$0xff] %v2781
        %2790 = vst [vmem:[#allocation2 + $0xc8] sm:$0xff] %v2782
        %2791 = vst [vmem:[#allocation2 + $0xd0] sm:$0xff] %v2783
        %2792 = vst [vmem:[#allocation2 + $0xe8] sm:$0xff] %v2784
        %2793 = vst [vmem:[#allocation2 + $0xf0] sm:$0xff] %v2785
        %v2794 = vld [vmem:[#allocation2 + $0x80] sm:$0xff]
        %v2795 = vld [vmem:[#allocation2 + $0x88] sm:$0xff]
        %v2796 = vld [vmem:[#allocation2 + $0x90] sm:$0xff]
        %v2797 = vld [vmem:[#allocation2 + $0xa0] sm:$0xff]
        %v2798 = vld [vmem:[#allocation2 + $0xa8] sm:$0xff]
        %v2799 = vld [vmem:[#allocation2 + $0xb0] sm:$0xff]
        %v2800 = vld [vmem:[#allocation2 + $0xc0] sm:$0xff]
        %v2801 = vld [vmem:[#allocation2 + $0xc8] sm:$0xff]
        %v2802 = vld [vmem:[#allocation2 + $0xd0] sm:$0xff]
        %v2803 = vld [vmem:[#allocation2 + $0xe0] sm:$0xff]
        %v2804 = vld [vmem:[#allocation2 + $0xe8] sm:$0xff]
        %v2805 = vld [vmem:[#allocation2 + $0xf0] sm:$0xff]
        %v2806 = vmul.f32 %v2794, %v284
        %v2807 = vmul.f32 %v2795, %v288
        %v2808 = vmul.f32 %v2796, %v286
        %v2809 = vmul.f32 %v2797, %v284
        %v2810 = vmul.f32 %v2798, %v288
        %v2811 = vmul.f32 %v2799, %v286
        %v2812 = vmul.f32 %v2800, %v284
        %v2813 = vmul.f32 %v2801, %v288
        %v2814 = vmul.f32 %v2802, %v286
        %v2815 = vmul.f32 %v2803, %v284
        %v2816 = vmul.f32 %v2804, %v288
        %v2817 = vmul.f32 %v2805, %v286
        %2830 = vrot.lane.b32.xlu0 %v2806, 1
        %v2831 = vpop.permute.xlu0 %2830
        %2832 = vrot.lane.b32.xlu0 %v2807, 1
        %v2833 = vpop.permute.xlu0 %2832
        %2834 = vrot.lane.b32.xlu0 %v2808, 1
        %v2835 = vpop.permute.xlu0 %2834
        %2836 = vrot.lane.b32.xlu0 %v2809, 1
        %v2837 = vpop.permute.xlu0 %2836
        %2838 = vrot.lane.b32.xlu0 %v2810, 1
        %v2839 = vpop.permute.xlu0 %2838
        %2840 = vrot.lane.b32.xlu0 %v2811, 1
        %v2841 = vpop.permute.xlu0 %2840
        %2842 = vrot.lane.b32.xlu0 %v2812, 1
        %v2843 = vpop.permute.xlu0 %2842
        %2844 = vrot.lane.b32.xlu0 %v2813, 1
        %v2845 = vpop.permute.xlu0 %2844
        %2846 = vrot.lane.b32.xlu0 %v2814, 1
        %v2847 = vpop.permute.xlu0 %2846
        %2848 = vrot.lane.b32.xlu0 %v2815, 1
        %v2849 = vpop.permute.xlu0 %2848
        %2850 = vrot.lane.b32.xlu0 %v2816, 1
        %v2851 = vpop.permute.xlu0 %2850
        %2852 = vrot.lane.b32.xlu0 %v2817, 1
        %v2853 = vpop.permute.xlu0 %2852
        %v2854 = vsel %vm340, %v2831, %v2833
        %v2855 = vsel %vm340, %v2833, %v2835
        %v2856 = vsel %vm340, %v2837, %v2839
        %v2857 = vsel %vm340, %v2839, %v2841
        %v2858 = vsel %vm340, %v2843, %v2845
        %v2859 = vsel %vm340, %v2845, %v2847
        %v2860 = vsel %vm340, %v2849, %v2851
        %v2861 = vsel %vm340, %v2851, %v2853
        %2870 = vst [vmem:[#allocation2 + $0x8] sm:$0xff] %v2854
        %2871 = vst [vmem:[#allocation2 + $0x10] sm:$0xff] %v2855
        %2872 = vst [vmem:[#allocation2 + $0x28] sm:$0xff] %v2856
        %2873 = vst [vmem:[#allocation2 + $0x30] sm:$0xff] %v2857
        %2874 = vst [vmem:[#allocation2 + $0x48] sm:$0xff] %v2858
        %2875 = vst [vmem:[#allocation2 + $0x50] sm:$0xff] %v2859
        %2876 = vst [vmem:[#allocation2 + $0x68] sm:$0xff] %v2860
        %2877 = vst [vmem:[#allocation2 + $0x70] sm:$0xff] %v2861
        %v2878 = vld [vmem:[#allocation2 + $0x88] sm:$0xff]
        %v2879 = vld [vmem:[#allocation2 + $0x90] sm:$0xff]
        %v2880 = vld [vmem:[#allocation2 + $0x98] sm:$0xff]
        %v2881 = vld [vmem:[#allocation2 + $0xa8] sm:$0xff]
        %v2882 = vld [vmem:[#allocation2 + $0xb0] sm:$0xff]
        %v2883 = vld [vmem:[#allocation2 + $0xb8] sm:$0xff]
        %v2884 = vld [vmem:[#allocation2 + $0xc8] sm:$0xff]
        %v2885 = vld [vmem:[#allocation2 + $0xd0] sm:$0xff]
        %v2886 = vld [vmem:[#allocation2 + $0xd8] sm:$0xff]
        %v2887 = vld [vmem:[#allocation2 + $0xe8] sm:$0xff]
        %v2888 = vld [vmem:[#allocation2 + $0xf0] sm:$0xff]
        %v2889 = vld [vmem:[#allocation2 + $0xf8] sm:$0xff]
        %v2890 = vmul.f32 %v2878, %v380
        %v2891 = vmul.f32 %v2879, %v383
        %v2892 = vmul.f32 %v2880, %v382
        %v2893 = vmul.f32 %v2881, %v380
        %v2894 = vmul.f32 %v2882, %v383
        %v2895 = vmul.f32 %v2883, %v382
        %v2896 = vmul.f32 %v2884, %v380
        %v2897 = vmul.f32 %v2885, %v383
        %v2898 = vmul.f32 %v2886, %v382
        %v2899 = vmul.f32 %v2887, %v380
        %v2900 = vmul.f32 %v2888, %v383
        %v2901 = vmul.f32 %v2889, %v382
        %2914 = vrot.lane.b32.xlu0 %v2890, 127
        %v2915 = vpop.permute.xlu0 %2914
        %2916 = vrot.lane.b32.xlu0 %v2891, 127
        %v2917 = vpop.permute.xlu0 %2916
        %2918 = vrot.lane.b32.xlu0 %v2892, 127
        %v2919 = vpop.permute.xlu0 %2918
        %2920 = vrot.lane.b32.xlu0 %v2893, 127
        %v2921 = vpop.permute.xlu0 %2920
        %2922 = vrot.lane.b32.xlu0 %v2894, 127
        %v2923 = vpop.permute.xlu0 %2922
        %2924 = vrot.lane.b32.xlu0 %v2895, 127
        %v2925 = vpop.permute.xlu0 %2924
        %2926 = vrot.lane.b32.xlu0 %v2896, 127
        %v2927 = vpop.permute.xlu0 %2926
        %2928 = vrot.lane.b32.xlu0 %v2897, 127
        %v2929 = vpop.permute.xlu0 %2928
        %2930 = vrot.lane.b32.xlu0 %v2898, 127
        %v2931 = vpop.permute.xlu0 %2930
        %2932 = vrot.lane.b32.xlu0 %v2899, 127
        %v2933 = vpop.permute.xlu0 %2932
        %2934 = vrot.lane.b32.xlu0 %v2900, 127
        %v2935 = vpop.permute.xlu0 %2934
        %2936 = vrot.lane.b32.xlu0 %v2901, 127
        %v2937 = vpop.permute.xlu0 %2936
        %v2938 = vsel %vm287, %v2915, %v2917
        %v2939 = vsel %vm287, %v2917, %v2919
        %v2940 = vsel %vm287, %v2921, %v2923
        %v2941 = vsel %vm287, %v2923, %v2925
        %v2942 = vsel %vm287, %v2927, %v2929
        %v2943 = vsel %vm287, %v2929, %v2931
        %v2944 = vsel %vm287, %v2933, %v2935
        %v2945 = vsel %vm287, %v2935, %v2937
        %2954 = vst [vmem:[#allocation2 + $0x108] sm:$0xff] %v2938
        %2955 = vst [vmem:[#allocation2 + $0x110] sm:$0xff] %v2939
        %2956 = vst [vmem:[#allocation2 + $0x128] sm:$0xff] %v2940
        %2957 = vst [vmem:[#allocation2 + $0x130] sm:$0xff] %v2941
        %2958 = vst [vmem:[#allocation2 + $0x148] sm:$0xff] %v2942
        %2959 = vst [vmem:[#allocation2 + $0x150] sm:$0xff] %v2943
        %2960 = vst [vmem:[#allocation2 + $0x168] sm:$0xff] %v2944
        %2961 = vst [vmem:[#allocation2 + $0x170] sm:$0xff] %v2945
        %s2962 = scalar_lea.vmem [#allocation3], 288
        %v2963 = vld [vmem:[%s2962] sm:$0xff]
        %v2964 = vld [vmem:[%s2962 + $0x8] sm:$0xff]
        %v2965 = vld [vmem:[%s2962 + $0x10] sm:$0xff]
        %v2966 = vld [vmem:[%s2962 + $0x18] sm:$0xff]
        %v2967 = vld [vmem:[#allocation2] sm:$0xff]
        %v2968 = vld [vmem:[#allocation2 + $0x8] sm:$0xff]
        %v2969 = vld [vmem:[#allocation2 + $0x10] sm:$0xff]
        %v2970 = vld [vmem:[#allocation2 + $0x20] sm:$0xff]
        %v2971 = vld [vmem:[#allocation2 + $0x28] sm:$0xff]
        %v2972 = vld [vmem:[#allocation2 + $0x30] sm:$0xff]
        %v2973 = vld [vmem:[#allocation2 + $0x40] sm:$0xff]
        %v2974 = vld [vmem:[#allocation2 + $0x48] sm:$0xff]
        %v2975 = vld [vmem:[#allocation2 + $0x50] sm:$0xff]
        %v2976 = vld [vmem:[#allocation2 + $0x60] sm:$0xff]
        %v2977 = vld [vmem:[#allocation2 + $0x68] sm:$0xff]
        %v2978 = vld [vmem:[#allocation2 + $0x70] sm:$0xff]
        %v2979 = vld [vmem:[#allocation2 + $0x80] sm:$0xff]
        %v2980 = vld [vmem:[#allocation2 + $0x88] sm:$0xff]
        %v2981 = vld [vmem:[#allocation2 + $0x90] sm:$0xff]
        %v2982 = vld [vmem:[#allocation2 + $0xa0] sm:$0xff]
        %v2983 = vld [vmem:[#allocation2 + $0xa8] sm:$0xff]
        %v2984 = vld [vmem:[#allocation2 + $0xb0] sm:$0xff]
        %v2985 = vld [vmem:[#allocation2 + $0xc0] sm:$0xff]
        %v2986 = vld [vmem:[#allocation2 + $0xc8] sm:$0xff]
        %v2987 = vld [vmem:[#allocation2 + $0xd0] sm:$0xff]
        %v2988 = vld [vmem:[#allocation2 + $0xe0] sm:$0xff]
        %v2989 = vld [vmem:[#allocation2 + $0xe8] sm:$0xff]
        %v2990 = vld [vmem:[#allocation2 + $0xf0] sm:$0xff]
        %v2991 = vld [vmem:[#allocation2 + $0x100] sm:$0xff]
        %v2992 = vld [vmem:[#allocation2 + $0x108] sm:$0xff]
        %v2993 = vld [vmem:[#allocation2 + $0x110] sm:$0xff]
        %v2994 = vld [vmem:[#allocation2 + $0x120] sm:$0xff]
        %v2995 = vld [vmem:[#allocation2 + $0x128] sm:$0xff]
        %v2996 = vld [vmem:[#allocation2 + $0x130] sm:$0xff]
        %v2997 = vld [vmem:[#allocation2 + $0x140] sm:$0xff]
        %v2998 = vld [vmem:[#allocation2 + $0x148] sm:$0xff]
        %v2999 = vld [vmem:[#allocation2 + $0x150] sm:$0xff]
        %v3000 = vld [vmem:[#allocation2 + $0x160] sm:$0xff]
        %v3001 = vld [vmem:[#allocation2 + $0x168] sm:$0xff]
        %v3002 = vld [vmem:[#allocation2 + $0x170] sm:$0xff]
        %s3003 = scalar_lea.vmem [#allocation3], 320
        %v3004 = vld [vmem:[%s3003] sm:$0xff]
        %v3005 = vld [vmem:[%s3003 + $0x8] sm:$0xff]
        %v3006 = vld [vmem:[%s3003 + $0x10] sm:$0xff]
        %v3007 = vld [vmem:[%s3003 + $0x18] sm:$0xff]
        %v3009 = vsel %vm504, %v3004, 0
        %v3012 = vsel %vm504, %v3005, 0
        %v3015 = vsel %vm504, %v3006, 0
        %v3018 = vsel %vm504, %v3007, 0
        %3020 = vmatpush.msra.mxu0 0.0
        %3021 = vmatpush.msra.mxu0 0.0
        %3022 = vmatpush.msra.mxu0 0.0
        %3023 = vmatpush.msra.mxu0 0.0
        %3024 = vmatpush.msra.mxu0 %v3001
        %3025 = vmatpush.msra.mxu0 %v2998
        %3026 = vmatpush.msra.mxu0 %v2995
        %3027 = vmatpush.msra.mxu0 %v2992
        %3028 = vmatpush.msra.mxu0 %v2989
        %3029 = vmatpush.msra.mxu0 %v2986
        %3030 = vmatpush.msra.mxu0 %v2983
        %3031 = vmatpush.msra.mxu0 %v2980
        %3032 = vmatpush.msra.mxu0 %v2977
        %3033 = vmatpush.msra.mxu0 %v2974
        %3034 = vmatpush.msra.mxu0 %v2971
        %3035 = vmatpush.msra.mxu0 %v2968
        %3036 = vmatmul.f32.gmra.mxu0 %v3009
        %v3037 = vpop.f32.mrf.mxu0
        %v3038 = vadd.f32 0.0, %v3037
        %3039 = vmatmul.f32.gmra.mxu0 %v3012
        %v3040 = vpop.f32.mrf.mxu0
        %v3041 = vadd.f32 0.0, %v3040
        %3042 = vmatmul.f32.gmra.mxu0 %v3015
        %v3043 = vpop.f32.mrf.mxu0
        %v3044 = vadd.f32 0.0, %v3043
        %3045 = vmatmul.f32.gmra.mxu0 %v3018
        %v3046 = vpop.f32.mrf.mxu0
        %v3047 = vadd.f32 0.0, %v3046
        %3048 = vdwg.mxu0
        %3049 = vmatpush.msra.mxu0 0.0
        %3050 = vmatpush.msra.mxu0 0.0
        %3051 = vmatpush.msra.mxu0 0.0
        %3052 = vmatpush.msra.mxu0 0.0
        %3053 = vmatpush.msra.mxu0 %v3002
        %3054 = vmatpush.msra.mxu0 %v2999
        %3055 = vmatpush.msra.mxu0 %v2996
        %3056 = vmatpush.msra.mxu0 %v2993
        %3057 = vmatpush.msra.mxu0 %v2990
        %3058 = vmatpush.msra.mxu0 %v2987
        %3059 = vmatpush.msra.mxu0 %v2984
        %3060 = vmatpush.msra.mxu0 %v2981
        %3061 = vmatpush.msra.mxu0 %v2978
        %3062 = vmatpush.msra.mxu0 %v2975
        %3063 = vmatpush.msra.mxu0 %v2972
        %3064 = vmatpush.msra.mxu0 %v2969
        %3065 = vmatmul.f32.gmra.mxu0 %v3009
        %v3066 = vpop.f32.mrf.mxu0
        %v3067 = vadd.f32 0.0, %v3066
        %3068 = vmatmul.f32.gmra.mxu0 %v3012
        %v3069 = vpop.f32.mrf.mxu0
        %v3070 = vadd.f32 0.0, %v3069
        %3071 = vmatmul.f32.gmra.mxu0 %v3015
        %v3072 = vpop.f32.mrf.mxu0
        %v3073 = vadd.f32 0.0, %v3072
        %3074 = vmatmul.f32.gmra.mxu0 %v3018
        %v3075 = vpop.f32.mrf.mxu0
        %v3076 = vadd.f32 0.0, %v3075
        %3077 = vdwg.mxu0
        %3114 = vrot.lane.b32.xlu0 %v2967, 16
        %v3115 = vpop.permute.xlu0 %3114
        %3116 = vrot.lane.b32.xlu0 %v2968, 16
        %v3117 = vpop.permute.xlu0 %3116
        %3118 = vrot.lane.b32.xlu0 %v2969, 16
        %v3119 = vpop.permute.xlu0 %3118
        %3120 = vrot.lane.b32.xlu0 %v2970, 16
        %v3121 = vpop.permute.xlu0 %3120
        %3122 = vrot.lane.b32.xlu0 %v2971, 16
        %v3123 = vpop.permute.xlu0 %3122
        %3124 = vrot.lane.b32.xlu0 %v2972, 16
        %v3125 = vpop.permute.xlu0 %3124
        %3126 = vrot.lane.b32.xlu0 %v2973, 16
        %v3127 = vpop.permute.xlu0 %3126
        %3128 = vrot.lane.b32.xlu0 %v2974, 16
        %v3129 = vpop.permute.xlu0 %3128
        %3130 = vrot.lane.b32.xlu0 %v2975, 16
        %v3131 = vpop.permute.xlu0 %3130
        %3132 = vrot.lane.b32.xlu0 %v2976, 16
        %v3133 = vpop.permute.xlu0 %3132
        %3134 = vrot.lane.b32.xlu0 %v2977, 16
        %v3135 = vpop.permute.xlu0 %3134
        %3136 = vrot.lane.b32.xlu0 %v2978, 16
        %v3137 = vpop.permute.xlu0 %3136
        %3138 = vrot.lane.b32.xlu0 %v2979, 16
        %v3139 = vpop.permute.xlu0 %3138
        %3140 = vrot.lane.b32.xlu0 %v2980, 16
        %v3141 = vpop.permute.xlu0 %3140
        %3142 = vrot.lane.b32.xlu0 %v2981, 16
        %v3143 = vpop.permute.xlu0 %3142
        %3144 = vrot.lane.b32.xlu0 %v2982, 16
        %v3145 = vpop.permute.xlu0 %3144
        %3146 = vrot.lane.b32.xlu0 %v2983, 16
        %v3147 = vpop.permute.xlu0 %3146
        %3148 = vrot.lane.b32.xlu0 %v2984, 16
        %v3149 = vpop.permute.xlu0 %3148
        %3150 = vrot.lane.b32.xlu0 %v2985, 16
        %v3151 = vpop.permute.xlu0 %3150
        %3152 = vrot.lane.b32.xlu0 %v2986, 16
        %v3153 = vpop.permute.xlu0 %3152
        %3154 = vrot.lane.b32.xlu0 %v2987, 16
        %v3155 = vpop.permute.xlu0 %3154
        %3156 = vrot.lane.b32.xlu0 %v2988, 16
        %v3157 = vpop.permute.xlu0 %3156
        %3158 = vrot.lane.b32.xlu0 %v2989, 16
        %v3159 = vpop.permute.xlu0 %3158
        %3160 = vrot.lane.b32.xlu0 %v2990, 16
        %v3161 = vpop.permute.xlu0 %3160
        %3162 = vrot.lane.b32.xlu0 %v2991, 16
        %v3163 = vpop.permute.xlu0 %3162
        %3164 = vrot.lane.b32.xlu0 %v2992, 16
        %v3165 = vpop.permute.xlu0 %3164
        %3166 = vrot.lane.b32.xlu0 %v2993, 16
        %v3167 = vpop.permute.xlu0 %3166
        %3168 = vrot.lane.b32.xlu0 %v2994, 16
        %v3169 = vpop.permute.xlu0 %3168
        %3170 = vrot.lane.b32.xlu0 %v2995, 16
        %v3171 = vpop.permute.xlu0 %3170
        %3172 = vrot.lane.b32.xlu0 %v2996, 16
        %v3173 = vpop.permute.xlu0 %3172
        %3174 = vrot.lane.b32.xlu0 %v2997, 16
        %v3175 = vpop.permute.xlu0 %3174
        %3176 = vrot.lane.b32.xlu0 %v2998, 16
        %v3177 = vpop.permute.xlu0 %3176
        %3178 = vrot.lane.b32.xlu0 %v2999, 16
        %v3179 = vpop.permute.xlu0 %3178
        %3180 = vrot.lane.b32.xlu0 %v3000, 16
        %v3181 = vpop.permute.xlu0 %3180
        %3182 = vrot.lane.b32.xlu0 %v3001, 16
        %v3183 = vpop.permute.xlu0 %3182
        %3184 = vrot.lane.b32.xlu0 %v3002, 16
        %v3185 = vpop.permute.xlu0 %3184
        %v3186 = vsel %vm683, %v3115, %v3117
        %v3187 = vsel %vm683, %v3117, %v3119
        %v3188 = vsel %vm683, %v3121, %v3123
        %v3189 = vsel %vm683, %v3123, %v3125
        %v3190 = vsel %vm683, %v3127, %v3129
        %v3191 = vsel %vm683, %v3129, %v3131
        %v3192 = vsel %vm683, %v3133, %v3135
        %v3193 = vsel %vm683, %v3135, %v3137
        %v3194 = vsel %vm683, %v3139, %v3141
        %v3195 = vsel %vm683, %v3141, %v3143
        %v3196 = vsel %vm683, %v3145, %v3147
        %v3197 = vsel %vm683, %v3147, %v3149
        %v3198 = vsel %vm683, %v3151, %v3153
        %v3199 = vsel %vm683, %v3153, %v3155
        %v3200 = vsel %vm683, %v3157, %v3159
        %v3201 = vsel %vm683, %v3159, %v3161
        %v3202 = vsel %vm683, %v3163, %v3165
        %v3203 = vsel %vm683, %v3165, %v3167
        %v3204 = vsel %vm683, %v3169, %v3171
        %v3205 = vsel %vm683, %v3171, %v3173
        %v3206 = vsel %vm683, %v3175, %v3177
        %v3207 = vsel %vm683, %v3177, %v3179
        %v3208 = vsel %vm683, %v3181, %v3183
        %v3209 = vsel %vm683, %v3183, %v3185
        %v3235 = vsel %vm504, %v2963, 0
        %v3238 = vsel %vm504, %v2964, 0
        %v3241 = vsel %vm504, %v2965, 0
        %v3244 = vsel %vm504, %v2966, 0
        %3246 = vmatpush.msra.mxu0 0.0
        %3247 = vmatpush.msra.mxu0 0.0
        %3248 = vmatpush.msra.mxu0 0.0
        %3249 = vmatpush.msra.mxu0 0.0
        %3250 = vmatpush.msra.mxu0 %v3208
        %3251 = vmatpush.msra.mxu0 %v3206
        %3252 = vmatpush.msra.mxu0 %v3204
        %3253 = vmatpush.msra.mxu0 %v3202
        %3254 = vmatpush.msra.mxu0 %v3200
        %3255 = vmatpush.msra.mxu0 %v3198
        %3256 = vmatpush.msra.mxu0 %v3196
        %3257 = vmatpush.msra.mxu0 %v3194
        %3258 = vmatpush.msra.mxu0 %v3192
        %3259 = vmatpush.msra.mxu0 %v3190
        %3260 = vmatpush.msra.mxu0 %v3188
        %3261 = vmatpush.msra.mxu0 %v3186
        %3262 = vmatmul.f32.gmra.mxu0 %v3235
        %v3263 = vpop.f32.mrf.mxu0
        %v3264 = vadd.f32 %v3038, %v3263
        %3265 = vmatmul.f32.gmra.mxu0 %v3238
        %v3266 = vpop.f32.mrf.mxu0
        %v3267 = vadd.f32 %v3041, %v3266
        %3268 = vmatmul.f32.gmra.mxu0 %v3241
        %v3269 = vpop.f32.mrf.mxu0
        %v3270 = vadd.f32 %v3044, %v3269
        %3271 = vmatmul.f32.gmra.mxu0 %v3244
        %v3272 = vpop.f32.mrf.mxu0
        %v3273 = vadd.f32 %v3047, %v3272
        %3274 = vdwg.mxu0
        %3275 = vmatpush.msra.mxu0 0.0
        %3276 = vmatpush.msra.mxu0 0.0
        %3277 = vmatpush.msra.mxu0 0.0
        %3278 = vmatpush.msra.mxu0 0.0
        %3279 = vmatpush.msra.mxu0 %v3209
        %3280 = vmatpush.msra.mxu0 %v3207
        %3281 = vmatpush.msra.mxu0 %v3205
        %3282 = vmatpush.msra.mxu0 %v3203
        %3283 = vmatpush.msra.mxu0 %v3201
        %3284 = vmatpush.msra.mxu0 %v3199
        %3285 = vmatpush.msra.mxu0 %v3197
        %3286 = vmatpush.msra.mxu0 %v3195
        %3287 = vmatpush.msra.mxu0 %v3193
        %3288 = vmatpush.msra.mxu0 %v3191
        %3289 = vmatpush.msra.mxu0 %v3189
        %3290 = vmatpush.msra.mxu0 %v3187
        %3291 = vmatmul.f32.gmra.mxu0 %v3235
        %v3292 = vpop.f32.mrf.mxu0
        %v3293 = vadd.f32 %v3067, %v3292
        %3294 = vmatmul.f32.gmra.mxu0 %v3238
        %v3295 = vpop.f32.mrf.mxu0
        %v3296 = vadd.f32 %v3070, %v3295
        %3297 = vmatmul.f32.gmra.mxu0 %v3241
        %v3298 = vpop.f32.mrf.mxu0
        %v3299 = vadd.f32 %v3073, %v3298
        %3300 = vmatmul.f32.gmra.mxu0 %v3244
        %v3301 = vpop.f32.mrf.mxu0
        %v3302 = vadd.f32 %v3076, %v3301
        %3303 = vdwg.mxu0
        %s3304 = scalar_lea.vmem [#allocation3], 352
        %v3305 = vld [vmem:[%s3304] sm:$0xff]
        %v3306 = vld [vmem:[%s3304 + $0x8] sm:$0xff]
        %v3307 = vld [vmem:[%s3304 + $0x10] sm:$0xff]
        %v3308 = vld [vmem:[%s3304 + $0x18] sm:$0xff]
        %v3309 = vld [vmem:[#allocation2 + $0x8] sm:$0xff]
        %v3310 = vld [vmem:[#allocation2 + $0x10] sm:$0xff]
        %v3311 = vld [vmem:[#allocation2 + $0x18] sm:$0xff]
        %v3312 = vld [vmem:[#allocation2 + $0x28] sm:$0xff]
        %v3313 = vld [vmem:[#allocation2 + $0x30] sm:$0xff]
        %v3314 = vld [vmem:[#allocation2 + $0x38] sm:$0xff]
        %v3315 = vld [vmem:[#allocation2 + $0x48] sm:$0xff]
        %v3316 = vld [vmem:[#allocation2 + $0x50] sm:$0xff]
        %v3317 = vld [vmem:[#allocation2 + $0x58] sm:$0xff]
        %v3318 = vld [vmem:[#allocation2 + $0x68] sm:$0xff]
        %v3319 = vld [vmem:[#allocation2 + $0x70] sm:$0xff]
        %v3320 = vld [vmem:[#allocation2 + $0x78] sm:$0xff]
        %v3321 = vld [vmem:[#allocation2 + $0x88] sm:$0xff]
        %v3322 = vld [vmem:[#allocation2 + $0x90] sm:$0xff]
        %v3323 = vld [vmem:[#allocation2 + $0x98] sm:$0xff]
        %v3324 = vld [vmem:[#allocation2 + $0xa8] sm:$0xff]
        %v3325 = vld [vmem:[#allocation2 + $0xb0] sm:$0xff]
        %v3326 = vld [vmem:[#allocation2 + $0xb8] sm:$0xff]
        %v3327 = vld [vmem:[#allocation2 + $0xc8] sm:$0xff]
        %v3328 = vld [vmem:[#allocation2 + $0xd0] sm:$0xff]
        %v3329 = vld [vmem:[#allocation2 + $0xd8] sm:$0xff]
        %v3330 = vld [vmem:[#allocation2 + $0xe8] sm:$0xff]
        %v3331 = vld [vmem:[#allocation2 + $0xf0] sm:$0xff]
        %v3332 = vld [vmem:[#allocation2 + $0xf8] sm:$0xff]
        %v3333 = vld [vmem:[#allocation2 + $0x108] sm:$0xff]
        %v3334 = vld [vmem:[#allocation2 + $0x110] sm:$0xff]
        %v3335 = vld [vmem:[#allocation2 + $0x118] sm:$0xff]
        %v3336 = vld [vmem:[#allocation2 + $0x128] sm:$0xff]
        %v3337 = vld [vmem:[#allocation2 + $0x130] sm:$0xff]
        %v3338 = vld [vmem:[#allocation2 + $0x138] sm:$0xff]
        %v3339 = vld [vmem:[#allocation2 + $0x148] sm:$0xff]
        %v3340 = vld [vmem:[#allocation2 + $0x150] sm:$0xff]
        %v3341 = vld [vmem:[#allocation2 + $0x158] sm:$0xff]
        %v3342 = vld [vmem:[#allocation2 + $0x168] sm:$0xff]
        %v3343 = vld [vmem:[#allocation2 + $0x170] sm:$0xff]
        %v3344 = vld [vmem:[#allocation2 + $0x178] sm:$0xff]
        %3381 = vrot.lane.b32.xlu0 %v3309, 112
        %v3382 = vpop.permute.xlu0 %3381
        %3383 = vrot.lane.b32.xlu0 %v3310, 112
        %v3384 = vpop.permute.xlu0 %3383
        %3385 = vrot.lane.b32.xlu0 %v3311, 112
        %v3386 = vpop.permute.xlu0 %3385
        %3387 = vrot.lane.b32.xlu0 %v3312, 112
        %v3388 = vpop.permute.xlu0 %3387
        %3389 = vrot.lane.b32.xlu0 %v3313, 112
        %v3390 = vpop.permute.xlu0 %3389
        %3391 = vrot.lane.b32.xlu0 %v3314, 112
        %v3392 = vpop.permute.xlu0 %3391
        %3393 = vrot.lane.b32.xlu0 %v3315, 112
        %v3394 = vpop.permute.xlu0 %3393
        %3395 = vrot.lane.b32.xlu0 %v3316, 112
        %v3396 = vpop.permute.xlu0 %3395
        %3397 = vrot.lane.b32.xlu0 %v3317, 112
        %v3398 = vpop.permute.xlu0 %3397
        %3399 = vrot.lane.b32.xlu0 %v3318, 112
        %v3400 = vpop.permute.xlu0 %3399
        %3401 = vrot.lane.b32.xlu0 %v3319, 112
        %v3402 = vpop.permute.xlu0 %3401
        %3403 = vrot.lane.b32.xlu0 %v3320, 112
        %v3404 = vpop.permute.xlu0 %3403
        %3405 = vrot.lane.b32.xlu0 %v3321, 112
        %v3406 = vpop.permute.xlu0 %3405
        %3407 = vrot.lane.b32.xlu0 %v3322, 112
        %v3408 = vpop.permute.xlu0 %3407
        %3409 = vrot.lane.b32.xlu0 %v3323, 112
        %v3410 = vpop.permute.xlu0 %3409
        %3411 = vrot.lane.b32.xlu0 %v3324, 112
        %v3412 = vpop.permute.xlu0 %3411
        %3413 = vrot.lane.b32.xlu0 %v3325, 112
        %v3414 = vpop.permute.xlu0 %3413
        %3415 = vrot.lane.b32.xlu0 %v3326, 112
        %v3416 = vpop.permute.xlu0 %3415
        %3417 = vrot.lane.b32.xlu0 %v3327, 112
        %v3418 = vpop.permute.xlu0 %3417
        %3419 = vrot.lane.b32.xlu0 %v3328, 112
        %v3420 = vpop.permute.xlu0 %3419
        %3421 = vrot.lane.b32.xlu0 %v3329, 112
        %v3422 = vpop.permute.xlu0 %3421
        %3423 = vrot.lane.b32.xlu0 %v3330, 112
        %v3424 = vpop.permute.xlu0 %3423
        %3425 = vrot.lane.b32.xlu0 %v3331, 112
        %v3426 = vpop.permute.xlu0 %3425
        %3427 = vrot.lane.b32.xlu0 %v3332, 112
        %v3428 = vpop.permute.xlu0 %3427
        %3429 = vrot.lane.b32.xlu0 %v3333, 112
        %v3430 = vpop.permute.xlu0 %3429
        %3431 = vrot.lane.b32.xlu0 %v3334, 112
        %v3432 = vpop.permute.xlu0 %3431
        %3433 = vrot.lane.b32.xlu0 %v3335, 112
        %v3434 = vpop.permute.xlu0 %3433
        %3435 = vrot.lane.b32.xlu0 %v3336, 112
        %v3436 = vpop.permute.xlu0 %3435
        %3437 = vrot.lane.b32.xlu0 %v3337, 112
        %v3438 = vpop.permute.xlu0 %3437
        %3439 = vrot.lane.b32.xlu0 %v3338, 112
        %v3440 = vpop.permute.xlu0 %3439
        %3441 = vrot.lane.b32.xlu0 %v3339, 112
        %v3442 = vpop.permute.xlu0 %3441
        %3443 = vrot.lane.b32.xlu0 %v3340, 112
        %v3444 = vpop.permute.xlu0 %3443
        %3445 = vrot.lane.b32.xlu0 %v3341, 112
        %v3446 = vpop.permute.xlu0 %3445
        %3447 = vrot.lane.b32.xlu0 %v3342, 112
        %v3448 = vpop.permute.xlu0 %3447
        %3449 = vrot.lane.b32.xlu0 %v3343, 112
        %v3450 = vpop.permute.xlu0 %3449
        %3451 = vrot.lane.b32.xlu0 %v3344, 112
        %v3452 = vpop.permute.xlu0 %3451
        %v3453 = vsel %vm951, %v3382, %v3384
        %v3454 = vsel %vm951, %v3384, %v3386
        %v3455 = vsel %vm951, %v3388, %v3390
        %v3456 = vsel %vm951, %v3390, %v3392
        %v3457 = vsel %vm951, %v3394, %v3396
        %v3458 = vsel %vm951, %v3396, %v3398
        %v3459 = vsel %vm951, %v3400, %v3402
        %v3460 = vsel %vm951, %v3402, %v3404
        %v3461 = vsel %vm951, %v3406, %v3408
        %v3462 = vsel %vm951, %v3408, %v3410
        %v3463 = vsel %vm951, %v3412, %v3414
        %v3464 = vsel %vm951, %v3414, %v3416
        %v3465 = vsel %vm951, %v3418, %v3420
        %v3466 = vsel %vm951, %v3420, %v3422
        %v3467 = vsel %vm951, %v3424, %v3426
        %v3468 = vsel %vm951, %v3426, %v3428
        %v3469 = vsel %vm951, %v3430, %v3432
        %v3470 = vsel %vm951, %v3432, %v3434
        %v3471 = vsel %vm951, %v3436, %v3438
        %v3472 = vsel %vm951, %v3438, %v3440
        %v3473 = vsel %vm951, %v3442, %v3444
        %v3474 = vsel %vm951, %v3444, %v3446
        %v3475 = vsel %vm951, %v3448, %v3450
        %v3476 = vsel %vm951, %v3450, %v3452
        %v3502 = vsel %vm504, %v3305, 0
        %v3505 = vsel %vm504, %v3306, 0
        %v3508 = vsel %vm504, %v3307, 0
        %v3511 = vsel %vm504, %v3308, 0
        %3513 = vmatpush.msra.mxu0 0.0
        %3514 = vmatpush.msra.mxu0 0.0
        %3515 = vmatpush.msra.mxu0 0.0
        %3516 = vmatpush.msra.mxu0 0.0
        %3517 = vmatpush.msra.mxu0 %v3475
        %3518 = vmatpush.msra.mxu0 %v3473
        %3519 = vmatpush.msra.mxu0 %v3471
        %3520 = vmatpush.msra.mxu0 %v3469
        %3521 = vmatpush.msra.mxu0 %v3467
        %3522 = vmatpush.msra.mxu0 %v3465
        %3523 = vmatpush.msra.mxu0 %v3463
        %3524 = vmatpush.msra.mxu0 %v3461
        %3525 = vmatpush.msra.mxu0 %v3459
        %3526 = vmatpush.msra.mxu0 %v3457
        %3527 = vmatpush.msra.mxu0 %v3455
        %3528 = vmatpush.msra.mxu0 %v3453
        %3529 = vmatmul.f32.gmra.mxu0 %v3502
        %v3530 = vpop.f32.mrf.mxu0
        %v3531 = vadd.f32 0.0, %v3530
        %3532 = vmatmul.f32.gmra.mxu0 %v3505
        %v3533 = vpop.f32.mrf.mxu0
        %v3534 = vadd.f32 0.0, %v3533
        %3535 = vmatmul.f32.gmra.mxu0 %v3508
        %v3536 = vpop.f32.mrf.mxu0
        %v3537 = vadd.f32 0.0, %v3536
        %3538 = vmatmul.f32.gmra.mxu0 %v3511
        %v3539 = vpop.f32.mrf.mxu0
        %v3540 = vadd.f32 0.0, %v3539
        %3541 = vdwg.mxu0
        %3542 = vmatpush.msra.mxu0 0.0
        %3543 = vmatpush.msra.mxu0 0.0
        %3544 = vmatpush.msra.mxu0 0.0
        %3545 = vmatpush.msra.mxu0 0.0
        %3546 = vmatpush.msra.mxu0 %v3476
        %3547 = vmatpush.msra.mxu0 %v3474
        %3548 = vmatpush.msra.mxu0 %v3472
        %3549 = vmatpush.msra.mxu0 %v3470
        %3550 = vmatpush.msra.mxu0 %v3468
        %3551 = vmatpush.msra.mxu0 %v3466
        %3552 = vmatpush.msra.mxu0 %v3464
        %3553 = vmatpush.msra.mxu0 %v3462
        %3554 = vmatpush.msra.mxu0 %v3460
        %3555 = vmatpush.msra.mxu0 %v3458
        %3556 = vmatpush.msra.mxu0 %v3456
        %3557 = vmatpush.msra.mxu0 %v3454
        %3558 = vmatmul.f32.gmra.mxu0 %v3502
        %v3559 = vpop.f32.mrf.mxu0
        %v3560 = vadd.f32 0.0, %v3559
        %3561 = vmatmul.f32.gmra.mxu0 %v3505
        %v3562 = vpop.f32.mrf.mxu0
        %v3563 = vadd.f32 0.0, %v3562
        %3564 = vmatmul.f32.gmra.mxu0 %v3508
        %v3565 = vpop.f32.mrf.mxu0
        %v3566 = vadd.f32 0.0, %v3565
        %3567 = vmatmul.f32.gmra.mxu0 %v3511
        %v3568 = vpop.f32.mrf.mxu0
        %v3569 = vadd.f32 0.0, %v3568
        %3570 = vdwg.mxu0
        %v3571 = vadd.f32 %v3264, %v3531
        %v3572 = vadd.f32 %v3293, %v3560
        %v3573 = vadd.f32 %v3267, %v3534
        %v3574 = vadd.f32 %v3296, %v3563
        %v3575 = vadd.f32 %v3270, %v3537
        %v3576 = vadd.f32 %v3299, %v3566
        %v3577 = vadd.f32 %v3273, %v3540
        %v3578 = vadd.f32 %v3302, %v3569
        %s3579 = scalar_lea.vmem %s2, 96
        %v3580 = vld [vmem:[%s3579] sm:$0xff]
        %v3581 = vld [vmem:[%s3579 + $0x8] sm:$0xff]
        %v3582 = vld [vmem:[%s3579 + $0x10] sm:$0xff]
        %v3583 = vld [vmem:[%s3579 + $0x18] sm:$0xff]
        %3585 = vset.pattern.permute.xlu0 0
        %3586 = vperm.xlu0 %3585, %v3580
        %v3587 = vpop.permute.xlu0 %3586
        %3590 = vset.pattern.permute.xlu0 0
        %3591 = vperm.xlu0 %3590, %v3581
        %v3592 = vpop.permute.xlu0 %3591
        %3595 = vset.pattern.permute.xlu0 0
        %3596 = vperm.xlu0 %3595, %v3582
        %v3597 = vpop.permute.xlu0 %3596
        %3600 = vset.pattern.permute.xlu0 0
        %3601 = vperm.xlu0 %3600, %v3583
        %v3602 = vpop.permute.xlu0 %3601
        %v3604 = vadd.f32 %v3571, %v3587
        %v3605 = vadd.f32 %v3572, %v3587
        %v3606 = vadd.f32 %v3573, %v3592
        %v3607 = vadd.f32 %v3574, %v3592
        %v3608 = vadd.f32 %v3575, %v3597
        %v3609 = vadd.f32 %v3576, %v3597
        %v3610 = vadd.f32 %v3577, %v3602
        %v3611 = vadd.f32 %v3578, %v3602
        %v3612 = vmax.f32 %v3604, 0.0
        %v3613 = vmax.f32 %v3605, 0.0
        %v3614 = vmax.f32 %v3606, 0.0
        %v3615 = vmax.f32 %v3607, 0.0
        %v3616 = vmax.f32 %v3608, 0.0
        %v3617 = vmax.f32 %v3609, 0.0
        %v3618 = vmax.f32 %v3610, 0.0
        %v3619 = vmax.f32 %v3611, 0.0
        %3620 = vst [vmem:[#allocation2 + $0x88] sm:$0xff] %v3612
        %3621 = vst [vmem:[#allocation2 + $0x90] sm:$0xff] %v3613
        %3622 = vst [vmem:[#allocation2 + $0xa8] sm:$0xff] %v3614
        %3623 = vst [vmem:[#allocation2 + $0xb0] sm:$0xff] %v3615
        %3624 = vst [vmem:[#allocation2 + $0xc8] sm:$0xff] %v3616
        %3625 = vst [vmem:[#allocation2 + $0xd0] sm:$0xff] %v3617
        %3626 = vst [vmem:[#allocation2 + $0xe8] sm:$0xff] %v3618
        %3627 = vst [vmem:[#allocation2 + $0xf0] sm:$0xff] %v3619
        %v3628 = vld [vmem:[#allocation2 + $0x80] sm:$0xff]
        %v3629 = vld [vmem:[#allocation2 + $0x88] sm:$0xff]
        %v3630 = vld [vmem:[#allocation2 + $0x90] sm:$0xff]
        %v3631 = vld [vmem:[#allocation2 + $0xa0] sm:$0xff]
        %v3632 = vld [vmem:[#allocation2 + $0xa8] sm:$0xff]
        %v3633 = vld [vmem:[#allocation2 + $0xb0] sm:$0xff]
        %v3634 = vld [vmem:[#allocation2 + $0xc0] sm:$0xff]
        %v3635 = vld [vmem:[#allocation2 + $0xc8] sm:$0xff]
        %v3636 = vld [vmem:[#allocation2 + $0xd0] sm:$0xff]
        %v3637 = vld [vmem:[#allocation2 + $0xe0] sm:$0xff]
        %v3638 = vld [vmem:[#allocation2 + $0xe8] sm:$0xff]
        %v3639 = vld [vmem:[#allocation2 + $0xf0] sm:$0xff]
        %v3640 = vmul.f32 %v3628, %v284
        %v3641 = vmul.f32 %v3629, %v288
        %v3642 = vmul.f32 %v3630, %v286
        %v3643 = vmul.f32 %v3631, %v284
        %v3644 = vmul.f32 %v3632, %v288
        %v3645 = vmul.f32 %v3633, %v286
        %v3646 = vmul.f32 %v3634, %v284
        %v3647 = vmul.f32 %v3635, %v288
        %v3648 = vmul.f32 %v3636, %v286
        %v3649 = vmul.f32 %v3637, %v284
        %v3650 = vmul.f32 %v3638, %v288
        %v3651 = vmul.f32 %v3639, %v286
        %3664 = vrot.lane.b32.xlu0 %v3640, 1
        %v3665 = vpop.permute.xlu0 %3664
        %3666 = vrot.lane.b32.xlu0 %v3641, 1
        %v3667 = vpop.permute.xlu0 %3666
        %3668 = vrot.lane.b32.xlu0 %v3642, 1
        %v3669 = vpop.permute.xlu0 %3668
        %3670 = vrot.lane.b32.xlu0 %v3643, 1
        %v3671 = vpop.permute.xlu0 %3670
        %3672 = vrot.lane.b32.xlu0 %v3644, 1
        %v3673 = vpop.permute.xlu0 %3672
        %3674 = vrot.lane.b32.xlu0 %v3645, 1
        %v3675 = vpop.permute.xlu0 %3674
        %3676 = vrot.lane.b32.xlu0 %v3646, 1
        %v3677 = vpop.permute.xlu0 %3676
        %3678 = vrot.lane.b32.xlu0 %v3647, 1
        %v3679 = vpop.permute.xlu0 %3678
        %3680 = vrot.lane.b32.xlu0 %v3648, 1
        %v3681 = vpop.permute.xlu0 %3680
        %3682 = vrot.lane.b32.xlu0 %v3649, 1
        %v3683 = vpop.permute.xlu0 %3682
        %3684 = vrot.lane.b32.xlu0 %v3650, 1
        %v3685 = vpop.permute.xlu0 %3684
        %3686 = vrot.lane.b32.xlu0 %v3651, 1
        %v3687 = vpop.permute.xlu0 %3686
        %v3688 = vsel %vm340, %v3665, %v3667
        %v3689 = vsel %vm340, %v3667, %v3669
        %v3690 = vsel %vm340, %v3671, %v3673
        %v3691 = vsel %vm340, %v3673, %v3675
        %v3692 = vsel %vm340, %v3677, %v3679
        %v3693 = vsel %vm340, %v3679, %v3681
        %v3694 = vsel %vm340, %v3683, %v3685
        %v3695 = vsel %vm340, %v3685, %v3687
        %3704 = vst [vmem:[#allocation2 + $0x8] sm:$0xff] %v3688
        %3705 = vst [vmem:[#allocation2 + $0x10] sm:$0xff] %v3689
        %3706 = vst [vmem:[#allocation2 + $0x28] sm:$0xff] %v3690
        %3707 = vst [vmem:[#allocation2 + $0x30] sm:$0xff] %v3691
        %3708 = vst [vmem:[#allocation2 + $0x48] sm:$0xff] %v3692
        %3709 = vst [vmem:[#allocation2 + $0x50] sm:$0xff] %v3693
        %3710 = vst [vmem:[#allocation2 + $0x68] sm:$0xff] %v3694
        %3711 = vst [vmem:[#allocation2 + $0x70] sm:$0xff] %v3695
        %v3712 = vld [vmem:[#allocation2 + $0x88] sm:$0xff]
        %v3713 = vld [vmem:[#allocation2 + $0x90] sm:$0xff]
        %v3714 = vld [vmem:[#allocation2 + $0x98] sm:$0xff]
        %v3715 = vld [vmem:[#allocation2 + $0xa8] sm:$0xff]
        %v3716 = vld [vmem:[#allocation2 + $0xb0] sm:$0xff]
        %v3717 = vld [vmem:[#allocation2 + $0xb8] sm:$0xff]
        %v3718 = vld [vmem:[#allocation2 + $0xc8] sm:$0xff]
        %v3719 = vld [vmem:[#allocation2 + $0xd0] sm:$0xff]
        %v3720 = vld [vmem:[#allocation2 + $0xd8] sm:$0xff]
        %v3721 = vld [vmem:[#allocation2 + $0xe8] sm:$0xff]
        %v3722 = vld [vmem:[#allocation2 + $0xf0] sm:$0xff]
        %v3723 = vld [vmem:[#allocation2 + $0xf8] sm:$0xff]
        %v3724 = vmul.f32 %v3712, %v380
        %v3725 = vmul.f32 %v3713, %v383
        %v3726 = vmul.f32 %v3714, %v382
        %v3727 = vmul.f32 %v3715, %v380
        %v3728 = vmul.f32 %v3716, %v383
        %v3729 = vmul.f32 %v3717, %v382
        %v3730 = vmul.f32 %v3718, %v380
        %v3731 = vmul.f32 %v3719, %v383
        %v3732 = vmul.f32 %v3720, %v382
        %v3733 = vmul.f32 %v3721, %v380
        %v3734 = vmul.f32 %v3722, %v383
        %v3735 = vmul.f32 %v3723, %v382
        %3748 = vrot.lane.b32.xlu0 %v3724, 127
        %v3749 = vpop.permute.xlu0 %3748
        %3750 = vrot.lane.b32.xlu0 %v3725, 127
        %v3751 = vpop.permute.xlu0 %3750
        %3752 = vrot.lane.b32.xlu0 %v3726, 127
        %v3753 = vpop.permute.xlu0 %3752
        %3754 = vrot.lane.b32.xlu0 %v3727, 127
        %v3755 = vpop.permute.xlu0 %3754
        %3756 = vrot.lane.b32.xlu0 %v3728, 127
        %v3757 = vpop.permute.xlu0 %3756
        %3758 = vrot.lane.b32.xlu0 %v3729, 127
        %v3759 = vpop.permute.xlu0 %3758
        %3760 = vrot.lane.b32.xlu0 %v3730, 127
        %v3761 = vpop.permute.xlu0 %3760
        %3762 = vrot.lane.b32.xlu0 %v3731, 127
        %v3763 = vpop.permute.xlu0 %3762
        %3764 = vrot.lane.b32.xlu0 %v3732, 127
        %v3765 = vpop.permute.xlu0 %3764
        %3766 = vrot.lane.b32.xlu0 %v3733, 127
        %v3767 = vpop.permute.xlu0 %3766
        %3768 = vrot.lane.b32.xlu0 %v3734, 127
        %v3769 = vpop.permute.xlu0 %3768
        %3770 = vrot.lane.b32.xlu0 %v3735, 127
        %v3771 = vpop.permute.xlu0 %3770
        %v3772 = vsel %vm287, %v3749, %v3751
        %v3773 = vsel %vm287, %v3751, %v3753
        %v3774 = vsel %vm287, %v3755, %v3757
        %v3775 = vsel %vm287, %v3757, %v3759
        %v3776 = vsel %vm287, %v3761, %v3763
        %v3777 = vsel %vm287, %v3763, %v3765
        %v3778 = vsel %vm287, %v3767, %v3769
        %v3779 = vsel %vm287, %v3769, %v3771
        %3788 = vst [vmem:[#allocation2 + $0x108] sm:$0xff] %v3772
        %3789 = vst [vmem:[#allocation2 + $0x110] sm:$0xff] %v3773
        %3790 = vst [vmem:[#allocation2 + $0x128] sm:$0xff] %v3774
        %3791 = vst [vmem:[#allocation2 + $0x130] sm:$0xff] %v3775
        %3792 = vst [vmem:[#allocation2 + $0x148] sm:$0xff] %v3776
        %3793 = vst [vmem:[#allocation2 + $0x150] sm:$0xff] %v3777
        %3794 = vst [vmem:[#allocation2 + $0x168] sm:$0xff] %v3778
        %3795 = vst [vmem:[#allocation2 + $0x170] sm:$0xff] %v3779
        %s3796 = scalar_lea.vmem [#allocation3], 384
        %v3797 = vld [vmem:[%s3796] sm:$0xff]
        %v3798 = vld [vmem:[%s3796 + $0x8] sm:$0xff]
        %v3799 = vld [vmem:[%s3796 + $0x10] sm:$0xff]
        %v3800 = vld [vmem:[%s3796 + $0x18] sm:$0xff]
        %v3801 = vld [vmem:[#allocation2] sm:$0xff]
        %v3802 = vld [vmem:[#allocation2 + $0x8] sm:$0xff]
        %v3803 = vld [vmem:[#allocation2 + $0x10] sm:$0xff]
        %v3804 = vld [vmem:[#allocation2 + $0x20] sm:$0xff]
        %v3805 = vld [vmem:[#allocation2 + $0x28] sm:$0xff]
        %v3806 = vld [vmem:[#allocation2 + $0x30] sm:$0xff]
        %v3807 = vld [vmem:[#allocation2 + $0x40] sm:$0xff]
        %v3808 = vld [vmem:[#allocation2 + $0x48] sm:$0xff]
        %v3809 = vld [vmem:[#allocation2 + $0x50] sm:$0xff]
        %v3810 = vld [vmem:[#allocation2 + $0x60] sm:$0xff]
        %v3811 = vld [vmem:[#allocation2 + $0x68] sm:$0xff]
        %v3812 = vld [vmem:[#allocation2 + $0x70] sm:$0xff]
        %v3813 = vld [vmem:[#allocation2 + $0x80] sm:$0xff]
        %v3814 = vld [vmem:[#allocation2 + $0x88] sm:$0xff]
        %v3815 = vld [vmem:[#allocation2 + $0x90] sm:$0xff]
        %v3816 = vld [vmem:[#allocation2 + $0xa0] sm:$0xff]
        %v3817 = vld [vmem:[#allocation2 + $0xa8] sm:$0xff]
        %v3818 = vld [vmem:[#allocation2 + $0xb0] sm:$0xff]
        %v3819 = vld [vmem:[#allocation2 + $0xc0] sm:$0xff]
        %v3820 = vld [vmem:[#allocation2 + $0xc8] sm:$0xff]
        %v3821 = vld [vmem:[#allocation2 + $0xd0] sm:$0xff]
        %v3822 = vld [vmem:[#allocation2 + $0xe0] sm:$0xff]
        %v3823 = vld [vmem:[#allocation2 + $0xe8] sm:$0xff]
        %v3824 = vld [vmem:[#allocation2 + $0xf0] sm:$0xff]
        %v3825 = vld [vmem:[#allocation2 + $0x100] sm:$0xff]
        %v3826 = vld [vmem:[#allocation2 + $0x108] sm:$0xff]
        %v3827 = vld [vmem:[#allocation2 + $0x110] sm:$0xff]
        %v3828 = vld [vmem:[#allocation2 + $0x120] sm:$0xff]
        %v3829 = vld [vmem:[#allocation2 + $0x128] sm:$0xff]
        %v3830 = vld [vmem:[#allocation2 + $0x130] sm:$0xff]
        %v3831 = vld [vmem:[#allocation2 + $0x140] sm:$0xff]
        %v3832 = vld [vmem:[#allocation2 + $0x148] sm:$0xff]
        %v3833 = vld [vmem:[#allocation2 + $0x150] sm:$0xff]
        %v3834 = vld [vmem:[#allocation2 + $0x160] sm:$0xff]
        %v3835 = vld [vmem:[#allocation2 + $0x168] sm:$0xff]
        %v3836 = vld [vmem:[#allocation2 + $0x170] sm:$0xff]
        %s3837 = scalar_lea.vmem [#allocation3], 416
        %v3838 = vld [vmem:[%s3837] sm:$0xff]
        %v3839 = vld [vmem:[%s3837 + $0x8] sm:$0xff]
        %v3840 = vld [vmem:[%s3837 + $0x10] sm:$0xff]
        %v3841 = vld [vmem:[%s3837 + $0x18] sm:$0xff]
        %v3843 = vsel %vm504, %v3838, 0
        %v3846 = vsel %vm504, %v3839, 0
        %v3849 = vsel %vm504, %v3840, 0
        %v3852 = vsel %vm504, %v3841, 0
        %3854 = vmatpush.msra.mxu0 0.0
        %3855 = vmatpush.msra.mxu0 0.0
        %3856 = vmatpush.msra.mxu0 0.0
        %3857 = vmatpush.msra.mxu0 0.0
        %3858 = vmatpush.msra.mxu0 %v3835
        %3859 = vmatpush.msra.mxu0 %v3832
        %3860 = vmatpush.msra.mxu0 %v3829
        %3861 = vmatpush.msra.mxu0 %v3826
        %3862 = vmatpush.msra.mxu0 %v3823
        %3863 = vmatpush.msra.mxu0 %v3820
        %3864 = vmatpush.msra.mxu0 %v3817
        %3865 = vmatpush.msra.mxu0 %v3814
        %3866 = vmatpush.msra.mxu0 %v3811
        %3867 = vmatpush.msra.mxu0 %v3808
        %3868 = vmatpush.msra.mxu0 %v3805
        %3869 = vmatpush.msra.mxu0 %v3802
        %3870 = vmatmul.f32.gmra.mxu0 %v3843
        %v3871 = vpop.f32.mrf.mxu0
        %v3872 = vadd.f32 0.0, %v3871
        %3873 = vmatmul.f32.gmra.mxu0 %v3846
        %v3874 = vpop.f32.mrf.mxu0
        %v3875 = vadd.f32 0.0, %v3874
        %3876 = vmatmul.f32.gmra.mxu0 %v3849
        %v3877 = vpop.f32.mrf.mxu0
        %v3878 = vadd.f32 0.0, %v3877
        %3879 = vmatmul.f32.gmra.mxu0 %v3852
        %v3880 = vpop.f32.mrf.mxu0
        %v3881 = vadd.f32 0.0, %v3880
        %3882 = vdwg.mxu0
        %3883 = vmatpush.msra.mxu0 0.0
        %3884 = vmatpush.msra.mxu0 0.0
        %3885 = vmatpush.msra.mxu0 0.0
        %3886 = vmatpush.msra.mxu0 0.0
        %3887 = vmatpush.msra.mxu0 %v3836
        %3888 = vmatpush.msra.mxu0 %v3833
        %3889 = vmatpush.msra.mxu0 %v3830
        %3890 = vmatpush.msra.mxu0 %v3827
        %3891 = vmatpush.msra.mxu0 %v3824
        %3892 = vmatpush.msra.mxu0 %v3821
        %3893 = vmatpush.msra.mxu0 %v3818
        %3894 = vmatpush.msra.mxu0 %v3815
        %3895 = vmatpush.msra.mxu0 %v3812
        %3896 = vmatpush.msra.mxu0 %v3809
        %3897 = vmatpush.msra.mxu0 %v3806
        %3898 = vmatpush.msra.mxu0 %v3803
        %3899 = vmatmul.f32.gmra.mxu0 %v3843
        %v3900 = vpop.f32.mrf.mxu0
        %v3901 = vadd.f32 0.0, %v3900
        %3902 = vmatmul.f32.gmra.mxu0 %v3846
        %v3903 = vpop.f32.mrf.mxu0
        %v3904 = vadd.f32 0.0, %v3903
        %3905 = vmatmul.f32.gmra.mxu0 %v3849
        %v3906 = vpop.f32.mrf.mxu0
        %v3907 = vadd.f32 0.0, %v3906
        %3908 = vmatmul.f32.gmra.mxu0 %v3852
        %v3909 = vpop.f32.mrf.mxu0
        %v3910 = vadd.f32 0.0, %v3909
        %3911 = vdwg.mxu0
        %3948 = vrot.lane.b32.xlu0 %v3801, 16
        %v3949 = vpop.permute.xlu0 %3948
        %3950 = vrot.lane.b32.xlu0 %v3802, 16
        %v3951 = vpop.permute.xlu0 %3950
        %3952 = vrot.lane.b32.xlu0 %v3803, 16
        %v3953 = vpop.permute.xlu0 %3952
        %3954 = vrot.lane.b32.xlu0 %v3804, 16
        %v3955 = vpop.permute.xlu0 %3954
        %3956 = vrot.lane.b32.xlu0 %v3805, 16
        %v3957 = vpop.permute.xlu0 %3956
        %3958 = vrot.lane.b32.xlu0 %v3806, 16
        %v3959 = vpop.permute.xlu0 %3958
        %3960 = vrot.lane.b32.xlu0 %v3807, 16
        %v3961 = vpop.permute.xlu0 %3960
        %3962 = vrot.lane.b32.xlu0 %v3808, 16
        %v3963 = vpop.permute.xlu0 %3962
        %3964 = vrot.lane.b32.xlu0 %v3809, 16
        %v3965 = vpop.permute.xlu0 %3964
        %3966 = vrot.lane.b32.xlu0 %v3810, 16
        %v3967 = vpop.permute.xlu0 %3966
        %3968 = vrot.lane.b32.xlu0 %v3811, 16
        %v3969 = vpop.permute.xlu0 %3968
        %3970 = vrot.lane.b32.xlu0 %v3812, 16
        %v3971 = vpop.permute.xlu0 %3970
        %3972 = vrot.lane.b32.xlu0 %v3813, 16
        %v3973 = vpop.permute.xlu0 %3972
        %3974 = vrot.lane.b32.xlu0 %v3814, 16
        %v3975 = vpop.permute.xlu0 %3974
        %3976 = vrot.lane.b32.xlu0 %v3815, 16
        %v3977 = vpop.permute.xlu0 %3976
        %3978 = vrot.lane.b32.xlu0 %v3816, 16
        %v3979 = vpop.permute.xlu0 %3978
        %3980 = vrot.lane.b32.xlu0 %v3817, 16
        %v3981 = vpop.permute.xlu0 %3980
        %3982 = vrot.lane.b32.xlu0 %v3818, 16
        %v3983 = vpop.permute.xlu0 %3982
        %3984 = vrot.lane.b32.xlu0 %v3819, 16
        %v3985 = vpop.permute.xlu0 %3984
        %3986 = vrot.lane.b32.xlu0 %v3820, 16
        %v3987 = vpop.permute.xlu0 %3986
        %3988 = vrot.lane.b32.xlu0 %v3821, 16
        %v3989 = vpop.permute.xlu0 %3988
        %3990 = vrot.lane.b32.xlu0 %v3822, 16
        %v3991 = vpop.permute.xlu0 %3990
        %3992 = vrot.lane.b32.xlu0 %v3823, 16
        %v3993 = vpop.permute.xlu0 %3992
        %3994 = vrot.lane.b32.xlu0 %v3824, 16
        %v3995 = vpop.permute.xlu0 %3994
        %3996 = vrot.lane.b32.xlu0 %v3825, 16
        %v3997 = vpop.permute.xlu0 %3996
        %3998 = vrot.lane.b32.xlu0 %v3826, 16
        %v3999 = vpop.permute.xlu0 %3998
        %4000 = vrot.lane.b32.xlu0 %v3827, 16
        %v4001 = vpop.permute.xlu0 %4000
        %4002 = vrot.lane.b32.xlu0 %v3828, 16
        %v4003 = vpop.permute.xlu0 %4002
        %4004 = vrot.lane.b32.xlu0 %v3829, 16
        %v4005 = vpop.permute.xlu0 %4004
        %4006 = vrot.lane.b32.xlu0 %v3830, 16
        %v4007 = vpop.permute.xlu0 %4006
        %4008 = vrot.lane.b32.xlu0 %v3831, 16
        %v4009 = vpop.permute.xlu0 %4008
        %4010 = vrot.lane.b32.xlu0 %v3832, 16
        %v4011 = vpop.permute.xlu0 %4010
        %4012 = vrot.lane.b32.xlu0 %v3833, 16
        %v4013 = vpop.permute.xlu0 %4012
        %4014 = vrot.lane.b32.xlu0 %v3834, 16
        %v4015 = vpop.permute.xlu0 %4014
        %4016 = vrot.lane.b32.xlu0 %v3835, 16
        %v4017 = vpop.permute.xlu0 %4016
        %4018 = vrot.lane.b32.xlu0 %v3836, 16
        %v4019 = vpop.permute.xlu0 %4018
        %v4020 = vsel %vm683, %v3949, %v3951
        %v4021 = vsel %vm683, %v3951, %v3953
        %v4022 = vsel %vm683, %v3955, %v3957
        %v4023 = vsel %vm683, %v3957, %v3959
        %v4024 = vsel %vm683, %v3961, %v3963
        %v4025 = vsel %vm683, %v3963, %v3965
        %v4026 = vsel %vm683, %v3967, %v3969
        %v4027 = vsel %vm683, %v3969, %v3971
        %v4028 = vsel %vm683, %v3973, %v3975
        %v4029 = vsel %vm683, %v3975, %v3977
        %v4030 = vsel %vm683, %v3979, %v3981
        %v4031 = vsel %vm683, %v3981, %v3983
        %v4032 = vsel %vm683, %v3985, %v3987
        %v4033 = vsel %vm683, %v3987, %v3989
        %v4034 = vsel %vm683, %v3991, %v3993
        %v4035 = vsel %vm683, %v3993, %v3995
        %v4036 = vsel %vm683, %v3997, %v3999
        %v4037 = vsel %vm683, %v3999, %v4001
        %v4038 = vsel %vm683, %v4003, %v4005
        %v4039 = vsel %vm683, %v4005, %v4007
        %v4040 = vsel %vm683, %v4009, %v4011
        %v4041 = vsel %vm683, %v4011, %v4013
        %v4042 = vsel %vm683, %v4015, %v4017
        %v4043 = vsel %vm683, %v4017, %v4019
        %v4069 = vsel %vm504, %v3797, 0
        %v4072 = vsel %vm504, %v3798, 0
        %v4075 = vsel %vm504, %v3799, 0
        %v4078 = vsel %vm504, %v3800, 0
        %4080 = vmatpush.msra.mxu0 0.0
        %4081 = vmatpush.msra.mxu0 0.0
        %4082 = vmatpush.msra.mxu0 0.0
        %4083 = vmatpush.msra.mxu0 0.0
        %4084 = vmatpush.msra.mxu0 %v4042
        %4085 = vmatpush.msra.mxu0 %v4040
        %4086 = vmatpush.msra.mxu0 %v4038
        %4087 = vmatpush.msra.mxu0 %v4036
        %4088 = vmatpush.msra.mxu0 %v4034
        %4089 = vmatpush.msra.mxu0 %v4032
        %4090 = vmatpush.msra.mxu0 %v4030
        %4091 = vmatpush.msra.mxu0 %v4028
        %4092 = vmatpush.msra.mxu0 %v4026
        %4093 = vmatpush.msra.mxu0 %v4024
        %4094 = vmatpush.msra.mxu0 %v4022
        %4095 = vmatpush.msra.mxu0 %v4020
        %4096 = vmatmul.f32.gmra.mxu0 %v4069
        %v4097 = vpop.f32.mrf.mxu0
        %v4098 = vadd.f32 %v3872, %v4097
        %4099 = vmatmul.f32.gmra.mxu0 %v4072
        %v4100 = vpop.f32.mrf.mxu0
        %v4101 = vadd.f32 %v3875, %v4100
        %4102 = vmatmul.f32.gmra.mxu0 %v4075
        %v4103 = vpop.f32.mrf.mxu0
        %v4104 = vadd.f32 %v3878, %v4103
        %4105 = vmatmul.f32.gmra.mxu0 %v4078
        %v4106 = vpop.f32.mrf.mxu0
        %v4107 = vadd.f32 %v3881, %v4106
        %4108 = vdwg.mxu0
        %4109 = vmatpush.msra.mxu0 0.0
        %4110 = vmatpush.msra.mxu0 0.0
        %4111 = vmatpush.msra.mxu0 0.0
        %4112 = vmatpush.msra.mxu0 0.0
        %4113 = vmatpush.msra.mxu0 %v4043
        %4114 = vmatpush.msra.mxu0 %v4041
        %4115 = vmatpush.msra.mxu0 %v4039
        %4116 = vmatpush.msra.mxu0 %v4037
        %4117 = vmatpush.msra.mxu0 %v4035
        %4118 = vmatpush.msra.mxu0 %v4033
        %4119 = vmatpush.msra.mxu0 %v4031
        %4120 = vmatpush.msra.mxu0 %v4029
        %4121 = vmatpush.msra.mxu0 %v4027
        %4122 = vmatpush.msra.mxu0 %v4025
        %4123 = vmatpush.msra.mxu0 %v4023
        %4124 = vmatpush.msra.mxu0 %v4021
        %4125 = vmatmul.f32.gmra.mxu0 %v4069
        %v4126 = vpop.f32.mrf.mxu0
        %v4127 = vadd.f32 %v3901, %v4126
        %4128 = vmatmul.f32.gmra.mxu0 %v4072
        %v4129 = vpop.f32.mrf.mxu0
        %v4130 = vadd.f32 %v3904, %v4129
        %4131 = vmatmul.f32.gmra.mxu0 %v4075
        %v4132 = vpop.f32.mrf.mxu0
        %v4133 = vadd.f32 %v3907, %v4132
        %4134 = vmatmul.f32.gmra.mxu0 %v4078
        %v4135 = vpop.f32.mrf.mxu0
        %v4136 = vadd.f32 %v3910, %v4135
        %4137 = vdwg.mxu0
        %s4138 = scalar_lea.vmem [#allocation3], 448
        %v4139 = vld [vmem:[%s4138] sm:$0xff]
        %v4140 = vld [vmem:[%s4138 + $0x8] sm:$0xff]
        %v4141 = vld [vmem:[%s4138 + $0x10] sm:$0xff]
        %v4142 = vld [vmem:[%s4138 + $0x18] sm:$0xff]
        %v4143 = vld [vmem:[#allocation2 + $0x8] sm:$0xff]
        %v4144 = vld [vmem:[#allocation2 + $0x10] sm:$0xff]
        %v4145 = vld [vmem:[#allocation2 + $0x18] sm:$0xff]
        %v4146 = vld [vmem:[#allocation2 + $0x28] sm:$0xff]
        %v4147 = vld [vmem:[#allocation2 + $0x30] sm:$0xff]
        %v4148 = vld [vmem:[#allocation2 + $0x38] sm:$0xff]
        %v4149 = vld [vmem:[#allocation2 + $0x48] sm:$0xff]
        %v4150 = vld [vmem:[#allocation2 + $0x50] sm:$0xff]
        %v4151 = vld [vmem:[#allocation2 + $0x58] sm:$0xff]
        %v4152 = vld [vmem:[#allocation2 + $0x68] sm:$0xff]
        %v4153 = vld [vmem:[#allocation2 + $0x70] sm:$0xff]
        %v4154 = vld [vmem:[#allocation2 + $0x78] sm:$0xff]
        %v4155 = vld [vmem:[#allocation2 + $0x88] sm:$0xff]
        %v4156 = vld [vmem:[#allocation2 + $0x90] sm:$0xff]
        %v4157 = vld [vmem:[#allocation2 + $0x98] sm:$0xff]
        %v4158 = vld [vmem:[#allocation2 + $0xa8] sm:$0xff]
        %v4159 = vld [vmem:[#allocation2 + $0xb0] sm:$0xff]
        %v4160 = vld [vmem:[#allocation2 + $0xb8] sm:$0xff]
        %v4161 = vld [vmem:[#allocation2 + $0xc8] sm:$0xff]
        %v4162 = vld [vmem:[#allocation2 + $0xd0] sm:$0xff]
        %v4163 = vld [vmem:[#allocation2 + $0xd8] sm:$0xff]
        %v4164 = vld [vmem:[#allocation2 + $0xe8] sm:$0xff]
        %v4165 = vld [vmem:[#allocation2 + $0xf0] sm:$0xff]
        %v4166 = vld [vmem:[#allocation2 + $0xf8] sm:$0xff]
        %v4167 = vld [vmem:[#allocation2 + $0x108] sm:$0xff]
        %v4168 = vld [vmem:[#allocation2 + $0x110] sm:$0xff]
        %v4169 = vld [vmem:[#allocation2 + $0x118] sm:$0xff]
        %v4170 = vld [vmem:[#allocation2 + $0x128] sm:$0xff]
        %v4171 = vld [vmem:[#allocation2 + $0x130] sm:$0xff]
        %v4172 = vld [vmem:[#allocation2 + $0x138] sm:$0xff]
        %v4173 = vld [vmem:[#allocation2 + $0x148] sm:$0xff]
        %v4174 = vld [vmem:[#allocation2 + $0x150] sm:$0xff]
        %v4175 = vld [vmem:[#allocation2 + $0x158] sm:$0xff]
        %v4176 = vld [vmem:[#allocation2 + $0x168] sm:$0xff]
        %v4177 = vld [vmem:[#allocation2 + $0x170] sm:$0xff]
        %v4178 = vld [vmem:[#allocation2 + $0x178] sm:$0xff]
        %4215 = vrot.lane.b32.xlu0 %v4143, 112
        %v4216 = vpop.permute.xlu0 %4215
        %4217 = vrot.lane.b32.xlu0 %v4144, 112
        %v4218 = vpop.permute.xlu0 %4217
        %4219 = vrot.lane.b32.xlu0 %v4145, 112
        %v4220 = vpop.permute.xlu0 %4219
        %4221 = vrot.lane.b32.xlu0 %v4146, 112
        %v4222 = vpop.permute.xlu0 %4221
        %4223 = vrot.lane.b32.xlu0 %v4147, 112
        %v4224 = vpop.permute.xlu0 %4223
        %4225 = vrot.lane.b32.xlu0 %v4148, 112
        %v4226 = vpop.permute.xlu0 %4225
        %4227 = vrot.lane.b32.xlu0 %v4149, 112
        %v4228 = vpop.permute.xlu0 %4227
        %4229 = vrot.lane.b32.xlu0 %v4150, 112
        %v4230 = vpop.permute.xlu0 %4229
        %4231 = vrot.lane.b32.xlu0 %v4151, 112
        %v4232 = vpop.permute.xlu0 %4231
        %4233 = vrot.lane.b32.xlu0 %v4152, 112
        %v4234 = vpop.permute.xlu0 %4233
        %4235 = vrot.lane.b32.xlu0 %v4153, 112
        %v4236 = vpop.permute.xlu0 %4235
        %4237 = vrot.lane.b32.xlu0 %v4154, 112
        %v4238 = vpop.permute.xlu0 %4237
        %4239 = vrot.lane.b32.xlu0 %v4155, 112
        %v4240 = vpop.permute.xlu0 %4239
        %4241 = vrot.lane.b32.xlu0 %v4156, 112
        %v4242 = vpop.permute.xlu0 %4241
        %4243 = vrot.lane.b32.xlu0 %v4157, 112
        %v4244 = vpop.permute.xlu0 %4243
        %4245 = vrot.lane.b32.xlu0 %v4158, 112
        %v4246 = vpop.permute.xlu0 %4245
        %4247 = vrot.lane.b32.xlu0 %v4159, 112
        %v4248 = vpop.permute.xlu0 %4247
        %4249 = vrot.lane.b32.xlu0 %v4160, 112
        %v4250 = vpop.permute.xlu0 %4249
        %4251 = vrot.lane.b32.xlu0 %v4161, 112
        %v4252 = vpop.permute.xlu0 %4251
        %4253 = vrot.lane.b32.xlu0 %v4162, 112
        %v4254 = vpop.permute.xlu0 %4253
        %4255 = vrot.lane.b32.xlu0 %v4163, 112
        %v4256 = vpop.permute.xlu0 %4255
        %4257 = vrot.lane.b32.xlu0 %v4164, 112
        %v4258 = vpop.permute.xlu0 %4257
        %4259 = vrot.lane.b32.xlu0 %v4165, 112
        %v4260 = vpop.permute.xlu0 %4259
        %4261 = vrot.lane.b32.xlu0 %v4166, 112
        %v4262 = vpop.permute.xlu0 %4261
        %4263 = vrot.lane.b32.xlu0 %v4167, 112
        %v4264 = vpop.permute.xlu0 %4263
        %4265 = vrot.lane.b32.xlu0 %v4168, 112
        %v4266 = vpop.permute.xlu0 %4265
        %4267 = vrot.lane.b32.xlu0 %v4169, 112
        %v4268 = vpop.permute.xlu0 %4267
        %4269 = vrot.lane.b32.xlu0 %v4170, 112
        %v4270 = vpop.permute.xlu0 %4269
        %4271 = vrot.lane.b32.xlu0 %v4171, 112
        %v4272 = vpop.permute.xlu0 %4271
        %4273 = vrot.lane.b32.xlu0 %v4172, 112
        %v4274 = vpop.permute.xlu0 %4273
        %4275 = vrot.lane.b32.xlu0 %v4173, 112
        %v4276 = vpop.permute.xlu0 %4275
        %4277 = vrot.lane.b32.xlu0 %v4174, 112
        %v4278 = vpop.permute.xlu0 %4277
        %4279 = vrot.lane.b32.xlu0 %v4175, 112
        %v4280 = vpop.permute.xlu0 %4279
        %4281 = vrot.lane.b32.xlu0 %v4176, 112
        %v4282 = vpop.permute.xlu0 %4281
        %4283 = vrot.lane.b32.xlu0 %v4177, 112
        %v4284 = vpop.permute.xlu0 %4283
        %4285 = vrot.lane.b32.xlu0 %v4178, 112
        %v4286 = vpop.permute.xlu0 %4285
        %v4287 = vsel %vm951, %v4216, %v4218
        %v4288 = vsel %vm951, %v4218, %v4220
        %v4289 = vsel %vm951, %v4222, %v4224
        %v4290 = vsel %vm951, %v4224, %v4226
        %v4291 = vsel %vm951, %v4228, %v4230
        %v4292 = vsel %vm951, %v4230, %v4232
        %v4293 = vsel %vm951, %v4234, %v4236
        %v4294 = vsel %vm951, %v4236, %v4238
        %v4295 = vsel %vm951, %v4240, %v4242
        %v4296 = vsel %vm951, %v4242, %v4244
        %v4297 = vsel %vm951, %v4246, %v4248
        %v4298 = vsel %vm951, %v4248, %v4250
        %v4299 = vsel %vm951, %v4252, %v4254
        %v4300 = vsel %vm951, %v4254, %v4256
        %v4301 = vsel %vm951, %v4258, %v4260
        %v4302 = vsel %vm951, %v4260, %v4262
        %v4303 = vsel %vm951, %v4264, %v4266
        %v4304 = vsel %vm951, %v4266, %v4268
        %v4305 = vsel %vm951, %v4270, %v4272
        %v4306 = vsel %vm951, %v4272, %v4274
        %v4307 = vsel %vm951, %v4276, %v4278
        %v4308 = vsel %vm951, %v4278, %v4280
        %v4309 = vsel %vm951, %v4282, %v4284
        %v4310 = vsel %vm951, %v4284, %v4286
        %v4336 = vsel %vm504, %v4139, 0
        %v4339 = vsel %vm504, %v4140, 0
        %v4342 = vsel %vm504, %v4141, 0
        %v4345 = vsel %vm504, %v4142, 0
        %4347 = vmatpush.msra.mxu0 0.0
        %4348 = vmatpush.msra.mxu0 0.0
        %4349 = vmatpush.msra.mxu0 0.0
        %4350 = vmatpush.msra.mxu0 0.0
        %4351 = vmatpush.msra.mxu0 %v4309
        %4352 = vmatpush.msra.mxu0 %v4307
        %4353 = vmatpush.msra.mxu0 %v4305
        %4354 = vmatpush.msra.mxu0 %v4303
        %4355 = vmatpush.msra.mxu0 %v4301
        %4356 = vmatpush.msra.mxu0 %v4299
        %4357 = vmatpush.msra.mxu0 %v4297
        %4358 = vmatpush.msra.mxu0 %v4295
        %4359 = vmatpush.msra.mxu0 %v4293
        %4360 = vmatpush.msra.mxu0 %v4291
        %4361 = vmatpush.msra.mxu0 %v4289
        %4362 = vmatpush.msra.mxu0 %v4287
        %4363 = vmatmul.f32.gmra.mxu0 %v4336
        %v4364 = vpop.f32.mrf.mxu0
        %v4365 = vadd.f32 0.0, %v4364
        %4366 = vmatmul.f32.gmra.mxu0 %v4339
        %v4367 = vpop.f32.mrf.mxu0
        %v4368 = vadd.f32 0.0, %v4367
        %4369 = vmatmul.f32.gmra.mxu0 %v4342
        %v4370 = vpop.f32.mrf.mxu0
        %v4371 = vadd.f32 0.0, %v4370
        %4372 = vmatmul.f32.gmra.mxu0 %v4345
        %v4373 = vpop.f32.mrf.mxu0
        %v4374 = vadd.f32 0.0, %v4373
        %4375 = vdwg.mxu0
        %4376 = vmatpush.msra.mxu0 0.0
        %4377 = vmatpush.msra.mxu0 0.0
        %4378 = vmatpush.msra.mxu0 0.0
        %4379 = vmatpush.msra.mxu0 0.0
        %4380 = vmatpush.msra.mxu0 %v4310
        %4381 = vmatpush.msra.mxu0 %v4308
        %4382 = vmatpush.msra.mxu0 %v4306
        %4383 = vmatpush.msra.mxu0 %v4304
        %4384 = vmatpush.msra.mxu0 %v4302
        %4385 = vmatpush.msra.mxu0 %v4300
        %4386 = vmatpush.msra.mxu0 %v4298
        %4387 = vmatpush.msra.mxu0 %v4296
        %4388 = vmatpush.msra.mxu0 %v4294
        %4389 = vmatpush.msra.mxu0 %v4292
        %4390 = vmatpush.msra.mxu0 %v4290
        %4391 = vmatpush.msra.mxu0 %v4288
        %4392 = vmatmul.f32.gmra.mxu0 %v4336
        %v4393 = vpop.f32.mrf.mxu0
        %v4394 = vadd.f32 0.0, %v4393
        %4395 = vmatmul.f32.gmra.mxu0 %v4339
        %v4396 = vpop.f32.mrf.mxu0
        %v4397 = vadd.f32 0.0, %v4396
        %4398 = vmatmul.f32.gmra.mxu0 %v4342
        %v4399 = vpop.f32.mrf.mxu0
        %v4400 = vadd.f32 0.0, %v4399
        %4401 = vmatmul.f32.gmra.mxu0 %v4345
        %v4402 = vpop.f32.mrf.mxu0
        %v4403 = vadd.f32 0.0, %v4402
        %4404 = vdwg.mxu0
        %v4405 = vadd.f32 %v4098, %v4365
        %v4406 = vadd.f32 %v4127, %v4394
        %v4407 = vadd.f32 %v4101, %v4368
        %v4408 = vadd.f32 %v4130, %v4397
        %v4409 = vadd.f32 %v4104, %v4371
        %v4410 = vadd.f32 %v4133, %v4400
        %v4411 = vadd.f32 %v4107, %v4374
        %v4412 = vadd.f32 %v4136, %v4403
        %s4413 = scalar_lea.vmem %s2, 128
        %v4414 = vld [vmem:[%s4413] sm:$0xff]
        %v4415 = vld [vmem:[%s4413 + $0x8] sm:$0xff]
        %v4416 = vld [vmem:[%s4413 + $0x10] sm:$0xff]
        %v4417 = vld [vmem:[%s4413 + $0x18] sm:$0xff]
        %4419 = vset.pattern.permute.xlu0 0
        %4420 = vperm.xlu0 %4419, %v4414
        %v4421 = vpop.permute.xlu0 %4420
        %4424 = vset.pattern.permute.xlu0 0
        %4425 = vperm.xlu0 %4424, %v4415
        %v4426 = vpop.permute.xlu0 %4425
        %4429 = vset.pattern.permute.xlu0 0
        %4430 = vperm.xlu0 %4429, %v4416
        %v4431 = vpop.permute.xlu0 %4430
        %4434 = vset.pattern.permute.xlu0 0
        %4435 = vperm.xlu0 %4434, %v4417
        %v4436 = vpop.permute.xlu0 %4435
        %v4438 = vadd.f32 %v4405, %v4421
        %v4439 = vadd.f32 %v4406, %v4421
        %v4440 = vadd.f32 %v4407, %v4426
        %v4441 = vadd.f32 %v4408, %v4426
        %v4442 = vadd.f32 %v4409, %v4431
        %v4443 = vadd.f32 %v4410, %v4431
        %v4444 = vadd.f32 %v4411, %v4436
        %v4445 = vadd.f32 %v4412, %v4436
        %v4446 = vmax.f32 %v4438, 0.0
        %v4447 = vmax.f32 %v4439, 0.0
        %v4448 = vmax.f32 %v4440, 0.0
        %v4449 = vmax.f32 %v4441, 0.0
        %v4450 = vmax.f32 %v4442, 0.0
        %v4451 = vmax.f32 %v4443, 0.0
        %v4452 = vmax.f32 %v4444, 0.0
        %v4453 = vmax.f32 %v4445, 0.0
        %4454 = vst [vmem:[#allocation2 + $0x88] sm:$0xff] %v4446
        %4455 = vst [vmem:[#allocation2 + $0x90] sm:$0xff] %v4447
        %4456 = vst [vmem:[#allocation2 + $0xa8] sm:$0xff] %v4448
        %4457 = vst [vmem:[#allocation2 + $0xb0] sm:$0xff] %v4449
        %4458 = vst [vmem:[#allocation2 + $0xc8] sm:$0xff] %v4450
        %4459 = vst [vmem:[#allocation2 + $0xd0] sm:$0xff] %v4451
        %4460 = vst [vmem:[#allocation2 + $0xe8] sm:$0xff] %v4452
        %4461 = vst [vmem:[#allocation2 + $0xf0] sm:$0xff] %v4453
        %v4462 = vld [vmem:[#allocation2 + $0x80] sm:$0xff]
        %v4463 = vld [vmem:[#allocation2 + $0x88] sm:$0xff]
        %v4464 = vld [vmem:[#allocation2 + $0x90] sm:$0xff]
        %v4465 = vld [vmem:[#allocation2 + $0xa0] sm:$0xff]
        %v4466 = vld [vmem:[#allocation2 + $0xa8] sm:$0xff]
        %v4467 = vld [vmem:[#allocation2 + $0xb0] sm:$0xff]
        %v4468 = vld [vmem:[#allocation2 + $0xc0] sm:$0xff]
        %v4469 = vld [vmem:[#allocation2 + $0xc8] sm:$0xff]
        %v4470 = vld [vmem:[#allocation2 + $0xd0] sm:$0xff]
        %v4471 = vld [vmem:[#allocation2 + $0xe0] sm:$0xff]
        %v4472 = vld [vmem:[#allocation2 + $0xe8] sm:$0xff]
        %v4473 = vld [vmem:[#allocation2 + $0xf0] sm:$0xff]
        %v4474 = vmul.f32 %v4462, %v284
        %v4475 = vmul.f32 %v4463, %v288
        %v4476 = vmul.f32 %v4464, %v286
        %v4477 = vmul.f32 %v4465, %v284
        %v4478 = vmul.f32 %v4466, %v288
        %v4479 = vmul.f32 %v4467, %v286
        %v4480 = vmul.f32 %v4468, %v284
        %v4481 = vmul.f32 %v4469, %v288
        %v4482 = vmul.f32 %v4470, %v286
        %v4483 = vmul.f32 %v4471, %v284
        %v4484 = vmul.f32 %v4472, %v288
        %v4485 = vmul.f32 %v4473, %v286
        %4498 = vrot.lane.b32.xlu0 %v4474, 1
        %v4499 = vpop.permute.xlu0 %4498
        %4500 = vrot.lane.b32.xlu0 %v4475, 1
        %v4501 = vpop.permute.xlu0 %4500
        %4502 = vrot.lane.b32.xlu0 %v4476, 1
        %v4503 = vpop.permute.xlu0 %4502
        %4504 = vrot.lane.b32.xlu0 %v4477, 1
        %v4505 = vpop.permute.xlu0 %4504
        %4506 = vrot.lane.b32.xlu0 %v4478, 1
        %v4507 = vpop.permute.xlu0 %4506
        %4508 = vrot.lane.b32.xlu0 %v4479, 1
        %v4509 = vpop.permute.xlu0 %4508
        %4510 = vrot.lane.b32.xlu0 %v4480, 1
        %v4511 = vpop.permute.xlu0 %4510
        %4512 = vrot.lane.b32.xlu0 %v4481, 1
        %v4513 = vpop.permute.xlu0 %4512
        %4514 = vrot.lane.b32.xlu0 %v4482, 1
        %v4515 = vpop.permute.xlu0 %4514
        %4516 = vrot.lane.b32.xlu0 %v4483, 1
        %v4517 = vpop.permute.xlu0 %4516
        %4518 = vrot.lane.b32.xlu0 %v4484, 1
        %v4519 = vpop.permute.xlu0 %4518
        %4520 = vrot.lane.b32.xlu0 %v4485, 1
        %v4521 = vpop.permute.xlu0 %4520
        %v4522 = vsel %vm340, %v4499, %v4501
        %v4523 = vsel %vm340, %v4501, %v4503
        %v4524 = vsel %vm340, %v4505, %v4507
        %v4525 = vsel %vm340, %v4507, %v4509
        %v4526 = vsel %vm340, %v4511, %v4513
        %v4527 = vsel %vm340, %v4513, %v4515
        %v4528 = vsel %vm340, %v4517, %v4519
        %v4529 = vsel %vm340, %v4519, %v4521
        %4538 = vst [vmem:[#allocation2 + $0x8] sm:$0xff] %v4522
        %4539 = vst [vmem:[#allocation2 + $0x10] sm:$0xff] %v4523
        %4540 = vst [vmem:[#allocation2 + $0x28] sm:$0xff] %v4524
        %4541 = vst [vmem:[#allocation2 + $0x30] sm:$0xff] %v4525
        %4542 = vst [vmem:[#allocation2 + $0x48] sm:$0xff] %v4526
        %4543 = vst [vmem:[#allocation2 + $0x50] sm:$0xff] %v4527
        %4544 = vst [vmem:[#allocation2 + $0x68] sm:$0xff] %v4528
        %4545 = vst [vmem:[#allocation2 + $0x70] sm:$0xff] %v4529
        %v4546 = vld [vmem:[#allocation2 + $0x88] sm:$0xff]
        %v4547 = vld [vmem:[#allocation2 + $0x90] sm:$0xff]
        %v4548 = vld [vmem:[#allocation2 + $0x98] sm:$0xff]
        %v4549 = vld [vmem:[#allocation2 + $0xa8] sm:$0xff]
        %v4550 = vld [vmem:[#allocation2 + $0xb0] sm:$0xff]
        %v4551 = vld [vmem:[#allocation2 + $0xb8] sm:$0xff]
        %v4552 = vld [vmem:[#allocation2 + $0xc8] sm:$0xff]
        %v4553 = vld [vmem:[#allocation2 + $0xd0] sm:$0xff]
        %v4554 = vld [vmem:[#allocation2 + $0xd8] sm:$0xff]
        %v4555 = vld [vmem:[#allocation2 + $0xe8] sm:$0xff]
        %v4556 = vld [vmem:[#allocation2 + $0xf0] sm:$0xff]
        %v4557 = vld [vmem:[#allocation2 + $0xf8] sm:$0xff]
        %v4558 = vmul.f32 %v4546, %v380
        %v4559 = vmul.f32 %v4547, %v383
        %v4560 = vmul.f32 %v4548, %v382
        %v4561 = vmul.f32 %v4549, %v380
        %v4562 = vmul.f32 %v4550, %v383
        %v4563 = vmul.f32 %v4551, %v382
        %v4564 = vmul.f32 %v4552, %v380
        %v4565 = vmul.f32 %v4553, %v383
        %v4566 = vmul.f32 %v4554, %v382
        %v4567 = vmul.f32 %v4555, %v380
        %v4568 = vmul.f32 %v4556, %v383
        %v4569 = vmul.f32 %v4557, %v382
        %4582 = vrot.lane.b32.xlu0 %v4558, 127
        %v4583 = vpop.permute.xlu0 %4582
        %4584 = vrot.lane.b32.xlu0 %v4559, 127
        %v4585 = vpop.permute.xlu0 %4584
        %4586 = vrot.lane.b32.xlu0 %v4560, 127
        %v4587 = vpop.permute.xlu0 %4586
        %4588 = vrot.lane.b32.xlu0 %v4561, 127
        %v4589 = vpop.permute.xlu0 %4588
        %4590 = vrot.lane.b32.xlu0 %v4562, 127
        %v4591 = vpop.permute.xlu0 %4590
        %4592 = vrot.lane.b32.xlu0 %v4563, 127
        %v4593 = vpop.permute.xlu0 %4592
        %4594 = vrot.lane.b32.xlu0 %v4564, 127
        %v4595 = vpop.permute.xlu0 %4594
        %4596 = vrot.lane.b32.xlu0 %v4565, 127
        %v4597 = vpop.permute.xlu0 %4596
        %4598 = vrot.lane.b32.xlu0 %v4566, 127
        %v4599 = vpop.permute.xlu0 %4598
        %4600 = vrot.lane.b32.xlu0 %v4567, 127
        %v4601 = vpop.permute.xlu0 %4600
        %4602 = vrot.lane.b32.xlu0 %v4568, 127
        %v4603 = vpop.permute.xlu0 %4602
        %4604 = vrot.lane.b32.xlu0 %v4569, 127
        %v4605 = vpop.permute.xlu0 %4604
        %v4606 = vsel %vm287, %v4583, %v4585
        %v4607 = vsel %vm287, %v4585, %v4587
        %v4608 = vsel %vm287, %v4589, %v4591
        %v4609 = vsel %vm287, %v4591, %v4593
        %v4610 = vsel %vm287, %v4595, %v4597
        %v4611 = vsel %vm287, %v4597, %v4599
        %v4612 = vsel %vm287, %v4601, %v4603
        %v4613 = vsel %vm287, %v4603, %v4605
        %4622 = vst [vmem:[#allocation2 + $0x108] sm:$0xff] %v4606
        %4623 = vst [vmem:[#allocation2 + $0x110] sm:$0xff] %v4607
        %4624 = vst [vmem:[#allocation2 + $0x128] sm:$0xff] %v4608
        %4625 = vst [vmem:[#allocation2 + $0x130] sm:$0xff] %v4609
        %4626 = vst [vmem:[#allocation2 + $0x148] sm:$0xff] %v4610
        %4627 = vst [vmem:[#allocation2 + $0x150] sm:$0xff] %v4611
        %4628 = vst [vmem:[#allocation2 + $0x168] sm:$0xff] %v4612
        %4629 = vst [vmem:[#allocation2 + $0x170] sm:$0xff] %v4613
        %s4630 = scalar_lea.vmem [#allocation3], 480
        %v4631 = vld [vmem:[%s4630] sm:$0xff]
        %v4632 = vld [vmem:[%s4630 + $0x8] sm:$0xff]
        %v4633 = vld [vmem:[%s4630 + $0x10] sm:$0xff]
        %v4634 = vld [vmem:[%s4630 + $0x18] sm:$0xff]
        %v4635 = vld [vmem:[#allocation2] sm:$0xff]
        %v4636 = vld [vmem:[#allocation2 + $0x8] sm:$0xff]
        %v4637 = vld [vmem:[#allocation2 + $0x10] sm:$0xff]
        %v4638 = vld [vmem:[#allocation2 + $0x20] sm:$0xff]
        %v4639 = vld [vmem:[#allocation2 + $0x28] sm:$0xff]
        %v4640 = vld [vmem:[#allocation2 + $0x30] sm:$0xff]
        %v4641 = vld [vmem:[#allocation2 + $0x40] sm:$0xff]
        %v4642 = vld [vmem:[#allocation2 + $0x48] sm:$0xff]
        %v4643 = vld [vmem:[#allocation2 + $0x50] sm:$0xff]
        %v4644 = vld [vmem:[#allocation2 + $0x60] sm:$0xff]
        %v4645 = vld [vmem:[#allocation2 + $0x68] sm:$0xff]
        %v4646 = vld [vmem:[#allocation2 + $0x70] sm:$0xff]
        %v4647 = vld [vmem:[#allocation2 + $0x80] sm:$0xff]
        %v4648 = vld [vmem:[#allocation2 + $0x88] sm:$0xff]
        %v4649 = vld [vmem:[#allocation2 + $0x90] sm:$0xff]
        %v4650 = vld [vmem:[#allocation2 + $0xa0] sm:$0xff]
        %v4651 = vld [vmem:[#allocation2 + $0xa8] sm:$0xff]
        %v4652 = vld [vmem:[#allocation2 + $0xb0] sm:$0xff]
        %v4653 = vld [vmem:[#allocation2 + $0xc0] sm:$0xff]
        %v4654 = vld [vmem:[#allocation2 + $0xc8] sm:$0xff]
        %v4655 = vld [vmem:[#allocation2 + $0xd0] sm:$0xff]
        %v4656 = vld [vmem:[#allocation2 + $0xe0] sm:$0xff]
        %v4657 = vld [vmem:[#allocation2 + $0xe8] sm:$0xff]
        %v4658 = vld [vmem:[#allocation2 + $0xf0] sm:$0xff]
        %v4659 = vld [vmem:[#allocation2 + $0x100] sm:$0xff]
        %v4660 = vld [vmem:[#allocation2 + $0x108] sm:$0xff]
        %v4661 = vld [vmem:[#allocation2 + $0x110] sm:$0xff]
        %v4662 = vld [vmem:[#allocation2 + $0x120] sm:$0xff]
        %v4663 = vld [vmem:[#allocation2 + $0x128] sm:$0xff]
        %v4664 = vld [vmem:[#allocation2 + $0x130] sm:$0xff]
        %v4665 = vld [vmem:[#allocation2 + $0x140] sm:$0xff]
        %v4666 = vld [vmem:[#allocation2 + $0x148] sm:$0xff]
        %v4667 = vld [vmem:[#allocation2 + $0x150] sm:$0xff]
        %v4668 = vld [vmem:[#allocation2 + $0x160] sm:$0xff]
        %v4669 = vld [vmem:[#allocation2 + $0x168] sm:$0xff]
        %v4670 = vld [vmem:[#allocation2 + $0x170] sm:$0xff]
        %s4671 = scalar_lea.vmem [#allocation3], 512
        %v4672 = vld [vmem:[%s4671] sm:$0xff]
        %v4673 = vld [vmem:[%s4671 + $0x8] sm:$0xff]
        %v4674 = vld [vmem:[%s4671 + $0x10] sm:$0xff]
        %v4675 = vld [vmem:[%s4671 + $0x18] sm:$0xff]
        %v4677 = vsel %vm504, %v4672, 0
        %v4680 = vsel %vm504, %v4673, 0
        %v4683 = vsel %vm504, %v4674, 0
        %v4686 = vsel %vm504, %v4675, 0
        %4688 = vmatpush.msra.mxu0 0.0
        %4689 = vmatpush.msra.mxu0 0.0
        %4690 = vmatpush.msra.mxu0 0.0
        %4691 = vmatpush.msra.mxu0 0.0
        %4692 = vmatpush.msra.mxu0 %v4669
        %4693 = vmatpush.msra.mxu0 %v4666
        %4694 = vmatpush.msra.mxu0 %v4663
        %4695 = vmatpush.msra.mxu0 %v4660
        %4696 = vmatpush.msra.mxu0 %v4657
        %4697 = vmatpush.msra.mxu0 %v4654
        %4698 = vmatpush.msra.mxu0 %v4651
        %4699 = vmatpush.msra.mxu0 %v4648
        %4700 = vmatpush.msra.mxu0 %v4645
        %4701 = vmatpush.msra.mxu0 %v4642
        %4702 = vmatpush.msra.mxu0 %v4639
        %4703 = vmatpush.msra.mxu0 %v4636
        %4704 = vmatmul.f32.gmra.mxu0 %v4677
        %v4705 = vpop.f32.mrf.mxu0
        %v4706 = vadd.f32 0.0, %v4705
        %4707 = vmatmul.f32.gmra.mxu0 %v4680
        %v4708 = vpop.f32.mrf.mxu0
        %v4709 = vadd.f32 0.0, %v4708
        %4710 = vmatmul.f32.gmra.mxu0 %v4683
        %v4711 = vpop.f32.mrf.mxu0
        %v4712 = vadd.f32 0.0, %v4711
        %4713 = vmatmul.f32.gmra.mxu0 %v4686
        %v4714 = vpop.f32.mrf.mxu0
        %v4715 = vadd.f32 0.0, %v4714
        %4716 = vdwg.mxu0
        %4717 = vmatpush.msra.mxu0 0.0
        %4718 = vmatpush.msra.mxu0 0.0
        %4719 = vmatpush.msra.mxu0 0.0
        %4720 = vmatpush.msra.mxu0 0.0
        %4721 = vmatpush.msra.mxu0 %v4670
        %4722 = vmatpush.msra.mxu0 %v4667
        %4723 = vmatpush.msra.mxu0 %v4664
        %4724 = vmatpush.msra.mxu0 %v4661
        %4725 = vmatpush.msra.mxu0 %v4658
        %4726 = vmatpush.msra.mxu0 %v4655
        %4727 = vmatpush.msra.mxu0 %v4652
        %4728 = vmatpush.msra.mxu0 %v4649
        %4729 = vmatpush.msra.mxu0 %v4646
        %4730 = vmatpush.msra.mxu0 %v4643
        %4731 = vmatpush.msra.mxu0 %v4640
        %4732 = vmatpush.msra.mxu0 %v4637
        %4733 = vmatmul.f32.gmra.mxu0 %v4677
        %v4734 = vpop.f32.mrf.mxu0
        %v4735 = vadd.f32 0.0, %v4734
        %4736 = vmatmul.f32.gmra.mxu0 %v4680
        %v4737 = vpop.f32.mrf.mxu0
        %v4738 = vadd.f32 0.0, %v4737
        %4739 = vmatmul.f32.gmra.mxu0 %v4683
        %v4740 = vpop.f32.mrf.mxu0
        %v4741 = vadd.f32 0.0, %v4740
        %4742 = vmatmul.f32.gmra.mxu0 %v4686
        %v4743 = vpop.f32.mrf.mxu0
        %v4744 = vadd.f32 0.0, %v4743
        %4745 = vdwg.mxu0
        %4782 = vrot.lane.b32.xlu0 %v4635, 16
        %v4783 = vpop.permute.xlu0 %4782
        %4784 = vrot.lane.b32.xlu0 %v4636, 16
        %v4785 = vpop.permute.xlu0 %4784
        %4786 = vrot.lane.b32.xlu0 %v4637, 16
        %v4787 = vpop.permute.xlu0 %4786
        %4788 = vrot.lane.b32.xlu0 %v4638, 16
        %v4789 = vpop.permute.xlu0 %4788
        %4790 = vrot.lane.b32.xlu0 %v4639, 16
        %v4791 = vpop.permute.xlu0 %4790
        %4792 = vrot.lane.b32.xlu0 %v4640, 16
        %v4793 = vpop.permute.xlu0 %4792
        %4794 = vrot.lane.b32.xlu0 %v4641, 16
        %v4795 = vpop.permute.xlu0 %4794
        %4796 = vrot.lane.b32.xlu0 %v4642, 16
        %v4797 = vpop.permute.xlu0 %4796
        %4798 = vrot.lane.b32.xlu0 %v4643, 16
        %v4799 = vpop.permute.xlu0 %4798
        %4800 = vrot.lane.b32.xlu0 %v4644, 16
        %v4801 = vpop.permute.xlu0 %4800
        %4802 = vrot.lane.b32.xlu0 %v4645, 16
        %v4803 = vpop.permute.xlu0 %4802
        %4804 = vrot.lane.b32.xlu0 %v4646, 16
        %v4805 = vpop.permute.xlu0 %4804
        %4806 = vrot.lane.b32.xlu0 %v4647, 16
        %v4807 = vpop.permute.xlu0 %4806
        %4808 = vrot.lane.b32.xlu0 %v4648, 16
        %v4809 = vpop.permute.xlu0 %4808
        %4810 = vrot.lane.b32.xlu0 %v4649, 16
        %v4811 = vpop.permute.xlu0 %4810
        %4812 = vrot.lane.b32.xlu0 %v4650, 16
        %v4813 = vpop.permute.xlu0 %4812
        %4814 = vrot.lane.b32.xlu0 %v4651, 16
        %v4815 = vpop.permute.xlu0 %4814
        %4816 = vrot.lane.b32.xlu0 %v4652, 16
        %v4817 = vpop.permute.xlu0 %4816
        %4818 = vrot.lane.b32.xlu0 %v4653, 16
        %v4819 = vpop.permute.xlu0 %4818
        %4820 = vrot.lane.b32.xlu0 %v4654, 16
        %v4821 = vpop.permute.xlu0 %4820
        %4822 = vrot.lane.b32.xlu0 %v4655, 16
        %v4823 = vpop.permute.xlu0 %4822
        %4824 = vrot.lane.b32.xlu0 %v4656, 16
        %v4825 = vpop.permute.xlu0 %4824
        %4826 = vrot.lane.b32.xlu0 %v4657, 16
        %v4827 = vpop.permute.xlu0 %4826
        %4828 = vrot.lane.b32.xlu0 %v4658, 16
        %v4829 = vpop.permute.xlu0 %4828
        %4830 = vrot.lane.b32.xlu0 %v4659, 16
        %v4831 = vpop.permute.xlu0 %4830
        %4832 = vrot.lane.b32.xlu0 %v4660, 16
        %v4833 = vpop.permute.xlu0 %4832
        %4834 = vrot.lane.b32.xlu0 %v4661, 16
        %v4835 = vpop.permute.xlu0 %4834
        %4836 = vrot.lane.b32.xlu0 %v4662, 16
        %v4837 = vpop.permute.xlu0 %4836
        %4838 = vrot.lane.b32.xlu0 %v4663, 16
        %v4839 = vpop.permute.xlu0 %4838
        %4840 = vrot.lane.b32.xlu0 %v4664, 16
        %v4841 = vpop.permute.xlu0 %4840
        %4842 = vrot.lane.b32.xlu0 %v4665, 16
        %v4843 = vpop.permute.xlu0 %4842
        %4844 = vrot.lane.b32.xlu0 %v4666, 16
        %v4845 = vpop.permute.xlu0 %4844
        %4846 = vrot.lane.b32.xlu0 %v4667, 16
        %v4847 = vpop.permute.xlu0 %4846
        %4848 = vrot.lane.b32.xlu0 %v4668, 16
        %v4849 = vpop.permute.xlu0 %4848
        %4850 = vrot.lane.b32.xlu0 %v4669, 16
        %v4851 = vpop.permute.xlu0 %4850
        %4852 = vrot.lane.b32.xlu0 %v4670, 16
        %v4853 = vpop.permute.xlu0 %4852
        %v4854 = vsel %vm683, %v4783, %v4785
        %v4855 = vsel %vm683, %v4785, %v4787
        %v4856 = vsel %vm683, %v4789, %v4791
        %v4857 = vsel %vm683, %v4791, %v4793
        %v4858 = vsel %vm683, %v4795, %v4797
        %v4859 = vsel %vm683, %v4797, %v4799
        %v4860 = vsel %vm683, %v4801, %v4803
        %v4861 = vsel %vm683, %v4803, %v4805
        %v4862 = vsel %vm683, %v4807, %v4809
        %v4863 = vsel %vm683, %v4809, %v4811
        %v4864 = vsel %vm683, %v4813, %v4815
        %v4865 = vsel %vm683, %v4815, %v4817
        %v4866 = vsel %vm683, %v4819, %v4821
        %v4867 = vsel %vm683, %v4821, %v4823
        %v4868 = vsel %vm683, %v4825, %v4827
        %v4869 = vsel %vm683, %v4827, %v4829
        %v4870 = vsel %vm683, %v4831, %v4833
        %v4871 = vsel %vm683, %v4833, %v4835
        %v4872 = vsel %vm683, %v4837, %v4839
        %v4873 = vsel %vm683, %v4839, %v4841
        %v4874 = vsel %vm683, %v4843, %v4845
        %v4875 = vsel %vm683, %v4845, %v4847
        %v4876 = vsel %vm683, %v4849, %v4851
        %v4877 = vsel %vm683, %v4851, %v4853
        %v4903 = vsel %vm504, %v4631, 0
        %v4906 = vsel %vm504, %v4632, 0
        %v4909 = vsel %vm504, %v4633, 0
        %v4912 = vsel %vm504, %v4634, 0
        %4914 = vmatpush.msra.mxu0 0.0
        %4915 = vmatpush.msra.mxu0 0.0
        %4916 = vmatpush.msra.mxu0 0.0
        %4917 = vmatpush.msra.mxu0 0.0
        %4918 = vmatpush.msra.mxu0 %v4876
        %4919 = vmatpush.msra.mxu0 %v4874
        %4920 = vmatpush.msra.mxu0 %v4872
        %4921 = vmatpush.msra.mxu0 %v4870
        %4922 = vmatpush.msra.mxu0 %v4868
        %4923 = vmatpush.msra.mxu0 %v4866
        %4924 = vmatpush.msra.mxu0 %v4864
        %4925 = vmatpush.msra.mxu0 %v4862
        %4926 = vmatpush.msra.mxu0 %v4860
        %4927 = vmatpush.msra.mxu0 %v4858
        %4928 = vmatpush.msra.mxu0 %v4856
        %4929 = vmatpush.msra.mxu0 %v4854
        %4930 = vmatmul.f32.gmra.mxu0 %v4903
        %v4931 = vpop.f32.mrf.mxu0
        %v4932 = vadd.f32 %v4706, %v4931
        %4933 = vmatmul.f32.gmra.mxu0 %v4906
        %v4934 = vpop.f32.mrf.mxu0
        %v4935 = vadd.f32 %v4709, %v4934
        %4936 = vmatmul.f32.gmra.mxu0 %v4909
        %v4937 = vpop.f32.mrf.mxu0
        %v4938 = vadd.f32 %v4712, %v4937
        %4939 = vmatmul.f32.gmra.mxu0 %v4912
        %v4940 = vpop.f32.mrf.mxu0
        %v4941 = vadd.f32 %v4715, %v4940
        %4942 = vdwg.mxu0
        %4943 = vmatpush.msra.mxu0 0.0
        %4944 = vmatpush.msra.mxu0 0.0
        %4945 = vmatpush.msra.mxu0 0.0
        %4946 = vmatpush.msra.mxu0 0.0
        %4947 = vmatpush.msra.mxu0 %v4877
        %4948 = vmatpush.msra.mxu0 %v4875
        %4949 = vmatpush.msra.mxu0 %v4873
        %4950 = vmatpush.msra.mxu0 %v4871
        %4951 = vmatpush.msra.mxu0 %v4869
        %4952 = vmatpush.msra.mxu0 %v4867
        %4953 = vmatpush.msra.mxu0 %v4865
        %4954 = vmatpush.msra.mxu0 %v4863
        %4955 = vmatpush.msra.mxu0 %v4861
        %4956 = vmatpush.msra.mxu0 %v4859
        %4957 = vmatpush.msra.mxu0 %v4857
        %4958 = vmatpush.msra.mxu0 %v4855
        %4959 = vmatmul.f32.gmra.mxu0 %v4903
        %v4960 = vpop.f32.mrf.mxu0
        %v4961 = vadd.f32 %v4735, %v4960
        %4962 = vmatmul.f32.gmra.mxu0 %v4906
        %v4963 = vpop.f32.mrf.mxu0
        %v4964 = vadd.f32 %v4738, %v4963
        %4965 = vmatmul.f32.gmra.mxu0 %v4909
        %v4966 = vpop.f32.mrf.mxu0
        %v4967 = vadd.f32 %v4741, %v4966
        %4968 = vmatmul.f32.gmra.mxu0 %v4912
        %v4969 = vpop.f32.mrf.mxu0
        %v4970 = vadd.f32 %v4744, %v4969
        %4971 = vdwg.mxu0
        %s4972 = scalar_lea.vmem [#allocation3], 544
        %v4973 = vld [vmem:[%s4972] sm:$0xff]
        %v4974 = vld [vmem:[%s4972 + $0x8] sm:$0xff]
        %v4975 = vld [vmem:[%s4972 + $0x10] sm:$0xff]
        %v4976 = vld [vmem:[%s4972 + $0x18] sm:$0xff]
        %v4977 = vld [vmem:[#allocation2 + $0x8] sm:$0xff]
        %v4978 = vld [vmem:[#allocation2 + $0x10] sm:$0xff]
        %v4979 = vld [vmem:[#allocation2 + $0x18] sm:$0xff]
        %v4980 = vld [vmem:[#allocation2 + $0x28] sm:$0xff]
        %v4981 = vld [vmem:[#allocation2 + $0x30] sm:$0xff]
        %v4982 = vld [vmem:[#allocation2 + $0x38] sm:$0xff]
        %v4983 = vld [vmem:[#allocation2 + $0x48] sm:$0xff]
        %v4984 = vld [vmem:[#allocation2 + $0x50] sm:$0xff]
        %v4985 = vld [vmem:[#allocation2 + $0x58] sm:$0xff]
        %v4986 = vld [vmem:[#allocation2 + $0x68] sm:$0xff]
        %v4987 = vld [vmem:[#allocation2 + $0x70] sm:$0xff]
        %v4988 = vld [vmem:[#allocation2 + $0x78] sm:$0xff]
        %v4989 = vld [vmem:[#allocation2 + $0x88] sm:$0xff]
        %v4990 = vld [vmem:[#allocation2 + $0x90] sm:$0xff]
        %v4991 = vld [vmem:[#allocation2 + $0x98] sm:$0xff]
        %v4992 = vld [vmem:[#allocation2 + $0xa8] sm:$0xff]
        %v4993 = vld [vmem:[#allocation2 + $0xb0] sm:$0xff]
        %v4994 = vld [vmem:[#allocation2 + $0xb8] sm:$0xff]
        %v4995 = vld [vmem:[#allocation2 + $0xc8] sm:$0xff]
        %v4996 = vld [vmem:[#allocation2 + $0xd0] sm:$0xff]
        %v4997 = vld [vmem:[#allocation2 + $0xd8] sm:$0xff]
        %v4998 = vld [vmem:[#allocation2 + $0xe8] sm:$0xff]
        %v4999 = vld [vmem:[#allocation2 + $0xf0] sm:$0xff]
        %v5000 = vld [vmem:[#allocation2 + $0xf8] sm:$0xff]
        %v5001 = vld [vmem:[#allocation2 + $0x108] sm:$0xff]
        %v5002 = vld [vmem:[#allocation2 + $0x110] sm:$0xff]
        %v5003 = vld [vmem:[#allocation2 + $0x118] sm:$0xff]
        %v5004 = vld [vmem:[#allocation2 + $0x128] sm:$0xff]
        %v5005 = vld [vmem:[#allocation2 + $0x130] sm:$0xff]
        %v5006 = vld [vmem:[#allocation2 + $0x138] sm:$0xff]
        %v5007 = vld [vmem:[#allocation2 + $0x148] sm:$0xff]
        %v5008 = vld [vmem:[#allocation2 + $0x150] sm:$0xff]
        %v5009 = vld [vmem:[#allocation2 + $0x158] sm:$0xff]
        %v5010 = vld [vmem:[#allocation2 + $0x168] sm:$0xff]
        %v5011 = vld [vmem:[#allocation2 + $0x170] sm:$0xff]
        %v5012 = vld [vmem:[#allocation2 + $0x178] sm:$0xff]
        %5049 = vrot.lane.b32.xlu0 %v4977, 112
        %v5050 = vpop.permute.xlu0 %5049
        %5051 = vrot.lane.b32.xlu0 %v4978, 112
        %v5052 = vpop.permute.xlu0 %5051
        %5053 = vrot.lane.b32.xlu0 %v4979, 112
        %v5054 = vpop.permute.xlu0 %5053
        %5055 = vrot.lane.b32.xlu0 %v4980, 112
        %v5056 = vpop.permute.xlu0 %5055
        %5057 = vrot.lane.b32.xlu0 %v4981, 112
        %v5058 = vpop.permute.xlu0 %5057
        %5059 = vrot.lane.b32.xlu0 %v4982, 112
        %v5060 = vpop.permute.xlu0 %5059
        %5061 = vrot.lane.b32.xlu0 %v4983, 112
        %v5062 = vpop.permute.xlu0 %5061
        %5063 = vrot.lane.b32.xlu0 %v4984, 112
        %v5064 = vpop.permute.xlu0 %5063
        %5065 = vrot.lane.b32.xlu0 %v4985, 112
        %v5066 = vpop.permute.xlu0 %5065
        %5067 = vrot.lane.b32.xlu0 %v4986, 112
        %v5068 = vpop.permute.xlu0 %5067
        %5069 = vrot.lane.b32.xlu0 %v4987, 112
        %v5070 = vpop.permute.xlu0 %5069
        %5071 = vrot.lane.b32.xlu0 %v4988, 112
        %v5072 = vpop.permute.xlu0 %5071
        %5073 = vrot.lane.b32.xlu0 %v4989, 112
        %v5074 = vpop.permute.xlu0 %5073
        %5075 = vrot.lane.b32.xlu0 %v4990, 112
        %v5076 = vpop.permute.xlu0 %5075
        %5077 = vrot.lane.b32.xlu0 %v4991, 112
        %v5078 = vpop.permute.xlu0 %5077
        %5079 = vrot.lane.b32.xlu0 %v4992, 112
        %v5080 = vpop.permute.xlu0 %5079
        %5081 = vrot.lane.b32.xlu0 %v4993, 112
        %v5082 = vpop.permute.xlu0 %5081
        %5083 = vrot.lane.b32.xlu0 %v4994, 112
        %v5084 = vpop.permute.xlu0 %5083
        %5085 = vrot.lane.b32.xlu0 %v4995, 112
        %v5086 = vpop.permute.xlu0 %5085
        %5087 = vrot.lane.b32.xlu0 %v4996, 112
        %v5088 = vpop.permute.xlu0 %5087
        %5089 = vrot.lane.b32.xlu0 %v4997, 112
        %v5090 = vpop.permute.xlu0 %5089
        %5091 = vrot.lane.b32.xlu0 %v4998, 112
        %v5092 = vpop.permute.xlu0 %5091
        %5093 = vrot.lane.b32.xlu0 %v4999, 112
        %v5094 = vpop.permute.xlu0 %5093
        %5095 = vrot.lane.b32.xlu0 %v5000, 112
        %v5096 = vpop.permute.xlu0 %5095
        %5097 = vrot.lane.b32.xlu0 %v5001, 112
        %v5098 = vpop.permute.xlu0 %5097
        %5099 = vrot.lane.b32.xlu0 %v5002, 112
        %v5100 = vpop.permute.xlu0 %5099
        %5101 = vrot.lane.b32.xlu0 %v5003, 112
        %v5102 = vpop.permute.xlu0 %5101
        %5103 = vrot.lane.b32.xlu0 %v5004, 112
        %v5104 = vpop.permute.xlu0 %5103
        %5105 = vrot.lane.b32.xlu0 %v5005, 112
        %v5106 = vpop.permute.xlu0 %5105
        %5107 = vrot.lane.b32.xlu0 %v5006, 112
        %v5108 = vpop.permute.xlu0 %5107
        %5109 = vrot.lane.b32.xlu0 %v5007, 112
        %v5110 = vpop.permute.xlu0 %5109
        %5111 = vrot.lane.b32.xlu0 %v5008, 112
        %v5112 = vpop.permute.xlu0 %5111
        %5113 = vrot.lane.b32.xlu0 %v5009, 112
        %v5114 = vpop.permute.xlu0 %5113
        %5115 = vrot.lane.b32.xlu0 %v5010, 112
        %v5116 = vpop.permute.xlu0 %5115
        %5117 = vrot.lane.b32.xlu0 %v5011, 112
        %v5118 = vpop.permute.xlu0 %5117
        %5119 = vrot.lane.b32.xlu0 %v5012, 112
        %v5120 = vpop.permute.xlu0 %5119
        %v5121 = vsel %vm951, %v5050, %v5052
        %v5122 = vsel %vm951, %v5052, %v5054
        %v5123 = vsel %vm951, %v5056, %v5058
        %v5124 = vsel %vm951, %v5058, %v5060
        %v5125 = vsel %vm951, %v5062, %v5064
        %v5126 = vsel %vm951, %v5064, %v5066
        %v5127 = vsel %vm951, %v5068, %v5070
        %v5128 = vsel %vm951, %v5070, %v5072
        %v5129 = vsel %vm951, %v5074, %v5076
        %v5130 = vsel %vm951, %v5076, %v5078
        %v5131 = vsel %vm951, %v5080, %v5082
        %v5132 = vsel %vm951, %v5082, %v5084
        %v5133 = vsel %vm951, %v5086, %v5088
        %v5134 = vsel %vm951, %v5088, %v5090
        %v5135 = vsel %vm951, %v5092, %v5094
        %v5136 = vsel %vm951, %v5094, %v5096
        %v5137 = vsel %vm951, %v5098, %v5100
        %v5138 = vsel %vm951, %v5100, %v5102
        %v5139 = vsel %vm951, %v5104, %v5106
        %v5140 = vsel %vm951, %v5106, %v5108
        %v5141 = vsel %vm951, %v5110, %v5112
        %v5142 = vsel %vm951, %v5112, %v5114
        %v5143 = vsel %vm951, %v5116, %v5118
        %v5144 = vsel %vm951, %v5118, %v5120
        %v5170 = vsel %vm504, %v4973, 0
        %v5173 = vsel %vm504, %v4974, 0
        %v5176 = vsel %vm504, %v4975, 0
        %v5179 = vsel %vm504, %v4976, 0
        %5181 = vmatpush.msra.mxu0 0.0
        %5182 = vmatpush.msra.mxu0 0.0
        %5183 = vmatpush.msra.mxu0 0.0
        %5184 = vmatpush.msra.mxu0 0.0
        %5185 = vmatpush.msra.mxu0 %v5143
        %5186 = vmatpush.msra.mxu0 %v5141
        %5187 = vmatpush.msra.mxu0 %v5139
        %5188 = vmatpush.msra.mxu0 %v5137
        %5189 = vmatpush.msra.mxu0 %v5135
        %5190 = vmatpush.msra.mxu0 %v5133
        %5191 = vmatpush.msra.mxu0 %v5131
        %5192 = vmatpush.msra.mxu0 %v5129
        %5193 = vmatpush.msra.mxu0 %v5127
        %5194 = vmatpush.msra.mxu0 %v5125
        %5195 = vmatpush.msra.mxu0 %v5123
        %5196 = vmatpush.msra.mxu0 %v5121
        %5197 = vmatmul.f32.gmra.mxu0 %v5170
        %v5198 = vpop.f32.mrf.mxu0
        %v5199 = vadd.f32 0.0, %v5198
        %5200 = vmatmul.f32.gmra.mxu0 %v5173
        %v5201 = vpop.f32.mrf.mxu0
        %v5202 = vadd.f32 0.0, %v5201
        %5203 = vmatmul.f32.gmra.mxu0 %v5176
        %v5204 = vpop.f32.mrf.mxu0
        %v5205 = vadd.f32 0.0, %v5204
        %5206 = vmatmul.f32.gmra.mxu0 %v5179
        %v5207 = vpop.f32.mrf.mxu0
        %v5208 = vadd.f32 0.0, %v5207
        %5209 = vdwg.mxu0
        %5210 = vmatpush.msra.mxu0 0.0
        %5211 = vmatpush.msra.mxu0 0.0
        %5212 = vmatpush.msra.mxu0 0.0
        %5213 = vmatpush.msra.mxu0 0.0
        %5214 = vmatpush.msra.mxu0 %v5144
        %5215 = vmatpush.msra.mxu0 %v5142
        %5216 = vmatpush.msra.mxu0 %v5140
        %5217 = vmatpush.msra.mxu0 %v5138
        %5218 = vmatpush.msra.mxu0 %v5136
        %5219 = vmatpush.msra.mxu0 %v5134
        %5220 = vmatpush.msra.mxu0 %v5132
        %5221 = vmatpush.msra.mxu0 %v5130
        %5222 = vmatpush.msra.mxu0 %v5128
        %5223 = vmatpush.msra.mxu0 %v5126
        %5224 = vmatpush.msra.mxu0 %v5124
        %5225 = vmatpush.msra.mxu0 %v5122
        %5226 = vmatmul.f32.gmra.mxu0 %v5170
        %v5227 = vpop.f32.mrf.mxu0
        %v5228 = vadd.f32 0.0, %v5227
        %5229 = vmatmul.f32.gmra.mxu0 %v5173
        %v5230 = vpop.f32.mrf.mxu0
        %v5231 = vadd.f32 0.0, %v5230
        %5232 = vmatmul.f32.gmra.mxu0 %v5176
        %v5233 = vpop.f32.mrf.mxu0
        %v5234 = vadd.f32 0.0, %v5233
        %5235 = vmatmul.f32.gmra.mxu0 %v5179
        %v5236 = vpop.f32.mrf.mxu0
        %v5237 = vadd.f32 0.0, %v5236
        %5238 = vdwg.mxu0
        %v5239 = vadd.f32 %v4932, %v5199
        %v5240 = vadd.f32 %v4961, %v5228
        %v5241 = vadd.f32 %v4935, %v5202
        %v5242 = vadd.f32 %v4964, %v5231
        %v5243 = vadd.f32 %v4938, %v5205
        %v5244 = vadd.f32 %v4967, %v5234
        %v5245 = vadd.f32 %v4941, %v5208
        %v5246 = vadd.f32 %v4970, %v5237
        %s5247 = scalar_lea.vmem %s2, 160
        %v5248 = vld [vmem:[%s5247] sm:$0xff]
        %v5249 = vld [vmem:[%s5247 + $0x8] sm:$0xff]
        %v5250 = vld [vmem:[%s5247 + $0x10] sm:$0xff]
        %v5251 = vld [vmem:[%s5247 + $0x18] sm:$0xff]
        %5253 = vset.pattern.permute.xlu0 0
        %5254 = vperm.xlu0 %5253, %v5248
        %v5255 = vpop.permute.xlu0 %5254
        %5258 = vset.pattern.permute.xlu0 0
        %5259 = vperm.xlu0 %5258, %v5249
        %v5260 = vpop.permute.xlu0 %5259
        %5263 = vset.pattern.permute.xlu0 0
        %5264 = vperm.xlu0 %5263, %v5250
        %v5265 = vpop.permute.xlu0 %5264
        %5268 = vset.pattern.permute.xlu0 0
        %5269 = vperm.xlu0 %5268, %v5251
        %v5270 = vpop.permute.xlu0 %5269
        %v5272 = vadd.f32 %v5239, %v5255
        %v5273 = vadd.f32 %v5240, %v5255
        %v5274 = vadd.f32 %v5241, %v5260
        %v5275 = vadd.f32 %v5242, %v5260
        %v5276 = vadd.f32 %v5243, %v5265
        %v5277 = vadd.f32 %v5244, %v5265
        %v5278 = vadd.f32 %v5245, %v5270
        %v5279 = vadd.f32 %v5246, %v5270
        %v5280 = vmax.f32 %v5272, 0.0
        %v5281 = vmax.f32 %v5273, 0.0
        %v5282 = vmax.f32 %v5274, 0.0
        %v5283 = vmax.f32 %v5275, 0.0
        %v5284 = vmax.f32 %v5276, 0.0
        %v5285 = vmax.f32 %v5277, 0.0
        %v5286 = vmax.f32 %v5278, 0.0
        %v5287 = vmax.f32 %v5279, 0.0
        %5288 = vst [vmem:[#allocation2 + $0x88] sm:$0xff] %v5280
        %5289 = vst [vmem:[#allocation2 + $0x90] sm:$0xff] %v5281
        %5290 = vst [vmem:[#allocation2 + $0xa8] sm:$0xff] %v5282
        %5291 = vst [vmem:[#allocation2 + $0xb0] sm:$0xff] %v5283
        %5292 = vst [vmem:[#allocation2 + $0xc8] sm:$0xff] %v5284
        %5293 = vst [vmem:[#allocation2 + $0xd0] sm:$0xff] %v5285
        %5294 = vst [vmem:[#allocation2 + $0xe8] sm:$0xff] %v5286
        %5295 = vst [vmem:[#allocation2 + $0xf0] sm:$0xff] %v5287
        %v5296 = vld [vmem:[#allocation2 + $0x80] sm:$0xff]
        %v5297 = vld [vmem:[#allocation2 + $0x88] sm:$0xff]
        %v5298 = vld [vmem:[#allocation2 + $0x90] sm:$0xff]
        %v5299 = vld [vmem:[#allocation2 + $0xa0] sm:$0xff]
        %v5300 = vld [vmem:[#allocation2 + $0xa8] sm:$0xff]
        %v5301 = vld [vmem:[#allocation2 + $0xb0] sm:$0xff]
        %v5302 = vld [vmem:[#allocation2 + $0xc0] sm:$0xff]
        %v5303 = vld [vmem:[#allocation2 + $0xc8] sm:$0xff]
        %v5304 = vld [vmem:[#allocation2 + $0xd0] sm:$0xff]
        %v5305 = vld [vmem:[#allocation2 + $0xe0] sm:$0xff]
        %v5306 = vld [vmem:[#allocation2 + $0xe8] sm:$0xff]
        %v5307 = vld [vmem:[#allocation2 + $0xf0] sm:$0xff]
        %v5308 = vmul.f32 %v5296, %v284
        %v5309 = vmul.f32 %v5297, %v288
        %v5310 = vmul.f32 %v5298, %v286
        %v5311 = vmul.f32 %v5299, %v284
        %v5312 = vmul.f32 %v5300, %v288
        %v5313 = vmul.f32 %v5301, %v286
        %v5314 = vmul.f32 %v5302, %v284
        %v5315 = vmul.f32 %v5303, %v288
        %v5316 = vmul.f32 %v5304, %v286
        %v5317 = vmul.f32 %v5305, %v284
        %v5318 = vmul.f32 %v5306, %v288
        %v5319 = vmul.f32 %v5307, %v286
        %5332 = vrot.lane.b32.xlu0 %v5308, 1
        %v5333 = vpop.permute.xlu0 %5332
        %5334 = vrot.lane.b32.xlu0 %v5309, 1
        %v5335 = vpop.permute.xlu0 %5334
        %5336 = vrot.lane.b32.xlu0 %v5310, 1
        %v5337 = vpop.permute.xlu0 %5336
        %5338 = vrot.lane.b32.xlu0 %v5311, 1
        %v5339 = vpop.permute.xlu0 %5338
        %5340 = vrot.lane.b32.xlu0 %v5312, 1
        %v5341 = vpop.permute.xlu0 %5340
        %5342 = vrot.lane.b32.xlu0 %v5313, 1
        %v5343 = vpop.permute.xlu0 %5342
        %5344 = vrot.lane.b32.xlu0 %v5314, 1
        %v5345 = vpop.permute.xlu0 %5344
        %5346 = vrot.lane.b32.xlu0 %v5315, 1
        %v5347 = vpop.permute.xlu0 %5346
        %5348 = vrot.lane.b32.xlu0 %v5316, 1
        %v5349 = vpop.permute.xlu0 %5348
        %5350 = vrot.lane.b32.xlu0 %v5317, 1
        %v5351 = vpop.permute.xlu0 %5350
        %5352 = vrot.lane.b32.xlu0 %v5318, 1
        %v5353 = vpop.permute.xlu0 %5352
        %5354 = vrot.lane.b32.xlu0 %v5319, 1
        %v5355 = vpop.permute.xlu0 %5354
        %v5356 = vsel %vm340, %v5333, %v5335
        %v5357 = vsel %vm340, %v5335, %v5337
        %v5358 = vsel %vm340, %v5339, %v5341
        %v5359 = vsel %vm340, %v5341, %v5343
        %v5360 = vsel %vm340, %v5345, %v5347
        %v5361 = vsel %vm340, %v5347, %v5349
        %v5362 = vsel %vm340, %v5351, %v5353
        %v5363 = vsel %vm340, %v5353, %v5355
        %5372 = vst [vmem:[#allocation2 + $0x8] sm:$0xff] %v5356
        %5373 = vst [vmem:[#allocation2 + $0x10] sm:$0xff] %v5357
        %5374 = vst [vmem:[#allocation2 + $0x28] sm:$0xff] %v5358
        %5375 = vst [vmem:[#allocation2 + $0x30] sm:$0xff] %v5359
        %5376 = vst [vmem:[#allocation2 + $0x48] sm:$0xff] %v5360
        %5377 = vst [vmem:[#allocation2 + $0x50] sm:$0xff] %v5361
        %5378 = vst [vmem:[#allocation2 + $0x68] sm:$0xff] %v5362
        %5379 = vst [vmem:[#allocation2 + $0x70] sm:$0xff] %v5363
        %v5380 = vld [vmem:[#allocation2 + $0x88] sm:$0xff]
        %v5381 = vld [vmem:[#allocation2 + $0x90] sm:$0xff]
        %v5382 = vld [vmem:[#allocation2 + $0x98] sm:$0xff]
        %v5383 = vld [vmem:[#allocation2 + $0xa8] sm:$0xff]
        %v5384 = vld [vmem:[#allocation2 + $0xb0] sm:$0xff]
        %v5385 = vld [vmem:[#allocation2 + $0xb8] sm:$0xff]
        %v5386 = vld [vmem:[#allocation2 + $0xc8] sm:$0xff]
        %v5387 = vld [vmem:[#allocation2 + $0xd0] sm:$0xff]
        %v5388 = vld [vmem:[#allocation2 + $0xd8] sm:$0xff]
        %v5389 = vld [vmem:[#allocation2 + $0xe8] sm:$0xff]
        %v5390 = vld [vmem:[#allocation2 + $0xf0] sm:$0xff]
        %v5391 = vld [vmem:[#allocation2 + $0xf8] sm:$0xff]
        %v5392 = vmul.f32 %v5380, %v380
        %v5393 = vmul.f32 %v5381, %v383
        %v5394 = vmul.f32 %v5382, %v382
        %v5395 = vmul.f32 %v5383, %v380
        %v5396 = vmul.f32 %v5384, %v383
        %v5397 = vmul.f32 %v5385, %v382
        %v5398 = vmul.f32 %v5386, %v380
        %v5399 = vmul.f32 %v5387, %v383
        %v5400 = vmul.f32 %v5388, %v382
        %v5401 = vmul.f32 %v5389, %v380
        %v5402 = vmul.f32 %v5390, %v383
        %v5403 = vmul.f32 %v5391, %v382
        %5416 = vrot.lane.b32.xlu0 %v5392, 127
        %v5417 = vpop.permute.xlu0 %5416
        %5418 = vrot.lane.b32.xlu0 %v5393, 127
        %v5419 = vpop.permute.xlu0 %5418
        %5420 = vrot.lane.b32.xlu0 %v5394, 127
        %v5421 = vpop.permute.xlu0 %5420
        %5422 = vrot.lane.b32.xlu0 %v5395, 127
        %v5423 = vpop.permute.xlu0 %5422
        %5424 = vrot.lane.b32.xlu0 %v5396, 127
        %v5425 = vpop.permute.xlu0 %5424
        %5426 = vrot.lane.b32.xlu0 %v5397, 127
        %v5427 = vpop.permute.xlu0 %5426
        %5428 = vrot.lane.b32.xlu0 %v5398, 127
        %v5429 = vpop.permute.xlu0 %5428
        %5430 = vrot.lane.b32.xlu0 %v5399, 127
        %v5431 = vpop.permute.xlu0 %5430
        %5432 = vrot.lane.b32.xlu0 %v5400, 127
        %v5433 = vpop.permute.xlu0 %5432
        %5434 = vrot.lane.b32.xlu0 %v5401, 127
        %v5435 = vpop.permute.xlu0 %5434
        %5436 = vrot.lane.b32.xlu0 %v5402, 127
        %v5437 = vpop.permute.xlu0 %5436
        %5438 = vrot.lane.b32.xlu0 %v5403, 127
        %v5439 = vpop.permute.xlu0 %5438
        %v5440 = vsel %vm287, %v5417, %v5419
        %v5441 = vsel %vm287, %v5419, %v5421
        %v5442 = vsel %vm287, %v5423, %v5425
        %v5443 = vsel %vm287, %v5425, %v5427
        %v5444 = vsel %vm287, %v5429, %v5431
        %v5445 = vsel %vm287, %v5431, %v5433
        %v5446 = vsel %vm287, %v5435, %v5437
        %v5447 = vsel %vm287, %v5437, %v5439
        %5456 = vst [vmem:[#allocation2 + $0x108] sm:$0xff] %v5440
        %5457 = vst [vmem:[#allocation2 + $0x110] sm:$0xff] %v5441
        %5458 = vst [vmem:[#allocation2 + $0x128] sm:$0xff] %v5442
        %5459 = vst [vmem:[#allocation2 + $0x130] sm:$0xff] %v5443
        %5460 = vst [vmem:[#allocation2 + $0x148] sm:$0xff] %v5444
        %5461 = vst [vmem:[#allocation2 + $0x150] sm:$0xff] %v5445
        %5462 = vst [vmem:[#allocation2 + $0x168] sm:$0xff] %v5446
        %5463 = vst [vmem:[#allocation2 + $0x170] sm:$0xff] %v5447
        %s5464 = scalar_lea.vmem [#allocation3], 576
        %v5465 = vld [vmem:[%s5464] sm:$0xff]
        %v5466 = vld [vmem:[%s5464 + $0x8] sm:$0xff]
        %v5467 = vld [vmem:[%s5464 + $0x10] sm:$0xff]
        %v5468 = vld [vmem:[%s5464 + $0x18] sm:$0xff]
        %v5469 = vld [vmem:[#allocation2] sm:$0xff]
        %v5470 = vld [vmem:[#allocation2 + $0x8] sm:$0xff]
        %v5471 = vld [vmem:[#allocation2 + $0x10] sm:$0xff]
        %v5472 = vld [vmem:[#allocation2 + $0x20] sm:$0xff]
        %v5473 = vld [vmem:[#allocation2 + $0x28] sm:$0xff]
        %v5474 = vld [vmem:[#allocation2 + $0x30] sm:$0xff]
        %v5475 = vld [vmem:[#allocation2 + $0x40] sm:$0xff]
        %v5476 = vld [vmem:[#allocation2 + $0x48] sm:$0xff]
        %v5477 = vld [vmem:[#allocation2 + $0x50] sm:$0xff]
        %v5478 = vld [vmem:[#allocation2 + $0x60] sm:$0xff]
        %v5479 = vld [vmem:[#allocation2 + $0x68] sm:$0xff]
        %v5480 = vld [vmem:[#allocation2 + $0x70] sm:$0xff]
        %v5481 = vld [vmem:[#allocation2 + $0x80] sm:$0xff]
        %v5482 = vld [vmem:[#allocation2 + $0x88] sm:$0xff]
        %v5483 = vld [vmem:[#allocation2 + $0x90] sm:$0xff]
        %v5484 = vld [vmem:[#allocation2 + $0xa0] sm:$0xff]
        %v5485 = vld [vmem:[#allocation2 + $0xa8] sm:$0xff]
        %v5486 = vld [vmem:[#allocation2 + $0xb0] sm:$0xff]
        %v5487 = vld [vmem:[#allocation2 + $0xc0] sm:$0xff]
        %v5488 = vld [vmem:[#allocation2 + $0xc8] sm:$0xff]
        %v5489 = vld [vmem:[#allocation2 + $0xd0] sm:$0xff]
        %v5490 = vld [vmem:[#allocation2 + $0xe0] sm:$0xff]
        %v5491 = vld [vmem:[#allocation2 + $0xe8] sm:$0xff]
        %v5492 = vld [vmem:[#allocation2 + $0xf0] sm:$0xff]
        %v5493 = vld [vmem:[#allocation2 + $0x100] sm:$0xff]
        %v5494 = vld [vmem:[#allocation2 + $0x108] sm:$0xff]
        %v5495 = vld [vmem:[#allocation2 + $0x110] sm:$0xff]
        %v5496 = vld [vmem:[#allocation2 + $0x120] sm:$0xff]
        %v5497 = vld [vmem:[#allocation2 + $0x128] sm:$0xff]
        %v5498 = vld [vmem:[#allocation2 + $0x130] sm:$0xff]
        %v5499 = vld [vmem:[#allocation2 + $0x140] sm:$0xff]
        %v5500 = vld [vmem:[#allocation2 + $0x148] sm:$0xff]
        %v5501 = vld [vmem:[#allocation2 + $0x150] sm:$0xff]
        %v5502 = vld [vmem:[#allocation2 + $0x160] sm:$0xff]
        %v5503 = vld [vmem:[#allocation2 + $0x168] sm:$0xff]
        %v5504 = vld [vmem:[#allocation2 + $0x170] sm:$0xff]
        %s5505 = scalar_lea.vmem [#allocation3], 608
        %v5506 = vld [vmem:[%s5505] sm:$0xff]
        %v5507 = vld [vmem:[%s5505 + $0x8] sm:$0xff]
        %v5508 = vld [vmem:[%s5505 + $0x10] sm:$0xff]
        %v5509 = vld [vmem:[%s5505 + $0x18] sm:$0xff]
        %v5511 = vsel %vm504, %v5506, 0
        %v5514 = vsel %vm504, %v5507, 0
        %v5517 = vsel %vm504, %v5508, 0
        %v5520 = vsel %vm504, %v5509, 0
        %5522 = vmatpush.msra.mxu0 0.0
        %5523 = vmatpush.msra.mxu0 0.0
        %5524 = vmatpush.msra.mxu0 0.0
        %5525 = vmatpush.msra.mxu0 0.0
        %5526 = vmatpush.msra.mxu0 %v5503
        %5527 = vmatpush.msra.mxu0 %v5500
        %5528 = vmatpush.msra.mxu0 %v5497
        %5529 = vmatpush.msra.mxu0 %v5494
        %5530 = vmatpush.msra.mxu0 %v5491
        %5531 = vmatpush.msra.mxu0 %v5488
        %5532 = vmatpush.msra.mxu0 %v5485
        %5533 = vmatpush.msra.mxu0 %v5482
        %5534 = vmatpush.msra.mxu0 %v5479
        %5535 = vmatpush.msra.mxu0 %v5476
        %5536 = vmatpush.msra.mxu0 %v5473
        %5537 = vmatpush.msra.mxu0 %v5470
        %5538 = vmatmul.f32.gmra.mxu0 %v5511
        %v5539 = vpop.f32.mrf.mxu0
        %v5540 = vadd.f32 0.0, %v5539
        %5541 = vmatmul.f32.gmra.mxu0 %v5514
        %v5542 = vpop.f32.mrf.mxu0
        %v5543 = vadd.f32 0.0, %v5542
        %5544 = vmatmul.f32.gmra.mxu0 %v5517
        %v5545 = vpop.f32.mrf.mxu0
        %v5546 = vadd.f32 0.0, %v5545
        %5547 = vmatmul.f32.gmra.mxu0 %v5520
        %v5548 = vpop.f32.mrf.mxu0
        %v5549 = vadd.f32 0.0, %v5548
        %5550 = vdwg.mxu0
        %5551 = vmatpush.msra.mxu0 0.0
        %5552 = vmatpush.msra.mxu0 0.0
        %5553 = vmatpush.msra.mxu0 0.0
        %5554 = vmatpush.msra.mxu0 0.0
        %5555 = vmatpush.msra.mxu0 %v5504
        %5556 = vmatpush.msra.mxu0 %v5501
        %5557 = vmatpush.msra.mxu0 %v5498
        %5558 = vmatpush.msra.mxu0 %v5495
        %5559 = vmatpush.msra.mxu0 %v5492
        %5560 = vmatpush.msra.mxu0 %v5489
        %5561 = vmatpush.msra.mxu0 %v5486
        %5562 = vmatpush.msra.mxu0 %v5483
        %5563 = vmatpush.msra.mxu0 %v5480
        %5564 = vmatpush.msra.mxu0 %v5477
        %5565 = vmatpush.msra.mxu0 %v5474
        %5566 = vmatpush.msra.mxu0 %v5471
        %5567 = vmatmul.f32.gmra.mxu0 %v5511
        %v5568 = vpop.f32.mrf.mxu0
        %v5569 = vadd.f32 0.0, %v5568
        %5570 = vmatmul.f32.gmra.mxu0 %v5514
        %v5571 = vpop.f32.mrf.mxu0
        %v5572 = vadd.f32 0.0, %v5571
        %5573 = vmatmul.f32.gmra.mxu0 %v5517
        %v5574 = vpop.f32.mrf.mxu0
        %v5575 = vadd.f32 0.0, %v5574
        %5576 = vmatmul.f32.gmra.mxu0 %v5520
        %v5577 = vpop.f32.mrf.mxu0
        %v5578 = vadd.f32 0.0, %v5577
        %5579 = vdwg.mxu0
        %5616 = vrot.lane.b32.xlu0 %v5469, 16
        %v5617 = vpop.permute.xlu0 %5616
        %5618 = vrot.lane.b32.xlu0 %v5470, 16
        %v5619 = vpop.permute.xlu0 %5618
        %5620 = vrot.lane.b32.xlu0 %v5471, 16
        %v5621 = vpop.permute.xlu0 %5620
        %5622 = vrot.lane.b32.xlu0 %v5472, 16
        %v5623 = vpop.permute.xlu0 %5622
        %5624 = vrot.lane.b32.xlu0 %v5473, 16
        %v5625 = vpop.permute.xlu0 %5624
        %5626 = vrot.lane.b32.xlu0 %v5474, 16
        %v5627 = vpop.permute.xlu0 %5626
        %5628 = vrot.lane.b32.xlu0 %v5475, 16
        %v5629 = vpop.permute.xlu0 %5628
        %5630 = vrot.lane.b32.xlu0 %v5476, 16
        %v5631 = vpop.permute.xlu0 %5630
        %5632 = vrot.lane.b32.xlu0 %v5477, 16
        %v5633 = vpop.permute.xlu0 %5632
        %5634 = vrot.lane.b32.xlu0 %v5478, 16
        %v5635 = vpop.permute.xlu0 %5634
        %5636 = vrot.lane.b32.xlu0 %v5479, 16
        %v5637 = vpop.permute.xlu0 %5636
        %5638 = vrot.lane.b32.xlu0 %v5480, 16
        %v5639 = vpop.permute.xlu0 %5638
        %5640 = vrot.lane.b32.xlu0 %v5481, 16
        %v5641 = vpop.permute.xlu0 %5640
        %5642 = vrot.lane.b32.xlu0 %v5482, 16
        %v5643 = vpop.permute.xlu0 %5642
        %5644 = vrot.lane.b32.xlu0 %v5483, 16
        %v5645 = vpop.permute.xlu0 %5644
        %5646 = vrot.lane.b32.xlu0 %v5484, 16
        %v5647 = vpop.permute.xlu0 %5646
        %5648 = vrot.lane.b32.xlu0 %v5485, 16
        %v5649 = vpop.permute.xlu0 %5648
        %5650 = vrot.lane.b32.xlu0 %v5486, 16
        %v5651 = vpop.permute.xlu0 %5650
        %5652 = vrot.lane.b32.xlu0 %v5487, 16
        %v5653 = vpop.permute.xlu0 %5652
        %5654 = vrot.lane.b32.xlu0 %v5488, 16
        %v5655 = vpop.permute.xlu0 %5654
        %5656 = vrot.lane.b32.xlu0 %v5489, 16
        %v5657 = vpop.permute.xlu0 %5656
        %5658 = vrot.lane.b32.xlu0 %v5490, 16
        %v5659 = vpop.permute.xlu0 %5658
        %5660 = vrot.lane.b32.xlu0 %v5491, 16
        %v5661 = vpop.permute.xlu0 %5660
        %5662 = vrot.lane.b32.xlu0 %v5492, 16
        %v5663 = vpop.permute.xlu0 %5662
        %5664 = vrot.lane.b32.xlu0 %v5493, 16
        %v5665 = vpop.permute.xlu0 %5664
        %5666 = vrot.lane.b32.xlu0 %v5494, 16
        %v5667 = vpop.permute.xlu0 %5666
        %5668 = vrot.lane.b32.xlu0 %v5495, 16
        %v5669 = vpop.permute.xlu0 %5668
        %5670 = vrot.lane.b32.xlu0 %v5496, 16
        %v5671 = vpop.permute.xlu0 %5670
        %5672 = vrot.lane.b32.xlu0 %v5497, 16
        %v5673 = vpop.permute.xlu0 %5672
        %5674 = vrot.lane.b32.xlu0 %v5498, 16
        %v5675 = vpop.permute.xlu0 %5674
        %5676 = vrot.lane.b32.xlu0 %v5499, 16
        %v5677 = vpop.permute.xlu0 %5676
        %5678 = vrot.lane.b32.xlu0 %v5500, 16
        %v5679 = vpop.permute.xlu0 %5678
        %5680 = vrot.lane.b32.xlu0 %v5501, 16
        %v5681 = vpop.permute.xlu0 %5680
        %5682 = vrot.lane.b32.xlu0 %v5502, 16
        %v5683 = vpop.permute.xlu0 %5682
        %5684 = vrot.lane.b32.xlu0 %v5503, 16
        %v5685 = vpop.permute.xlu0 %5684
        %5686 = vrot.lane.b32.xlu0 %v5504, 16
        %v5687 = vpop.permute.xlu0 %5686
        %v5688 = vsel %vm683, %v5617, %v5619
        %v5689 = vsel %vm683, %v5619, %v5621
        %v5690 = vsel %vm683, %v5623, %v5625
        %v5691 = vsel %vm683, %v5625, %v5627
        %v5692 = vsel %vm683, %v5629, %v5631
        %v5693 = vsel %vm683, %v5631, %v5633
        %v5694 = vsel %vm683, %v5635, %v5637
        %v5695 = vsel %vm683, %v5637, %v5639
        %v5696 = vsel %vm683, %v5641, %v5643
        %v5697 = vsel %vm683, %v5643, %v5645
        %v5698 = vsel %vm683, %v5647, %v5649
        %v5699 = vsel %vm683, %v5649, %v5651
        %v5700 = vsel %vm683, %v5653, %v5655
        %v5701 = vsel %vm683, %v5655, %v5657
        %v5702 = vsel %vm683, %v5659, %v5661
        %v5703 = vsel %vm683, %v5661, %v5663
        %v5704 = vsel %vm683, %v5665, %v5667
        %v5705 = vsel %vm683, %v5667, %v5669
        %v5706 = vsel %vm683, %v5671, %v5673
        %v5707 = vsel %vm683, %v5673, %v5675
        %v5708 = vsel %vm683, %v5677, %v5679
        %v5709 = vsel %vm683, %v5679, %v5681
        %v5710 = vsel %vm683, %v5683, %v5685
        %v5711 = vsel %vm683, %v5685, %v5687
        %v5737 = vsel %vm504, %v5465, 0
        %v5740 = vsel %vm504, %v5466, 0
        %v5743 = vsel %vm504, %v5467, 0
        %v5746 = vsel %vm504, %v5468, 0
        %5748 = vmatpush.msra.mxu0 0.0
        %5749 = vmatpush.msra.mxu0 0.0
        %5750 = vmatpush.msra.mxu0 0.0
        %5751 = vmatpush.msra.mxu0 0.0
        %5752 = vmatpush.msra.mxu0 %v5710
        %5753 = vmatpush.msra.mxu0 %v5708
        %5754 = vmatpush.msra.mxu0 %v5706
        %5755 = vmatpush.msra.mxu0 %v5704
        %5756 = vmatpush.msra.mxu0 %v5702
        %5757 = vmatpush.msra.mxu0 %v5700
        %5758 = vmatpush.msra.mxu0 %v5698
        %5759 = vmatpush.msra.mxu0 %v5696
        %5760 = vmatpush.msra.mxu0 %v5694
        %5761 = vmatpush.msra.mxu0 %v5692
        %5762 = vmatpush.msra.mxu0 %v5690
        %5763 = vmatpush.msra.mxu0 %v5688
        %5764 = vmatmul.f32.gmra.mxu0 %v5737
        %v5765 = vpop.f32.mrf.mxu0
        %v5766 = vadd.f32 %v5540, %v5765
        %5767 = vmatmul.f32.gmra.mxu0 %v5740
        %v5768 = vpop.f32.mrf.mxu0
        %v5769 = vadd.f32 %v5543, %v5768
        %5770 = vmatmul.f32.gmra.mxu0 %v5743
        %v5771 = vpop.f32.mrf.mxu0
        %v5772 = vadd.f32 %v5546, %v5771
        %5773 = vmatmul.f32.gmra.mxu0 %v5746
        %v5774 = vpop.f32.mrf.mxu0
        %v5775 = vadd.f32 %v5549, %v5774
        %5776 = vdwg.mxu0
        %5777 = vmatpush.msra.mxu0 0.0
        %5778 = vmatpush.msra.mxu0 0.0
        %5779 = vmatpush.msra.mxu0 0.0
        %5780 = vmatpush.msra.mxu0 0.0
        %5781 = vmatpush.msra.mxu0 %v5711
        %5782 = vmatpush.msra.mxu0 %v5709
        %5783 = vmatpush.msra.mxu0 %v5707
        %5784 = vmatpush.msra.mxu0 %v5705
        %5785 = vmatpush.msra.mxu0 %v5703
        %5786 = vmatpush.msra.mxu0 %v5701
        %5787 = vmatpush.msra.mxu0 %v5699
        %5788 = vmatpush.msra.mxu0 %v5697
        %5789 = vmatpush.msra.mxu0 %v5695
        %5790 = vmatpush.msra.mxu0 %v5693
        %5791 = vmatpush.msra.mxu0 %v5691
        %5792 = vmatpush.msra.mxu0 %v5689
        %5793 = vmatmul.f32.gmra.mxu0 %v5737
        %v5794 = vpop.f32.mrf.mxu0
        %v5795 = vadd.f32 %v5569, %v5794
        %5796 = vmatmul.f32.gmra.mxu0 %v5740
        %v5797 = vpop.f32.mrf.mxu0
        %v5798 = vadd.f32 %v5572, %v5797
        %5799 = vmatmul.f32.gmra.mxu0 %v5743
        %v5800 = vpop.f32.mrf.mxu0
        %v5801 = vadd.f32 %v5575, %v5800
        %5802 = vmatmul.f32.gmra.mxu0 %v5746
        %v5803 = vpop.f32.mrf.mxu0
        %v5804 = vadd.f32 %v5578, %v5803
        %5805 = vdwg.mxu0
        %s5806 = scalar_lea.vmem [#allocation3], 640
        %v5807 = vld [vmem:[%s5806] sm:$0xff]
        %v5808 = vld [vmem:[%s5806 + $0x8] sm:$0xff]
        %v5809 = vld [vmem:[%s5806 + $0x10] sm:$0xff]
        %v5810 = vld [vmem:[%s5806 + $0x18] sm:$0xff]
        %v5811 = vld [vmem:[#allocation2 + $0x8] sm:$0xff]
        %v5812 = vld [vmem:[#allocation2 + $0x10] sm:$0xff]
        %v5813 = vld [vmem:[#allocation2 + $0x18] sm:$0xff]
        %v5814 = vld [vmem:[#allocation2 + $0x28] sm:$0xff]
        %v5815 = vld [vmem:[#allocation2 + $0x30] sm:$0xff]
        %v5816 = vld [vmem:[#allocation2 + $0x38] sm:$0xff]
        %v5817 = vld [vmem:[#allocation2 + $0x48] sm:$0xff]
        %v5818 = vld [vmem:[#allocation2 + $0x50] sm:$0xff]
        %v5819 = vld [vmem:[#allocation2 + $0x58] sm:$0xff]
        %v5820 = vld [vmem:[#allocation2 + $0x68] sm:$0xff]
        %v5821 = vld [vmem:[#allocation2 + $0x70] sm:$0xff]
        %v5822 = vld [vmem:[#allocation2 + $0x78] sm:$0xff]
        %v5823 = vld [vmem:[#allocation2 + $0x88] sm:$0xff]
        %v5824 = vld [vmem:[#allocation2 + $0x90] sm:$0xff]
        %v5825 = vld [vmem:[#allocation2 + $0x98] sm:$0xff]
        %v5826 = vld [vmem:[#allocation2 + $0xa8] sm:$0xff]
        %v5827 = vld [vmem:[#allocation2 + $0xb0] sm:$0xff]
        %v5828 = vld [vmem:[#allocation2 + $0xb8] sm:$0xff]
        %v5829 = vld [vmem:[#allocation2 + $0xc8] sm:$0xff]
        %v5830 = vld [vmem:[#allocation2 + $0xd0] sm:$0xff]
        %v5831 = vld [vmem:[#allocation2 + $0xd8] sm:$0xff]
        %v5832 = vld [vmem:[#allocation2 + $0xe8] sm:$0xff]
        %v5833 = vld [vmem:[#allocation2 + $0xf0] sm:$0xff]
        %v5834 = vld [vmem:[#allocation2 + $0xf8] sm:$0xff]
        %v5835 = vld [vmem:[#allocation2 + $0x108] sm:$0xff]
        %v5836 = vld [vmem:[#allocation2 + $0x110] sm:$0xff]
        %v5837 = vld [vmem:[#allocation2 + $0x118] sm:$0xff]
        %v5838 = vld [vmem:[#allocation2 + $0x128] sm:$0xff]
        %v5839 = vld [vmem:[#allocation2 + $0x130] sm:$0xff]
        %v5840 = vld [vmem:[#allocation2 + $0x138] sm:$0xff]
        %v5841 = vld [vmem:[#allocation2 + $0x148] sm:$0xff]
        %v5842 = vld [vmem:[#allocation2 + $0x150] sm:$0xff]
        %v5843 = vld [vmem:[#allocation2 + $0x158] sm:$0xff]
        %v5844 = vld [vmem:[#allocation2 + $0x168] sm:$0xff]
        %v5845 = vld [vmem:[#allocation2 + $0x170] sm:$0xff]
        %v5846 = vld [vmem:[#allocation2 + $0x178] sm:$0xff]
        %5883 = vrot.lane.b32.xlu0 %v5811, 112
        %v5884 = vpop.permute.xlu0 %5883
        %5885 = vrot.lane.b32.xlu0 %v5812, 112
        %v5886 = vpop.permute.xlu0 %5885
        %5887 = vrot.lane.b32.xlu0 %v5813, 112
        %v5888 = vpop.permute.xlu0 %5887
        %5889 = vrot.lane.b32.xlu0 %v5814, 112
        %v5890 = vpop.permute.xlu0 %5889
        %5891 = vrot.lane.b32.xlu0 %v5815, 112
        %v5892 = vpop.permute.xlu0 %5891
        %5893 = vrot.lane.b32.xlu0 %v5816, 112
        %v5894 = vpop.permute.xlu0 %5893
        %5895 = vrot.lane.b32.xlu0 %v5817, 112
        %v5896 = vpop.permute.xlu0 %5895
        %5897 = vrot.lane.b32.xlu0 %v5818, 112
        %v5898 = vpop.permute.xlu0 %5897
        %5899 = vrot.lane.b32.xlu0 %v5819, 112
        %v5900 = vpop.permute.xlu0 %5899
        %5901 = vrot.lane.b32.xlu0 %v5820, 112
        %v5902 = vpop.permute.xlu0 %5901
        %5903 = vrot.lane.b32.xlu0 %v5821, 112
        %v5904 = vpop.permute.xlu0 %5903
        %5905 = vrot.lane.b32.xlu0 %v5822, 112
        %v5906 = vpop.permute.xlu0 %5905
        %5907 = vrot.lane.b32.xlu0 %v5823, 112
        %v5908 = vpop.permute.xlu0 %5907
        %5909 = vrot.lane.b32.xlu0 %v5824, 112
        %v5910 = vpop.permute.xlu0 %5909
        %5911 = vrot.lane.b32.xlu0 %v5825, 112
        %v5912 = vpop.permute.xlu0 %5911
        %5913 = vrot.lane.b32.xlu0 %v5826, 112
        %v5914 = vpop.permute.xlu0 %5913
        %5915 = vrot.lane.b32.xlu0 %v5827, 112
        %v5916 = vpop.permute.xlu0 %5915
        %5917 = vrot.lane.b32.xlu0 %v5828, 112
        %v5918 = vpop.permute.xlu0 %5917
        %5919 = vrot.lane.b32.xlu0 %v5829, 112
        %v5920 = vpop.permute.xlu0 %5919
        %5921 = vrot.lane.b32.xlu0 %v5830, 112
        %v5922 = vpop.permute.xlu0 %5921
        %5923 = vrot.lane.b32.xlu0 %v5831, 112
        %v5924 = vpop.permute.xlu0 %5923
        %5925 = vrot.lane.b32.xlu0 %v5832, 112
        %v5926 = vpop.permute.xlu0 %5925
        %5927 = vrot.lane.b32.xlu0 %v5833, 112
        %v5928 = vpop.permute.xlu0 %5927
        %5929 = vrot.lane.b32.xlu0 %v5834, 112
        %v5930 = vpop.permute.xlu0 %5929
        %5931 = vrot.lane.b32.xlu0 %v5835, 112
        %v5932 = vpop.permute.xlu0 %5931
        %5933 = vrot.lane.b32.xlu0 %v5836, 112
        %v5934 = vpop.permute.xlu0 %5933
        %5935 = vrot.lane.b32.xlu0 %v5837, 112
        %v5936 = vpop.permute.xlu0 %5935
        %5937 = vrot.lane.b32.xlu0 %v5838, 112
        %v5938 = vpop.permute.xlu0 %5937
        %5939 = vrot.lane.b32.xlu0 %v5839, 112
        %v5940 = vpop.permute.xlu0 %5939
        %5941 = vrot.lane.b32.xlu0 %v5840, 112
        %v5942 = vpop.permute.xlu0 %5941
        %5943 = vrot.lane.b32.xlu0 %v5841, 112
        %v5944 = vpop.permute.xlu0 %5943
        %5945 = vrot.lane.b32.xlu0 %v5842, 112
        %v5946 = vpop.permute.xlu0 %5945
        %5947 = vrot.lane.b32.xlu0 %v5843, 112
        %v5948 = vpop.permute.xlu0 %5947
        %5949 = vrot.lane.b32.xlu0 %v5844, 112
        %v5950 = vpop.permute.xlu0 %5949
        %5951 = vrot.lane.b32.xlu0 %v5845, 112
        %v5952 = vpop.permute.xlu0 %5951
        %5953 = vrot.lane.b32.xlu0 %v5846, 112
        %v5954 = vpop.permute.xlu0 %5953
        %v5955 = vsel %vm951, %v5884, %v5886
        %v5956 = vsel %vm951, %v5886, %v5888
        %v5957 = vsel %vm951, %v5890, %v5892
        %v5958 = vsel %vm951, %v5892, %v5894
        %v5959 = vsel %vm951, %v5896, %v5898
        %v5960 = vsel %vm951, %v5898, %v5900
        %v5961 = vsel %vm951, %v5902, %v5904
        %v5962 = vsel %vm951, %v5904, %v5906
        %v5963 = vsel %vm951, %v5908, %v5910
        %v5964 = vsel %vm951, %v5910, %v5912
        %v5965 = vsel %vm951, %v5914, %v5916
        %v5966 = vsel %vm951, %v5916, %v5918
        %v5967 = vsel %vm951, %v5920, %v5922
        %v5968 = vsel %vm951, %v5922, %v5924
        %v5969 = vsel %vm951, %v5926, %v5928
        %v5970 = vsel %vm951, %v5928, %v5930
        %v5971 = vsel %vm951, %v5932, %v5934
        %v5972 = vsel %vm951, %v5934, %v5936
        %v5973 = vsel %vm951, %v5938, %v5940
        %v5974 = vsel %vm951, %v5940, %v5942
        %v5975 = vsel %vm951, %v5944, %v5946
        %v5976 = vsel %vm951, %v5946, %v5948
        %v5977 = vsel %vm951, %v5950, %v5952
        %v5978 = vsel %vm951, %v5952, %v5954
        %v6004 = vsel %vm504, %v5807, 0
        %v6007 = vsel %vm504, %v5808, 0
        %v6010 = vsel %vm504, %v5809, 0
        %v6013 = vsel %vm504, %v5810, 0
        %6015 = vmatpush.msra.mxu0 0.0
        %6016 = vmatpush.msra.mxu0 0.0
        %6017 = vmatpush.msra.mxu0 0.0
        %6018 = vmatpush.msra.mxu0 0.0
        %6019 = vmatpush.msra.mxu0 %v5977
        %6020 = vmatpush.msra.mxu0 %v5975
        %6021 = vmatpush.msra.mxu0 %v5973
        %6022 = vmatpush.msra.mxu0 %v5971
        %6023 = vmatpush.msra.mxu0 %v5969
        %6024 = vmatpush.msra.mxu0 %v5967
        %6025 = vmatpush.msra.mxu0 %v5965
        %6026 = vmatpush.msra.mxu0 %v5963
        %6027 = vmatpush.msra.mxu0 %v5961
        %6028 = vmatpush.msra.mxu0 %v5959
        %6029 = vmatpush.msra.mxu0 %v5957
        %6030 = vmatpush.msra.mxu0 %v5955
        %6031 = vmatmul.f32.gmra.mxu0 %v6004
        %v6032 = vpop.f32.mrf.mxu0
        %v6033 = vadd.f32 0.0, %v6032
        %6034 = vmatmul.f32.gmra.mxu0 %v6007
        %v6035 = vpop.f32.mrf.mxu0
        %v6036 = vadd.f32 0.0, %v6035
        %6037 = vmatmul.f32.gmra.mxu0 %v6010
        %v6038 = vpop.f32.mrf.mxu0
        %v6039 = vadd.f32 0.0, %v6038
        %6040 = vmatmul.f32.gmra.mxu0 %v6013
        %v6041 = vpop.f32.mrf.mxu0
        %v6042 = vadd.f32 0.0, %v6041
        %6043 = vdwg.mxu0
        %6044 = vmatpush.msra.mxu0 0.0
        %6045 = vmatpush.msra.mxu0 0.0
        %6046 = vmatpush.msra.mxu0 0.0
        %6047 = vmatpush.msra.mxu0 0.0
        %6048 = vmatpush.msra.mxu0 %v5978
        %6049 = vmatpush.msra.mxu0 %v5976
        %6050 = vmatpush.msra.mxu0 %v5974
        %6051 = vmatpush.msra.mxu0 %v5972
        %6052 = vmatpush.msra.mxu0 %v5970
        %6053 = vmatpush.msra.mxu0 %v5968
        %6054 = vmatpush.msra.mxu0 %v5966
        %6055 = vmatpush.msra.mxu0 %v5964
        %6056 = vmatpush.msra.mxu0 %v5962
        %6057 = vmatpush.msra.mxu0 %v5960
        %6058 = vmatpush.msra.mxu0 %v5958
        %6059 = vmatpush.msra.mxu0 %v5956
        %6060 = vmatmul.f32.gmra.mxu0 %v6004
        %v6061 = vpop.f32.mrf.mxu0
        %v6062 = vadd.f32 0.0, %v6061
        %6063 = vmatmul.f32.gmra.mxu0 %v6007
        %v6064 = vpop.f32.mrf.mxu0
        %v6065 = vadd.f32 0.0, %v6064
        %6066 = vmatmul.f32.gmra.mxu0 %v6010
        %v6067 = vpop.f32.mrf.mxu0
        %v6068 = vadd.f32 0.0, %v6067
        %6069 = vmatmul.f32.gmra.mxu0 %v6013
        %v6070 = vpop.f32.mrf.mxu0
        %v6071 = vadd.f32 0.0, %v6070
        %6072 = vdwg.mxu0
        %v6073 = vadd.f32 %v5766, %v6033
        %v6074 = vadd.f32 %v5795, %v6062
        %v6075 = vadd.f32 %v5769, %v6036
        %v6076 = vadd.f32 %v5798, %v6065
        %v6077 = vadd.f32 %v5772, %v6039
        %v6078 = vadd.f32 %v5801, %v6068
        %v6079 = vadd.f32 %v5775, %v6042
        %v6080 = vadd.f32 %v5804, %v6071
        %s6081 = scalar_lea.vmem %s2, 192
        %v6082 = vld [vmem:[%s6081] sm:$0xff]
        %v6083 = vld [vmem:[%s6081 + $0x8] sm:$0xff]
        %v6084 = vld [vmem:[%s6081 + $0x10] sm:$0xff]
        %v6085 = vld [vmem:[%s6081 + $0x18] sm:$0xff]
        %6087 = vset.pattern.permute.xlu0 0
        %6088 = vperm.xlu0 %6087, %v6082
        %v6089 = vpop.permute.xlu0 %6088
        %6092 = vset.pattern.permute.xlu0 0
        %6093 = vperm.xlu0 %6092, %v6083
        %v6094 = vpop.permute.xlu0 %6093
        %6097 = vset.pattern.permute.xlu0 0
        %6098 = vperm.xlu0 %6097, %v6084
        %v6099 = vpop.permute.xlu0 %6098
        %6102 = vset.pattern.permute.xlu0 0
        %6103 = vperm.xlu0 %6102, %v6085
        %v6104 = vpop.permute.xlu0 %6103
        %v6106 = vadd.f32 %v6073, %v6089
        %v6107 = vadd.f32 %v6074, %v6089
        %v6108 = vadd.f32 %v6075, %v6094
        %v6109 = vadd.f32 %v6076, %v6094
        %v6110 = vadd.f32 %v6077, %v6099
        %v6111 = vadd.f32 %v6078, %v6099
        %v6112 = vadd.f32 %v6079, %v6104
        %v6113 = vadd.f32 %v6080, %v6104
        %v6114 = vmax.f32 %v6106, 0.0
        %v6115 = vmax.f32 %v6107, 0.0
        %v6116 = vmax.f32 %v6108, 0.0
        %v6117 = vmax.f32 %v6109, 0.0
        %v6118 = vmax.f32 %v6110, 0.0
        %v6119 = vmax.f32 %v6111, 0.0
        %v6120 = vmax.f32 %v6112, 0.0
        %v6121 = vmax.f32 %v6113, 0.0
        %6122 = vst [vmem:[#allocation2 + $0x88] sm:$0xff] %v6114
        %6123 = vst [vmem:[#allocation2 + $0x90] sm:$0xff] %v6115
        %6124 = vst [vmem:[#allocation2 + $0xa8] sm:$0xff] %v6116
        %6125 = vst [vmem:[#allocation2 + $0xb0] sm:$0xff] %v6117
        %6126 = vst [vmem:[#allocation2 + $0xc8] sm:$0xff] %v6118
        %6127 = vst [vmem:[#allocation2 + $0xd0] sm:$0xff] %v6119
        %6128 = vst [vmem:[#allocation2 + $0xe8] sm:$0xff] %v6120
        %6129 = vst [vmem:[#allocation2 + $0xf0] sm:$0xff] %v6121
        %v6130 = vld [vmem:[#allocation2 + $0x80] sm:$0xff]
        %v6131 = vld [vmem:[#allocation2 + $0x88] sm:$0xff]
        %v6132 = vld [vmem:[#allocation2 + $0x90] sm:$0xff]
        %v6133 = vld [vmem:[#allocation2 + $0xa0] sm:$0xff]
        %v6134 = vld [vmem:[#allocation2 + $0xa8] sm:$0xff]
        %v6135 = vld [vmem:[#allocation2 + $0xb0] sm:$0xff]
        %v6136 = vld [vmem:[#allocation2 + $0xc0] sm:$0xff]
        %v6137 = vld [vmem:[#allocation2 + $0xc8] sm:$0xff]
        %v6138 = vld [vmem:[#allocation2 + $0xd0] sm:$0xff]
        %v6139 = vld [vmem:[#allocation2 + $0xe0] sm:$0xff]
        %v6140 = vld [vmem:[#allocation2 + $0xe8] sm:$0xff]
        %v6141 = vld [vmem:[#allocation2 + $0xf0] sm:$0xff]
        %v6142 = vmul.f32 %v6130, %v284
        %v6143 = vmul.f32 %v6131, %v288
        %v6144 = vmul.f32 %v6132, %v286
        %v6145 = vmul.f32 %v6133, %v284
        %v6146 = vmul.f32 %v6134, %v288
        %v6147 = vmul.f32 %v6135, %v286
        %v6148 = vmul.f32 %v6136, %v284
        %v6149 = vmul.f32 %v6137, %v288
        %v6150 = vmul.f32 %v6138, %v286
        %v6151 = vmul.f32 %v6139, %v284
        %v6152 = vmul.f32 %v6140, %v288
        %v6153 = vmul.f32 %v6141, %v286
        %6166 = vrot.lane.b32.xlu0 %v6142, 1
        %v6167 = vpop.permute.xlu0 %6166
        %6168 = vrot.lane.b32.xlu0 %v6143, 1
        %v6169 = vpop.permute.xlu0 %6168
        %6170 = vrot.lane.b32.xlu0 %v6144, 1
        %v6171 = vpop.permute.xlu0 %6170
        %6172 = vrot.lane.b32.xlu0 %v6145, 1
        %v6173 = vpop.permute.xlu0 %6172
        %6174 = vrot.lane.b32.xlu0 %v6146, 1
        %v6175 = vpop.permute.xlu0 %6174
        %6176 = vrot.lane.b32.xlu0 %v6147, 1
        %v6177 = vpop.permute.xlu0 %6176
        %6178 = vrot.lane.b32.xlu0 %v6148, 1
        %v6179 = vpop.permute.xlu0 %6178
        %6180 = vrot.lane.b32.xlu0 %v6149, 1
        %v6181 = vpop.permute.xlu0 %6180
        %6182 = vrot.lane.b32.xlu0 %v6150, 1
        %v6183 = vpop.permute.xlu0 %6182
        %6184 = vrot.lane.b32.xlu0 %v6151, 1
        %v6185 = vpop.permute.xlu0 %6184
        %6186 = vrot.lane.b32.xlu0 %v6152, 1
        %v6187 = vpop.permute.xlu0 %6186
        %6188 = vrot.lane.b32.xlu0 %v6153, 1
        %v6189 = vpop.permute.xlu0 %6188
        %v6190 = vsel %vm340, %v6167, %v6169
        %v6191 = vsel %vm340, %v6169, %v6171
        %v6192 = vsel %vm340, %v6173, %v6175
        %v6193 = vsel %vm340, %v6175, %v6177
        %v6194 = vsel %vm340, %v6179, %v6181
        %v6195 = vsel %vm340, %v6181, %v6183
        %v6196 = vsel %vm340, %v6185, %v6187
        %v6197 = vsel %vm340, %v6187, %v6189
        %6206 = vst [vmem:[#allocation2 + $0x8] sm:$0xff] %v6190
        %6207 = vst [vmem:[#allocation2 + $0x10] sm:$0xff] %v6191
        %6208 = vst [vmem:[#allocation2 + $0x28] sm:$0xff] %v6192
        %6209 = vst [vmem:[#allocation2 + $0x30] sm:$0xff] %v6193
        %6210 = vst [vmem:[#allocation2 + $0x48] sm:$0xff] %v6194
        %6211 = vst [vmem:[#allocation2 + $0x50] sm:$0xff] %v6195
        %6212 = vst [vmem:[#allocation2 + $0x68] sm:$0xff] %v6196
        %6213 = vst [vmem:[#allocation2 + $0x70] sm:$0xff] %v6197
        %v6214 = vld [vmem:[#allocation2 + $0x88] sm:$0xff]
        %v6215 = vld [vmem:[#allocation2 + $0x90] sm:$0xff]
        %v6216 = vld [vmem:[#allocation2 + $0x98] sm:$0xff]
        %v6217 = vld [vmem:[#allocation2 + $0xa8] sm:$0xff]
        %v6218 = vld [vmem:[#allocation2 + $0xb0] sm:$0xff]
        %v6219 = vld [vmem:[#allocation2 + $0xb8] sm:$0xff]
        %v6220 = vld [vmem:[#allocation2 + $0xc8] sm:$0xff]
        %v6221 = vld [vmem:[#allocation2 + $0xd0] sm:$0xff]
        %v6222 = vld [vmem:[#allocation2 + $0xd8] sm:$0xff]
        %v6223 = vld [vmem:[#allocation2 + $0xe8] sm:$0xff]
        %v6224 = vld [vmem:[#allocation2 + $0xf0] sm:$0xff]
        %v6225 = vld [vmem:[#allocation2 + $0xf8] sm:$0xff]
        %v6226 = vmul.f32 %v6214, %v380
        %v6227 = vmul.f32 %v6215, %v383
        %v6228 = vmul.f32 %v6216, %v382
        %v6229 = vmul.f32 %v6217, %v380
        %v6230 = vmul.f32 %v6218, %v383
        %v6231 = vmul.f32 %v6219, %v382
        %v6232 = vmul.f32 %v6220, %v380
        %v6233 = vmul.f32 %v6221, %v383
        %v6234 = vmul.f32 %v6222, %v382
        %v6235 = vmul.f32 %v6223, %v380
        %v6236 = vmul.f32 %v6224, %v383
        %v6237 = vmul.f32 %v6225, %v382
        %6250 = vrot.lane.b32.xlu0 %v6226, 127
        %v6251 = vpop.permute.xlu0 %6250
        %6252 = vrot.lane.b32.xlu0 %v6227, 127
        %v6253 = vpop.permute.xlu0 %6252
        %6254 = vrot.lane.b32.xlu0 %v6228, 127
        %v6255 = vpop.permute.xlu0 %6254
        %6256 = vrot.lane.b32.xlu0 %v6229, 127
        %v6257 = vpop.permute.xlu0 %6256
        %6258 = vrot.lane.b32.xlu0 %v6230, 127
        %v6259 = vpop.permute.xlu0 %6258
        %6260 = vrot.lane.b32.xlu0 %v6231, 127
        %v6261 = vpop.permute.xlu0 %6260
        %6262 = vrot.lane.b32.xlu0 %v6232, 127
        %v6263 = vpop.permute.xlu0 %6262
        %6264 = vrot.lane.b32.xlu0 %v6233, 127
        %v6265 = vpop.permute.xlu0 %6264
        %6266 = vrot.lane.b32.xlu0 %v6234, 127
        %v6267 = vpop.permute.xlu0 %6266
        %6268 = vrot.lane.b32.xlu0 %v6235, 127
        %v6269 = vpop.permute.xlu0 %6268
        %6270 = vrot.lane.b32.xlu0 %v6236, 127
        %v6271 = vpop.permute.xlu0 %6270
        %6272 = vrot.lane.b32.xlu0 %v6237, 127
        %v6273 = vpop.permute.xlu0 %6272
        %v6274 = vsel %vm287, %v6251, %v6253
        %v6275 = vsel %vm287, %v6253, %v6255
        %v6276 = vsel %vm287, %v6257, %v6259
        %v6277 = vsel %vm287, %v6259, %v6261
        %v6278 = vsel %vm287, %v6263, %v6265
        %v6279 = vsel %vm287, %v6265, %v6267
        %v6280 = vsel %vm287, %v6269, %v6271
        %v6281 = vsel %vm287, %v6271, %v6273
        %6290 = vst [vmem:[#allocation2 + $0x108] sm:$0xff] %v6274
        %6291 = vst [vmem:[#allocation2 + $0x110] sm:$0xff] %v6275
        %6292 = vst [vmem:[#allocation2 + $0x128] sm:$0xff] %v6276
        %6293 = vst [vmem:[#allocation2 + $0x130] sm:$0xff] %v6277
        %6294 = vst [vmem:[#allocation2 + $0x148] sm:$0xff] %v6278
        %6295 = vst [vmem:[#allocation2 + $0x150] sm:$0xff] %v6279
        %6296 = vst [vmem:[#allocation2 + $0x168] sm:$0xff] %v6280
        %6297 = vst [vmem:[#allocation2 + $0x170] sm:$0xff] %v6281
        %s6298 = scalar_lea.vmem [#allocation3], 672
        %v6299 = vld [vmem:[%s6298] sm:$0xff]
        %v6300 = vld [vmem:[%s6298 + $0x8] sm:$0xff]
        %v6301 = vld [vmem:[%s6298 + $0x10] sm:$0xff]
        %v6302 = vld [vmem:[%s6298 + $0x18] sm:$0xff]
        %v6303 = vld [vmem:[#allocation2] sm:$0xff]
        %v6304 = vld [vmem:[#allocation2 + $0x8] sm:$0xff]
        %v6305 = vld [vmem:[#allocation2 + $0x10] sm:$0xff]
        %v6306 = vld [vmem:[#allocation2 + $0x20] sm:$0xff]
        %v6307 = vld [vmem:[#allocation2 + $0x28] sm:$0xff]
        %v6308 = vld [vmem:[#allocation2 + $0x30] sm:$0xff]
        %v6309 = vld [vmem:[#allocation2 + $0x40] sm:$0xff]
        %v6310 = vld [vmem:[#allocation2 + $0x48] sm:$0xff]
        %v6311 = vld [vmem:[#allocation2 + $0x50] sm:$0xff]
        %v6312 = vld [vmem:[#allocation2 + $0x60] sm:$0xff]
        %v6313 = vld [vmem:[#allocation2 + $0x68] sm:$0xff]
        %v6314 = vld [vmem:[#allocation2 + $0x70] sm:$0xff]
        %v6315 = vld [vmem:[#allocation2 + $0x80] sm:$0xff]
        %v6316 = vld [vmem:[#allocation2 + $0x88] sm:$0xff]
        %v6317 = vld [vmem:[#allocation2 + $0x90] sm:$0xff]
        %v6318 = vld [vmem:[#allocation2 + $0xa0] sm:$0xff]
        %v6319 = vld [vmem:[#allocation2 + $0xa8] sm:$0xff]
        %v6320 = vld [vmem:[#allocation2 + $0xb0] sm:$0xff]
        %v6321 = vld [vmem:[#allocation2 + $0xc0] sm:$0xff]
        %v6322 = vld [vmem:[#allocation2 + $0xc8] sm:$0xff]
        %v6323 = vld [vmem:[#allocation2 + $0xd0] sm:$0xff]
        %v6324 = vld [vmem:[#allocation2 + $0xe0] sm:$0xff]
        %v6325 = vld [vmem:[#allocation2 + $0xe8] sm:$0xff]
        %v6326 = vld [vmem:[#allocation2 + $0xf0] sm:$0xff]
        %v6327 = vld [vmem:[#allocation2 + $0x100] sm:$0xff]
        %v6328 = vld [vmem:[#allocation2 + $0x108] sm:$0xff]
        %v6329 = vld [vmem:[#allocation2 + $0x110] sm:$0xff]
        %v6330 = vld [vmem:[#allocation2 + $0x120] sm:$0xff]
        %v6331 = vld [vmem:[#allocation2 + $0x128] sm:$0xff]
        %v6332 = vld [vmem:[#allocation2 + $0x130] sm:$0xff]
        %v6333 = vld [vmem:[#allocation2 + $0x140] sm:$0xff]
        %v6334 = vld [vmem:[#allocation2 + $0x148] sm:$0xff]
        %v6335 = vld [vmem:[#allocation2 + $0x150] sm:$0xff]
        %v6336 = vld [vmem:[#allocation2 + $0x160] sm:$0xff]
        %v6337 = vld [vmem:[#allocation2 + $0x168] sm:$0xff]
        %v6338 = vld [vmem:[#allocation2 + $0x170] sm:$0xff]
        %s6339 = scalar_lea.vmem [#allocation3], 704
        %v6340 = vld [vmem:[%s6339] sm:$0xff]
        %v6341 = vld [vmem:[%s6339 + $0x8] sm:$0xff]
        %v6342 = vld [vmem:[%s6339 + $0x10] sm:$0xff]
        %v6343 = vld [vmem:[%s6339 + $0x18] sm:$0xff]
        %v6345 = vsel %vm504, %v6340, 0
        %v6348 = vsel %vm504, %v6341, 0
        %v6351 = vsel %vm504, %v6342, 0
        %v6354 = vsel %vm504, %v6343, 0
        %6356 = vmatpush.msra.mxu0 0.0
        %6357 = vmatpush.msra.mxu0 0.0
        %6358 = vmatpush.msra.mxu0 0.0
        %6359 = vmatpush.msra.mxu0 0.0
        %6360 = vmatpush.msra.mxu0 %v6337
        %6361 = vmatpush.msra.mxu0 %v6334
        %6362 = vmatpush.msra.mxu0 %v6331
        %6363 = vmatpush.msra.mxu0 %v6328
        %6364 = vmatpush.msra.mxu0 %v6325
        %6365 = vmatpush.msra.mxu0 %v6322
        %6366 = vmatpush.msra.mxu0 %v6319
        %6367 = vmatpush.msra.mxu0 %v6316
        %6368 = vmatpush.msra.mxu0 %v6313
        %6369 = vmatpush.msra.mxu0 %v6310
        %6370 = vmatpush.msra.mxu0 %v6307
        %6371 = vmatpush.msra.mxu0 %v6304
        %6372 = vmatmul.f32.gmra.mxu0 %v6345
        %v6373 = vpop.f32.mrf.mxu0
        %v6374 = vadd.f32 0.0, %v6373
        %6375 = vmatmul.f32.gmra.mxu0 %v6348
        %v6376 = vpop.f32.mrf.mxu0
        %v6377 = vadd.f32 0.0, %v6376
        %6378 = vmatmul.f32.gmra.mxu0 %v6351
        %v6379 = vpop.f32.mrf.mxu0
        %v6380 = vadd.f32 0.0, %v6379
        %6381 = vmatmul.f32.gmra.mxu0 %v6354
        %v6382 = vpop.f32.mrf.mxu0
        %v6383 = vadd.f32 0.0, %v6382
        %6384 = vdwg.mxu0
        %6385 = vmatpush.msra.mxu0 0.0
        %6386 = vmatpush.msra.mxu0 0.0
        %6387 = vmatpush.msra.mxu0 0.0
        %6388 = vmatpush.msra.mxu0 0.0
        %6389 = vmatpush.msra.mxu0 %v6338
        %6390 = vmatpush.msra.mxu0 %v6335
        %6391 = vmatpush.msra.mxu0 %v6332
        %6392 = vmatpush.msra.mxu0 %v6329
        %6393 = vmatpush.msra.mxu0 %v6326
        %6394 = vmatpush.msra.mxu0 %v6323
        %6395 = vmatpush.msra.mxu0 %v6320
        %6396 = vmatpush.msra.mxu0 %v6317
        %6397 = vmatpush.msra.mxu0 %v6314
        %6398 = vmatpush.msra.mxu0 %v6311
        %6399 = vmatpush.msra.mxu0 %v6308
        %6400 = vmatpush.msra.mxu0 %v6305
        %6401 = vmatmul.f32.gmra.mxu0 %v6345
        %v6402 = vpop.f32.mrf.mxu0
        %v6403 = vadd.f32 0.0, %v6402
        %6404 = vmatmul.f32.gmra.mxu0 %v6348
        %v6405 = vpop.f32.mrf.mxu0
        %v6406 = vadd.f32 0.0, %v6405
        %6407 = vmatmul.f32.gmra.mxu0 %v6351
        %v6408 = vpop.f32.mrf.mxu0
        %v6409 = vadd.f32 0.0, %v6408
        %6410 = vmatmul.f32.gmra.mxu0 %v6354
        %v6411 = vpop.f32.mrf.mxu0
        %v6412 = vadd.f32 0.0, %v6411
        %6413 = vdwg.mxu0
        %6450 = vrot.lane.b32.xlu0 %v6303, 16
        %v6451 = vpop.permute.xlu0 %6450
        %6452 = vrot.lane.b32.xlu0 %v6304, 16
        %v6453 = vpop.permute.xlu0 %6452
        %6454 = vrot.lane.b32.xlu0 %v6305, 16
        %v6455 = vpop.permute.xlu0 %6454
        %6456 = vrot.lane.b32.xlu0 %v6306, 16
        %v6457 = vpop.permute.xlu0 %6456
        %6458 = vrot.lane.b32.xlu0 %v6307, 16
        %v6459 = vpop.permute.xlu0 %6458
        %6460 = vrot.lane.b32.xlu0 %v6308, 16
        %v6461 = vpop.permute.xlu0 %6460
        %6462 = vrot.lane.b32.xlu0 %v6309, 16
        %v6463 = vpop.permute.xlu0 %6462
        %6464 = vrot.lane.b32.xlu0 %v6310, 16
        %v6465 = vpop.permute.xlu0 %6464
        %6466 = vrot.lane.b32.xlu0 %v6311, 16
        %v6467 = vpop.permute.xlu0 %6466
        %6468 = vrot.lane.b32.xlu0 %v6312, 16
        %v6469 = vpop.permute.xlu0 %6468
        %6470 = vrot.lane.b32.xlu0 %v6313, 16
        %v6471 = vpop.permute.xlu0 %6470
        %6472 = vrot.lane.b32.xlu0 %v6314, 16
        %v6473 = vpop.permute.xlu0 %6472
        %6474 = vrot.lane.b32.xlu0 %v6315, 16
        %v6475 = vpop.permute.xlu0 %6474
        %6476 = vrot.lane.b32.xlu0 %v6316, 16
        %v6477 = vpop.permute.xlu0 %6476
        %6478 = vrot.lane.b32.xlu0 %v6317, 16
        %v6479 = vpop.permute.xlu0 %6478
        %6480 = vrot.lane.b32.xlu0 %v6318, 16
        %v6481 = vpop.permute.xlu0 %6480
        %6482 = vrot.lane.b32.xlu0 %v6319, 16
        %v6483 = vpop.permute.xlu0 %6482
        %6484 = vrot.lane.b32.xlu0 %v6320, 16
        %v6485 = vpop.permute.xlu0 %6484
        %6486 = vrot.lane.b32.xlu0 %v6321, 16
        %v6487 = vpop.permute.xlu0 %6486
        %6488 = vrot.lane.b32.xlu0 %v6322, 16
        %v6489 = vpop.permute.xlu0 %6488
        %6490 = vrot.lane.b32.xlu0 %v6323, 16
        %v6491 = vpop.permute.xlu0 %6490
        %6492 = vrot.lane.b32.xlu0 %v6324, 16
        %v6493 = vpop.permute.xlu0 %6492
        %6494 = vrot.lane.b32.xlu0 %v6325, 16
        %v6495 = vpop.permute.xlu0 %6494
        %6496 = vrot.lane.b32.xlu0 %v6326, 16
        %v6497 = vpop.permute.xlu0 %6496
        %6498 = vrot.lane.b32.xlu0 %v6327, 16
        %v6499 = vpop.permute.xlu0 %6498
        %6500 = vrot.lane.b32.xlu0 %v6328, 16
        %v6501 = vpop.permute.xlu0 %6500
        %6502 = vrot.lane.b32.xlu0 %v6329, 16
        %v6503 = vpop.permute.xlu0 %6502
        %6504 = vrot.lane.b32.xlu0 %v6330, 16
        %v6505 = vpop.permute.xlu0 %6504
        %6506 = vrot.lane.b32.xlu0 %v6331, 16
        %v6507 = vpop.permute.xlu0 %6506
        %6508 = vrot.lane.b32.xlu0 %v6332, 16
        %v6509 = vpop.permute.xlu0 %6508
        %6510 = vrot.lane.b32.xlu0 %v6333, 16
        %v6511 = vpop.permute.xlu0 %6510
        %6512 = vrot.lane.b32.xlu0 %v6334, 16
        %v6513 = vpop.permute.xlu0 %6512
        %6514 = vrot.lane.b32.xlu0 %v6335, 16
        %v6515 = vpop.permute.xlu0 %6514
        %6516 = vrot.lane.b32.xlu0 %v6336, 16
        %v6517 = vpop.permute.xlu0 %6516
        %6518 = vrot.lane.b32.xlu0 %v6337, 16
        %v6519 = vpop.permute.xlu0 %6518
        %6520 = vrot.lane.b32.xlu0 %v6338, 16
        %v6521 = vpop.permute.xlu0 %6520
        %v6522 = vsel %vm683, %v6451, %v6453
        %v6523 = vsel %vm683, %v6453, %v6455
        %v6524 = vsel %vm683, %v6457, %v6459
        %v6525 = vsel %vm683, %v6459, %v6461
        %v6526 = vsel %vm683, %v6463, %v6465
        %v6527 = vsel %vm683, %v6465, %v6467
        %v6528 = vsel %vm683, %v6469, %v6471
        %v6529 = vsel %vm683, %v6471, %v6473
        %v6530 = vsel %vm683, %v6475, %v6477
        %v6531 = vsel %vm683, %v6477, %v6479
        %v6532 = vsel %vm683, %v6481, %v6483
        %v6533 = vsel %vm683, %v6483, %v6485
        %v6534 = vsel %vm683, %v6487, %v6489
        %v6535 = vsel %vm683, %v6489, %v6491
        %v6536 = vsel %vm683, %v6493, %v6495
        %v6537 = vsel %vm683, %v6495, %v6497
        %v6538 = vsel %vm683, %v6499, %v6501
        %v6539 = vsel %vm683, %v6501, %v6503
        %v6540 = vsel %vm683, %v6505, %v6507
        %v6541 = vsel %vm683, %v6507, %v6509
        %v6542 = vsel %vm683, %v6511, %v6513
        %v6543 = vsel %vm683, %v6513, %v6515
        %v6544 = vsel %vm683, %v6517, %v6519
        %v6545 = vsel %vm683, %v6519, %v6521
        %v6571 = vsel %vm504, %v6299, 0
        %v6574 = vsel %vm504, %v6300, 0
        %v6577 = vsel %vm504, %v6301, 0
        %v6580 = vsel %vm504, %v6302, 0
        %6582 = vmatpush.msra.mxu0 0.0
        %6583 = vmatpush.msra.mxu0 0.0
        %6584 = vmatpush.msra.mxu0 0.0
        %6585 = vmatpush.msra.mxu0 0.0
        %6586 = vmatpush.msra.mxu0 %v6544
        %6587 = vmatpush.msra.mxu0 %v6542
        %6588 = vmatpush.msra.mxu0 %v6540
        %6589 = vmatpush.msra.mxu0 %v6538
        %6590 = vmatpush.msra.mxu0 %v6536
        %6591 = vmatpush.msra.mxu0 %v6534
        %6592 = vmatpush.msra.mxu0 %v6532
        %6593 = vmatpush.msra.mxu0 %v6530
        %6594 = vmatpush.msra.mxu0 %v6528
        %6595 = vmatpush.msra.mxu0 %v6526
        %6596 = vmatpush.msra.mxu0 %v6524
        %6597 = vmatpush.msra.mxu0 %v6522
        %6598 = vmatmul.f32.gmra.mxu0 %v6571
        %v6599 = vpop.f32.mrf.mxu0
        %v6600 = vadd.f32 %v6374, %v6599
        %6601 = vmatmul.f32.gmra.mxu0 %v6574
        %v6602 = vpop.f32.mrf.mxu0
        %v6603 = vadd.f32 %v6377, %v6602
        %6604 = vmatmul.f32.gmra.mxu0 %v6577
        %v6605 = vpop.f32.mrf.mxu0
        %v6606 = vadd.f32 %v6380, %v6605
        %6607 = vmatmul.f32.gmra.mxu0 %v6580
        %v6608 = vpop.f32.mrf.mxu0
        %v6609 = vadd.f32 %v6383, %v6608
        %6610 = vdwg.mxu0
        %6611 = vmatpush.msra.mxu0 0.0
        %6612 = vmatpush.msra.mxu0 0.0
        %6613 = vmatpush.msra.mxu0 0.0
        %6614 = vmatpush.msra.mxu0 0.0
        %6615 = vmatpush.msra.mxu0 %v6545
        %6616 = vmatpush.msra.mxu0 %v6543
        %6617 = vmatpush.msra.mxu0 %v6541
        %6618 = vmatpush.msra.mxu0 %v6539
        %6619 = vmatpush.msra.mxu0 %v6537
        %6620 = vmatpush.msra.mxu0 %v6535
        %6621 = vmatpush.msra.mxu0 %v6533
        %6622 = vmatpush.msra.mxu0 %v6531
        %6623 = vmatpush.msra.mxu0 %v6529
        %6624 = vmatpush.msra.mxu0 %v6527
        %6625 = vmatpush.msra.mxu0 %v6525
        %6626 = vmatpush.msra.mxu0 %v6523
        %6627 = vmatmul.f32.gmra.mxu0 %v6571
        %v6628 = vpop.f32.mrf.mxu0
        %v6629 = vadd.f32 %v6403, %v6628
        %6630 = vmatmul.f32.gmra.mxu0 %v6574
        %v6631 = vpop.f32.mrf.mxu0
        %v6632 = vadd.f32 %v6406, %v6631
        %6633 = vmatmul.f32.gmra.mxu0 %v6577
        %v6634 = vpop.f32.mrf.mxu0
        %v6635 = vadd.f32 %v6409, %v6634
        %6636 = vmatmul.f32.gmra.mxu0 %v6580
        %v6637 = vpop.f32.mrf.mxu0
        %v6638 = vadd.f32 %v6412, %v6637
        %6639 = vdwg.mxu0
        %s6640 = scalar_lea.vmem [#allocation3], 736
        %v6641 = vld [vmem:[%s6640] sm:$0xff]
        %v6642 = vld [vmem:[%s6640 + $0x8] sm:$0xff]
        %v6643 = vld [vmem:[%s6640 + $0x10] sm:$0xff]
        %v6644 = vld [vmem:[%s6640 + $0x18] sm:$0xff]
        %v6645 = vld [vmem:[#allocation2 + $0x8] sm:$0xff]
        %v6646 = vld [vmem:[#allocation2 + $0x10] sm:$0xff]
        %v6647 = vld [vmem:[#allocation2 + $0x18] sm:$0xff]
        %v6648 = vld [vmem:[#allocation2 + $0x28] sm:$0xff]
        %v6649 = vld [vmem:[#allocation2 + $0x30] sm:$0xff]
        %v6650 = vld [vmem:[#allocation2 + $0x38] sm:$0xff]
        %v6651 = vld [vmem:[#allocation2 + $0x48] sm:$0xff]
        %v6652 = vld [vmem:[#allocation2 + $0x50] sm:$0xff]
        %v6653 = vld [vmem:[#allocation2 + $0x58] sm:$0xff]
        %v6654 = vld [vmem:[#allocation2 + $0x68] sm:$0xff]
        %v6655 = vld [vmem:[#allocation2 + $0x70] sm:$0xff]
        %v6656 = vld [vmem:[#allocation2 + $0x78] sm:$0xff]
        %v6657 = vld [vmem:[#allocation2 + $0x88] sm:$0xff]
        %v6658 = vld [vmem:[#allocation2 + $0x90] sm:$0xff]
        %v6659 = vld [vmem:[#allocation2 + $0x98] sm:$0xff]
        %v6660 = vld [vmem:[#allocation2 + $0xa8] sm:$0xff]
        %v6661 = vld [vmem:[#allocation2 + $0xb0] sm:$0xff]
        %v6662 = vld [vmem:[#allocation2 + $0xb8] sm:$0xff]
        %v6663 = vld [vmem:[#allocation2 + $0xc8] sm:$0xff]
        %v6664 = vld [vmem:[#allocation2 + $0xd0] sm:$0xff]
        %v6665 = vld [vmem:[#allocation2 + $0xd8] sm:$0xff]
        %v6666 = vld [vmem:[#allocation2 + $0xe8] sm:$0xff]
        %v6667 = vld [vmem:[#allocation2 + $0xf0] sm:$0xff]
        %v6668 = vld [vmem:[#allocation2 + $0xf8] sm:$0xff]
        %v6669 = vld [vmem:[#allocation2 + $0x108] sm:$0xff]
        %v6670 = vld [vmem:[#allocation2 + $0x110] sm:$0xff]
        %v6671 = vld [vmem:[#allocation2 + $0x118] sm:$0xff]
        %v6672 = vld [vmem:[#allocation2 + $0x128] sm:$0xff]
        %v6673 = vld [vmem:[#allocation2 + $0x130] sm:$0xff]
        %v6674 = vld [vmem:[#allocation2 + $0x138] sm:$0xff]
        %v6675 = vld [vmem:[#allocation2 + $0x148] sm:$0xff]
        %v6676 = vld [vmem:[#allocation2 + $0x150] sm:$0xff]
        %v6677 = vld [vmem:[#allocation2 + $0x158] sm:$0xff]
        %v6678 = vld [vmem:[#allocation2 + $0x168] sm:$0xff]
        %v6679 = vld [vmem:[#allocation2 + $0x170] sm:$0xff]
        %v6680 = vld [vmem:[#allocation2 + $0x178] sm:$0xff]
        %6717 = vrot.lane.b32.xlu0 %v6645, 112
        %v6718 = vpop.permute.xlu0 %6717
        %6719 = vrot.lane.b32.xlu0 %v6646, 112
        %v6720 = vpop.permute.xlu0 %6719
        %6721 = vrot.lane.b32.xlu0 %v6647, 112
        %v6722 = vpop.permute.xlu0 %6721
        %6723 = vrot.lane.b32.xlu0 %v6648, 112
        %v6724 = vpop.permute.xlu0 %6723
        %6725 = vrot.lane.b32.xlu0 %v6649, 112
        %v6726 = vpop.permute.xlu0 %6725
        %6727 = vrot.lane.b32.xlu0 %v6650, 112
        %v6728 = vpop.permute.xlu0 %6727
        %6729 = vrot.lane.b32.xlu0 %v6651, 112
        %v6730 = vpop.permute.xlu0 %6729
        %6731 = vrot.lane.b32.xlu0 %v6652, 112
        %v6732 = vpop.permute.xlu0 %6731
        %6733 = vrot.lane.b32.xlu0 %v6653, 112
        %v6734 = vpop.permute.xlu0 %6733
        %6735 = vrot.lane.b32.xlu0 %v6654, 112
        %v6736 = vpop.permute.xlu0 %6735
        %6737 = vrot.lane.b32.xlu0 %v6655, 112
        %v6738 = vpop.permute.xlu0 %6737
        %6739 = vrot.lane.b32.xlu0 %v6656, 112
        %v6740 = vpop.permute.xlu0 %6739
        %6741 = vrot.lane.b32.xlu0 %v6657, 112
        %v6742 = vpop.permute.xlu0 %6741
        %6743 = vrot.lane.b32.xlu0 %v6658, 112
        %v6744 = vpop.permute.xlu0 %6743
        %6745 = vrot.lane.b32.xlu0 %v6659, 112
        %v6746 = vpop.permute.xlu0 %6745
        %6747 = vrot.lane.b32.xlu0 %v6660, 112
        %v6748 = vpop.permute.xlu0 %6747
        %6749 = vrot.lane.b32.xlu0 %v6661, 112
        %v6750 = vpop.permute.xlu0 %6749
        %6751 = vrot.lane.b32.xlu0 %v6662, 112
        %v6752 = vpop.permute.xlu0 %6751
        %6753 = vrot.lane.b32.xlu0 %v6663, 112
        %v6754 = vpop.permute.xlu0 %6753
        %6755 = vrot.lane.b32.xlu0 %v6664, 112
        %v6756 = vpop.permute.xlu0 %6755
        %6757 = vrot.lane.b32.xlu0 %v6665, 112
        %v6758 = vpop.permute.xlu0 %6757
        %6759 = vrot.lane.b32.xlu0 %v6666, 112
        %v6760 = vpop.permute.xlu0 %6759
        %6761 = vrot.lane.b32.xlu0 %v6667, 112
        %v6762 = vpop.permute.xlu0 %6761
        %6763 = vrot.lane.b32.xlu0 %v6668, 112
        %v6764 = vpop.permute.xlu0 %6763
        %6765 = vrot.lane.b32.xlu0 %v6669, 112
        %v6766 = vpop.permute.xlu0 %6765
        %6767 = vrot.lane.b32.xlu0 %v6670, 112
        %v6768 = vpop.permute.xlu0 %6767
        %6769 = vrot.lane.b32.xlu0 %v6671, 112
        %v6770 = vpop.permute.xlu0 %6769
        %6771 = vrot.lane.b32.xlu0 %v6672, 112
        %v6772 = vpop.permute.xlu0 %6771
        %6773 = vrot.lane.b32.xlu0 %v6673, 112
        %v6774 = vpop.permute.xlu0 %6773
        %6775 = vrot.lane.b32.xlu0 %v6674, 112
        %v6776 = vpop.permute.xlu0 %6775
        %6777 = vrot.lane.b32.xlu0 %v6675, 112
        %v6778 = vpop.permute.xlu0 %6777
        %6779 = vrot.lane.b32.xlu0 %v6676, 112
        %v6780 = vpop.permute.xlu0 %6779
        %6781 = vrot.lane.b32.xlu0 %v6677, 112
        %v6782 = vpop.permute.xlu0 %6781
        %6783 = vrot.lane.b32.xlu0 %v6678, 112
        %v6784 = vpop.permute.xlu0 %6783
        %6785 = vrot.lane.b32.xlu0 %v6679, 112
        %v6786 = vpop.permute.xlu0 %6785
        %6787 = vrot.lane.b32.xlu0 %v6680, 112
        %v6788 = vpop.permute.xlu0 %6787
        %v6789 = vsel %vm951, %v6718, %v6720
        %v6790 = vsel %vm951, %v6720, %v6722
        %v6791 = vsel %vm951, %v6724, %v6726
        %v6792 = vsel %vm951, %v6726, %v6728
        %v6793 = vsel %vm951, %v6730, %v6732
        %v6794 = vsel %vm951, %v6732, %v6734
        %v6795 = vsel %vm951, %v6736, %v6738
        %v6796 = vsel %vm951, %v6738, %v6740
        %v6797 = vsel %vm951, %v6742, %v6744
        %v6798 = vsel %vm951, %v6744, %v6746
        %v6799 = vsel %vm951, %v6748, %v6750
        %v6800 = vsel %vm951, %v6750, %v6752
        %v6801 = vsel %vm951, %v6754, %v6756
        %v6802 = vsel %vm951, %v6756, %v6758
        %v6803 = vsel %vm951, %v6760, %v6762
        %v6804 = vsel %vm951, %v6762, %v6764
        %v6805 = vsel %vm951, %v6766, %v6768
        %v6806 = vsel %vm951, %v6768, %v6770
        %v6807 = vsel %vm951, %v6772, %v6774
        %v6808 = vsel %vm951, %v6774, %v6776
        %v6809 = vsel %vm951, %v6778, %v6780
        %v6810 = vsel %vm951, %v6780, %v6782
        %v6811 = vsel %vm951, %v6784, %v6786
        %v6812 = vsel %vm951, %v6786, %v6788
        %v6838 = vsel %vm504, %v6641, 0
        %v6841 = vsel %vm504, %v6642, 0
        %v6844 = vsel %vm504, %v6643, 0
        %v6847 = vsel %vm504, %v6644, 0
        %6849 = vmatpush.msra.mxu0 0.0
        %6850 = vmatpush.msra.mxu0 0.0
        %6851 = vmatpush.msra.mxu0 0.0
        %6852 = vmatpush.msra.mxu0 0.0
        %6853 = vmatpush.msra.mxu0 %v6811
        %6854 = vmatpush.msra.mxu0 %v6809
        %6855 = vmatpush.msra.mxu0 %v6807
        %6856 = vmatpush.msra.mxu0 %v6805
        %6857 = vmatpush.msra.mxu0 %v6803
        %6858 = vmatpush.msra.mxu0 %v6801
        %6859 = vmatpush.msra.mxu0 %v6799
        %6860 = vmatpush.msra.mxu0 %v6797
        %6861 = vmatpush.msra.mxu0 %v6795
        %6862 = vmatpush.msra.mxu0 %v6793
        %6863 = vmatpush.msra.mxu0 %v6791
        %6864 = vmatpush.msra.mxu0 %v6789
        %6865 = vmatmul.f32.gmra.mxu0 %v6838
        %v6866 = vpop.f32.mrf.mxu0
        %v6867 = vadd.f32 0.0, %v6866
        %6868 = vmatmul.f32.gmra.mxu0 %v6841
        %v6869 = vpop.f32.mrf.mxu0
        %v6870 = vadd.f32 0.0, %v6869
        %6871 = vmatmul.f32.gmra.mxu0 %v6844
        %v6872 = vpop.f32.mrf.mxu0
        %v6873 = vadd.f32 0.0, %v6872
        %6874 = vmatmul.f32.gmra.mxu0 %v6847
        %v6875 = vpop.f32.mrf.mxu0
        %v6876 = vadd.f32 0.0, %v6875
        %6877 = vdwg.mxu0
        %6878 = vmatpush.msra.mxu0 0.0
        %6879 = vmatpush.msra.mxu0 0.0
        %6880 = vmatpush.msra.mxu0 0.0
        %6881 = vmatpush.msra.mxu0 0.0
        %6882 = vmatpush.msra.mxu0 %v6812
        %6883 = vmatpush.msra.mxu0 %v6810
        %6884 = vmatpush.msra.mxu0 %v6808
        %6885 = vmatpush.msra.mxu0 %v6806
        %6886 = vmatpush.msra.mxu0 %v6804
        %6887 = vmatpush.msra.mxu0 %v6802
        %6888 = vmatpush.msra.mxu0 %v6800
        %6889 = vmatpush.msra.mxu0 %v6798
        %6890 = vmatpush.msra.mxu0 %v6796
        %6891 = vmatpush.msra.mxu0 %v6794
        %6892 = vmatpush.msra.mxu0 %v6792
        %6893 = vmatpush.msra.mxu0 %v6790
        %6894 = vmatmul.f32.gmra.mxu0 %v6838
        %v6895 = vpop.f32.mrf.mxu0
        %v6896 = vadd.f32 0.0, %v6895
        %6897 = vmatmul.f32.gmra.mxu0 %v6841
        %v6898 = vpop.f32.mrf.mxu0
        %v6899 = vadd.f32 0.0, %v6898
        %6900 = vmatmul.f32.gmra.mxu0 %v6844
        %v6901 = vpop.f32.mrf.mxu0
        %v6902 = vadd.f32 0.0, %v6901
        %6903 = vmatmul.f32.gmra.mxu0 %v6847
        %v6904 = vpop.f32.mrf.mxu0
        %v6905 = vadd.f32 0.0, %v6904
        %6906 = vdwg.mxu0
        %v6907 = vadd.f32 %v6600, %v6867
        %v6908 = vadd.f32 %v6629, %v6896
        %v6909 = vadd.f32 %v6603, %v6870
        %v6910 = vadd.f32 %v6632, %v6899
        %v6911 = vadd.f32 %v6606, %v6873
        %v6912 = vadd.f32 %v6635, %v6902
        %v6913 = vadd.f32 %v6609, %v6876
        %v6914 = vadd.f32 %v6638, %v6905
        %s6915 = scalar_lea.vmem %s2, 224
        %v6916 = vld [vmem:[%s6915] sm:$0xff]
        %v6917 = vld [vmem:[%s6915 + $0x8] sm:$0xff]
        %v6918 = vld [vmem:[%s6915 + $0x10] sm:$0xff]
        %v6919 = vld [vmem:[%s6915 + $0x18] sm:$0xff]
        %6921 = vset.pattern.permute.xlu0 0
        %6922 = vperm.xlu0 %6921, %v6916
        %v6923 = vpop.permute.xlu0 %6922
        %6926 = vset.pattern.permute.xlu0 0
        %6927 = vperm.xlu0 %6926, %v6917
        %v6928 = vpop.permute.xlu0 %6927
        %6931 = vset.pattern.permute.xlu0 0
        %6932 = vperm.xlu0 %6931, %v6918
        %v6933 = vpop.permute.xlu0 %6932
        %6936 = vset.pattern.permute.xlu0 0
        %6937 = vperm.xlu0 %6936, %v6919
        %v6938 = vpop.permute.xlu0 %6937
        %v6940 = vadd.f32 %v6907, %v6923
        %v6941 = vadd.f32 %v6908, %v6923
        %v6942 = vadd.f32 %v6909, %v6928
        %v6943 = vadd.f32 %v6910, %v6928
        %v6944 = vadd.f32 %v6911, %v6933
        %v6945 = vadd.f32 %v6912, %v6933
        %v6946 = vadd.f32 %v6913, %v6938
        %v6947 = vadd.f32 %v6914, %v6938
        %6948 = vst [vmem:[%s187] sm:$0xff] %v6940
        %6949 = vst [vmem:[%s187 + $0x8] sm:$0xff] %v6941
        %6950 = vst [vmem:[%s187 + $0x10] sm:$0xff] %v6942
        %6951 = vst [vmem:[%s187 + $0x18] sm:$0xff] %v6943
        %6952 = vst [vmem:[%s187 + $0x20] sm:$0xff] %v6944
        %6953 = vst [vmem:[%s187 + $0x28] sm:$0xff] %v6945
        %6954 = vst [vmem:[%s187 + $0x30] sm:$0xff] %v6946
        %6955 = vst [vmem:[%s187 + $0x38] sm:$0xff] %v6947
        %p6956 = scmp.lt.s32.totalorder %s15, 1
        %s6957 = scalar_select %p6956, %s15, 1
        %s6958 = smul.addr %s6957, 8
        %s6959 = smul.addr %s6958, 8
        %s6960 = scalar_lea.vmem %s3, %s6959
        // Predicated region
        $region37: #{forward.1} parent=31 // pred_check
          %p6961 = pneg %p101
        $region38: #{forward.1} parent=31 // pred_check_branch
          %6963 = sbr.rel (%p6961) target = $region40
        $region39: #{forward.1} parent=31 // pred_region
          _
        $region40: #{forward.1} parent=31 // pred_fallthru
          _
      $region32: #{forward.1} parent=5 // pred_fallthru
        _
      %p6964 = scmp.le.s32.totalorder 2, %s10
      // Predicated region
      $region41: #{forward.1} parent=5 // pred_check
        %p6965 = pneg %p6964
      $region42: #{forward.1} parent=5 // pred_check_branch
        %6967 = sbr.rel (%p6965) target = $region44
      $region43: #{forward.1} parent=5 // pred_region
        %s6968 = ssub.s32 %s10, 2
        // Predicated region
        $region45: #{forward.1} parent=43 // pred_check
          %p6969 = pneg %p107
        $region46: #{forward.1} parent=43 // pred_check_branch
          %6971 = sbr.rel (%p6969) target = $region48
        $region47: #{forward.1} parent=43 // pred_region
          %p6972 = scmp.lt.s32.totalorder %s16, 1
          %s6973 = scalar_select %p6972, %s16, 1
          %s6974 = smul.addr %s6973, 8
          %s6975 = smul.addr %s6974, 8
          %s6976 = scalar_lea.vmem %s3, %s6975
        $region48: #{forward.1} parent=43 // pred_fallthru
          _
      $region44: #{forward.1} parent=5 // pred_fallthru
        _
    $region6: #{forward.1} parent=1 // loop_footer
      %s14 = sadd.s32 1, %s10
    $region7: #{forward.1} parent=1 // loop_footer_branch
      %9 = sbr.rel target = $region3
    $region8: #{forward.1} parent=1 // loop_exit
      _
    %6977 = vsyncpa [#allocation4], 1
    %s6978 = scalar_lea.sflag [#allocation4], 1
    %6979 = vsyncpa %s6978, 1

</llo_original>
